<compile_context>
chip_gen: v7x
topology: tpu7x:2x2x1
jax: 0.10.0
libtpu: 0.0.40
codegen_flags: <defaults>
</compile_context>

<pallas_src>
import functools

import numpy as np
import jax
import jax.numpy as jnp
from jax.experimental import pallas as pl
from jax.experimental.pallas import tpu as pltpu

# ------------------- configuration (mirrors GraphRNNDecoder params) ----------
NUM_VARS = 4           # params['num_vars']
INPUT_SIZE = 4         # params['input_size']
N_HID = 32             # params['decoder_hidden']
NUM_EDGE_TYPES = 2     # params['num_edge_types']
SKIP_FIRST = False     # params['skip_first']
DROPOUT_P = 0.0        # params['decoder_dropout'] == 0 -> F.dropout is identity
GRAPH_TYPE = "dynamic" # not 'semantic'
BATCH = 2
TIME_STEPS = 8
NUM_EDGES = NUM_VARS * (NUM_VARS - 1)

assert GRAPH_TYPE != "semantic", "semantic graph_type path not supported by this kernel"
assert DROPOUT_P == 0.0, "dropout > 0 not supported by this kernel"


# --------------------------- const slab packing -------------------------------
def _pack_const_slab(named_arrays, lane_width=128):
    """Pack 2-D f32 constants into one [rows, 128] slab: one DMA, static carves."""
    offsets, row = {}, 0
    for name, a in named_arrays:
        a = np.asarray(a, np.float32)
        assert a.ndim == 2 and a.shape[1] <= lane_width, (name, a.shape)
        offsets[name] = (row, a.shape)
        row += ((a.shape[0] + 7) // 8) * 8          # 8-row (sublane) alignment
    slab = np.zeros((row, lane_width), np.float32)
    for name, a in named_arrays:
        r0, shp = offsets[name]
        slab[r0:r0 + shp[0], :shp[1]] = np.asarray(a, np.float32)
    return jnp.asarray(slab), offsets


# ------------------------------ Pallas kernel ---------------------------------
def _make_fused_kernel(T, n_hid, n_vars, input_size, num_edges, num_active,
                       batch_per_shard, offsets):
    """Whole-sequence decoder kernel for one batch shard (one grid step)."""
    H = n_hid
    I = input_size
    A = num_active
    AH = A * H
    Rn = batch_per_shard * n_vars        # node rows per grid step (batches stacked)
    Re = batch_per_shard * num_edges     # edge rows per grid step

    def kernel(ins0_ref, rel_ref, slab_ref, out_ref):
        f32 = jnp.float32
        dot = lambda a, b: jnp.dot(a, b, preferred_element_type=f32)

        def cut(name):                       # static carve out of the const slab
            r0, (r, c) = offsets[name]
            return slab_ref[r0:r0 + r, 0:c]

        # ---- one-time slab carve + broadcast hoisting (outside the t-loop) ----
        w1 = cut("w1")           # [H, 2*AH]   [W1_recv | W1_send] stacked over types
        gg = cut("gg")           # [Re, 2*Rn]  fused recv|send block-diag one-hot gather
        grecvT = cut("grecvT")   # [Rn, Re]    edge->node agg (1/norm, 1/(N-1) folded in)
        w2 = cut("w2")           # [AH, AH]    block-diagonal over edge types
        wh = cut("wh")           # [H, 3H]     fused GRU hidden weights (r|i|n)
        wi = cut("wi")           # [I, 3H]     fused GRU input weights (r|i|n)
        wo1 = cut("wo1")         # [H, H]
        wo2 = cut("wo2")         # [H, H]
        wo3 = cut("wo3")         # [H, I]
        wo3wi = cut("wo3wi")     # [H, 3H] = wo3 @ wi   (feedback-path fusion)

        b1f = jnp.broadcast_to(cut("b1"), (Re, AH))
        b2f = jnp.broadcast_to(cut("b2"), (Re, AH))
        bo1f = jnp.broadcast_to(cut("bo1"), (Rn, H))
        bo2f = jnp.broadcast_to(cut("bo2"), (Rn, H))
        bo3f = jnp.broadcast_to(cut("bo3"), (Rn, I))
        bo3wif = jnp.broadcast_to(cut("bo3wi"), (Rn, 3 * H))

        ins = ins0_ref[...]      # [Rn, I]   step-0 ground-truth input (batches stacked)
        rel = rel_ref[...]       # [Re, A]   sampled edge weights (active types only)
        # pre-expanded per-type edge-weight lane mask (hoisted out of the loop)
        rel_mask = jnp.concatenate(
            [jnp.broadcast_to(rel[:, a:a + 1], (Re, H)) for a in range(A)], axis=1)

        hid = jnp.zeros((Rn, H), f32)
        # carried GRU input-gate pre-activations (gi = ins @ wi + bi)
        gi = dot(ins, wi) + jnp.broadcast_to(cut("bi"), (Rn, 3 * H))

        # Fully unrolled in-kernel time recurrence (T static & small); hidden
        # state, fed-back prediction and gi stay in vregs across steps.
        for t in range(T):
            # ---- message passing ----
            hz = dot(hid, w1)                                          # [Rn, 2AH]
            hz_st = jnp.concatenate([hz[:, :AH], hz[:, AH:]], axis=0)  # [2Rn, AH]
            m = jnp.tanh(dot(gg, hz_st) + b1f)                         # [Re, AH]
            # dropout p=0.0 is a no-op
            m = jnp.tanh(dot(m, w2) + b2f)                             # [Re, AH]
            aggf = dot(grecvT, m * rel_mask)                           # [Rn, AH]
            agg = aggf[:, :H]
            for a in range(1, A):                                      # sum over edge types
                agg = agg + aggf[:, a * H:(a + 1) * H]

            # ---- GRU cell (fused gates; gi carried across steps) ----
            gh = dot(agg, wh)                                          # [Rn, 3H]
            r = jax.nn.sigmoid(gi[:, :H] + gh[:, :H])
            z = jax.nn.sigmoid(gi[:, H:2 * H] + gh[:, H:2 * H])
            n = jnp.tanh(gi[:, 2 * H:] + r * gh[:, 2 * H:])
            hid = (1.0 - z) * n + z * hid

            # ---- output MLP + skip connection ----
            p = jax.nn.relu(dot(hid, wo1) + bo1f)
            p = jax.nn.relu(dot(p, wo2) + bo2f)
            pred = ins + dot(p, wo3) + bo3f                            # [Rn, I]

            out_ref[:, t * I:(t + 1) * I] = pred     # lane-dense output block
            ins = pred                               # feed back the prediction
            if t + 1 < T:
                # gi_{t+1} = ins_{t+1} @ wi + bi = gi_t + p @ (wo3@wi) + bo3@wi
                gi = gi + dot(p, wo3wi) + bo3wif

    return kernel


def graph_rnn_decoder_forward(inputs, sampled_edges, slab, *, offsets,
                              active_types, num_shards):
    """inputs: [B, T, N, I]; sampled_edges: [B, NE, E] -> preds [B, T, N, I]."""
    B, T, N, I = inputs.shape
    NE = N * (N - 1)
    A = len(active_types)
    assert B % num_shards == 0
    Bs = B // num_shards
    Rn = Bs * N
    Re = Bs * NE

    # batch-stacked per-shard inputs (batch folded into rows, not into the grid)
    ins0 = inputs[:, 0].astype(jnp.float32).reshape(num_shards, Rn, I)
    rel = sampled_edges.astype(jnp.float32)[..., active_types[0]:]     # active types
    rel = rel.reshape(num_shards, Re, A)

    kernel = _make_fused_kernel(T, N_HID, N, I, NE, A, Bs, offsets)

    out = pl.pallas_call(
        kernel,
        grid=(num_shards,),                  # 1 on v5e/v6e, 2 on v7x (one per TC)
        in_specs=[
            pl.BlockSpec((None, Rn, I), lambda s: (s, 0, 0)),
            pl.BlockSpec((None, Re, A), lambda s: (s, 0, 0)),
            pl.BlockSpec(slab.shape, lambda s: (0, 0)),      # single const slab
        ],
        out_specs=pl.BlockSpec((None, Rn, T * I), lambda s: (s, 0, 0)),
        out_shape=jax.ShapeDtypeStruct((num_shards, Rn, T * I), jnp.float32),
        compiler_params=pltpu.CompilerParams(dimension_semantics=("parallel",)),
    )(ins0, rel, slab)

    # [num_shards, Bs*N, T*I] -> [B, T, N, I]  (layout plumbing in the wrapper)
    out = out.reshape(num_shards, Bs, N, T, I).transpose(0, 1, 3, 2, 4)
    return out.reshape(B, T, N, I)


# ------------------------ pure-JAX reference (for checking) -------------------
def reference_forward(inputs, sampled_edges, W, send_edges, recv_edges, e2n):
    B, T, N, I = inputs.shape
    start_idx = 1 if SKIP_FIRST else 0
    norm = float(NUM_EDGE_TYPES - 1) if SKIP_FIRST else float(NUM_EDGE_TYPES)
    hidden = jnp.zeros((B, N, N_HID), jnp.float32)
    e2n = jnp.asarray(e2n, jnp.float32)
    preds = []
    for t in range(T):
        ins = inputs[:, t] if t == 0 else preds[-1]
        recv = hidden[:, recv_edges, :]
        send = hidden[:, send_edges, :]
        pre = jnp.concatenate([recv, send], axis=-1)
        all_msgs = jnp.zeros((B, NUM_EDGES, N_HID), jnp.float32)
        for i in range(start_idx, NUM_EDGE_TYPES):
            m = jnp.tanh(pre @ W["W1T"][i] + W["b1"][i])
            m = jnp.tanh(m @ W["W2T"][i] + W["b2"][i])
            m = m * sampled_edges[:, :, i:i + 1]
            all_msgs = all_msgs + m / norm
        agg = jnp.einsum("beh,en->bnh", all_msgs, e2n) / (N - 1)
        inp_r = ins @ W["WirT"] + W["bir"]
        inp_i = ins @ W["WiiT"] + W["bii"]
        inp_n = ins @ W["WinT"] + W["bin"]
        r = jax.nn.sigmoid(inp_r + agg @ W["WhrT"])
        i_g = jax.nn.sigmoid(inp_i + agg @ W["WhiT"])
        n_g = jnp.tanh(inp_n + r * (agg @ W["WhhT"]))
        hidden = (1 - i_g) * n_g + i_g * hidden
        p = jax.nn.relu(hidden @ W["Wo1T"] + W["bo1"])
        p = jax.nn.relu(p @ W["Wo2T"] + W["bo2"])
        p = p @ W["Wo3T"] + W["bo3"]
        preds.append(ins + p)
    return jnp.stack(preds, axis=1)


# ----------------------------------- main --------------------------------------
if __name__ == "__main__":
    B, T, N, I, H, E = BATCH, TIME_STEPS, NUM_VARS, INPUT_SIZE, N_HID, NUM_EDGE_TYPES

    # grid shards: 2 on dual-TensorCore parts (v7x), else 1 (row-stack everything)
    try:
        kind = jax.devices()[0].device_kind.lower()
    except Exception:
        kind = ""
    num_shards = 2 if ("v7" in kind and B % 2 == 0) else 1
    Bs = B // num_shards

    # graph structure: fully connected without self-loops (as in __init__)
    adj = np.ones((N, N), np.float32) - np.eye(N, dtype=np.float32)
    send_edges = np.where(adj)[0]
    recv_edges = np.where(adj)[1]
    R = np.zeros((NUM_EDGES, N), np.float32); R[np.arange(NUM_EDGES), recv_edges] = 1.0
    S = np.zeros((NUM_EDGES, N), np.float32); S[np.arange(NUM_EDGES), send_edges] = 1.0

    start_idx = 1 if SKIP_FIRST else 0
    active = tuple(range(start_idx, NUM_EDGE_TYPES))
    A = len(active)
    norm = float(NUM_EDGE_TYPES - start_idx)
    inv_scale = (1.0 / norm) * (1.0 / float(N - 1))   # folded into edge->node matrix

    # block-diagonal per-shard gather matrices (batches row-stacked inside a shard)
    eyeBs = np.eye(Bs, dtype=np.float32)
    R_bd = np.kron(eyeBs, R)                           # [Bs*NE, Bs*N]
    S_bd = np.kron(eyeBs, S)                           # [Bs*NE, Bs*N]
    GG = np.concatenate([R_bd, S_bd], axis=1)          # [Bs*NE, 2*Bs*N]  fused gather
    grecvT_bd = R_bd.T.copy() * inv_scale              # [Bs*N, Bs*NE]  scalings folded

    # deterministic parameter init (Linear weights stored pre-transposed [in, out])
    keys = jax.random.split(jax.random.PRNGKey(0), 24)
    nrm = lambda k, s, sc=0.1: (sc * jax.random.normal(k, s)).astype(jnp.float32)
    W = {
        "W1T": nrm(keys[0], (E, 2 * H, H)), "b1": nrm(keys[1], (E, 1, H)),
        "W2T": nrm(keys[2], (E, H, H)),     "b2": nrm(keys[3], (E, 1, H)),
        "WhrT": nrm(keys[4], (H, H)), "WhiT": nrm(keys[5], (H, H)), "WhhT": nrm(keys[6], (H, H)),
        "WirT": nrm(keys[7], (I, H)), "bir": nrm(keys[8], (1, H)),
        "WiiT": nrm(keys[9], (I, H)), "bii": nrm(keys[10], (1, H)),
        "WinT": nrm(keys[11], (I, H)), "bin": nrm(keys[12], (1, H)),
        "Wo1T": nrm(keys[13], (H, H)), "bo1": nrm(keys[14], (1, H)),
        "Wo2T": nrm(keys[15], (H, H)), "bo2": nrm(keys[16], (1, H)),
        "Wo3T": nrm(keys[17], (H, I)), "bo3": nrm(keys[18], (1, I)),
    }

    # ---- one-time weight fusion (outside the kernel / outside any loop) ----
    AH = A * H
    # message W1: [W1_recv(all types) | W1_send(all types)] -> [H, 2*A*H]
    W1cat = np.concatenate(
        [np.concatenate([np.asarray(W["W1T"][i])[:H, :] for i in active], axis=1),
         np.concatenate([np.asarray(W["W1T"][i])[H:, :] for i in active], axis=1)], axis=1)
    b1cat = np.concatenate([np.asarray(W["b1"][i]) for i in active], axis=1)   # [1, A*H]
    # message W2: block-diagonal over active edge types -> [A*H, A*H]
    W2bd = np.zeros((AH, AH), np.float32)
    for a, i in enumerate(active):
        W2bd[a * H:(a + 1) * H, a * H:(a + 1) * H] = np.asarray(W["W2T"][i])
    b2cat = np.concatenate([np.asarray(W["b2"][i]) for i in active], axis=1)   # [1, A*H]
    # fused GRU weights (r | i | n)
    Wi_cat = np.concatenate([np.asarray(W["WirT"]), np.asarray(W["WiiT"]),
                             np.asarray(W["WinT"])], axis=1)                   # [I, 3H]
    bi_cat = np.concatenate([np.asarray(W["bir"]), np.asarray(W["bii"]),
                             np.asarray(W["bin"])], axis=1)                    # [1, 3H]
    Wh_cat = np.concatenate([np.asarray(W["WhrT"]), np.asarray(W["WhiT"]),
                             np.asarray(W["WhhT"])], axis=1)                   # [H, 3H]
    # feedback-path fusion: pred -> next-step GRU input gates
    Wo3Wi = np.asarray(W["Wo3T"]) @ Wi_cat                                     # [H, 3H]
    bo3Wi = np.asarray(W["bo3"]) @ Wi_cat                                      # [1, 3H]

    # ---- pack all constants into a single slab (one DMA, static carves) ----
    slab, offsets = _pack_const_slab([
        ("w1", W1cat), ("w2", W2bd), ("wh", Wh_cat), ("wo3wi", Wo3Wi),
        ("wi", Wi_cat), ("wo1", np.asarray(W["Wo1T"])), ("wo2", np.asarray(W["Wo2T"])),
        ("wo3", np.asarray(W["Wo3T"])),
        ("gg", GG), ("grecvT", grecvT_bd),
        ("b1", b1cat), ("b2", b2cat), ("bi", bi_cat), ("bo3wi", bo3Wi),
        ("bo1", np.asarray(W["bo1"])), ("bo2", np.asarray(W["bo2"])),
        ("bo3", np.asarray(W["bo3"])),
    ])

    # deterministic example inputs
    inputs = (0.5 * jax.random.normal(keys[19], (B, T, N, I))).astype(jnp.float32)
    sampled_edges = jax.nn.softmax(
        jax.random.normal(keys[20], (B, NUM_EDGES, E)), axis=-1).astype(jnp.float32)

    fwd = jax.jit(functools.partial(graph_rnn_decoder_forward,
                                    offsets=offsets, active_types=active,
                                    num_shards=num_shards))
    preds = fwd(inputs, sampled_edges, slab)
    preds = jax.block_until_ready(preds)

    ref = reference_forward(inputs, sampled_edges, W, send_edges, recv_edges, R)
    np.testing.assert_allclose(np.asarray(preds), np.asarray(ref), rtol=5e-3, atol=5e-3)
    print("KERNEL_OK")
</pallas_src>

<mosaic_0001>
module attributes {stable_mosaic.version = 11 : i64} {
  func.func @kernel(%arg0: i32, %arg1: memref<1x8x4xf32, #tpu.memory_space<vmem>>, %arg2: memref<1x24x2xf32, #tpu.memory_space<vmem>>, %arg3: memref<352x128xf32, #tpu.memory_space<vmem>>, %arg4: memref<1x8x32xf32, #tpu.memory_space<vmem>>) attributes {dimension_semantics = [#tpu.dimension_semantics<parallel>], iteration_bounds = array<i64: 1>, scalar_prefetch = 0 : i64, scratch_operands = 0 : i64, tpu.core_type = #tpu.core_type<tc>, window_params = [{transform_indices = @transform_0, window_bounds = array<i64: 1, 8, 4>}, {transform_indices = @transform_1, window_bounds = array<i64: 1, 24, 2>}, {pipeline_mode = #tpu.pipeline_mode<synchronous>, transform_indices = @transform_2, window_bounds = array<i64: 352, 128>}, {transform_indices = @transform_3, window_bounds = array<i64: 1, 8, 32>}]} {
    %c0 = arith.constant 0 : index
    %c0_0 = arith.constant 0 : index
    %0 = vector.load %arg3[%c0, %c0_0] : memref<352x128xf32, #tpu.memory_space<vmem>>, vector<32x128xf32>
    %c264 = arith.constant 264 : index
    %c0_1 = arith.constant 0 : index
    %1 = vector.load %arg3[%c264, %c0_1] : memref<352x128xf32, #tpu.memory_space<vmem>>, vector<24x16xf32>
    %c288 = arith.constant 288 : index
    %c0_2 = arith.constant 0 : index
    %2 = vector.load %arg3[%c288, %c0_2] : memref<352x128xf32, #tpu.memory_space<vmem>>, vector<8x24xf32>
    %c32 = arith.constant 32 : index
    %c0_3 = arith.constant 0 : index
    %3 = vector.load %arg3[%c32, %c0_3] : memref<352x128xf32, #tpu.memory_space<vmem>>, vector<64x64xf32>
    %c96 = arith.constant 96 : index
    %c0_4 = arith.constant 0 : index
    %4 = vector.load %arg3[%c96, %c0_4] : memref<352x128xf32, #tpu.memory_space<vmem>>, vector<32x96xf32>
    %c160 = arith.constant 160 : index
    %c0_5 = arith.constant 0 : index
    %5 = vector.load %arg3[%c160, %c0_5] : memref<352x128xf32, #tpu.memory_space<vmem>>, vector<4x96xf32>
    %c168 = arith.constant 168 : index
    %c0_6 = arith.constant 0 : index
    %6 = vector.load %arg3[%c168, %c0_6] : memref<352x128xf32, #tpu.memory_space<vmem>>, vector<32x32xf32>
    %c200 = arith.constant 200 : index
    %c0_7 = arith.constant 0 : index
    %7 = vector.load %arg3[%c200, %c0_7] : memref<352x128xf32, #tpu.memory_space<vmem>>, vector<32x32xf32>
    %c232 = arith.constant 232 : index
    %c0_8 = arith.constant 0 : index
    %8 = vector.load %arg3[%c232, %c0_8] : memref<352x128xf32, #tpu.memory_space<vmem>>, vector<32x4xf32>
    %c128 = arith.constant 128 : index
    %c0_9 = arith.constant 0 : index
    %9 = vector.load %arg3[%c128, %c0_9] : memref<352x128xf32, #tpu.memory_space<vmem>>, vector<32x96xf32>
    %c296 = arith.constant 296 : index
    %c0_10 = arith.constant 0 : index
    %10 = vector.load %arg3[%c296, %c0_10] : memref<352x128xf32, #tpu.memory_space<vmem>>, vector<1x64xf32>
    %11 = vector.shape_cast %10 : vector<1x64xf32> to vector<1x64xf32>
    %12 = vector.broadcast %11 : vector<1x64xf32> to vector<24x64xf32>
    %c304 = arith.constant 304 : index
    %c0_11 = arith.constant 0 : index
    %13 = vector.load %arg3[%c304, %c0_11] : memref<352x128xf32, #tpu.memory_space<vmem>>, vector<1x64xf32>
    %14 = vector.shape_cast %13 : vector<1x64xf32> to vector<1x64xf32>
    %15 = vector.broadcast %14 : vector<1x64xf32> to vector<24x64xf32>
    %c328 = arith.constant 328 : index
    %c0_12 = arith.constant 0 : index
    %16 = vector.load %arg3[%c328, %c0_12] : memref<352x128xf32, #tpu.memory_space<vmem>>, vector<1x32xf32>
    %17 = vector.shape_cast %16 : vector<1x32xf32> to vector<1x32xf32>
    %18 = vector.broadcast %17 : vector<1x32xf32> to vector<8x32xf32>
    %c336 = arith.constant 336 : index
    %c0_13 = arith.constant 0 : index
    %19 = vector.load %arg3[%c336, %c0_13] : memref<352x128xf32, #tpu.memory_space<vmem>>, vector<1x32xf32>
    %20 = vector.shape_cast %19 : vector<1x32xf32> to vector<1x32xf32>
    %21 = vector.broadcast %20 : vector<1x32xf32> to vector<8x32xf32>
    %c344 = arith.constant 344 : index
    %c0_14 = arith.constant 0 : index
    %22 = vector.load %arg3[%c344, %c0_14] : memref<352x128xf32, #tpu.memory_space<vmem>>, vector<1x4xf32>
    %23 = vector.shape_cast %22 : vector<1x4xf32> to vector<1x4xf32>
    %24 = vector.broadcast %23 : vector<1x4xf32> to vector<8x4xf32>
    %c320 = arith.constant 320 : index
    %c0_15 = arith.constant 0 : index
    %25 = vector.load %arg3[%c320, %c0_15] : memref<352x128xf32, #tpu.memory_space<vmem>>, vector<1x96xf32>
    %26 = vector.shape_cast %25 : vector<1x96xf32> to vector<1x96xf32>
    %27 = vector.broadcast %26 : vector<1x96xf32> to vector<8x96xf32>
    %c0_16 = arith.constant 0 : index
    %c0_17 = arith.constant 0 : index
    %c0_18 = arith.constant 0 : index
    %28 = vector.load %arg1[%c0_16, %c0_17, %c0_18] : memref<1x8x4xf32, #tpu.memory_space<vmem>>, vector<1x8x4xf32>
    %29 = vector.shape_cast %28 : vector<1x8x4xf32> to vector<8x4xf32>
    %c0_19 = arith.constant 0 : index
    %c0_20 = arith.constant 0 : index
    %c0_21 = arith.constant 0 : index
    %30 = vector.load %arg2[%c0_19, %c0_20, %c0_21] : memref<1x24x2xf32, #tpu.memory_space<vmem>>, vector<1x24x2xf32>
    %31 = vector.shape_cast %30 : vector<1x24x2xf32> to vector<24x2xf32>
    %32 = vector.extract_strided_slice %31 {offsets = [0, 0], sizes = [24, 1], strides = [1, 1]} : vector<24x2xf32> to vector<24x1xf32>
    %33 = vector.shape_cast %32 : vector<24x1xf32> to vector<24x1xf32>
    %34 = vector.broadcast %33 : vector<24x1xf32> to vector<24x32xf32>
    %35 = vector.extract_strided_slice %31 {offsets = [0, 1], sizes = [24, 1], strides = [1, 1]} : vector<24x2xf32> to vector<24x1xf32>
    %36 = vector.shape_cast %35 : vector<24x1xf32> to vector<24x1xf32>
    %37 = vector.broadcast %36 : vector<24x1xf32> to vector<24x32xf32>
    %38 = tpu.concatenate %34, %37 in 1 : vector<24x32xf32>, vector<24x32xf32> -> vector<24x64xf32>
    %cst = arith.constant 0.000000e+00 : f32
    %39 = vector.broadcast %cst : f32 to vector<8x32xf32>
    %cst_22 = arith.constant dense<0.000000e+00> : vector<8x96xf32>
    %40 = tpu.matmul %29, %5, %cst_22 {dimension_numbers = #tpu.dot_dimension_numbers<[1], [0], [0], [1], [0, 0, 1, 1], [], []>} : vector<8x4xf32>, vector<4x96xf32>, vector<8x96xf32> -> vector<8x96xf32>
    %c312 = arith.constant 312 : index
    %c0_23 = arith.constant 0 : index
    %41 = vector.load %arg3[%c312, %c0_23] : memref<352x128xf32, #tpu.memory_space<vmem>>, vector<1x96xf32>
    %42 = vector.shape_cast %41 : vector<1x96xf32> to vector<1x96xf32>
    %43 = vector.broadcast %42 : vector<1x96xf32> to vector<8x96xf32>
    %44 = arith.addf %40, %43 : vector<8x96xf32>
    %cst_24 = arith.constant dense<0.000000e+00> : vector<8x128xf32>
    %45 = tpu.matmul %39, %0, %cst_24 {dimension_numbers = #tpu.dot_dimension_numbers<[1], [0], [0], [1], [0, 0, 1, 1], [], []>} : vector<8x32xf32>, vector<32x128xf32>, vector<8x128xf32> -> vector<8x128xf32>
    %46 = vector.extract_strided_slice %45 {offsets = [0, 0], sizes = [8, 64], strides = [1, 1]} : vector<8x128xf32> to vector<8x64xf32>
    %47 = vector.extract_strided_slice %45 {offsets = [0, 64], sizes = [8, 64], strides = [1, 1]} : vector<8x128xf32> to vector<8x64xf32>
    %48 = tpu.concatenate %46, %47 in 0 : vector<8x64xf32>, vector<8x64xf32> -> vector<16x64xf32>
    %cst_25 = arith.constant dense<0.000000e+00> : vector<24x64xf32>
    %49 = tpu.matmul %1, %48, %cst_25 {dimension_numbers = #tpu.dot_dimension_numbers<[1], [0], [0], [1], [0, 0, 1, 1], [], []>} : vector<24x16xf32>, vector<16x64xf32>, vector<24x64xf32> -> vector<24x64xf32>
    %50 = arith.addf %49, %12 : vector<24x64xf32>
    %51 = math.tanh %50 : vector<24x64xf32>
    %cst_26 = arith.constant dense<0.000000e+00> : vector<24x64xf32>
    %52 = tpu.matmul %51, %3, %cst_26 {dimension_numbers = #tpu.dot_dimension_numbers<[1], [0], [0], [1], [0, 0, 1, 1], [], []>} : vector<24x64xf32>, vector<64x64xf32>, vector<24x64xf32> -> vector<24x64xf32>
    %53 = arith.addf %52, %15 : vector<24x64xf32>
    %54 = math.tanh %53 : vector<24x64xf32>
    %55 = arith.mulf %54, %38 : vector<24x64xf32>
    %cst_27 = arith.constant dense<0.000000e+00> : vector<8x64xf32>
    %56 = tpu.matmul %2, %55, %cst_27 {dimension_numbers = #tpu.dot_dimension_numbers<[1], [0], [0], [1], [0, 0, 1, 1], [], []>} : vector<8x24xf32>, vector<24x64xf32>, vector<8x64xf32> -> vector<8x64xf32>
    %57 = vector.extract_strided_slice %56 {offsets = [0, 0], sizes = [8, 32], strides = [1, 1]} : vector<8x64xf32> to vector<8x32xf32>
    %58 = vector.extract_strided_slice %56 {offsets = [0, 32], sizes = [8, 32], strides = [1, 1]} : vector<8x64xf32> to vector<8x32xf32>
    %59 = arith.addf %57, %58 : vector<8x32xf32>
    %cst_28 = arith.constant dense<0.000000e+00> : vector<8x96xf32>
    %60 = tpu.matmul %59, %4, %cst_28 {dimension_numbers = #tpu.dot_dimension_numbers<[1], [0], [0], [1], [0, 0, 1, 1], [], []>} : vector<8x32xf32>, vector<32x96xf32>, vector<8x96xf32> -> vector<8x96xf32>
    %61 = vector.extract_strided_slice %44 {offsets = [0, 0], sizes = [8, 32], strides = [1, 1]} : vector<8x96xf32> to vector<8x32xf32>
    %62 = vector.extract_strided_slice %60 {offsets = [0, 0], sizes = [8, 32], strides = [1, 1]} : vector<8x96xf32> to vector<8x32xf32>
    %63 = arith.addf %61, %62 : vector<8x32xf32>
    %64 = arith.negf %63 : vector<8x32xf32>
    %65 = math.exp %64 : vector<8x32xf32>
    %cst_29 = arith.constant 1.000000e+00 : f32
    %66 = vector.broadcast %cst_29 : f32 to vector<8x32xf32>
    %67 = arith.addf %66, %65 : vector<8x32xf32>
    %68 = arith.divf %66, %67 : vector<8x32xf32>
    %69 = vector.extract_strided_slice %44 {offsets = [0, 32], sizes = [8, 32], strides = [1, 1]} : vector<8x96xf32> to vector<8x32xf32>
    %70 = vector.extract_strided_slice %60 {offsets = [0, 32], sizes = [8, 32], strides = [1, 1]} : vector<8x96xf32> to vector<8x32xf32>
    %71 = arith.addf %69, %70 : vector<8x32xf32>
    %72 = arith.negf %71 : vector<8x32xf32>
    %73 = math.exp %72 : vector<8x32xf32>
    %cst_30 = arith.constant 1.000000e+00 : f32
    %74 = vector.broadcast %cst_30 : f32 to vector<8x32xf32>
    %75 = arith.addf %74, %73 : vector<8x32xf32>
    %76 = arith.divf %74, %75 : vector<8x32xf32>
    %77 = vector.extract_strided_slice %44 {offsets = [0, 64], sizes = [8, 32], strides = [1, 1]} : vector<8x96xf32> to vector<8x32xf32>
    %78 = vector.extract_strided_slice %60 {offsets = [0, 64], sizes = [8, 32], strides = [1, 1]} : vector<8x96xf32> to vector<8x32xf32>
    %79 = arith.mulf %68, %78 : vector<8x32xf32>
    %80 = arith.addf %77, %79 : vector<8x32xf32>
    %81 = math.tanh %80 : vector<8x32xf32>
    %cst_31 = arith.constant 1.000000e+00 : f32
    %82 = vector.broadcast %cst_31 : f32 to vector<8x32xf32>
    %83 = arith.subf %82, %76 : vector<8x32xf32>
    %84 = arith.mulf %83, %81 : vector<8x32xf32>
    %85 = arith.mulf %76, %39 : vector<8x32xf32>
    %86 = arith.addf %84, %85 : vector<8x32xf32>
    %cst_32 = arith.constant dense<0.000000e+00> : vector<8x32xf32>
    %87 = tpu.matmul %86, %6, %cst_32 {dimension_numbers = #tpu.dot_dimension_numbers<[1], [0], [0], [1], [0, 0, 1, 1], [], []>} : vector<8x32xf32>, vector<32x32xf32>, vector<8x32xf32> -> vector<8x32xf32>
    %88 = arith.addf %87, %18 : vector<8x32xf32>
    %cst_33 = arith.constant 0.000000e+00 : f32
    %89 = vector.broadcast %cst_33 : f32 to vector<8x32xf32>
    %90 = arith.maximumf %88, %89 : vector<8x32xf32>
    %cst_34 = arith.constant dense<0.000000e+00> : vector<8x32xf32>
    %91 = tpu.matmul %90, %7, %cst_34 {dimension_numbers = #tpu.dot_dimension_numbers<[1], [0], [0], [1], [0, 0, 1, 1], [], []>} : vector<8x32xf32>, vector<32x32xf32>, vector<8x32xf32> -> vector<8x32xf32>
    %92 = arith.addf %91, %21 : vector<8x32xf32>
    %cst_35 = arith.constant 0.000000e+00 : f32
    %93 = vector.broadcast %cst_35 : f32 to vector<8x32xf32>
    %94 = arith.maximumf %92, %93 : vector<8x32xf32>
    %cst_36 = arith.constant dense<0.000000e+00> : vector<8x4xf32>
    %95 = tpu.matmul %94, %8, %cst_36 {dimension_numbers = #tpu.dot_dimension_numbers<[1], [0], [0], [1], [0, 0, 1, 1], [], []>} : vector<8x32xf32>, vector<32x4xf32>, vector<8x4xf32> -> vector<8x4xf32>
    %96 = arith.addf %29, %95 : vector<8x4xf32>
    %97 = arith.addf %96, %24 : vector<8x4xf32>
    %c0_37 = arith.constant 0 : index
    %c0_38 = arith.constant 0 : index
    %c0_39 = arith.constant 0 : index
    %98 = vector.load %arg4[%c0_37, %c0_38, %c0_39] : memref<1x8x32xf32, #tpu.memory_space<vmem>>, vector<1x8x4xf32>
    %99 = vector.shape_cast %98 : vector<1x8x4xf32> to vector<8x4xf32>
    %100 = vector.shape_cast %97 : vector<8x4xf32> to vector<1x8x4xf32>
    tpu.vector_store %arg4[%c0_37, %c0_38, %c0_39], %100 {strides = array<i32>} : memref<1x8x32xf32, #tpu.memory_space<vmem>>, vector<1x8x4xf32>,
    %cst_40 = arith.constant dense<0.000000e+00> : vector<8x96xf32>
    %101 = tpu.matmul %94, %9, %cst_40 {dimension_numbers = #tpu.dot_dimension_numbers<[1], [0], [0], [1], [0, 0, 1, 1], [], []>} : vector<8x32xf32>, vector<32x96xf32>, vector<8x96xf32> -> vector<8x96xf32>
    %102 = arith.addf %44, %101 : vector<8x96xf32>
    %103 = arith.addf %102, %27 : vector<8x96xf32>
    %cst_41 = arith.constant dense<0.000000e+00> : vector<8x128xf32>
    %104 = tpu.matmul %86, %0, %cst_41 {dimension_numbers = #tpu.dot_dimension_numbers<[1], [0], [0], [1], [0, 0, 1, 1], [], []>} : vector<8x32xf32>, vector<32x128xf32>, vector<8x128xf32> -> vector<8x128xf32>
    %105 = vector.extract_strided_slice %104 {offsets = [0, 0], sizes = [8, 64], strides = [1, 1]} : vector<8x128xf32> to vector<8x64xf32>
    %106 = vector.extract_strided_slice %104 {offsets = [0, 64], sizes = [8, 64], strides = [1, 1]} : vector<8x128xf32> to vector<8x64xf32>
    %107 = tpu.concatenate %105, %106 in 0 : vector<8x64xf32>, vector<8x64xf32> -> vector<16x64xf32>
    %cst_42 = arith.constant dense<0.000000e+00> : vector<24x64xf32>
    %108 = tpu.matmul %1, %107, %cst_42 {dimension_numbers = #tpu.dot_dimension_numbers<[1], [0], [0], [1], [0, 0, 1, 1], [], []>} : vector<24x16xf32>, vector<16x64xf32>, vector<24x64xf32> -> vector<24x64xf32>
    %109 = arith.addf %108, %12 : vector<24x64xf32>
    %110 = math.tanh %109 : vector<24x64xf32>
    %cst_43 = arith.constant dense<0.000000e+00> : vector<24x64xf32>
    %111 = tpu.matmul %110, %3, %cst_43 {dimension_numbers = #tpu.dot_dimension_numbers<[1], [0], [0], [1], [0, 0, 1, 1], [], []>} : vector<24x64xf32>, vector<64x64xf32>, vector<24x64xf32> -> vector<24x64xf32>
    %112 = arith.addf %111, %15 : vector<24x64xf32>
    %113 = math.tanh %112 : vector<24x64xf32>
    %114 = arith.mulf %113, %38 : vector<24x64xf32>
    %cst_44 = arith.constant dense<0.000000e+00> : vector<8x64xf32>
    %115 = tpu.matmul %2, %114, %cst_44 {dimension_numbers = #tpu.dot_dimension_numbers<[1], [0], [0], [1], [0, 0, 1, 1], [], []>} : vector<8x24xf32>, vector<24x64xf32>, vector<8x64xf32> -> vector<8x64xf32>
    %116 = vector.extract_strided_slice %115 {offsets = [0, 0], sizes = [8, 32], strides = [1, 1]} : vector<8x64xf32> to vector<8x32xf32>
    %117 = vector.extract_strided_slice %115 {offsets = [0, 32], sizes = [8, 32], strides = [1, 1]} : vector<8x64xf32> to vector<8x32xf32>
    %118 = arith.addf %116, %117 : vector<8x32xf32>
    %cst_45 = arith.constant dense<0.000000e+00> : vector<8x96xf32>
    %119 = tpu.matmul %118, %4, %cst_45 {dimension_numbers = #tpu.dot_dimension_numbers<[1], [0], [0], [1], [0, 0, 1, 1], [], []>} : vector<8x32xf32>, vector<32x96xf32>, vector<8x96xf32> -> vector<8x96xf32>
    %120 = vector.extract_strided_slice %103 {offsets = [0, 0], sizes = [8, 32], strides = [1, 1]} : vector<8x96xf32> to vector<8x32xf32>
    %121 = vector.extract_strided_slice %119 {offsets = [0, 0], sizes = [8, 32], strides = [1, 1]} : vector<8x96xf32> to vector<8x32xf32>
    %122 = arith.addf %120, %121 : vector<8x32xf32>
    %123 = arith.negf %122 : vector<8x32xf32>
    %124 = math.exp %123 : vector<8x32xf32>
    %cst_46 = arith.constant 1.000000e+00 : f32
    %125 = vector.broadcast %cst_46 : f32 to vector<8x32xf32>
    %126 = arith.addf %125, %124 : vector<8x32xf32>
    %127 = arith.divf %125, %126 : vector<8x32xf32>
    %128 = vector.extract_strided_slice %103 {offsets = [0, 32], sizes = [8, 32], strides = [1, 1]} : vector<8x96xf32> to vector<8x32xf32>
    %129 = vector.extract_strided_slice %119 {offsets = [0, 32], sizes = [8, 32], strides = [1, 1]} : vector<8x96xf32> to vector<8x32xf32>
    %130 = arith.addf %128, %129 : vector<8x32xf32>
    %131 = arith.negf %130 : vector<8x32xf32>
    %132 = math.exp %131 : vector<8x32xf32>
    %cst_47 = arith.constant 1.000000e+00 : f32
    %133 = vector.broadcast %cst_47 : f32 to vector<8x32xf32>
    %134 = arith.addf %133, %132 : vector<8x32xf32>
    %135 = arith.divf %133, %134 : vector<8x32xf32>
    %136 = vector.extract_strided_slice %103 {offsets = [0, 64], sizes = [8, 32], strides = [1, 1]} : vector<8x96xf32> to vector<8x32xf32>
    %137 = vector.extract_strided_slice %119 {offsets = [0, 64], sizes = [8, 32], strides = [1, 1]} : vector<8x96xf32> to vector<8x32xf32>
    %138 = arith.mulf %127, %137 : vector<8x32xf32>
    %139 = arith.addf %136, %138 : vector<8x32xf32>
    %140 = math.tanh %139 : vector<8x32xf32>
    %cst_48 = arith.constant 1.000000e+00 : f32
    %141 = vector.broadcast %cst_48 : f32 to vector<8x32xf32>
    %142 = arith.subf %141, %135 : vector<8x32xf32>
    %143 = arith.mulf %142, %140 : vector<8x32xf32>
    %144 = arith.mulf %135, %86 : vector<8x32xf32>
    %145 = arith.addf %143, %144 : vector<8x32xf32>
    %cst_49 = arith.constant dense<0.000000e+00> : vector<8x32xf32>
    %146 = tpu.matmul %145, %6, %cst_49 {dimension_numbers = #tpu.dot_dimension_numbers<[1], [0], [0], [1], [0, 0, 1, 1], [], []>} : vector<8x32xf32>, vector<32x32xf32>, vector<8x32xf32> -> vector<8x32xf32>
    %147 = arith.addf %146, %18 : vector<8x32xf32>
    %cst_50 = arith.constant 0.000000e+00 : f32
    %148 = vector.broadcast %cst_50 : f32 to vector<8x32xf32>
    %149 = arith.maximumf %147, %148 : vector<8x32xf32>
    %cst_51 = arith.constant dense<0.000000e+00> : vector<8x32xf32>
    %150 = tpu.matmul %149, %7, %cst_51 {dimension_numbers = #tpu.dot_dimension_numbers<[1], [0], [0], [1], [0, 0, 1, 1], [], []>} : vector<8x32xf32>, vector<32x32xf32>, vector<8x32xf32> -> vector<8x32xf32>
    %151 = arith.addf %150, %21 : vector<8x32xf32>
    %cst_52 = arith.constant 0.000000e+00 : f32
    %152 = vector.broadcast %cst_52 : f32 to vector<8x32xf32>
    %153 = arith.maximumf %151, %152 : vector<8x32xf32>
    %cst_53 = arith.constant dense<0.000000e+00> : vector<8x4xf32>
    %154 = tpu.matmul %153, %8, %cst_53 {dimension_numbers = #tpu.dot_dimension_numbers<[1], [0], [0], [1], [0, 0, 1, 1], [], []>} : vector<8x32xf32>, vector<32x4xf32>, vector<8x4xf32> -> vector<8x4xf32>
    %155 = arith.addf %97, %154 : vector<8x4xf32>
    %156 = arith.addf %155, %24 : vector<8x4xf32>
    %c0_54 = arith.constant 0 : index
    %c0_55 = arith.constant 0 : index
    %c4 = arith.constant 4 : index
    %157 = vector.load %arg4[%c0_54, %c0_55, %c4] : memref<1x8x32xf32, #tpu.memory_space<vmem>>, vector<1x8x4xf32>
    %158 = vector.shape_cast %157 : vector<1x8x4xf32> to vector<8x4xf32>
    %159 = vector.shape_cast %156 : vector<8x4xf32> to vector<1x8x4xf32>
    tpu.vector_store %arg4[%c0_54, %c0_55, %c4], %159 {strides = array<i32>} : memref<1x8x32xf32, #tpu.memory_space<vmem>>, vector<1x8x4xf32>,
    %cst_56 = arith.constant dense<0.000000e+00> : vector<8x96xf32>
    %160 = tpu.matmul %153, %9, %cst_56 {dimension_numbers = #tpu.dot_dimension_numbers<[1], [0], [0], [1], [0, 0, 1, 1], [], []>} : vector<8x32xf32>, vector<32x96xf32>, vector<8x96xf32> -> vector<8x96xf32>
    %161 = arith.addf %103, %160 : vector<8x96xf32>
    %162 = arith.addf %161, %27 : vector<8x96xf32>
    %cst_57 = arith.constant dense<0.000000e+00> : vector<8x128xf32>
    %163 = tpu.matmul %145, %0, %cst_57 {dimension_numbers = #tpu.dot_dimension_numbers<[1], [0], [0], [1], [0, 0, 1, 1], [], []>} : vector<8x32xf32>, vector<32x128xf32>, vector<8x128xf32> -> vector<8x128xf32>
    %164 = vector.extract_strided_slice %163 {offsets = [0, 0], sizes = [8, 64], strides = [1, 1]} : vector<8x128xf32> to vector<8x64xf32>
    %165 = vector.extract_strided_slice %163 {offsets = [0, 64], sizes = [8, 64], strides = [1, 1]} : vector<8x128xf32> to vector<8x64xf32>
    %166 = tpu.concatenate %164, %165 in 0 : vector<8x64xf32>, vector<8x64xf32> -> vector<16x64xf32>
    %cst_58 = arith.constant dense<0.000000e+00> : vector<24x64xf32>
    %167 = tpu.matmul %1, %166, %cst_58 {dimension_numbers = #tpu.dot_dimension_numbers<[1], [0], [0], [1], [0, 0, 1, 1], [], []>} : vector<24x16xf32>, vector<16x64xf32>, vector<24x64xf32> -> vector<24x64xf32>
    %168 = arith.addf %167, %12 : vector<24x64xf32>
    %169 = math.tanh %168 : vector<24x64xf32>
    %cst_59 = arith.constant dense<0.000000e+00> : vector<24x64xf32>
    %170 = tpu.matmul %169, %3, %cst_59 {dimension_numbers = #tpu.dot_dimension_numbers<[1], [0], [0], [1], [0, 0, 1, 1], [], []>} : vector<24x64xf32>, vector<64x64xf32>, vector<24x64xf32> -> vector<24x64xf32>
    %171 = arith.addf %170, %15 : vector<24x64xf32>
    %172 = math.tanh %171 : vector<24x64xf32>
    %173 = arith.mulf %172, %38 : vector<24x64xf32>
    %cst_60 = arith.constant dense<0.000000e+00> : vector<8x64xf32>
    %174 = tpu.matmul %2, %173, %cst_60 {dimension_numbers = #tpu.dot_dimension_numbers<[1], [0], [0], [1], [0, 0, 1, 1], [], []>} : vector<8x24xf32>, vector<24x64xf32>, vector<8x64xf32> -> vector<8x64xf32>
    %175 = vector.extract_strided_slice %174 {offsets = [0, 0], sizes = [8, 32], strides = [1, 1]} : vector<8x64xf32> to vector<8x32xf32>
    %176 = vector.extract_strided_slice %174 {offsets = [0, 32], sizes = [8, 32], strides = [1, 1]} : vector<8x64xf32> to vector<8x32xf32>
    %177 = arith.addf %175, %176 : vector<8x32xf32>
    %cst_61 = arith.constant dense<0.000000e+00> : vector<8x96xf32>
    %178 = tpu.matmul %177, %4, %cst_61 {dimension_numbers = #tpu.dot_dimension_numbers<[1], [0], [0], [1], [0, 0, 1, 1], [], []>} : vector<8x32xf32>, vector<32x96xf32>, vector<8x96xf32> -> vector<8x96xf32>
    %179 = vector.extract_strided_slice %162 {offsets = [0, 0], sizes = [8, 32], strides = [1, 1]} : vector<8x96xf32> to vector<8x32xf32>
    %180 = vector.extract_strided_slice %178 {offsets = [0, 0], sizes = [8, 32], strides = [1, 1]} : vector<8x96xf32> to vector<8x32xf32>
    %181 = arith.addf %179, %180 : vector<8x32xf32>
    %182 = arith.negf %181 : vector<8x32xf32>
    %183 = math.exp %182 : vector<8x32xf32>
    %cst_62 = arith.constant 1.000000e+00 : f32
    %184 = vector.broadcast %cst_62 : f32 to vector<8x32xf32>
    %185 = arith.addf %184, %183 : vector<8x32xf32>
    %186 = arith.divf %184, %185 : vector<8x32xf32>
    %187 = vector.extract_strided_slice %162 {offsets = [0, 32], sizes = [8, 32], strides = [1, 1]} : vector<8x96xf32> to vector<8x32xf32>
    %188 = vector.extract_strided_slice %178 {offsets = [0, 32], sizes = [8, 32], strides = [1, 1]} : vector<8x96xf32> to vector<8x32xf32>
    %189 = arith.addf %187, %188 : vector<8x32xf32>
    %190 = arith.negf %189 : vector<8x32xf32>
    %191 = math.exp %190 : vector<8x32xf32>
    %cst_63 = arith.constant 1.000000e+00 : f32
    %192 = vector.broadcast %cst_63 : f32 to vector<8x32xf32>
    %193 = arith.addf %192, %191 : vector<8x32xf32>
    %194 = arith.divf %192, %193 : vector<8x32xf32>
    %195 = vector.extract_strided_slice %162 {offsets = [0, 64], sizes = [8, 32], strides = [1, 1]} : vector<8x96xf32> to vector<8x32xf32>
    %196 = vector.extract_strided_slice %178 {offsets = [0, 64], sizes = [8, 32], strides = [1, 1]} : vector<8x96xf32> to vector<8x32xf32>
    %197 = arith.mulf %186, %196 : vector<8x32xf32>
    %198 = arith.addf %195, %197 : vector<8x32xf32>
    %199 = math.tanh %198 : vector<8x32xf32>
    %cst_64 = arith.constant 1.000000e+00 : f32
    %200 = vector.broadcast %cst_64 : f32 to vector<8x32xf32>
    %201 = arith.subf %200, %194 : vector<8x32xf32>
    %202 = arith.mulf %201, %199 : vector<8x32xf32>
    %203 = arith.mulf %194, %145 : vector<8x32xf32>
    %204 = arith.addf %202, %203 : vector<8x32xf32>
    %cst_65 = arith.constant dense<0.000000e+00> : vector<8x32xf32>
    %205 = tpu.matmul %204, %6, %cst_65 {dimension_numbers = #tpu.dot_dimension_numbers<[1], [0], [0], [1], [0, 0, 1, 1], [], []>} : vector<8x32xf32>, vector<32x32xf32>, vector<8x32xf32> -> vector<8x32xf32>
    %206 = arith.addf %205, %18 : vector<8x32xf32>
    %cst_66 = arith.constant 0.000000e+00 : f32
    %207 = vector.broadcast %cst_66 : f32 to vector<8x32xf32>
    %208 = arith.maximumf %206, %207 : vector<8x32xf32>
    %cst_67 = arith.constant dense<0.000000e+00> : vector<8x32xf32>
    %209 = tpu.matmul %208, %7, %cst_67 {dimension_numbers = #tpu.dot_dimension_numbers<[1], [0], [0], [1], [0, 0, 1, 1], [], []>} : vector<8x32xf32>, vector<32x32xf32>, vector<8x32xf32> -> vector<8x32xf32>
    %210 = arith.addf %209, %21 : vector<8x32xf32>
    %cst_68 = arith.constant 0.000000e+00 : f32
    %211 = vector.broadcast %cst_68 : f32 to vector<8x32xf32>
    %212 = arith.maximumf %210, %211 : vector<8x32xf32>
    %cst_69 = arith.constant dense<0.000000e+00> : vector<8x4xf32>
    %213 = tpu.matmul %212, %8, %cst_69 {dimension_numbers = #tpu.dot_dimension_numbers<[1], [0], [0], [1], [0, 0, 1, 1], [], []>} : vector<8x32xf32>, vector<32x4xf32>, vector<8x4xf32> -> vector<8x4xf32>
    %214 = arith.addf %156, %213 : vector<8x4xf32>
    %215 = arith.addf %214, %24 : vector<8x4xf32>
    %c0_70 = arith.constant 0 : index
    %c0_71 = arith.constant 0 : index
    %c8 = arith.constant 8 : index
    %216 = vector.load %arg4[%c0_70, %c0_71, %c8] : memref<1x8x32xf32, #tpu.memory_space<vmem>>, vector<1x8x4xf32>
    %217 = vector.shape_cast %216 : vector<1x8x4xf32> to vector<8x4xf32>
    %218 = vector.shape_cast %215 : vector<8x4xf32> to vector<1x8x4xf32>
    tpu.vector_store %arg4[%c0_70, %c0_71, %c8], %218 {strides = array<i32>} : memref<1x8x32xf32, #tpu.memory_space<vmem>>, vector<1x8x4xf32>,
    %cst_72 = arith.constant dense<0.000000e+00> : vector<8x96xf32>
    %219 = tpu.matmul %212, %9, %cst_72 {dimension_numbers = #tpu.dot_dimension_numbers<[1], [0], [0], [1], [0, 0, 1, 1], [], []>} : vector<8x32xf32>, vector<32x96xf32>, vector<8x96xf32> -> vector<8x96xf32>
    %220 = arith.addf %162, %219 : vector<8x96xf32>
    %221 = arith.addf %220, %27 : vector<8x96xf32>
    %cst_73 = arith.constant dense<0.000000e+00> : vector<8x128xf32>
    %222 = tpu.matmul %204, %0, %cst_73 {dimension_numbers = #tpu.dot_dimension_numbers<[1], [0], [0], [1], [0, 0, 1, 1], [], []>} : vector<8x32xf32>, vector<32x128xf32>, vector<8x128xf32> -> vector<8x128xf32>
    %223 = vector.extract_strided_slice %222 {offsets = [0, 0], sizes = [8, 64], strides = [1, 1]} : vector<8x128xf32> to vector<8x64xf32>
    %224 = vector.extract_strided_slice %222 {offsets = [0, 64], sizes = [8, 64], strides = [1, 1]} : vector<8x128xf32> to vector<8x64xf32>
    %225 = tpu.concatenate %223, %224 in 0 : vector<8x64xf32>, vector<8x64xf32> -> vector<16x64xf32>
    %cst_74 = arith.constant dense<0.000000e+00> : vector<24x64xf32>
    %226 = tpu.matmul %1, %225, %cst_74 {dimension_numbers = #tpu.dot_dimension_numbers<[1], [0], [0], [1], [0, 0, 1, 1], [], []>} : vector<24x16xf32>, vector<16x64xf32>, vector<24x64xf32> -> vector<24x64xf32>
    %227 = arith.addf %226, %12 : vector<24x64xf32>
    %228 = math.tanh %227 : vector<24x64xf32>
    %cst_75 = arith.constant dense<0.000000e+00> : vector<24x64xf32>
    %229 = tpu.matmul %228, %3, %cst_75 {dimension_numbers = #tpu.dot_dimension_numbers<[1], [0], [0], [1], [0, 0, 1, 1], [], []>} : vector<24x64xf32>, vector<64x64xf32>, vector<24x64xf32> -> vector<24x64xf32>
    %230 = arith.addf %229, %15 : vector<24x64xf32>
    %231 = math.tanh %230 : vector<24x64xf32>
    %232 = arith.mulf %231, %38 : vector<24x64xf32>
    %cst_76 = arith.constant dense<0.000000e+00> : vector<8x64xf32>
    %233 = tpu.matmul %2, %232, %cst_76 {dimension_numbers = #tpu.dot_dimension_numbers<[1], [0], [0], [1], [0, 0, 1, 1], [], []>} : vector<8x24xf32>, vector<24x64xf32>, vector<8x64xf32> -> vector<8x64xf32>
    %234 = vector.extract_strided_slice %233 {offsets = [0, 0], sizes = [8, 32], strides = [1, 1]} : vector<8x64xf32> to vector<8x32xf32>
    %235 = vector.extract_strided_slice %233 {offsets = [0, 32], sizes = [8, 32], strides = [1, 1]} : vector<8x64xf32> to vector<8x32xf32>
    %236 = arith.addf %234, %235 : vector<8x32xf32>
    %cst_77 = arith.constant dense<0.000000e+00> : vector<8x96xf32>
    %237 = tpu.matmul %236, %4, %cst_77 {dimension_numbers = #tpu.dot_dimension_numbers<[1], [0], [0], [1], [0, 0, 1, 1], [], []>} : vector<8x32xf32>, vector<32x96xf32>, vector<8x96xf32> -> vector<8x96xf32>
    %238 = vector.extract_strided_slice %221 {offsets = [0, 0], sizes = [8, 32], strides = [1, 1]} : vector<8x96xf32> to vector<8x32xf32>
    %239 = vector.extract_strided_slice %237 {offsets = [0, 0], sizes = [8, 32], strides = [1, 1]} : vector<8x96xf32> to vector<8x32xf32>
    %240 = arith.addf %238, %239 : vector<8x32xf32>
    %241 = arith.negf %240 : vector<8x32xf32>
    %242 = math.exp %241 : vector<8x32xf32>
    %cst_78 = arith.constant 1.000000e+00 : f32
    %243 = vector.broadcast %cst_78 : f32 to vector<8x32xf32>
    %244 = arith.addf %243, %242 : vector<8x32xf32>
    %245 = arith.divf %243, %244 : vector<8x32xf32>
    %246 = vector.extract_strided_slice %221 {offsets = [0, 32], sizes = [8, 32], strides = [1, 1]} : vector<8x96xf32> to vector<8x32xf32>
    %247 = vector.extract_strided_slice %237 {offsets = [0, 32], sizes = [8, 32], strides = [1, 1]} : vector<8x96xf32> to vector<8x32xf32>
    %248 = arith.addf %246, %247 : vector<8x32xf32>
    %249 = arith.negf %248 : vector<8x32xf32>
    %250 = math.exp %249 : vector<8x32xf32>
    %cst_79 = arith.constant 1.000000e+00 : f32
    %251 = vector.broadcast %cst_79 : f32 to vector<8x32xf32>
    %252 = arith.addf %251, %250 : vector<8x32xf32>
    %253 = arith.divf %251, %252 : vector<8x32xf32>
    %254 = vector.extract_strided_slice %221 {offsets = [0, 64], sizes = [8, 32], strides = [1, 1]} : vector<8x96xf32> to vector<8x32xf32>
    %255 = vector.extract_strided_slice %237 {offsets = [0, 64], sizes = [8, 32], strides = [1, 1]} : vector<8x96xf32> to vector<8x32xf32>
    %256 = arith.mulf %245, %255 : vector<8x32xf32>
    %257 = arith.addf %254, %256 : vector<8x32xf32>
    %258 = math.tanh %257 : vector<8x32xf32>
    %cst_80 = arith.constant 1.000000e+00 : f32
    %259 = vector.broadcast %cst_80 : f32 to vector<8x32xf32>
    %260 = arith.subf %259, %253 : vector<8x32xf32>
    %261 = arith.mulf %260, %258 : vector<8x32xf32>
    %262 = arith.mulf %253, %204 : vector<8x32xf32>
    %263 = arith.addf %261, %262 : vector<8x32xf32>
    %cst_81 = arith.constant dense<0.000000e+00> : vector<8x32xf32>
    %264 = tpu.matmul %263, %6, %cst_81 {dimension_numbers = #tpu.dot_dimension_numbers<[1], [0], [0], [1], [0, 0, 1, 1], [], []>} : vector<8x32xf32>, vector<32x32xf32>, vector<8x32xf32> -> vector<8x32xf32>
    %265 = arith.addf %264, %18 : vector<8x32xf32>
    %cst_82 = arith.constant 0.000000e+00 : f32
    %266 = vector.broadcast %cst_82 : f32 to vector<8x32xf32>
    %267 = arith.maximumf %265, %266 : vector<8x32xf32>
    %cst_83 = arith.constant dense<0.000000e+00> : vector<8x32xf32>
    %268 = tpu.matmul %267, %7, %cst_83 {dimension_numbers = #tpu.dot_dimension_numbers<[1], [0], [0], [1], [0, 0, 1, 1], [], []>} : vector<8x32xf32>, vector<32x32xf32>, vector<8x32xf32> -> vector<8x32xf32>
    %269 = arith.addf %268, %21 : vector<8x32xf32>
    %cst_84 = arith.constant 0.000000e+00 : f32
    %270 = vector.broadcast %cst_84 : f32 to vector<8x32xf32>
    %271 = arith.maximumf %269, %270 : vector<8x32xf32>
    %cst_85 = arith.constant dense<0.000000e+00> : vector<8x4xf32>
    %272 = tpu.matmul %271, %8, %cst_85 {dimension_numbers = #tpu.dot_dimension_numbers<[1], [0], [0], [1], [0, 0, 1, 1], [], []>} : vector<8x32xf32>, vector<32x4xf32>, vector<8x4xf32> -> vector<8x4xf32>
    %273 = arith.addf %215, %272 : vector<8x4xf32>
    %274 = arith.addf %273, %24 : vector<8x4xf32>
    %c0_86 = arith.constant 0 : index
    %c0_87 = arith.constant 0 : index
    %c12 = arith.constant 12 : index
    %275 = vector.load %arg4[%c0_86, %c0_87, %c12] : memref<1x8x32xf32, #tpu.memory_space<vmem>>, vector<1x8x4xf32>
    %276 = vector.shape_cast %275 : vector<1x8x4xf32> to vector<8x4xf32>
    %277 = vector.shape_cast %274 : vector<8x4xf32> to vector<1x8x4xf32>
    tpu.vector_store %arg4[%c0_86, %c0_87, %c12], %277 {strides = array<i32>} : memref<1x8x32xf32, #tpu.memory_space<vmem>>, vector<1x8x4xf32>,
    %cst_88 = arith.constant dense<0.000000e+00> : vector<8x96xf32>
    %278 = tpu.matmul %271, %9, %cst_88 {dimension_numbers = #tpu.dot_dimension_numbers<[1], [0], [0], [1], [0, 0, 1, 1], [], []>} : vector<8x32xf32>, vector<32x96xf32>, vector<8x96xf32> -> vector<8x96xf32>
    %279 = arith.addf %221, %278 : vector<8x96xf32>
    %280 = arith.addf %279, %27 : vector<8x96xf32>
    %cst_89 = arith.constant dense<0.000000e+00> : vector<8x128xf32>
    %281 = tpu.matmul %263, %0, %cst_89 {dimension_numbers = #tpu.dot_dimension_numbers<[1], [0], [0], [1], [0, 0, 1, 1], [], []>} : vector<8x32xf32>, vector<32x128xf32>, vector<8x128xf32> -> vector<8x128xf32>
    %282 = vector.extract_strided_slice %281 {offsets = [0, 0], sizes = [8, 64], strides = [1, 1]} : vector<8x128xf32> to vector<8x64xf32>
    %283 = vector.extract_strided_slice %281 {offsets = [0, 64], sizes = [8, 64], strides = [1, 1]} : vector<8x128xf32> to vector<8x64xf32>
    %284 = tpu.concatenate %282, %283 in 0 : vector<8x64xf32>, vector<8x64xf32> -> vector<16x64xf32>
    %cst_90 = arith.constant dense<0.000000e+00> : vector<24x64xf32>
    %285 = tpu.matmul %1, %284, %cst_90 {dimension_numbers = #tpu.dot_dimension_numbers<[1], [0], [0], [1], [0, 0, 1, 1], [], []>} : vector<24x16xf32>, vector<16x64xf32>, vector<24x64xf32> -> vector<24x64xf32>
    %286 = arith.addf %285, %12 : vector<24x64xf32>
    %287 = math.tanh %286 : vector<24x64xf32>
    %cst_91 = arith.constant dense<0.000000e+00> : vector<24x64xf32>
    %288 = tpu.matmul %287, %3, %cst_91 {dimension_numbers = #tpu.dot_dimension_numbers<[1], [0], [0], [1], [0, 0, 1, 1], [], []>} : vector<24x64xf32>, vector<64x64xf32>, vector<24x64xf32> -> vector<24x64xf32>
    %289 = arith.addf %288, %15 : vector<24x64xf32>
    %290 = math.tanh %289 : vector<24x64xf32>
    %291 = arith.mulf %290, %38 : vector<24x64xf32>
    %cst_92 = arith.constant dense<0.000000e+00> : vector<8x64xf32>
    %292 = tpu.matmul %2, %291, %cst_92 {dimension_numbers = #tpu.dot_dimension_numbers<[1], [0], [0], [1], [0, 0, 1, 1], [], []>} : vector<8x24xf32>, vector<24x64xf32>, vector<8x64xf32> -> vector<8x64xf32>
    %293 = vector.extract_strided_slice %292 {offsets = [0, 0], sizes = [8, 32], strides = [1, 1]} : vector<8x64xf32> to vector<8x32xf32>
    %294 = vector.extract_strided_slice %292 {offsets = [0, 32], sizes = [8, 32], strides = [1, 1]} : vector<8x64xf32> to vector<8x32xf32>
    %295 = arith.addf %293, %294 : vector<8x32xf32>
    %cst_93 = arith.constant dense<0.000000e+00> : vector<8x96xf32>
    %296 = tpu.matmul %295, %4, %cst_93 {dimension_numbers = #tpu.dot_dimension_numbers<[1], [0], [0], [1], [0, 0, 1, 1], [], []>} : vector<8x32xf32>, vector<32x96xf32>, vector<8x96xf32> -> vector<8x96xf32>
    %297 = vector.extract_strided_slice %280 {offsets = [0, 0], sizes = [8, 32], strides = [1, 1]} : vector<8x96xf32> to vector<8x32xf32>
    %298 = vector.extract_strided_slice %296 {offsets = [0, 0], sizes = [8, 32], strides = [1, 1]} : vector<8x96xf32> to vector<8x32xf32>
    %299 = arith.addf %297, %298 : vector<8x32xf32>
    %300 = arith.negf %299 : vector<8x32xf32>
    %301 = math.exp %300 : vector<8x32xf32>
    %cst_94 = arith.constant 1.000000e+00 : f32
    %302 = vector.broadcast %cst_94 : f32 to vector<8x32xf32>
    %303 = arith.addf %302, %301 : vector<8x32xf32>
    %304 = arith.divf %302, %303 : vector<8x32xf32>
    %305 = vector.extract_strided_slice %280 {offsets = [0, 32], sizes = [8, 32], strides = [1, 1]} : vector<8x96xf32> to vector<8x32xf32>
    %306 = vector.extract_strided_slice %296 {offsets = [0, 32], sizes = [8, 32], strides = [1, 1]} : vector<8x96xf32> to vector<8x32xf32>
    %307 = arith.addf %305, %306 : vector<8x32xf32>
    %308 = arith.negf %307 : vector<8x32xf32>
    %309 = math.exp %308 : vector<8x32xf32>
    %cst_95 = arith.constant 1.000000e+00 : f32
    %310 = vector.broadcast %cst_95 : f32 to vector<8x32xf32>
    %311 = arith.addf %310, %309 : vector<8x32xf32>
    %312 = arith.divf %310, %311 : vector<8x32xf32>
    %313 = vector.extract_strided_slice %280 {offsets = [0, 64], sizes = [8, 32], strides = [1, 1]} : vector<8x96xf32> to vector<8x32xf32>
    %314 = vector.extract_strided_slice %296 {offsets = [0, 64], sizes = [8, 32], strides = [1, 1]} : vector<8x96xf32> to vector<8x32xf32>
    %315 = arith.mulf %304, %314 : vector<8x32xf32>
    %316 = arith.addf %313, %315 : vector<8x32xf32>
    %317 = math.tanh %316 : vector<8x32xf32>
    %cst_96 = arith.constant 1.000000e+00 : f32
    %318 = vector.broadcast %cst_96 : f32 to vector<8x32xf32>
    %319 = arith.subf %318, %312 : vector<8x32xf32>
    %320 = arith.mulf %319, %317 : vector<8x32xf32>
    %321 = arith.mulf %312, %263 : vector<8x32xf32>
    %322 = arith.addf %320, %321 : vector<8x32xf32>
    %cst_97 = arith.constant dense<0.000000e+00> : vector<8x32xf32>
    %323 = tpu.matmul %322, %6, %cst_97 {dimension_numbers = #tpu.dot_dimension_numbers<[1], [0], [0], [1], [0, 0, 1, 1], [], []>} : vector<8x32xf32>, vector<32x32xf32>, vector<8x32xf32> -> vector<8x32xf32>
    %324 = arith.addf %323, %18 : vector<8x32xf32>
    %cst_98 = arith.constant 0.000000e+00 : f32
    %325 = vector.broadcast %cst_98 : f32 to vector<8x32xf32>
    %326 = arith.maximumf %324, %325 : vector<8x32xf32>
    %cst_99 = arith.constant dense<0.000000e+00> : vector<8x32xf32>
    %327 = tpu.matmul %326, %7, %cst_99 {dimension_numbers = #tpu.dot_dimension_numbers<[1], [0], [0], [1], [0, 0, 1, 1], [], []>} : vector<8x32xf32>, vector<32x32xf32>, vector<8x32xf32> -> vector<8x32xf32>
    %328 = arith.addf %327, %21 : vector<8x32xf32>
    %cst_100 = arith.constant 0.000000e+00 : f32
    %329 = vector.broadcast %cst_100 : f32 to vector<8x32xf32>
    %330 = arith.maximumf %328, %329 : vector<8x32xf32>
    %cst_101 = arith.constant dense<0.000000e+00> : vector<8x4xf32>
    %331 = tpu.matmul %330, %8, %cst_101 {dimension_numbers = #tpu.dot_dimension_numbers<[1], [0], [0], [1], [0, 0, 1, 1], [], []>} : vector<8x32xf32>, vector<32x4xf32>, vector<8x4xf32> -> vector<8x4xf32>
    %332 = arith.addf %274, %331 : vector<8x4xf32>
    %333 = arith.addf %332, %24 : vector<8x4xf32>
    %c0_102 = arith.constant 0 : index
    %c0_103 = arith.constant 0 : index
    %c16 = arith.constant 16 : index
    %334 = vector.load %arg4[%c0_102, %c0_103, %c16] : memref<1x8x32xf32, #tpu.memory_space<vmem>>, vector<1x8x4xf32>
    %335 = vector.shape_cast %334 : vector<1x8x4xf32> to vector<8x4xf32>
    %336 = vector.shape_cast %333 : vector<8x4xf32> to vector<1x8x4xf32>
    tpu.vector_store %arg4[%c0_102, %c0_103, %c16], %336 {strides = array<i32>} : memref<1x8x32xf32, #tpu.memory_space<vmem>>, vector<1x8x4xf32>,
    %cst_104 = arith.constant dense<0.000000e+00> : vector<8x96xf32>
    %337 = tpu.matmul %330, %9, %cst_104 {dimension_numbers = #tpu.dot_dimension_numbers<[1], [0], [0], [1], [0, 0, 1, 1], [], []>} : vector<8x32xf32>, vector<32x96xf32>, vector<8x96xf32> -> vector<8x96xf32>
    %338 = arith.addf %280, %337 : vector<8x96xf32>
    %339 = arith.addf %338, %27 : vector<8x96xf32>
    %cst_105 = arith.constant dense<0.000000e+00> : vector<8x128xf32>
    %340 = tpu.matmul %322, %0, %cst_105 {dimension_numbers = #tpu.dot_dimension_numbers<[1], [0], [0], [1], [0, 0, 1, 1], [], []>} : vector<8x32xf32>, vector<32x128xf32>, vector<8x128xf32> -> vector<8x128xf32>
    %341 = vector.extract_strided_slice %340 {offsets = [0, 0], sizes = [8, 64], strides = [1, 1]} : vector<8x128xf32> to vector<8x64xf32>
    %342 = vector.extract_strided_slice %340 {offsets = [0, 64], sizes = [8, 64], strides = [1, 1]} : vector<8x128xf32> to vector<8x64xf32>
    %343 = tpu.concatenate %341, %342 in 0 : vector<8x64xf32>, vector<8x64xf32> -> vector<16x64xf32>
    %cst_106 = arith.constant dense<0.000000e+00> : vector<24x64xf32>
    %344 = tpu.matmul %1, %343, %cst_106 {dimension_numbers = #tpu.dot_dimension_numbers<[1], [0], [0], [1], [0, 0, 1, 1], [], []>} : vector<24x16xf32>, vector<16x64xf32>, vector<24x64xf32> -> vector<24x64xf32>
    %345 = arith.addf %344, %12 : vector<24x64xf32>
    %346 = math.tanh %345 : vector<24x64xf32>
    %cst_107 = arith.constant dense<0.000000e+00> : vector<24x64xf32>
    %347 = tpu.matmul %346, %3, %cst_107 {dimension_numbers = #tpu.dot_dimension_numbers<[1], [0], [0], [1], [0, 0, 1, 1], [], []>} : vector<24x64xf32>, vector<64x64xf32>, vector<24x64xf32> -> vector<24x64xf32>
    %348 = arith.addf %347, %15 : vector<24x64xf32>
    %349 = math.tanh %348 : vector<24x64xf32>
    %350 = arith.mulf %349, %38 : vector<24x64xf32>
    %cst_108 = arith.constant dense<0.000000e+00> : vector<8x64xf32>
    %351 = tpu.matmul %2, %350, %cst_108 {dimension_numbers = #tpu.dot_dimension_numbers<[1], [0], [0], [1], [0, 0, 1, 1], [], []>} : vector<8x24xf32>, vector<24x64xf32>, vector<8x64xf32> -> vector<8x64xf32>
    %352 = vector.extract_strided_slice %351 {offsets = [0, 0], sizes = [8, 32], strides = [1, 1]} : vector<8x64xf32> to vector<8x32xf32>
    %353 = vector.extract_strided_slice %351 {offsets = [0, 32], sizes = [8, 32], strides = [1, 1]} : vector<8x64xf32> to vector<8x32xf32>
    %354 = arith.addf %352, %353 : vector<8x32xf32>
    %cst_109 = arith.constant dense<0.000000e+00> : vector<8x96xf32>
    %355 = tpu.matmul %354, %4, %cst_109 {dimension_numbers = #tpu.dot_dimension_numbers<[1], [0], [0], [1], [0, 0, 1, 1], [], []>} : vector<8x32xf32>, vector<32x96xf32>, vector<8x96xf32> -> vector<8x96xf32>
    %356 = vector.extract_strided_slice %339 {offsets = [0, 0], sizes = [8, 32], strides = [1, 1]} : vector<8x96xf32> to vector<8x32xf32>
    %357 = vector.extract_strided_slice %355 {offsets = [0, 0], sizes = [8, 32], strides = [1, 1]} : vector<8x96xf32> to vector<8x32xf32>
    %358 = arith.addf %356, %357 : vector<8x32xf32>
    %359 = arith.negf %358 : vector<8x32xf32>
    %360 = math.exp %359 : vector<8x32xf32>
    %cst_110 = arith.constant 1.000000e+00 : f32
    %361 = vector.broadcast %cst_110 : f32 to vector<8x32xf32>
    %362 = arith.addf %361, %360 : vector<8x32xf32>
    %363 = arith.divf %361, %362 : vector<8x32xf32>
    %364 = vector.extract_strided_slice %339 {offsets = [0, 32], sizes = [8, 32], strides = [1, 1]} : vector<8x96xf32> to vector<8x32xf32>
    %365 = vector.extract_strided_slice %355 {offsets = [0, 32], sizes = [8, 32], strides = [1, 1]} : vector<8x96xf32> to vector<8x32xf32>
    %366 = arith.addf %364, %365 : vector<8x32xf32>
    %367 = arith.negf %366 : vector<8x32xf32>
    %368 = math.exp %367 : vector<8x32xf32>
    %cst_111 = arith.constant 1.000000e+00 : f32
    %369 = vector.broadcast %cst_111 : f32 to vector<8x32xf32>
    %370 = arith.addf %369, %368 : vector<8x32xf32>
    %371 = arith.divf %369, %370 : vector<8x32xf32>
    %372 = vector.extract_strided_slice %339 {offsets = [0, 64], sizes = [8, 32], strides = [1, 1]} : vector<8x96xf32> to vector<8x32xf32>
    %373 = vector.extract_strided_slice %355 {offsets = [0, 64], sizes = [8, 32], strides = [1, 1]} : vector<8x96xf32> to vector<8x32xf32>
    %374 = arith.mulf %363, %373 : vector<8x32xf32>
    %375 = arith.addf %372, %374 : vector<8x32xf32>
    %376 = math.tanh %375 : vector<8x32xf32>
    %cst_112 = arith.constant 1.000000e+00 : f32
    %377 = vector.broadcast %cst_112 : f32 to vector<8x32xf32>
    %378 = arith.subf %377, %371 : vector<8x32xf32>
    %379 = arith.mulf %378, %376 : vector<8x32xf32>
    %380 = arith.mulf %371, %322 : vector<8x32xf32>
    %381 = arith.addf %379, %380 : vector<8x32xf32>
    %cst_113 = arith.constant dense<0.000000e+00> : vector<8x32xf32>
    %382 = tpu.matmul %381, %6, %cst_113 {dimension_numbers = #tpu.dot_dimension_numbers<[1], [0], [0], [1], [0, 0, 1, 1], [], []>} : vector<8x32xf32>, vector<32x32xf32>, vector<8x32xf32> -> vector<8x32xf32>
    %383 = arith.addf %382, %18 : vector<8x32xf32>
    %cst_114 = arith.constant 0.000000e+00 : f32
    %384 = vector.broadcast %cst_114 : f32 to vector<8x32xf32>
    %385 = arith.maximumf %383, %384 : vector<8x32xf32>
    %cst_115 = arith.constant dense<0.000000e+00> : vector<8x32xf32>
    %386 = tpu.matmul %385, %7, %cst_115 {dimension_numbers = #tpu.dot_dimension_numbers<[1], [0], [0], [1], [0, 0, 1, 1], [], []>} : vector<8x32xf32>, vector<32x32xf32>, vector<8x32xf32> -> vector<8x32xf32>
    %387 = arith.addf %386, %21 : vector<8x32xf32>
    %cst_116 = arith.constant 0.000000e+00 : f32
    %388 = vector.broadcast %cst_116 : f32 to vector<8x32xf32>
    %389 = arith.maximumf %387, %388 : vector<8x32xf32>
    %cst_117 = arith.constant dense<0.000000e+00> : vector<8x4xf32>
    %390 = tpu.matmul %389, %8, %cst_117 {dimension_numbers = #tpu.dot_dimension_numbers<[1], [0], [0], [1], [0, 0, 1, 1], [], []>} : vector<8x32xf32>, vector<32x4xf32>, vector<8x4xf32> -> vector<8x4xf32>
    %391 = arith.addf %333, %390 : vector<8x4xf32>
    %392 = arith.addf %391, %24 : vector<8x4xf32>
    %c0_118 = arith.constant 0 : index
    %c0_119 = arith.constant 0 : index
    %c20 = arith.constant 20 : index
    %393 = vector.load %arg4[%c0_118, %c0_119, %c20] : memref<1x8x32xf32, #tpu.memory_space<vmem>>, vector<1x8x4xf32>
    %394 = vector.shape_cast %393 : vector<1x8x4xf32> to vector<8x4xf32>
    %395 = vector.shape_cast %392 : vector<8x4xf32> to vector<1x8x4xf32>
    tpu.vector_store %arg4[%c0_118, %c0_119, %c20], %395 {strides = array<i32>} : memref<1x8x32xf32, #tpu.memory_space<vmem>>, vector<1x8x4xf32>,
    %cst_120 = arith.constant dense<0.000000e+00> : vector<8x96xf32>
    %396 = tpu.matmul %389, %9, %cst_120 {dimension_numbers = #tpu.dot_dimension_numbers<[1], [0], [0], [1], [0, 0, 1, 1], [], []>} : vector<8x32xf32>, vector<32x96xf32>, vector<8x96xf32> -> vector<8x96xf32>
    %397 = arith.addf %339, %396 : vector<8x96xf32>
    %398 = arith.addf %397, %27 : vector<8x96xf32>
    %cst_121 = arith.constant dense<0.000000e+00> : vector<8x128xf32>
    %399 = tpu.matmul %381, %0, %cst_121 {dimension_numbers = #tpu.dot_dimension_numbers<[1], [0], [0], [1], [0, 0, 1, 1], [], []>} : vector<8x32xf32>, vector<32x128xf32>, vector<8x128xf32> -> vector<8x128xf32>
    %400 = vector.extract_strided_slice %399 {offsets = [0, 0], sizes = [8, 64], strides = [1, 1]} : vector<8x128xf32> to vector<8x64xf32>
    %401 = vector.extract_strided_slice %399 {offsets = [0, 64], sizes = [8, 64], strides = [1, 1]} : vector<8x128xf32> to vector<8x64xf32>
    %402 = tpu.concatenate %400, %401 in 0 : vector<8x64xf32>, vector<8x64xf32> -> vector<16x64xf32>
    %cst_122 = arith.constant dense<0.000000e+00> : vector<24x64xf32>
    %403 = tpu.matmul %1, %402, %cst_122 {dimension_numbers = #tpu.dot_dimension_numbers<[1], [0], [0], [1], [0, 0, 1, 1], [], []>} : vector<24x16xf32>, vector<16x64xf32>, vector<24x64xf32> -> vector<24x64xf32>
    %404 = arith.addf %403, %12 : vector<24x64xf32>
    %405 = math.tanh %404 : vector<24x64xf32>
    %cst_123 = arith.constant dense<0.000000e+00> : vector<24x64xf32>
    %406 = tpu.matmul %405, %3, %cst_123 {dimension_numbers = #tpu.dot_dimension_numbers<[1], [0], [0], [1], [0, 0, 1, 1], [], []>} : vector<24x64xf32>, vector<64x64xf32>, vector<24x64xf32> -> vector<24x64xf32>
    %407 = arith.addf %406, %15 : vector<24x64xf32>
    %408 = math.tanh %407 : vector<24x64xf32>
    %409 = arith.mulf %408, %38 : vector<24x64xf32>
    %cst_124 = arith.constant dense<0.000000e+00> : vector<8x64xf32>
    %410 = tpu.matmul %2, %409, %cst_124 {dimension_numbers = #tpu.dot_dimension_numbers<[1], [0], [0], [1], [0, 0, 1, 1], [], []>} : vector<8x24xf32>, vector<24x64xf32>, vector<8x64xf32> -> vector<8x64xf32>
    %411 = vector.extract_strided_slice %410 {offsets = [0, 0], sizes = [8, 32], strides = [1, 1]} : vector<8x64xf32> to vector<8x32xf32>
    %412 = vector.extract_strided_slice %410 {offsets = [0, 32], sizes = [8, 32], strides = [1, 1]} : vector<8x64xf32> to vector<8x32xf32>
    %413 = arith.addf %411, %412 : vector<8x32xf32>
    %cst_125 = arith.constant dense<0.000000e+00> : vector<8x96xf32>
    %414 = tpu.matmul %413, %4, %cst_125 {dimension_numbers = #tpu.dot_dimension_numbers<[1], [0], [0], [1], [0, 0, 1, 1], [], []>} : vector<8x32xf32>, vector<32x96xf32>, vector<8x96xf32> -> vector<8x96xf32>
    %415 = vector.extract_strided_slice %398 {offsets = [0, 0], sizes = [8, 32], strides = [1, 1]} : vector<8x96xf32> to vector<8x32xf32>
    %416 = vector.extract_strided_slice %414 {offsets = [0, 0], sizes = [8, 32], strides = [1, 1]} : vector<8x96xf32> to vector<8x32xf32>
    %417 = arith.addf %415, %416 : vector<8x32xf32>
    %418 = arith.negf %417 : vector<8x32xf32>
    %419 = math.exp %418 : vector<8x32xf32>
    %cst_126 = arith.constant 1.000000e+00 : f32
    %420 = vector.broadcast %cst_126 : f32 to vector<8x32xf32>
    %421 = arith.addf %420, %419 : vector<8x32xf32>
    %422 = arith.divf %420, %421 : vector<8x32xf32>
    %423 = vector.extract_strided_slice %398 {offsets = [0, 32], sizes = [8, 32], strides = [1, 1]} : vector<8x96xf32> to vector<8x32xf32>
    %424 = vector.extract_strided_slice %414 {offsets = [0, 32], sizes = [8, 32], strides = [1, 1]} : vector<8x96xf32> to vector<8x32xf32>
    %425 = arith.addf %423, %424 : vector<8x32xf32>
    %426 = arith.negf %425 : vector<8x32xf32>
    %427 = math.exp %426 : vector<8x32xf32>
    %cst_127 = arith.constant 1.000000e+00 : f32
    %428 = vector.broadcast %cst_127 : f32 to vector<8x32xf32>
    %429 = arith.addf %428, %427 : vector<8x32xf32>
    %430 = arith.divf %428, %429 : vector<8x32xf32>
    %431 = vector.extract_strided_slice %398 {offsets = [0, 64], sizes = [8, 32], strides = [1, 1]} : vector<8x96xf32> to vector<8x32xf32>
    %432 = vector.extract_strided_slice %414 {offsets = [0, 64], sizes = [8, 32], strides = [1, 1]} : vector<8x96xf32> to vector<8x32xf32>
    %433 = arith.mulf %422, %432 : vector<8x32xf32>
    %434 = arith.addf %431, %433 : vector<8x32xf32>
    %435 = math.tanh %434 : vector<8x32xf32>
    %cst_128 = arith.constant 1.000000e+00 : f32
    %436 = vector.broadcast %cst_128 : f32 to vector<8x32xf32>
    %437 = arith.subf %436, %430 : vector<8x32xf32>
    %438 = arith.mulf %437, %435 : vector<8x32xf32>
    %439 = arith.mulf %430, %381 : vector<8x32xf32>
    %440 = arith.addf %438, %439 : vector<8x32xf32>
    %cst_129 = arith.constant dense<0.000000e+00> : vector<8x32xf32>
    %441 = tpu.matmul %440, %6, %cst_129 {dimension_numbers = #tpu.dot_dimension_numbers<[1], [0], [0], [1], [0, 0, 1, 1], [], []>} : vector<8x32xf32>, vector<32x32xf32>, vector<8x32xf32> -> vector<8x32xf32>
    %442 = arith.addf %441, %18 : vector<8x32xf32>
    %cst_130 = arith.constant 0.000000e+00 : f32
    %443 = vector.broadcast %cst_130 : f32 to vector<8x32xf32>
    %444 = arith.maximumf %442, %443 : vector<8x32xf32>
    %cst_131 = arith.constant dense<0.000000e+00> : vector<8x32xf32>
    %445 = tpu.matmul %444, %7, %cst_131 {dimension_numbers = #tpu.dot_dimension_numbers<[1], [0], [0], [1], [0, 0, 1, 1], [], []>} : vector<8x32xf32>, vector<32x32xf32>, vector<8x32xf32> -> vector<8x32xf32>
    %446 = arith.addf %445, %21 : vector<8x32xf32>
    %cst_132 = arith.constant 0.000000e+00 : f32
    %447 = vector.broadcast %cst_132 : f32 to vector<8x32xf32>
    %448 = arith.maximumf %446, %447 : vector<8x32xf32>
    %cst_133 = arith.constant dense<0.000000e+00> : vector<8x4xf32>
    %449 = tpu.matmul %448, %8, %cst_133 {dimension_numbers = #tpu.dot_dimension_numbers<[1], [0], [0], [1], [0, 0, 1, 1], [], []>} : vector<8x32xf32>, vector<32x4xf32>, vector<8x4xf32> -> vector<8x4xf32>
    %450 = arith.addf %392, %449 : vector<8x4xf32>
    %451 = arith.addf %450, %24 : vector<8x4xf32>
    %c0_134 = arith.constant 0 : index
    %c0_135 = arith.constant 0 : index
    %c24 = arith.constant 24 : index
    %452 = vector.load %arg4[%c0_134, %c0_135, %c24] : memref<1x8x32xf32, #tpu.memory_space<vmem>>, vector<1x8x4xf32>
    %453 = vector.shape_cast %452 : vector<1x8x4xf32> to vector<8x4xf32>
    %454 = vector.shape_cast %451 : vector<8x4xf32> to vector<1x8x4xf32>
    tpu.vector_store %arg4[%c0_134, %c0_135, %c24], %454 {strides = array<i32>} : memref<1x8x32xf32, #tpu.memory_space<vmem>>, vector<1x8x4xf32>,
    %cst_136 = arith.constant dense<0.000000e+00> : vector<8x96xf32>
    %455 = tpu.matmul %448, %9, %cst_136 {dimension_numbers = #tpu.dot_dimension_numbers<[1], [0], [0], [1], [0, 0, 1, 1], [], []>} : vector<8x32xf32>, vector<32x96xf32>, vector<8x96xf32> -> vector<8x96xf32>
    %456 = arith.addf %398, %455 : vector<8x96xf32>
    %457 = arith.addf %456, %27 : vector<8x96xf32>
    %cst_137 = arith.constant dense<0.000000e+00> : vector<8x128xf32>
    %458 = tpu.matmul %440, %0, %cst_137 {dimension_numbers = #tpu.dot_dimension_numbers<[1], [0], [0], [1], [0, 0, 1, 1], [], []>} : vector<8x32xf32>, vector<32x128xf32>, vector<8x128xf32> -> vector<8x128xf32>
    %459 = vector.extract_strided_slice %458 {offsets = [0, 0], sizes = [8, 64], strides = [1, 1]} : vector<8x128xf32> to vector<8x64xf32>
    %460 = vector.extract_strided_slice %458 {offsets = [0, 64], sizes = [8, 64], strides = [1, 1]} : vector<8x128xf32> to vector<8x64xf32>
    %461 = tpu.concatenate %459, %460 in 0 : vector<8x64xf32>, vector<8x64xf32> -> vector<16x64xf32>
    %cst_138 = arith.constant dense<0.000000e+00> : vector<24x64xf32>
    %462 = tpu.matmul %1, %461, %cst_138 {dimension_numbers = #tpu.dot_dimension_numbers<[1], [0], [0], [1], [0, 0, 1, 1], [], []>} : vector<24x16xf32>, vector<16x64xf32>, vector<24x64xf32> -> vector<24x64xf32>
    %463 = arith.addf %462, %12 : vector<24x64xf32>
    %464 = math.tanh %463 : vector<24x64xf32>
    %cst_139 = arith.constant dense<0.000000e+00> : vector<24x64xf32>
    %465 = tpu.matmul %464, %3, %cst_139 {dimension_numbers = #tpu.dot_dimension_numbers<[1], [0], [0], [1], [0, 0, 1, 1], [], []>} : vector<24x64xf32>, vector<64x64xf32>, vector<24x64xf32> -> vector<24x64xf32>
    %466 = arith.addf %465, %15 : vector<24x64xf32>
    %467 = math.tanh %466 : vector<24x64xf32>
    %468 = arith.mulf %467, %38 : vector<24x64xf32>
    %cst_140 = arith.constant dense<0.000000e+00> : vector<8x64xf32>
    %469 = tpu.matmul %2, %468, %cst_140 {dimension_numbers = #tpu.dot_dimension_numbers<[1], [0], [0], [1], [0, 0, 1, 1], [], []>} : vector<8x24xf32>, vector<24x64xf32>, vector<8x64xf32> -> vector<8x64xf32>
    %470 = vector.extract_strided_slice %469 {offsets = [0, 0], sizes = [8, 32], strides = [1, 1]} : vector<8x64xf32> to vector<8x32xf32>
    %471 = vector.extract_strided_slice %469 {offsets = [0, 32], sizes = [8, 32], strides = [1, 1]} : vector<8x64xf32> to vector<8x32xf32>
    %472 = arith.addf %470, %471 : vector<8x32xf32>
    %cst_141 = arith.constant dense<0.000000e+00> : vector<8x96xf32>
    %473 = tpu.matmul %472, %4, %cst_141 {dimension_numbers = #tpu.dot_dimension_numbers<[1], [0], [0], [1], [0, 0, 1, 1], [], []>} : vector<8x32xf32>, vector<32x96xf32>, vector<8x96xf32> -> vector<8x96xf32>
    %474 = vector.extract_strided_slice %457 {offsets = [0, 0], sizes = [8, 32], strides = [1, 1]} : vector<8x96xf32> to vector<8x32xf32>
    %475 = vector.extract_strided_slice %473 {offsets = [0, 0], sizes = [8, 32], strides = [1, 1]} : vector<8x96xf32> to vector<8x32xf32>
    %476 = arith.addf %474, %475 : vector<8x32xf32>
    %477 = arith.negf %476 : vector<8x32xf32>
    %478 = math.exp %477 : vector<8x32xf32>
    %cst_142 = arith.constant 1.000000e+00 : f32
    %479 = vector.broadcast %cst_142 : f32 to vector<8x32xf32>
    %480 = arith.addf %479, %478 : vector<8x32xf32>
    %481 = arith.divf %479, %480 : vector<8x32xf32>
    %482 = vector.extract_strided_slice %457 {offsets = [0, 32], sizes = [8, 32], strides = [1, 1]} : vector<8x96xf32> to vector<8x32xf32>
    %483 = vector.extract_strided_slice %473 {offsets = [0, 32], sizes = [8, 32], strides = [1, 1]} : vector<8x96xf32> to vector<8x32xf32>
    %484 = arith.addf %482, %483 : vector<8x32xf32>
    %485 = arith.negf %484 : vector<8x32xf32>
    %486 = math.exp %485 : vector<8x32xf32>
    %cst_143 = arith.constant 1.000000e+00 : f32
    %487 = vector.broadcast %cst_143 : f32 to vector<8x32xf32>
    %488 = arith.addf %487, %486 : vector<8x32xf32>
    %489 = arith.divf %487, %488 : vector<8x32xf32>
    %490 = vector.extract_strided_slice %457 {offsets = [0, 64], sizes = [8, 32], strides = [1, 1]} : vector<8x96xf32> to vector<8x32xf32>
    %491 = vector.extract_strided_slice %473 {offsets = [0, 64], sizes = [8, 32], strides = [1, 1]} : vector<8x96xf32> to vector<8x32xf32>
    %492 = arith.mulf %481, %491 : vector<8x32xf32>
    %493 = arith.addf %490, %492 : vector<8x32xf32>
    %494 = math.tanh %493 : vector<8x32xf32>
    %cst_144 = arith.constant 1.000000e+00 : f32
    %495 = vector.broadcast %cst_144 : f32 to vector<8x32xf32>
    %496 = arith.subf %495, %489 : vector<8x32xf32>
    %497 = arith.mulf %496, %494 : vector<8x32xf32>
    %498 = arith.mulf %489, %440 : vector<8x32xf32>
    %499 = arith.addf %497, %498 : vector<8x32xf32>
    %cst_145 = arith.constant dense<0.000000e+00> : vector<8x32xf32>
    %500 = tpu.matmul %499, %6, %cst_145 {dimension_numbers = #tpu.dot_dimension_numbers<[1], [0], [0], [1], [0, 0, 1, 1], [], []>} : vector<8x32xf32>, vector<32x32xf32>, vector<8x32xf32> -> vector<8x32xf32>
    %501 = arith.addf %500, %18 : vector<8x32xf32>
    %cst_146 = arith.constant 0.000000e+00 : f32
    %502 = vector.broadcast %cst_146 : f32 to vector<8x32xf32>
    %503 = arith.maximumf %501, %502 : vector<8x32xf32>
    %cst_147 = arith.constant dense<0.000000e+00> : vector<8x32xf32>
    %504 = tpu.matmul %503, %7, %cst_147 {dimension_numbers = #tpu.dot_dimension_numbers<[1], [0], [0], [1], [0, 0, 1, 1], [], []>} : vector<8x32xf32>, vector<32x32xf32>, vector<8x32xf32> -> vector<8x32xf32>
    %505 = arith.addf %504, %21 : vector<8x32xf32>
    %cst_148 = arith.constant 0.000000e+00 : f32
    %506 = vector.broadcast %cst_148 : f32 to vector<8x32xf32>
    %507 = arith.maximumf %505, %506 : vector<8x32xf32>
    %cst_149 = arith.constant dense<0.000000e+00> : vector<8x4xf32>
    %508 = tpu.matmul %507, %8, %cst_149 {dimension_numbers = #tpu.dot_dimension_numbers<[1], [0], [0], [1], [0, 0, 1, 1], [], []>} : vector<8x32xf32>, vector<32x4xf32>, vector<8x4xf32> -> vector<8x4xf32>
    %509 = arith.addf %451, %508 : vector<8x4xf32>
    %510 = arith.addf %509, %24 : vector<8x4xf32>
    %c0_150 = arith.constant 0 : index
    %c0_151 = arith.constant 0 : index
    %c28 = arith.constant 28 : index
    %511 = vector.load %arg4[%c0_150, %c0_151, %c28] : memref<1x8x32xf32, #tpu.memory_space<vmem>>, vector<1x8x4xf32>
    %512 = vector.shape_cast %511 : vector<1x8x4xf32> to vector<8x4xf32>
    %513 = vector.shape_cast %510 : vector<8x4xf32> to vector<1x8x4xf32>
    tpu.vector_store %arg4[%c0_150, %c0_151, %c28], %513 {strides = array<i32>} : memref<1x8x32xf32, #tpu.memory_space<vmem>>, vector<1x8x4xf32>,
    return
  }
  func.func @transform_0(%arg0: i32) -> (i32, i32, i32) {
    %c0_i32 = arith.constant 0 : i32
    %c0_i32_0 = arith.constant 0 : i32
    %c0_i32_1 = arith.constant 0 : i32
    return %arg0, %c0_i32, %c0_i32_0 : i32, i32, i32
  }
  func.func @transform_1(%arg0: i32) -> (i32, i32, i32) {
    %c0_i32 = arith.constant 0 : i32
    %c0_i32_0 = arith.constant 0 : i32
    %c0_i32_1 = arith.constant 0 : i32
    return %arg0, %c0_i32, %c0_i32_0 : i32, i32, i32
  }
  func.func @transform_2(%arg0: i32) -> (i32, i32) {
    %c0_i32 = arith.constant 0 : i32
    %c0_i32_0 = arith.constant 0 : i32
    %c0_i32_1 = arith.constant 0 : i32
    return %c0_i32, %c0_i32_0 : i32, i32
  }
  func.func @transform_3(%arg0: i32) -> (i32, i32, i32) {
    %c0_i32 = arith.constant 0 : i32
    %c0_i32_0 = arith.constant 0 : i32
    %c0_i32_1 = arith.constant 0 : i32
    return %arg0, %c0_i32, %c0_i32_0 : i32, i32, i32
  }
}

</mosaic_0001>

<llo_original>
// kernel: graph_rnn_decoder_forward.1
$region0: #{graph_rnn_decoder_forward.1}
  #allocation0 [shape = 'u32[]', space=smem, size = 0x4, offset = 0x4, fixed_abs, tag = 'smem constant byte address 0x4 - core index']
  #allocation1 [shape = 'u32[144,128]{1,0:T(1,128)}', space=vmem, size = 0x12000, scoped, tag = 'internal scratch']
  %s0 = inlined_call_operand.vmem [shape: f32[1,8,4], index: 0, kind: input, shape index: {}]
  %s1 = inlined_call_operand.vmem [shape: f32[1,24,2], index: 1, kind: input, shape index: {}]
  %s2 = inlined_call_operand.hbm [shape: f32[352,128], index: 2, kind: input, shape index: {}]
  %s3 = inlined_call_operand.vmem [shape: f32[1,8,32], index: 3, kind: output, shape index: {}]
  %s4 = sld [smem:[#allocation0]]
  $region26: #{graph_rnn_decoder_forward.1} parent=0
    _
  %s6 = ssub.s32 1, %s4
  %s7 = scalar_select 0, %s6, %s4
  $region1: #{graph_rnn_decoder_forward.1} parent=0
    #allocation2 [shape = 'u8[180224]{0}', space=vmem, size = 0x2c000, scoped, tag = 'input window, operand 2, single buffered']
    #allocation3 [shape = 's32[1]{0}', space=sflag, size = 0x4, scoped, tag = 'scoped memory for graph_rnn_decoder_forward.1']
    %8 = vsyncpa [#allocation3], 0
    // Predicated region
    $region2: #{graph_rnn_decoder_forward.1} parent=1 // pred_check
      _
    $region3: #{graph_rnn_decoder_forward.1} parent=1 // pred_check_branch
      %10 = sbr.rel (0) target = $region5
    $region4: #{graph_rnn_decoder_forward.1} parent=1 // pred_region
      _
    $region5: #{graph_rnn_decoder_forward.1} parent=1 // pred_fallthru
      _
    // Predicated region
    $region6: #{graph_rnn_decoder_forward.1} parent=1 // pred_check
      _
    $region7: #{graph_rnn_decoder_forward.1} parent=1 // pred_check_branch
      %12 = sbr.rel (0) target = $region9
    $region8: #{graph_rnn_decoder_forward.1} parent=1 // pred_region
      _
    $region9: #{graph_rnn_decoder_forward.1} parent=1 // pred_fallthru
      _
    // Predicated region
    $region10: #{graph_rnn_decoder_forward.1} parent=1 // pred_check
      _
    $region11: #{graph_rnn_decoder_forward.1} parent=1 // pred_check_branch
      %14 = sbr.rel (0) target = $region13
    $region12: #{graph_rnn_decoder_forward.1} parent=1 // pred_region
      %s16 = ssub.s32 5632, 5632
      %17 = vsyncadd [#allocation3], %s16
      %s18 = sshll.u32 [#allocation2], 4
      %s19 = int_to_ptr.vmem [resolvable:$true] %s18
      %24 = dma.hbm_to_vmem [thread:$0]  %s2, 5632, %s19, [#allocation3], 128, 128, 8
    $region13: #{graph_rnn_decoder_forward.1} parent=1 // pred_fallthru
      _
    // Predicated region
    $region14: #{graph_rnn_decoder_forward.1} parent=1 // pred_check
      _
    $region15: #{graph_rnn_decoder_forward.1} parent=1 // pred_check_branch
      %26 = sbr.rel (0) target = $region17
    $region16: #{graph_rnn_decoder_forward.1} parent=1 // pred_region
      %27 = dma.done [#allocation3], 5632
    $region17: #{graph_rnn_decoder_forward.1} parent=1 // pred_fallthru
      _
    %v28 = vld [vmem:[#allocation2] sm:$0xff]
    %v29 = vld [vmem:[#allocation2 + $0x8] sm:$0xff]
    %v30 = vld [vmem:[#allocation2 + $0x10] sm:$0xff]
    %v31 = vld [vmem:[#allocation2 + $0x18] sm:$0xff]
    %v32 = vld [vmem:[#allocation2 + $0x108] sm:$0xff]
    %v33 = vld [vmem:[#allocation2 + $0x110] sm:$0xff]
    %v34 = vld [vmem:[#allocation2 + $0x118] sm:$0xff]
    %v35 = vld [vmem:[#allocation2 + $0x120] sm:$0xff]
    %v36 = vld [vmem:[#allocation2 + $0x20] sm:$0xff]
    %v37 = vld [vmem:[#allocation2 + $0x28] sm:$0xff]
    %v38 = vld [vmem:[#allocation2 + $0x30] sm:$0xff]
    %v39 = vld [vmem:[#allocation2 + $0x38] sm:$0xff]
    %v40 = vld [vmem:[#allocation2 + $0x40] sm:$0xff]
    %v41 = vld [vmem:[#allocation2 + $0x48] sm:$0xff]
    %v42 = vld [vmem:[#allocation2 + $0x50] sm:$0xff]
    %v43 = vld [vmem:[#allocation2 + $0x58] sm:$0xff]
    %v44 = vld [vmem:[#allocation2 + $0x60] sm:$0xff]
    %v45 = vld [vmem:[#allocation2 + $0x68] sm:$0xff]
    %v46 = vld [vmem:[#allocation2 + $0x70] sm:$0xff]
    %v47 = vld [vmem:[#allocation2 + $0x78] sm:$0xff]
    %v48 = vld [vmem:[#allocation2 + $0xa0] sm:$0xf]
    %v49 = vld [vmem:[#allocation2 + $0xa8] sm:$0xff]
    %v50 = vld [vmem:[#allocation2 + $0xb0] sm:$0xff]
    %v51 = vld [vmem:[#allocation2 + $0xb8] sm:$0xff]
    %v52 = vld [vmem:[#allocation2 + $0xc0] sm:$0xff]
    %v53 = vld [vmem:[#allocation2 + $0xc8] sm:$0xff]
    %v54 = vld [vmem:[#allocation2 + $0xd0] sm:$0xff]
    %v55 = vld [vmem:[#allocation2 + $0xd8] sm:$0xff]
    %v56 = vld [vmem:[#allocation2 + $0xe0] sm:$0xff]
    %v57 = vld [vmem:[#allocation2 + $0xe8] sm:$0xff]
    %v58 = vld [vmem:[#allocation2 + $0xf0] sm:$0xff]
    %v59 = vld [vmem:[#allocation2 + $0xf8] sm:$0xff]
    %v60 = vld [vmem:[#allocation2 + $0x100] sm:$0xff]
    %v61 = vld [vmem:[#allocation2 + $0x80] sm:$0xff]
    %v62 = vld [vmem:[#allocation2 + $0x88] sm:$0xff]
    %v63 = vld [vmem:[#allocation2 + $0x90] sm:$0xff]
    %v64 = vld [vmem:[#allocation2 + $0x98] sm:$0xff]
    %v65 = vld [vmem:[#allocation2 + $0x128] sm:$0x1]
    %v66 = vlaneseq
    %v67 = vshrl.u32 %v66, 7
    %v68 = vsub.s32 0, %v67
    %v69 = vrot.slane %v65, %v68
    %v70 = vld [vmem:[#allocation2 + $0x130] sm:$0x1]
    %v71 = vlaneseq
    %v72 = vshrl.u32 %v71, 7
    %v73 = vsub.s32 0, %v72
    %v74 = vrot.slane %v70, %v73
    %v75 = vld [vmem:[#allocation2 + $0x148] sm:$0x1]
    %v76 = vlaneseq
    %v77 = vshrl.u32 %v76, 7
    %v78 = vsub.s32 0, %v77
    %v79 = vrot.slane %v75, %v78
    %v80 = vld [vmem:[#allocation2 + $0x150] sm:$0x1]
    %v81 = vlaneseq
    %v82 = vshrl.u32 %v81, 7
    %v83 = vsub.s32 0, %v82
    %v84 = vrot.slane %v80, %v83
    %v85 = vld [vmem:[#allocation2 + $0x158] sm:$0x1]
    %v86 = vlaneseq
    %v87 = vshrl.u32 %v86, 7
    %v88 = vsub.s32 0, %v87
    %v89 = vrot.slane %v85, %v88
    %v90 = vld [vmem:[#allocation2 + $0x140] sm:$0x1]
    %v91 = vlaneseq
    %v92 = vshrl.u32 %v91, 7
    %v93 = vsub.s32 0, %v92
    %v94 = vrot.slane %v90, %v93
    %v95 = vld [vmem:[%s0] sm:$0xff]
    %v96 = vld [vmem:[%s1] sm:$0xff]
    %v97 = vld [vmem:[%s1 + $0x8] sm:$0xff]
    %v98 = vld [vmem:[%s1 + $0x10] sm:$0xff]
    %100 = vset.pattern.permute.xlu0 0
    %101 = vperm.xlu0 %100, %v96
    %v102 = vpop.permute.xlu0 %101
    %105 = vset.pattern.permute.xlu0 0
    %106 = vperm.xlu0 %105, %v97
    %v107 = vpop.permute.xlu0 %106
    %110 = vset.pattern.permute.xlu0 0
    %111 = vperm.xlu0 %110, %v98
    %v112 = vpop.permute.xlu0 %111
    %114 = vset.pattern.permute.xlu0 1
    %115 = vperm.xlu0 %114, %v96
    %v116 = vpop.permute.xlu0 %115
    %118 = vset.pattern.permute.xlu0 1
    %119 = vperm.xlu0 %118, %v97
    %v120 = vpop.permute.xlu0 %119
    %122 = vset.pattern.permute.xlu0 1
    %123 = vperm.xlu0 %122, %v98
    %v124 = vpop.permute.xlu0 %123
    %vm126 = vcmask 261120
    %v127 = vsel %vm126, %v102, %v116
    %v128 = vsel %vm126, %v107, %v120
    %v129 = vsel %vm126, %v112, %v124
    %v130 = vld [vmem:[#allocation2 + $0x138] sm:$0x1]
    %v131 = vlaneseq
    %v132 = vshrl.u32 %v131, 7
    %v133 = vsub.s32 0, %v132
    %v134 = vrot.slane %v130, %v133
    %vm135 = vcmask 31744
    %v137 = vsel %vm135, %v95, 0
    %vm139 = vcmask 1043456
    %v141 = vsel %vm139, %v48, 0
    %143 = vmatprep.subr.mxu0 0.0
    %144 = vmatpush1.msra.mxu0 %v141
    %145 = vmatprep.subr.mxu0 0.0
    %146 = vmatpush1.msra.mxu0 0.0
    %147 = vmatprep.subr.mxu0 0.0
    %148 = vmatpush1.msra.mxu0 0.0
    %149 = vmatprep.subr.mxu0 0.0
    %150 = vmatpush1.msra.mxu0 0.0
    %151 = vmatprep.subr.mxu0 0.0
    %152 = vmatpush1.msra.mxu0 0.0
    %153 = vmatprep.subr.mxu0 0.0
    %154 = vmatpush1.msra.mxu0 0.0
    %155 = vmatprep.subr.mxu0 0.0
    %156 = vmatpush1.msra.mxu0 0.0
    %157 = vmatprep.subr.mxu0 0.0
    %158 = vmatpush1.msra.mxu0 0.0
    %159 = vmatprep.subr.mxu0 0.0
    %160 = vmatpush1.msra.mxu0 0.0
    %161 = vmatprep.subr.mxu0 0.0
    %162 = vmatpush1.msra.mxu0 0.0
    %163 = vmatprep.subr.mxu0 0.0
    %164 = vmatpush1.msra.mxu0 0.0
    %165 = vmatprep.subr.mxu0 0.0
    %166 = vmatpush1.msra.mxu0 0.0
    %167 = vmatprep.subr.mxu0 0.0
    %168 = vmatpush1.msra.mxu0 0.0
    %169 = vmatprep.subr.mxu0 0.0
    %170 = vmatpush1.msra.mxu0 0.0
    %171 = vmatprep.subr.mxu0 0.0
    %172 = vmatpush1.msra.mxu0 0.0
    %173 = vmatprep.subr.mxu0 0.0
    %174 = vmatpush1.msra.mxu0 0.0
    %175 = vmatprep.subr.mxu0 0.0
    %176 = vmatpush1.msra.mxu0 0.0
    %177 = vmatprep.subr.mxu0 0.0
    %178 = vmatpush1.msra.mxu0 0.0
    %179 = vmatprep.subr.mxu0 0.0
    %180 = vmatpush1.msra.mxu0 0.0
    %181 = vmatprep.subr.mxu0 0.0
    %182 = vmatpush1.msra.mxu0 0.0
    %183 = vmatprep.subr.mxu0 0.0
    %184 = vmatpush1.msra.mxu0 0.0
    %185 = vmatprep.subr.mxu0 0.0
    %186 = vmatpush1.msra.mxu0 0.0
    %187 = vmatprep.subr.mxu0 0.0
    %188 = vmatpush1.msra.mxu0 0.0
    %189 = vmatprep.subr.mxu0 0.0
    %190 = vmatpush1.msra.mxu0 0.0
    %191 = vmatprep.subr.mxu0 0.0
    %192 = vmatpush1.msra.mxu0 0.0
    %193 = vmatprep.subr.mxu0 0.0
    %194 = vmatpush1.msra.mxu0 0.0
    %195 = vmatprep.subr.mxu0 0.0
    %196 = vmatpush1.msra.mxu0 0.0
    %197 = vmatprep.subr.mxu0 0.0
    %198 = vmatpush1.msra.mxu0 0.0
    %199 = vmatprep.subr.mxu0 0.0
    %200 = vmatpush1.msra.mxu0 0.0
    %201 = vmatprep.subr.mxu0 0.0
    %202 = vmatpush1.msra.mxu0 0.0
    %203 = vmatprep.subr.mxu0 0.0
    %204 = vmatpush1.msra.mxu0 0.0
    %205 = vmatprep.subr.mxu0 0.0
    %206 = vmatpush1.msra.mxu0 0.0
    %207 = vmatprep.mubr.f32.mxu0 0.0
    %208 = vmatmul.mubr.f32.gmra.mrb[0].mxu0 %v137
    %v209 = vpop.f32.mrb[0].mxu0
    %v210 = vadd.f32 %v134, %v209
    %v211 = vpop.f32.mrb[0].mxu0
    %212 = vdwg.mxu0
    %v214 = vsel %vm126, 0.0, 0
    %216 = vmatprep.subr.mxu0 0.0
    %217 = vmatpush1.msra.mxu0 %v28
    %218 = vmatprep.subr.mxu0 0.0
    %219 = vmatpush1.msra.mxu0 %v29
    %220 = vmatprep.subr.mxu0 0.0
    %221 = vmatpush1.msra.mxu0 %v30
    %222 = vmatprep.subr.mxu0 0.0
    %223 = vmatpush1.msra.mxu0 %v31
    %224 = vmatprep.subr.mxu0 0.0
    %225 = vmatpush1.msra.mxu0 0.0
    %226 = vmatprep.subr.mxu0 0.0
    %227 = vmatpush1.msra.mxu0 0.0
    %228 = vmatprep.subr.mxu0 0.0
    %229 = vmatpush1.msra.mxu0 0.0
    %230 = vmatprep.subr.mxu0 0.0
    %231 = vmatpush1.msra.mxu0 0.0
    %232 = vmatprep.subr.mxu0 0.0
    %233 = vmatpush1.msra.mxu0 0.0
    %234 = vmatprep.subr.mxu0 0.0
    %235 = vmatpush1.msra.mxu0 0.0
    %236 = vmatprep.subr.mxu0 0.0
    %237 = vmatpush1.msra.mxu0 0.0
    %238 = vmatprep.subr.mxu0 0.0
    %239 = vmatpush1.msra.mxu0 0.0
    %240 = vmatprep.subr.mxu0 0.0
    %241 = vmatpush1.msra.mxu0 0.0
    %242 = vmatprep.subr.mxu0 0.0
    %243 = vmatpush1.msra.mxu0 0.0
    %244 = vmatprep.subr.mxu0 0.0
    %245 = vmatpush1.msra.mxu0 0.0
    %246 = vmatprep.subr.mxu0 0.0
    %247 = vmatpush1.msra.mxu0 0.0
    %248 = vmatprep.subr.mxu0 0.0
    %249 = vmatpush1.msra.mxu0 0.0
    %250 = vmatprep.subr.mxu0 0.0
    %251 = vmatpush1.msra.mxu0 0.0
    %252 = vmatprep.subr.mxu0 0.0
    %253 = vmatpush1.msra.mxu0 0.0
    %254 = vmatprep.subr.mxu0 0.0
    %255 = vmatpush1.msra.mxu0 0.0
    %256 = vmatprep.subr.mxu0 0.0
    %257 = vmatpush1.msra.mxu0 0.0
    %258 = vmatprep.subr.mxu0 0.0
    %259 = vmatpush1.msra.mxu0 0.0
    %260 = vmatprep.subr.mxu0 0.0
    %261 = vmatpush1.msra.mxu0 0.0
    %262 = vmatprep.subr.mxu0 0.0
    %263 = vmatpush1.msra.mxu0 0.0
    %264 = vmatprep.subr.mxu0 0.0
    %265 = vmatpush1.msra.mxu0 0.0
    %266 = vmatprep.subr.mxu0 0.0
    %267 = vmatpush1.msra.mxu0 0.0
    %268 = vmatprep.subr.mxu0 0.0
    %269 = vmatpush1.msra.mxu0 0.0
    %270 = vmatprep.subr.mxu0 0.0
    %271 = vmatpush1.msra.mxu0 0.0
    %272 = vmatprep.subr.mxu0 0.0
    %273 = vmatpush1.msra.mxu0 0.0
    %274 = vmatprep.subr.mxu0 0.0
    %275 = vmatpush1.msra.mxu0 0.0
    %276 = vmatprep.subr.mxu0 0.0
    %277 = vmatpush1.msra.mxu0 0.0
    %278 = vmatprep.subr.mxu0 0.0
    %279 = vmatpush1.msra.mxu0 0.0
    %280 = vmatprep.mubr.f32.mxu0 0.0
    %281 = vmatmul.mubr.f32.gmra.mrb[0].mxu0 %v214
    %v282 = vpop.f32.mrb[0].mxu0
    %v283 = vadd.f32 0.0, %v282
    %v284 = vpop.f32.mrb[0].mxu0
    %285 = vdwg.mxu0
    %287 = vrot.lane.b32.xlu0 %v283, 64
    %v288 = vpop.permute.xlu0 %287
    %vm290 = vcmask 130048
    %v292 = vsel %vm290, %v32, 0
    %v295 = vsel %vm290, %v33, 0
    %v298 = vsel %vm290, %v34, 0
    %300 = vmatprep.subr.mxu0 0.0
    %301 = vmatpush1.msra.mxu0 %v283
    %302 = vmatprep.subr.mxu0 0.0
    %303 = vmatpush1.msra.mxu0 %v288
    %304 = vmatprep.subr.mxu0 0.0
    %305 = vmatpush1.msra.mxu0 0.0
    %306 = vmatprep.subr.mxu0 0.0
    %307 = vmatpush1.msra.mxu0 0.0
    %308 = vmatprep.subr.mxu0 0.0
    %309 = vmatpush1.msra.mxu0 0.0
    %310 = vmatprep.subr.mxu0 0.0
    %311 = vmatpush1.msra.mxu0 0.0
    %312 = vmatprep.subr.mxu0 0.0
    %313 = vmatpush1.msra.mxu0 0.0
    %314 = vmatprep.subr.mxu0 0.0
    %315 = vmatpush1.msra.mxu0 0.0
    %316 = vmatprep.subr.mxu0 0.0
    %317 = vmatpush1.msra.mxu0 0.0
    %318 = vmatprep.subr.mxu0 0.0
    %319 = vmatpush1.msra.mxu0 0.0
    %320 = vmatprep.subr.mxu0 0.0
    %321 = vmatpush1.msra.mxu0 0.0
    %322 = vmatprep.subr.mxu0 0.0
    %323 = vmatpush1.msra.mxu0 0.0
    %324 = vmatprep.subr.mxu0 0.0
    %325 = vmatpush1.msra.mxu0 0.0
    %326 = vmatprep.subr.mxu0 0.0
    %327 = vmatpush1.msra.mxu0 0.0
    %328 = vmatprep.subr.mxu0 0.0
    %329 = vmatpush1.msra.mxu0 0.0
    %330 = vmatprep.subr.mxu0 0.0
    %331 = vmatpush1.msra.mxu0 0.0
    %332 = vmatprep.subr.mxu0 0.0
    %333 = vmatpush1.msra.mxu0 0.0
    %334 = vmatprep.subr.mxu0 0.0
    %335 = vmatpush1.msra.mxu0 0.0
    %336 = vmatprep.subr.mxu0 0.0
    %337 = vmatpush1.msra.mxu0 0.0
    %338 = vmatprep.subr.mxu0 0.0
    %339 = vmatpush1.msra.mxu0 0.0
    %340 = vmatprep.subr.mxu0 0.0
    %341 = vmatpush1.msra.mxu0 0.0
    %342 = vmatprep.subr.mxu0 0.0
    %343 = vmatpush1.msra.mxu0 0.0
    %344 = vmatprep.subr.mxu0 0.0
    %345 = vmatpush1.msra.mxu0 0.0
    %346 = vmatprep.subr.mxu0 0.0
    %347 = vmatpush1.msra.mxu0 0.0
    %348 = vmatprep.subr.mxu0 0.0
    %349 = vmatpush1.msra.mxu0 0.0
    %350 = vmatprep.subr.mxu0 0.0
    %351 = vmatpush1.msra.mxu0 0.0
    %352 = vmatprep.subr.mxu0 0.0
    %353 = vmatpush1.msra.mxu0 0.0
    %354 = vmatprep.subr.mxu0 0.0
    %355 = vmatpush1.msra.mxu0 0.0
    %356 = vmatprep.subr.mxu0 0.0
    %357 = vmatpush1.msra.mxu0 0.0
    %358 = vmatprep.subr.mxu0 0.0
    %359 = vmatpush1.msra.mxu0 0.0
    %360 = vmatprep.subr.mxu0 0.0
    %361 = vmatpush1.msra.mxu0 0.0
    %362 = vmatprep.subr.mxu0 0.0
    %363 = vmatpush1.msra.mxu0 0.0
    %364 = vmatprep.mubr.f32.mxu0 0.0
    %365 = vmatmul.mubr.f32.gmra.mrb[0].mxu0 %v292
    %v366 = vpop.f32.mrb[0].mxu0
    %v367 = vadd.f32 %v69, %v366
    %v368 = vpop.f32.mrb[0].mxu0
    %369 = vmatprep.mubr.f32.mxu0 0.0
    %370 = vmatmul.mubr.f32.gmra.mrb[0].mxu0 %v295
    %v371 = vpop.f32.mrb[0].mxu0
    %v372 = vadd.f32 %v69, %v371
    %v373 = vpop.f32.mrb[0].mxu0
    %374 = vmatprep.mubr.f32.mxu0 0.0
    %375 = vmatmul.mubr.f32.gmra.mrb[0].mxu0 %v298
    %v376 = vpop.f32.mrb[0].mxu0
    %v377 = vadd.f32 %v69, %v376
    %v378 = vpop.f32.mrb[0].mxu0
    %379 = vdwg.mxu0
    %v380 = vtanh.pop %v367
    %v381 = vtanh.pop %v372
    %v382 = vtanh.pop %v377
    %vm383 = vcmask 523264
    %v385 = vsel %vm383, %v380, 0
    %v388 = vsel %vm383, %v381, 0
    %v391 = vsel %vm383, %v382, 0
    %393 = vmatprep.subr.mxu0 0.0
    %394 = vmatpush1.msra.mxu0 %v36
    %395 = vmatprep.subr.mxu0 0.0
    %396 = vmatpush1.msra.mxu0 %v37
    %397 = vmatprep.subr.mxu0 0.0
    %398 = vmatpush1.msra.mxu0 %v38
    %399 = vmatprep.subr.mxu0 0.0
    %400 = vmatpush1.msra.mxu0 %v39
    %401 = vmatprep.subr.mxu0 0.0
    %402 = vmatpush1.msra.mxu0 %v40
    %403 = vmatprep.subr.mxu0 0.0
    %404 = vmatpush1.msra.mxu0 %v41
    %405 = vmatprep.subr.mxu0 0.0
    %406 = vmatpush1.msra.mxu0 %v42
    %407 = vmatprep.subr.mxu0 0.0
    %408 = vmatpush1.msra.mxu0 %v43
    %409 = vmatprep.subr.mxu0 0.0
    %410 = vmatpush1.msra.mxu0 0.0
    %411 = vmatprep.subr.mxu0 0.0
    %412 = vmatpush1.msra.mxu0 0.0
    %413 = vmatprep.subr.mxu0 0.0
    %414 = vmatpush1.msra.mxu0 0.0
    %415 = vmatprep.subr.mxu0 0.0
    %416 = vmatpush1.msra.mxu0 0.0
    %417 = vmatprep.subr.mxu0 0.0
    %418 = vmatpush1.msra.mxu0 0.0
    %419 = vmatprep.subr.mxu0 0.0
    %420 = vmatpush1.msra.mxu0 0.0
    %421 = vmatprep.subr.mxu0 0.0
    %422 = vmatpush1.msra.mxu0 0.0
    %423 = vmatprep.subr.mxu0 0.0
    %424 = vmatpush1.msra.mxu0 0.0
    %425 = vmatprep.subr.mxu0 0.0
    %426 = vmatpush1.msra.mxu0 0.0
    %427 = vmatprep.subr.mxu0 0.0
    %428 = vmatpush1.msra.mxu0 0.0
    %429 = vmatprep.subr.mxu0 0.0
    %430 = vmatpush1.msra.mxu0 0.0
    %431 = vmatprep.subr.mxu0 0.0
    %432 = vmatpush1.msra.mxu0 0.0
    %433 = vmatprep.subr.mxu0 0.0
    %434 = vmatpush1.msra.mxu0 0.0
    %435 = vmatprep.subr.mxu0 0.0
    %436 = vmatpush1.msra.mxu0 0.0
    %437 = vmatprep.subr.mxu0 0.0
    %438 = vmatpush1.msra.mxu0 0.0
    %439 = vmatprep.subr.mxu0 0.0
    %440 = vmatpush1.msra.mxu0 0.0
    %441 = vmatprep.subr.mxu0 0.0
    %442 = vmatpush1.msra.mxu0 0.0
    %443 = vmatprep.subr.mxu0 0.0
    %444 = vmatpush1.msra.mxu0 0.0
    %445 = vmatprep.subr.mxu0 0.0
    %446 = vmatpush1.msra.mxu0 0.0
    %447 = vmatprep.subr.mxu0 0.0
    %448 = vmatpush1.msra.mxu0 0.0
    %449 = vmatprep.subr.mxu0 0.0
    %450 = vmatpush1.msra.mxu0 0.0
    %451 = vmatprep.subr.mxu0 0.0
    %452 = vmatpush1.msra.mxu0 0.0
    %453 = vmatprep.subr.mxu0 0.0
    %454 = vmatpush1.msra.mxu0 0.0
    %455 = vmatprep.subr.mxu0 0.0
    %456 = vmatpush1.msra.mxu0 0.0
    %457 = vmatprep.mubr.f32.mxu0 0.0
    %458 = vmatmul.mubr.f32.gmra.mrb[0].mxu0 %v385
    %v459 = vpop.f32.mrb[0].mxu0
    %v460 = vadd.f32 %v74, %v459
    %v461 = vpop.f32.mrb[0].mxu0
    %462 = vmatprep.mubr.f32.mxu0 0.0
    %463 = vmatmul.mubr.f32.gmra.mrb[0].mxu0 %v388
    %v464 = vpop.f32.mrb[0].mxu0
    %v465 = vadd.f32 %v74, %v464
    %v466 = vpop.f32.mrb[0].mxu0
    %467 = vmatprep.mubr.f32.mxu0 0.0
    %468 = vmatmul.mubr.f32.gmra.mrb[0].mxu0 %v391
    %v469 = vpop.f32.mrb[0].mxu0
    %v470 = vadd.f32 %v74, %v469
    %v471 = vpop.f32.mrb[0].mxu0
    %472 = vdwg.mxu0
    %v473 = vtanh.pop %v460
    %v474 = vtanh.pop %v465
    %v475 = vtanh.pop %v470
    %v476 = vmul.f32 %v473, %v127
    %v477 = vmul.f32 %v474, %v128
    %v478 = vmul.f32 %v475, %v129
    %vm479 = vcmask 195584
    %v481 = vsel %vm479, %v35, 0
    %483 = vmatprep.subr.mxu0 0.0
    %484 = vmatpush1.msra.mxu0 %v476
    %485 = vmatprep.subr.mxu0 0.0
    %486 = vmatpush1.msra.mxu0 %v477
    %487 = vmatprep.subr.mxu0 0.0
    %488 = vmatpush1.msra.mxu0 %v478
    %489 = vmatprep.subr.mxu0 0.0
    %490 = vmatpush1.msra.mxu0 0.0
    %491 = vmatprep.subr.mxu0 0.0
    %492 = vmatpush1.msra.mxu0 0.0
    %493 = vmatprep.subr.mxu0 0.0
    %494 = vmatpush1.msra.mxu0 0.0
    %495 = vmatprep.subr.mxu0 0.0
    %496 = vmatpush1.msra.mxu0 0.0
    %497 = vmatprep.subr.mxu0 0.0
    %498 = vmatpush1.msra.mxu0 0.0
    %499 = vmatprep.subr.mxu0 0.0
    %500 = vmatpush1.msra.mxu0 0.0
    %501 = vmatprep.subr.mxu0 0.0
    %502 = vmatpush1.msra.mxu0 0.0
    %503 = vmatprep.subr.mxu0 0.0
    %504 = vmatpush1.msra.mxu0 0.0
    %505 = vmatprep.subr.mxu0 0.0
    %506 = vmatpush1.msra.mxu0 0.0
    %507 = vmatprep.subr.mxu0 0.0
    %508 = vmatpush1.msra.mxu0 0.0
    %509 = vmatprep.subr.mxu0 0.0
    %510 = vmatpush1.msra.mxu0 0.0
    %511 = vmatprep.subr.mxu0 0.0
    %512 = vmatpush1.msra.mxu0 0.0
    %513 = vmatprep.subr.mxu0 0.0
    %514 = vmatpush1.msra.mxu0 0.0
    %515 = vmatprep.subr.mxu0 0.0
    %516 = vmatpush1.msra.mxu0 0.0
    %517 = vmatprep.subr.mxu0 0.0
    %518 = vmatpush1.msra.mxu0 0.0
    %519 = vmatprep.subr.mxu0 0.0
    %520 = vmatpush1.msra.mxu0 0.0
    %521 = vmatprep.subr.mxu0 0.0
    %522 = vmatpush1.msra.mxu0 0.0
    %523 = vmatprep.subr.mxu0 0.0
    %524 = vmatpush1.msra.mxu0 0.0
    %525 = vmatprep.subr.mxu0 0.0
    %526 = vmatpush1.msra.mxu0 0.0
    %527 = vmatprep.subr.mxu0 0.0
    %528 = vmatpush1.msra.mxu0 0.0
    %529 = vmatprep.subr.mxu0 0.0
    %530 = vmatpush1.msra.mxu0 0.0
    %531 = vmatprep.subr.mxu0 0.0
    %532 = vmatpush1.msra.mxu0 0.0
    %533 = vmatprep.subr.mxu0 0.0
    %534 = vmatpush1.msra.mxu0 0.0
    %535 = vmatprep.subr.mxu0 0.0
    %536 = vmatpush1.msra.mxu0 0.0
    %537 = vmatprep.subr.mxu0 0.0
    %538 = vmatpush1.msra.mxu0 0.0
    %539 = vmatprep.subr.mxu0 0.0
    %540 = vmatpush1.msra.mxu0 0.0
    %541 = vmatprep.subr.mxu0 0.0
    %542 = vmatpush1.msra.mxu0 0.0
    %543 = vmatprep.subr.mxu0 0.0
    %544 = vmatpush1.msra.mxu0 0.0
    %545 = vmatprep.subr.mxu0 0.0
    %546 = vmatpush1.msra.mxu0 0.0
    %547 = vmatprep.mubr.f32.mxu0 0.0
    %548 = vmatmul.mubr.f32.gmra.mrb[0].mxu0 %v481
    %v549 = vpop.f32.mrb[0].mxu0
    %v550 = vadd.f32 0.0, %v549
    %v551 = vpop.f32.mrb[0].mxu0
    %552 = vdwg.mxu0
    %554 = vrot.lane.b32.xlu0 %v550, 96
    %v555 = vpop.permute.xlu0 %554
    %v557 = vadd.f32 %v550, %v555
    %v559 = vsel %vm126, %v557, 0
    %561 = vmatprep.subr.mxu0 0.0
    %562 = vmatpush1.msra.mxu0 %v44
    %563 = vmatprep.subr.mxu0 0.0
    %564 = vmatpush1.msra.mxu0 %v45
    %565 = vmatprep.subr.mxu0 0.0
    %566 = vmatpush1.msra.mxu0 %v46
    %567 = vmatprep.subr.mxu0 0.0
    %568 = vmatpush1.msra.mxu0 %v47
    %569 = vmatprep.subr.mxu0 0.0
    %570 = vmatpush1.msra.mxu0 0.0
    %571 = vmatprep.subr.mxu0 0.0
    %572 = vmatpush1.msra.mxu0 0.0
    %573 = vmatprep.subr.mxu0 0.0
    %574 = vmatpush1.msra.mxu0 0.0
    %575 = vmatprep.subr.mxu0 0.0
    %576 = vmatpush1.msra.mxu0 0.0
    %577 = vmatprep.subr.mxu0 0.0
    %578 = vmatpush1.msra.mxu0 0.0
    %579 = vmatprep.subr.mxu0 0.0
    %580 = vmatpush1.msra.mxu0 0.0
    %581 = vmatprep.subr.mxu0 0.0
    %582 = vmatpush1.msra.mxu0 0.0
    %583 = vmatprep.subr.mxu0 0.0
    %584 = vmatpush1.msra.mxu0 0.0
    %585 = vmatprep.subr.mxu0 0.0
    %586 = vmatpush1.msra.mxu0 0.0
    %587 = vmatprep.subr.mxu0 0.0
    %588 = vmatpush1.msra.mxu0 0.0
    %589 = vmatprep.subr.mxu0 0.0
    %590 = vmatpush1.msra.mxu0 0.0
    %591 = vmatprep.subr.mxu0 0.0
    %592 = vmatpush1.msra.mxu0 0.0
    %593 = vmatprep.subr.mxu0 0.0
    %594 = vmatpush1.msra.mxu0 0.0
    %595 = vmatprep.subr.mxu0 0.0
    %596 = vmatpush1.msra.mxu0 0.0
    %597 = vmatprep.subr.mxu0 0.0
    %598 = vmatpush1.msra.mxu0 0.0
    %599 = vmatprep.subr.mxu0 0.0
    %600 = vmatpush1.msra.mxu0 0.0
    %601 = vmatprep.subr.mxu0 0.0
    %602 = vmatpush1.msra.mxu0 0.0
    %603 = vmatprep.subr.mxu0 0.0
    %604 = vmatpush1.msra.mxu0 0.0
    %605 = vmatprep.subr.mxu0 0.0
    %606 = vmatpush1.msra.mxu0 0.0
    %607 = vmatprep.subr.mxu0 0.0
    %608 = vmatpush1.msra.mxu0 0.0
    %609 = vmatprep.subr.mxu0 0.0
    %610 = vmatpush1.msra.mxu0 0.0
    %611 = vmatprep.subr.mxu0 0.0
    %612 = vmatpush1.msra.mxu0 0.0
    %613 = vmatprep.subr.mxu0 0.0
    %614 = vmatpush1.msra.mxu0 0.0
    %615 = vmatprep.subr.mxu0 0.0
    %616 = vmatpush1.msra.mxu0 0.0
    %617 = vmatprep.subr.mxu0 0.0
    %618 = vmatpush1.msra.mxu0 0.0
    %619 = vmatprep.subr.mxu0 0.0
    %620 = vmatpush1.msra.mxu0 0.0
    %621 = vmatprep.subr.mxu0 0.0
    %622 = vmatpush1.msra.mxu0 0.0
    %623 = vmatprep.subr.mxu0 0.0
    %624 = vmatpush1.msra.mxu0 0.0
    %625 = vmatprep.mubr.f32.mxu0 0.0
    %626 = vmatmul.mubr.f32.gmra.mrb[0].mxu0 %v559
    %v627 = vpop.f32.mrb[0].mxu0
    %v628 = vadd.f32 0.0, %v627
    %v629 = vpop.f32.mrb[0].mxu0
    %630 = vdwg.mxu0
    %v631 = vadd.f32 %v210, %v628
    %v632 = vxor.u32 %v631, 2147483648
    %v633 = vmul.f32 %v632, 1.442695
    %v634 = vpow.pop %v633
    %v635 = vadd.f32 %v634, 1.0
    %v636 = vrcp.pop %v635
    %v637 = vmul.f32 1.0, %v636
    %639 = vrot.lane.b32.xlu0 %v628, 64
    %v640 = vpop.permute.xlu0 %639
    %v642 = vmul.f32 %v637, %v640
    %644 = vrot.lane.b32.xlu0 %v642, 64
    %v645 = vpop.permute.xlu0 %644
    %v647 = vadd.f32 %v210, %v645
    %v648 = vtanh.pop %v647
    %v649 = vsub.f32 1.0, %v637
    %651 = vrot.lane.b32.xlu0 %v648, 96
    %v652 = vpop.permute.xlu0 %651
    %v654 = vmul.f32 %v649, %v652
    %v655 = vmul.f32 %v637, 0.0
    %v656 = vadd.f32 %v654, %v655
    %658 = vrot.lane.b32.xlu0 %v656, 96
    %v659 = vpop.permute.xlu0 %658
    %v660 = vsel %vm126, %v659, 0
    %662 = vmatprep.subr.mxu0 0.0
    %663 = vmatpush1.msra.mxu0 %v49
    %664 = vmatprep.subr.mxu0 0.0
    %665 = vmatpush1.msra.mxu0 %v50
    %666 = vmatprep.subr.mxu0 0.0
    %667 = vmatpush1.msra.mxu0 %v51
    %668 = vmatprep.subr.mxu0 0.0
    %669 = vmatpush1.msra.mxu0 %v52
    %670 = vmatprep.subr.mxu0 0.0
    %671 = vmatpush1.msra.mxu0 0.0
    %672 = vmatprep.subr.mxu0 0.0
    %673 = vmatpush1.msra.mxu0 0.0
    %674 = vmatprep.subr.mxu0 0.0
    %675 = vmatpush1.msra.mxu0 0.0
    %676 = vmatprep.subr.mxu0 0.0
    %677 = vmatpush1.msra.mxu0 0.0
    %678 = vmatprep.subr.mxu0 0.0
    %679 = vmatpush1.msra.mxu0 0.0
    %680 = vmatprep.subr.mxu0 0.0
    %681 = vmatpush1.msra.mxu0 0.0
    %682 = vmatprep.subr.mxu0 0.0
    %683 = vmatpush1.msra.mxu0 0.0
    %684 = vmatprep.subr.mxu0 0.0
    %685 = vmatpush1.msra.mxu0 0.0
    %686 = vmatprep.subr.mxu0 0.0
    %687 = vmatpush1.msra.mxu0 0.0
    %688 = vmatprep.subr.mxu0 0.0
    %689 = vmatpush1.msra.mxu0 0.0
    %690 = vmatprep.subr.mxu0 0.0
    %691 = vmatpush1.msra.mxu0 0.0
    %692 = vmatprep.subr.mxu0 0.0
    %693 = vmatpush1.msra.mxu0 0.0
    %694 = vmatprep.subr.mxu0 0.0
    %695 = vmatpush1.msra.mxu0 0.0
    %696 = vmatprep.subr.mxu0 0.0
    %697 = vmatpush1.msra.mxu0 0.0
    %698 = vmatprep.subr.mxu0 0.0
    %699 = vmatpush1.msra.mxu0 0.0
    %700 = vmatprep.subr.mxu0 0.0
    %701 = vmatpush1.msra.mxu0 0.0
    %702 = vmatprep.subr.mxu0 0.0
    %703 = vmatpush1.msra.mxu0 0.0
    %704 = vmatprep.subr.mxu0 0.0
    %705 = vmatpush1.msra.mxu0 0.0
    %706 = vmatprep.subr.mxu0 0.0
    %707 = vmatpush1.msra.mxu0 0.0
    %708 = vmatprep.subr.mxu0 0.0
    %709 = vmatpush1.msra.mxu0 0.0
    %710 = vmatprep.subr.mxu0 0.0
    %711 = vmatpush1.msra.mxu0 0.0
    %712 = vmatprep.subr.mxu0 0.0
    %713 = vmatpush1.msra.mxu0 0.0
    %714 = vmatprep.subr.mxu0 0.0
    %715 = vmatpush1.msra.mxu0 0.0
    %716 = vmatprep.subr.mxu0 0.0
    %717 = vmatpush1.msra.mxu0 0.0
    %718 = vmatprep.subr.mxu0 0.0
    %719 = vmatpush1.msra.mxu0 0.0
    %720 = vmatprep.subr.mxu0 0.0
    %721 = vmatpush1.msra.mxu0 0.0
    %722 = vmatprep.subr.mxu0 0.0
    %723 = vmatpush1.msra.mxu0 0.0
    %724 = vmatprep.subr.mxu0 0.0
    %725 = vmatpush1.msra.mxu0 0.0
    %726 = vmatprep.mubr.f32.mxu0 0.0
    %727 = vmatmul.mubr.f32.gmra.mrb[0].mxu0 %v660
    %v728 = vpop.f32.mrb[0].mxu0
    %v729 = vadd.f32 %v79, %v728
    %v730 = vpop.f32.mrb[0].mxu0
    %731 = vdwg.mxu0
    %v732 = vmax.f32 %v729, 0.0
    %v734 = vsel %vm126, %v732, 0
    %736 = vmatprep.subr.mxu0 0.0
    %737 = vmatpush1.msra.mxu0 %v53
    %738 = vmatprep.subr.mxu0 0.0
    %739 = vmatpush1.msra.mxu0 %v54
    %740 = vmatprep.subr.mxu0 0.0
    %741 = vmatpush1.msra.mxu0 %v55
    %742 = vmatprep.subr.mxu0 0.0
    %743 = vmatpush1.msra.mxu0 %v56
    %744 = vmatprep.subr.mxu0 0.0
    %745 = vmatpush1.msra.mxu0 0.0
    %746 = vmatprep.subr.mxu0 0.0
    %747 = vmatpush1.msra.mxu0 0.0
    %748 = vmatprep.subr.mxu0 0.0
    %749 = vmatpush1.msra.mxu0 0.0
    %750 = vmatprep.subr.mxu0 0.0
    %751 = vmatpush1.msra.mxu0 0.0
    %752 = vmatprep.subr.mxu0 0.0
    %753 = vmatpush1.msra.mxu0 0.0
    %754 = vmatprep.subr.mxu0 0.0
    %755 = vmatpush1.msra.mxu0 0.0
    %756 = vmatprep.subr.mxu0 0.0
    %757 = vmatpush1.msra.mxu0 0.0
    %758 = vmatprep.subr.mxu0 0.0
    %759 = vmatpush1.msra.mxu0 0.0
    %760 = vmatprep.subr.mxu0 0.0
    %761 = vmatpush1.msra.mxu0 0.0
    %762 = vmatprep.subr.mxu0 0.0
    %763 = vmatpush1.msra.mxu0 0.0
    %764 = vmatprep.subr.mxu0 0.0
    %765 = vmatpush1.msra.mxu0 0.0
    %766 = vmatprep.subr.mxu0 0.0
    %767 = vmatpush1.msra.mxu0 0.0
    %768 = vmatprep.subr.mxu0 0.0
    %769 = vmatpush1.msra.mxu0 0.0
    %770 = vmatprep.subr.mxu0 0.0
    %771 = vmatpush1.msra.mxu0 0.0
    %772 = vmatprep.subr.mxu0 0.0
    %773 = vmatpush1.msra.mxu0 0.0
    %774 = vmatprep.subr.mxu0 0.0
    %775 = vmatpush1.msra.mxu0 0.0
    %776 = vmatprep.subr.mxu0 0.0
    %777 = vmatpush1.msra.mxu0 0.0
    %778 = vmatprep.subr.mxu0 0.0
    %779 = vmatpush1.msra.mxu0 0.0
    %780 = vmatprep.subr.mxu0 0.0
    %781 = vmatpush1.msra.mxu0 0.0
    %782 = vmatprep.subr.mxu0 0.0
    %783 = vmatpush1.msra.mxu0 0.0
    %784 = vmatprep.subr.mxu0 0.0
    %785 = vmatpush1.msra.mxu0 0.0
    %786 = vmatprep.subr.mxu0 0.0
    %787 = vmatpush1.msra.mxu0 0.0
    %788 = vmatprep.subr.mxu0 0.0
    %789 = vmatpush1.msra.mxu0 0.0
    %790 = vmatprep.subr.mxu0 0.0
    %791 = vmatpush1.msra.mxu0 0.0
    %792 = vmatprep.subr.mxu0 0.0
    %793 = vmatpush1.msra.mxu0 0.0
    %794 = vmatprep.subr.mxu0 0.0
    %795 = vmatpush1.msra.mxu0 0.0
    %796 = vmatprep.subr.mxu0 0.0
    %797 = vmatpush1.msra.mxu0 0.0
    %798 = vmatprep.subr.mxu0 0.0
    %799 = vmatpush1.msra.mxu0 0.0
    %800 = vmatprep.mubr.f32.mxu0 0.0
    %801 = vmatmul.mubr.f32.gmra.mrb[0].mxu0 %v734
    %v802 = vpop.f32.mrb[0].mxu0
    %v803 = vadd.f32 %v84, %v802
    %v804 = vpop.f32.mrb[0].mxu0
    %805 = vdwg.mxu0
    %v806 = vmax.f32 %v803, 0.0
    %v808 = vsel %vm126, %v806, 0
    %810 = vmatprep.subr.mxu0 0.0
    %811 = vmatpush1.msra.mxu0 %v57
    %812 = vmatprep.subr.mxu0 0.0
    %813 = vmatpush1.msra.mxu0 %v58
    %814 = vmatprep.subr.mxu0 0.0
    %815 = vmatpush1.msra.mxu0 %v59
    %816 = vmatprep.subr.mxu0 0.0
    %817 = vmatpush1.msra.mxu0 %v60
    %818 = vmatprep.subr.mxu0 0.0
    %819 = vmatpush1.msra.mxu0 0.0
    %820 = vmatprep.subr.mxu0 0.0
    %821 = vmatpush1.msra.mxu0 0.0
    %822 = vmatprep.subr.mxu0 0.0
    %823 = vmatpush1.msra.mxu0 0.0
    %824 = vmatprep.subr.mxu0 0.0
    %825 = vmatpush1.msra.mxu0 0.0
    %826 = vmatprep.subr.mxu0 0.0
    %827 = vmatpush1.msra.mxu0 0.0
    %828 = vmatprep.subr.mxu0 0.0
    %829 = vmatpush1.msra.mxu0 0.0
    %830 = vmatprep.subr.mxu0 0.0
    %831 = vmatpush1.msra.mxu0 0.0
    %832 = vmatprep.subr.mxu0 0.0
    %833 = vmatpush1.msra.mxu0 0.0
    %834 = vmatprep.subr.mxu0 0.0
    %835 = vmatpush1.msra.mxu0 0.0
    %836 = vmatprep.subr.mxu0 0.0
    %837 = vmatpush1.msra.mxu0 0.0
    %838 = vmatprep.subr.mxu0 0.0
    %839 = vmatpush1.msra.mxu0 0.0
    %840 = vmatprep.subr.mxu0 0.0
    %841 = vmatpush1.msra.mxu0 0.0
    %842 = vmatprep.subr.mxu0 0.0
    %843 = vmatpush1.msra.mxu0 0.0
    %844 = vmatprep.subr.mxu0 0.0
    %845 = vmatpush1.msra.mxu0 0.0
    %846 = vmatprep.subr.mxu0 0.0
    %847 = vmatpush1.msra.mxu0 0.0
    %848 = vmatprep.subr.mxu0 0.0
    %849 = vmatpush1.msra.mxu0 0.0
    %850 = vmatprep.subr.mxu0 0.0
    %851 = vmatpush1.msra.mxu0 0.0
    %852 = vmatprep.subr.mxu0 0.0
    %853 = vmatpush1.msra.mxu0 0.0
    %854 = vmatprep.subr.mxu0 0.0
    %855 = vmatpush1.msra.mxu0 0.0
    %856 = vmatprep.subr.mxu0 0.0
    %857 = vmatpush1.msra.mxu0 0.0
    %858 = vmatprep.subr.mxu0 0.0
    %859 = vmatpush1.msra.mxu0 0.0
    %860 = vmatprep.subr.mxu0 0.0
    %861 = vmatpush1.msra.mxu0 0.0
    %862 = vmatprep.subr.mxu0 0.0
    %863 = vmatpush1.msra.mxu0 0.0
    %864 = vmatprep.subr.mxu0 0.0
    %865 = vmatpush1.msra.mxu0 0.0
    %866 = vmatprep.subr.mxu0 0.0
    %867 = vmatpush1.msra.mxu0 0.0
    %868 = vmatprep.subr.mxu0 0.0
    %869 = vmatpush1.msra.mxu0 0.0
    %870 = vmatprep.subr.mxu0 0.0
    %871 = vmatpush1.msra.mxu0 0.0
    %872 = vmatprep.subr.mxu0 0.0
    %873 = vmatpush1.msra.mxu0 0.0
    %874 = vmatprep.mubr.f32.mxu0 0.0
    %875 = vmatmul.mubr.f32.gmra.mrb[0].mxu0 %v808
    %v876 = vpop.f32.mrb[0].mxu0
    %v877 = vadd.f32 0.0, %v876
    %v878 = vpop.f32.mrb[0].mxu0
    %879 = vdwg.mxu0
    %v880 = vadd.f32 %v95, %v877
    %v881 = vadd.f32 %v880, %v89
    %882 = vst.msk [vmem:[%s3] sm:$0xff] %vm135, %v881
    %883 = vmatprep.subr.mxu0 0.0
    %884 = vmatpush1.msra.mxu0 %v61
    %885 = vmatprep.subr.mxu0 0.0
    %886 = vmatpush1.msra.mxu0 %v62
    %887 = vmatprep.subr.mxu0 0.0
    %888 = vmatpush1.msra.mxu0 %v63
    %889 = vmatprep.subr.mxu0 0.0
    %890 = vmatpush1.msra.mxu0 %v64
    %891 = vmatprep.subr.mxu0 0.0
    %892 = vmatpush1.msra.mxu0 0.0
    %893 = vmatprep.subr.mxu0 0.0
    %894 = vmatpush1.msra.mxu0 0.0
    %895 = vmatprep.subr.mxu0 0.0
    %896 = vmatpush1.msra.mxu0 0.0
    %897 = vmatprep.subr.mxu0 0.0
    %898 = vmatpush1.msra.mxu0 0.0
    %899 = vmatprep.subr.mxu0 0.0
    %900 = vmatpush1.msra.mxu0 0.0
    %901 = vmatprep.subr.mxu0 0.0
    %902 = vmatpush1.msra.mxu0 0.0
    %903 = vmatprep.subr.mxu0 0.0
    %904 = vmatpush1.msra.mxu0 0.0
    %905 = vmatprep.subr.mxu0 0.0
    %906 = vmatpush1.msra.mxu0 0.0
    %907 = vmatprep.subr.mxu0 0.0
    %908 = vmatpush1.msra.mxu0 0.0
    %909 = vmatprep.subr.mxu0 0.0
    %910 = vmatpush1.msra.mxu0 0.0
    %911 = vmatprep.subr.mxu0 0.0
    %912 = vmatpush1.msra.mxu0 0.0
    %913 = vmatprep.subr.mxu0 0.0
    %914 = vmatpush1.msra.mxu0 0.0
    %915 = vmatprep.subr.mxu0 0.0
    %916 = vmatpush1.msra.mxu0 0.0
    %917 = vmatprep.subr.mxu0 0.0
    %918 = vmatpush1.msra.mxu0 0.0
    %919 = vmatprep.subr.mxu0 0.0
    %920 = vmatpush1.msra.mxu0 0.0
    %921 = vmatprep.subr.mxu0 0.0
    %922 = vmatpush1.msra.mxu0 0.0
    %923 = vmatprep.subr.mxu0 0.0
    %924 = vmatpush1.msra.mxu0 0.0
    %925 = vmatprep.subr.mxu0 0.0
    %926 = vmatpush1.msra.mxu0 0.0
    %927 = vmatprep.subr.mxu0 0.0
    %928 = vmatpush1.msra.mxu0 0.0
    %929 = vmatprep.subr.mxu0 0.0
    %930 = vmatpush1.msra.mxu0 0.0
    %931 = vmatprep.subr.mxu0 0.0
    %932 = vmatpush1.msra.mxu0 0.0
    %933 = vmatprep.subr.mxu0 0.0
    %934 = vmatpush1.msra.mxu0 0.0
    %935 = vmatprep.subr.mxu0 0.0
    %936 = vmatpush1.msra.mxu0 0.0
    %937 = vmatprep.subr.mxu0 0.0
    %938 = vmatpush1.msra.mxu0 0.0
    %939 = vmatprep.subr.mxu0 0.0
    %940 = vmatpush1.msra.mxu0 0.0
    %941 = vmatprep.subr.mxu0 0.0
    %942 = vmatpush1.msra.mxu0 0.0
    %943 = vmatprep.subr.mxu0 0.0
    %944 = vmatpush1.msra.mxu0 0.0
    %945 = vmatprep.subr.mxu0 0.0
    %946 = vmatpush1.msra.mxu0 0.0
    %947 = vmatprep.mubr.f32.mxu0 0.0
    %948 = vmatmul.mubr.f32.gmra.mrb[0].mxu0 %v808
    %v949 = vpop.f32.mrb[0].mxu0
    %v950 = vadd.f32 0.0, %v949
    %v951 = vpop.f32.mrb[0].mxu0
    %952 = vdwg.mxu0
    %v953 = vadd.f32 %v210, %v950
    %v954 = vadd.f32 %v953, %v94
    %955 = vmatprep.subr.mxu0 0.0
    %956 = vmatpush1.msra.mxu0 %v28
    %957 = vmatprep.subr.mxu0 0.0
    %958 = vmatpush1.msra.mxu0 %v29
    %959 = vmatprep.subr.mxu0 0.0
    %960 = vmatpush1.msra.mxu0 %v30
    %961 = vmatprep.subr.mxu0 0.0
    %962 = vmatpush1.msra.mxu0 %v31
    %963 = vmatprep.subr.mxu0 0.0
    %964 = vmatpush1.msra.mxu0 0.0
    %965 = vmatprep.subr.mxu0 0.0
    %966 = vmatpush1.msra.mxu0 0.0
    %967 = vmatprep.subr.mxu0 0.0
    %968 = vmatpush1.msra.mxu0 0.0
    %969 = vmatprep.subr.mxu0 0.0
    %970 = vmatpush1.msra.mxu0 0.0
    %971 = vmatprep.subr.mxu0 0.0
    %972 = vmatpush1.msra.mxu0 0.0
    %973 = vmatprep.subr.mxu0 0.0
    %974 = vmatpush1.msra.mxu0 0.0
    %975 = vmatprep.subr.mxu0 0.0
    %976 = vmatpush1.msra.mxu0 0.0
    %977 = vmatprep.subr.mxu0 0.0
    %978 = vmatpush1.msra.mxu0 0.0
    %979 = vmatprep.subr.mxu0 0.0
    %980 = vmatpush1.msra.mxu0 0.0
    %981 = vmatprep.subr.mxu0 0.0
    %982 = vmatpush1.msra.mxu0 0.0
    %983 = vmatprep.subr.mxu0 0.0
    %984 = vmatpush1.msra.mxu0 0.0
    %985 = vmatprep.subr.mxu0 0.0
    %986 = vmatpush1.msra.mxu0 0.0
    %987 = vmatprep.subr.mxu0 0.0
    %988 = vmatpush1.msra.mxu0 0.0
    %989 = vmatprep.subr.mxu0 0.0
    %990 = vmatpush1.msra.mxu0 0.0
    %991 = vmatprep.subr.mxu0 0.0
    %992 = vmatpush1.msra.mxu0 0.0
    %993 = vmatprep.subr.mxu0 0.0
    %994 = vmatpush1.msra.mxu0 0.0
    %995 = vmatprep.subr.mxu0 0.0
    %996 = vmatpush1.msra.mxu0 0.0
    %997 = vmatprep.subr.mxu0 0.0
    %998 = vmatpush1.msra.mxu0 0.0
    %999 = vmatprep.subr.mxu0 0.0
    %1000 = vmatpush1.msra.mxu0 0.0
    %1001 = vmatprep.subr.mxu0 0.0
    %1002 = vmatpush1.msra.mxu0 0.0
    %1003 = vmatprep.subr.mxu0 0.0
    %1004 = vmatpush1.msra.mxu0 0.0
    %1005 = vmatprep.subr.mxu0 0.0
    %1006 = vmatpush1.msra.mxu0 0.0
    %1007 = vmatprep.subr.mxu0 0.0
    %1008 = vmatpush1.msra.mxu0 0.0
    %1009 = vmatprep.subr.mxu0 0.0
    %1010 = vmatpush1.msra.mxu0 0.0
    %1011 = vmatprep.subr.mxu0 0.0
    %1012 = vmatpush1.msra.mxu0 0.0
    %1013 = vmatprep.subr.mxu0 0.0
    %1014 = vmatpush1.msra.mxu0 0.0
    %1015 = vmatprep.subr.mxu0 0.0
    %1016 = vmatpush1.msra.mxu0 0.0
    %1017 = vmatprep.subr.mxu0 0.0
    %1018 = vmatpush1.msra.mxu0 0.0
    %1019 = vmatprep.mubr.f32.mxu0 0.0
    %1020 = vmatmul.mubr.f32.gmra.mrb[0].mxu0 %v660
    %v1021 = vpop.f32.mrb[0].mxu0
    %v1022 = vadd.f32 0.0, %v1021
    %v1023 = vpop.f32.mrb[0].mxu0
    %1024 = vdwg.mxu0
    %1026 = vrot.lane.b32.xlu0 %v1022, 64
    %v1027 = vpop.permute.xlu0 %1026
    %1029 = vmatprep.subr.mxu0 0.0
    %1030 = vmatpush1.msra.mxu0 %v1022
    %1031 = vmatprep.subr.mxu0 0.0
    %1032 = vmatpush1.msra.mxu0 %v1027
    %1033 = vmatprep.subr.mxu0 0.0
    %1034 = vmatpush1.msra.mxu0 0.0
    %1035 = vmatprep.subr.mxu0 0.0
    %1036 = vmatpush1.msra.mxu0 0.0
    %1037 = vmatprep.subr.mxu0 0.0
    %1038 = vmatpush1.msra.mxu0 0.0
    %1039 = vmatprep.subr.mxu0 0.0
    %1040 = vmatpush1.msra.mxu0 0.0
    %1041 = vmatprep.subr.mxu0 0.0
    %1042 = vmatpush1.msra.mxu0 0.0
    %1043 = vmatprep.subr.mxu0 0.0
    %1044 = vmatpush1.msra.mxu0 0.0
    %1045 = vmatprep.subr.mxu0 0.0
    %1046 = vmatpush1.msra.mxu0 0.0
    %1047 = vmatprep.subr.mxu0 0.0
    %1048 = vmatpush1.msra.mxu0 0.0
    %1049 = vmatprep.subr.mxu0 0.0
    %1050 = vmatpush1.msra.mxu0 0.0
    %1051 = vmatprep.subr.mxu0 0.0
    %1052 = vmatpush1.msra.mxu0 0.0
    %1053 = vmatprep.subr.mxu0 0.0
    %1054 = vmatpush1.msra.mxu0 0.0
    %1055 = vmatprep.subr.mxu0 0.0
    %1056 = vmatpush1.msra.mxu0 0.0
    %1057 = vmatprep.subr.mxu0 0.0
    %1058 = vmatpush1.msra.mxu0 0.0
    %1059 = vmatprep.subr.mxu0 0.0
    %1060 = vmatpush1.msra.mxu0 0.0
    %1061 = vmatprep.subr.mxu0 0.0
    %1062 = vmatpush1.msra.mxu0 0.0
    %1063 = vmatprep.subr.mxu0 0.0
    %1064 = vmatpush1.msra.mxu0 0.0
    %1065 = vmatprep.subr.mxu0 0.0
    %1066 = vmatpush1.msra.mxu0 0.0
    %1067 = vmatprep.subr.mxu0 0.0
    %1068 = vmatpush1.msra.mxu0 0.0
    %1069 = vmatprep.subr.mxu0 0.0
    %1070 = vmatpush1.msra.mxu0 0.0
    %1071 = vmatprep.subr.mxu0 0.0
    %1072 = vmatpush1.msra.mxu0 0.0
    %1073 = vmatprep.subr.mxu0 0.0
    %1074 = vmatpush1.msra.mxu0 0.0
    %1075 = vmatprep.subr.mxu0 0.0
    %1076 = vmatpush1.msra.mxu0 0.0
    %1077 = vmatprep.subr.mxu0 0.0
    %1078 = vmatpush1.msra.mxu0 0.0
    %1079 = vmatprep.subr.mxu0 0.0
    %1080 = vmatpush1.msra.mxu0 0.0
    %1081 = vmatprep.subr.mxu0 0.0
    %1082 = vmatpush1.msra.mxu0 0.0
    %1083 = vmatprep.subr.mxu0 0.0
    %1084 = vmatpush1.msra.mxu0 0.0
    %1085 = vmatprep.subr.mxu0 0.0
    %1086 = vmatpush1.msra.mxu0 0.0
    %1087 = vmatprep.subr.mxu0 0.0
    %1088 = vmatpush1.msra.mxu0 0.0
    %1089 = vmatprep.subr.mxu0 0.0
    %1090 = vmatpush1.msra.mxu0 0.0
    %1091 = vmatprep.subr.mxu0 0.0
    %1092 = vmatpush1.msra.mxu0 0.0
    %1093 = vmatprep.mubr.f32.mxu0 0.0
    %1094 = vmatmul.mubr.f32.gmra.mrb[0].mxu0 %v292
    %v1095 = vpop.f32.mrb[0].mxu0
    %v1096 = vadd.f32 %v69, %v1095
    %v1097 = vpop.f32.mrb[0].mxu0
    %1098 = vmatprep.mubr.f32.mxu0 0.0
    %1099 = vmatmul.mubr.f32.gmra.mrb[0].mxu0 %v295
    %v1100 = vpop.f32.mrb[0].mxu0
    %v1101 = vadd.f32 %v69, %v1100
    %v1102 = vpop.f32.mrb[0].mxu0
    %1103 = vmatprep.mubr.f32.mxu0 0.0
    %1104 = vmatmul.mubr.f32.gmra.mrb[0].mxu0 %v298
    %v1105 = vpop.f32.mrb[0].mxu0
    %v1106 = vadd.f32 %v69, %v1105
    %v1107 = vpop.f32.mrb[0].mxu0
    %1108 = vdwg.mxu0
    %v1109 = vtanh.pop %v1096
    %v1110 = vtanh.pop %v1101
    %v1111 = vtanh.pop %v1106
    %v1113 = vsel %vm383, %v1109, 0
    %v1116 = vsel %vm383, %v1110, 0
    %v1119 = vsel %vm383, %v1111, 0
    %1121 = vmatprep.subr.mxu0 0.0
    %1122 = vmatpush1.msra.mxu0 %v36
    %1123 = vmatprep.subr.mxu0 0.0
    %1124 = vmatpush1.msra.mxu0 %v37
    %1125 = vmatprep.subr.mxu0 0.0
    %1126 = vmatpush1.msra.mxu0 %v38
    %1127 = vmatprep.subr.mxu0 0.0
    %1128 = vmatpush1.msra.mxu0 %v39
    %1129 = vmatprep.subr.mxu0 0.0
    %1130 = vmatpush1.msra.mxu0 %v40
    %1131 = vmatprep.subr.mxu0 0.0
    %1132 = vmatpush1.msra.mxu0 %v41
    %1133 = vmatprep.subr.mxu0 0.0
    %1134 = vmatpush1.msra.mxu0 %v42
    %1135 = vmatprep.subr.mxu0 0.0
    %1136 = vmatpush1.msra.mxu0 %v43
    %1137 = vmatprep.subr.mxu0 0.0
    %1138 = vmatpush1.msra.mxu0 0.0
    %1139 = vmatprep.subr.mxu0 0.0
    %1140 = vmatpush1.msra.mxu0 0.0
    %1141 = vmatprep.subr.mxu0 0.0
    %1142 = vmatpush1.msra.mxu0 0.0
    %1143 = vmatprep.subr.mxu0 0.0
    %1144 = vmatpush1.msra.mxu0 0.0
    %1145 = vmatprep.subr.mxu0 0.0
    %1146 = vmatpush1.msra.mxu0 0.0
    %1147 = vmatprep.subr.mxu0 0.0
    %1148 = vmatpush1.msra.mxu0 0.0
    %1149 = vmatprep.subr.mxu0 0.0
    %1150 = vmatpush1.msra.mxu0 0.0
    %1151 = vmatprep.subr.mxu0 0.0
    %1152 = vmatpush1.msra.mxu0 0.0
    %1153 = vmatprep.subr.mxu0 0.0
    %1154 = vmatpush1.msra.mxu0 0.0
    %1155 = vmatprep.subr.mxu0 0.0
    %1156 = vmatpush1.msra.mxu0 0.0
    %1157 = vmatprep.subr.mxu0 0.0
    %1158 = vmatpush1.msra.mxu0 0.0
    %1159 = vmatprep.subr.mxu0 0.0
    %1160 = vmatpush1.msra.mxu0 0.0
    %1161 = vmatprep.subr.mxu0 0.0
    %1162 = vmatpush1.msra.mxu0 0.0
    %1163 = vmatprep.subr.mxu0 0.0
    %1164 = vmatpush1.msra.mxu0 0.0
    %1165 = vmatprep.subr.mxu0 0.0
    %1166 = vmatpush1.msra.mxu0 0.0
    %1167 = vmatprep.subr.mxu0 0.0
    %1168 = vmatpush1.msra.mxu0 0.0
    %1169 = vmatprep.subr.mxu0 0.0
    %1170 = vmatpush1.msra.mxu0 0.0
    %1171 = vmatprep.subr.mxu0 0.0
    %1172 = vmatpush1.msra.mxu0 0.0
    %1173 = vmatprep.subr.mxu0 0.0
    %1174 = vmatpush1.msra.mxu0 0.0
    %1175 = vmatprep.subr.mxu0 0.0
    %1176 = vmatpush1.msra.mxu0 0.0
    %1177 = vmatprep.subr.mxu0 0.0
    %1178 = vmatpush1.msra.mxu0 0.0
    %1179 = vmatprep.subr.mxu0 0.0
    %1180 = vmatpush1.msra.mxu0 0.0
    %1181 = vmatprep.subr.mxu0 0.0
    %1182 = vmatpush1.msra.mxu0 0.0
    %1183 = vmatprep.subr.mxu0 0.0
    %1184 = vmatpush1.msra.mxu0 0.0
    %1185 = vmatprep.mubr.f32.mxu0 0.0
    %1186 = vmatmul.mubr.f32.gmra.mrb[0].mxu0 %v1113
    %v1187 = vpop.f32.mrb[0].mxu0
    %v1188 = vadd.f32 %v74, %v1187
    %v1189 = vpop.f32.mrb[0].mxu0
    %1190 = vmatprep.mubr.f32.mxu0 0.0
    %1191 = vmatmul.mubr.f32.gmra.mrb[0].mxu0 %v1116
    %v1192 = vpop.f32.mrb[0].mxu0
    %v1193 = vadd.f32 %v74, %v1192
    %v1194 = vpop.f32.mrb[0].mxu0
    %1195 = vmatprep.mubr.f32.mxu0 0.0
    %1196 = vmatmul.mubr.f32.gmra.mrb[0].mxu0 %v1119
    %v1197 = vpop.f32.mrb[0].mxu0
    %v1198 = vadd.f32 %v74, %v1197
    %v1199 = vpop.f32.mrb[0].mxu0
    %1200 = vdwg.mxu0
    %v1201 = vtanh.pop %v1188
    %v1202 = vtanh.pop %v1193
    %v1203 = vtanh.pop %v1198
    %v1204 = vmul.f32 %v1201, %v127
    %v1205 = vmul.f32 %v1202, %v128
    %v1206 = vmul.f32 %v1203, %v129
    %1207 = vmatprep.subr.mxu0 0.0
    %1208 = vmatpush1.msra.mxu0 %v1204
    %1209 = vmatprep.subr.mxu0 0.0
    %1210 = vmatpush1.msra.mxu0 %v1205
    %1211 = vmatprep.subr.mxu0 0.0
    %1212 = vmatpush1.msra.mxu0 %v1206
    %1213 = vmatprep.subr.mxu0 0.0
    %1214 = vmatpush1.msra.mxu0 0.0
    %1215 = vmatprep.subr.mxu0 0.0
    %1216 = vmatpush1.msra.mxu0 0.0
    %1217 = vmatprep.subr.mxu0 0.0
    %1218 = vmatpush1.msra.mxu0 0.0
    %1219 = vmatprep.subr.mxu0 0.0
    %1220 = vmatpush1.msra.mxu0 0.0
    %1221 = vmatprep.subr.mxu0 0.0
    %1222 = vmatpush1.msra.mxu0 0.0
    %1223 = vmatprep.subr.mxu0 0.0
    %1224 = vmatpush1.msra.mxu0 0.0
    %1225 = vmatprep.subr.mxu0 0.0
    %1226 = vmatpush1.msra.mxu0 0.0
    %1227 = vmatprep.subr.mxu0 0.0
    %1228 = vmatpush1.msra.mxu0 0.0
    %1229 = vmatprep.subr.mxu0 0.0
    %1230 = vmatpush1.msra.mxu0 0.0
    %1231 = vmatprep.subr.mxu0 0.0
    %1232 = vmatpush1.msra.mxu0 0.0
    %1233 = vmatprep.subr.mxu0 0.0
    %1234 = vmatpush1.msra.mxu0 0.0
    %1235 = vmatprep.subr.mxu0 0.0
    %1236 = vmatpush1.msra.mxu0 0.0
    %1237 = vmatprep.subr.mxu0 0.0
    %1238 = vmatpush1.msra.mxu0 0.0
    %1239 = vmatprep.subr.mxu0 0.0
    %1240 = vmatpush1.msra.mxu0 0.0
    %1241 = vmatprep.subr.mxu0 0.0
    %1242 = vmatpush1.msra.mxu0 0.0
    %1243 = vmatprep.subr.mxu0 0.0
    %1244 = vmatpush1.msra.mxu0 0.0
    %1245 = vmatprep.subr.mxu0 0.0
    %1246 = vmatpush1.msra.mxu0 0.0
    %1247 = vmatprep.subr.mxu0 0.0
    %1248 = vmatpush1.msra.mxu0 0.0
    %1249 = vmatprep.subr.mxu0 0.0
    %1250 = vmatpush1.msra.mxu0 0.0
    %1251 = vmatprep.subr.mxu0 0.0
    %1252 = vmatpush1.msra.mxu0 0.0
    %1253 = vmatprep.subr.mxu0 0.0
    %1254 = vmatpush1.msra.mxu0 0.0
    %1255 = vmatprep.subr.mxu0 0.0
    %1256 = vmatpush1.msra.mxu0 0.0
    %1257 = vmatprep.subr.mxu0 0.0
    %1258 = vmatpush1.msra.mxu0 0.0
    %1259 = vmatprep.subr.mxu0 0.0
    %1260 = vmatpush1.msra.mxu0 0.0
    %1261 = vmatprep.subr.mxu0 0.0
    %1262 = vmatpush1.msra.mxu0 0.0
    %1263 = vmatprep.subr.mxu0 0.0
    %1264 = vmatpush1.msra.mxu0 0.0
    %1265 = vmatprep.subr.mxu0 0.0
    %1266 = vmatpush1.msra.mxu0 0.0
    %1267 = vmatprep.subr.mxu0 0.0
    %1268 = vmatpush1.msra.mxu0 0.0
    %1269 = vmatprep.subr.mxu0 0.0
    %1270 = vmatpush1.msra.mxu0 0.0
    %1271 = vmatprep.mubr.f32.mxu0 0.0
    %1272 = vmatmul.mubr.f32.gmra.mrb[0].mxu0 %v481
    %v1273 = vpop.f32.mrb[0].mxu0
    %v1274 = vadd.f32 0.0, %v1273
    %v1275 = vpop.f32.mrb[0].mxu0
    %1276 = vdwg.mxu0
    %1278 = vrot.lane.b32.xlu0 %v1274, 96
    %v1279 = vpop.permute.xlu0 %1278
    %v1281 = vadd.f32 %v1274, %v1279
    %v1283 = vsel %vm126, %v1281, 0
    %1285 = vmatprep.subr.mxu0 0.0
    %1286 = vmatpush1.msra.mxu0 %v44
    %1287 = vmatprep.subr.mxu0 0.0
    %1288 = vmatpush1.msra.mxu0 %v45
    %1289 = vmatprep.subr.mxu0 0.0
    %1290 = vmatpush1.msra.mxu0 %v46
    %1291 = vmatprep.subr.mxu0 0.0
    %1292 = vmatpush1.msra.mxu0 %v47
    %1293 = vmatprep.subr.mxu0 0.0
    %1294 = vmatpush1.msra.mxu0 0.0
    %1295 = vmatprep.subr.mxu0 0.0
    %1296 = vmatpush1.msra.mxu0 0.0
    %1297 = vmatprep.subr.mxu0 0.0
    %1298 = vmatpush1.msra.mxu0 0.0
    %1299 = vmatprep.subr.mxu0 0.0
    %1300 = vmatpush1.msra.mxu0 0.0
    %1301 = vmatprep.subr.mxu0 0.0
    %1302 = vmatpush1.msra.mxu0 0.0
    %1303 = vmatprep.subr.mxu0 0.0
    %1304 = vmatpush1.msra.mxu0 0.0
    %1305 = vmatprep.subr.mxu0 0.0
    %1306 = vmatpush1.msra.mxu0 0.0
    %1307 = vmatprep.subr.mxu0 0.0
    %1308 = vmatpush1.msra.mxu0 0.0
    %1309 = vmatprep.subr.mxu0 0.0
    %1310 = vmatpush1.msra.mxu0 0.0
    %1311 = vmatprep.subr.mxu0 0.0
    %1312 = vmatpush1.msra.mxu0 0.0
    %1313 = vmatprep.subr.mxu0 0.0
    %1314 = vmatpush1.msra.mxu0 0.0
    %1315 = vmatprep.subr.mxu0 0.0
    %1316 = vmatpush1.msra.mxu0 0.0
    %1317 = vmatprep.subr.mxu0 0.0
    %1318 = vmatpush1.msra.mxu0 0.0
    %1319 = vmatprep.subr.mxu0 0.0
    %1320 = vmatpush1.msra.mxu0 0.0
    %1321 = vmatprep.subr.mxu0 0.0
    %1322 = vmatpush1.msra.mxu0 0.0
    %1323 = vmatprep.subr.mxu0 0.0
    %1324 = vmatpush1.msra.mxu0 0.0
    %1325 = vmatprep.subr.mxu0 0.0
    %1326 = vmatpush1.msra.mxu0 0.0
    %1327 = vmatprep.subr.mxu0 0.0
    %1328 = vmatpush1.msra.mxu0 0.0
    %1329 = vmatprep.subr.mxu0 0.0
    %1330 = vmatpush1.msra.mxu0 0.0
    %1331 = vmatprep.subr.mxu0 0.0
    %1332 = vmatpush1.msra.mxu0 0.0
    %1333 = vmatprep.subr.mxu0 0.0
    %1334 = vmatpush1.msra.mxu0 0.0
    %1335 = vmatprep.subr.mxu0 0.0
    %1336 = vmatpush1.msra.mxu0 0.0
    %1337 = vmatprep.subr.mxu0 0.0
    %1338 = vmatpush1.msra.mxu0 0.0
    %1339 = vmatprep.subr.mxu0 0.0
    %1340 = vmatpush1.msra.mxu0 0.0
    %1341 = vmatprep.subr.mxu0 0.0
    %1342 = vmatpush1.msra.mxu0 0.0
    %1343 = vmatprep.subr.mxu0 0.0
    %1344 = vmatpush1.msra.mxu0 0.0
    %1345 = vmatprep.subr.mxu0 0.0
    %1346 = vmatpush1.msra.mxu0 0.0
    %1347 = vmatprep.subr.mxu0 0.0
    %1348 = vmatpush1.msra.mxu0 0.0
    %1349 = vmatprep.mubr.f32.mxu0 0.0
    %1350 = vmatmul.mubr.f32.gmra.mrb[0].mxu0 %v1283
    %v1351 = vpop.f32.mrb[0].mxu0
    %v1352 = vadd.f32 0.0, %v1351
    %v1353 = vpop.f32.mrb[0].mxu0
    %1354 = vdwg.mxu0
    %v1355 = vadd.f32 %v954, %v1352
    %v1356 = vxor.u32 %v1355, 2147483648
    %v1357 = vmul.f32 %v1356, 1.442695
    %v1358 = vpow.pop %v1357
    %v1359 = vadd.f32 %v1358, 1.0
    %v1360 = vrcp.pop %v1359
    %v1361 = vmul.f32 1.0, %v1360
    %1363 = vrot.lane.b32.xlu0 %v1352, 64
    %v1364 = vpop.permute.xlu0 %1363
    %v1366 = vmul.f32 %v1361, %v1364
    %1368 = vrot.lane.b32.xlu0 %v1366, 64
    %v1369 = vpop.permute.xlu0 %1368
    %v1371 = vadd.f32 %v954, %v1369
    %v1372 = vtanh.pop %v1371
    %v1373 = vsub.f32 1.0, %v1361
    %1375 = vrot.lane.b32.xlu0 %v1372, 96
    %v1376 = vpop.permute.xlu0 %1375
    %v1378 = vmul.f32 %v1373, %v1376
    %v1379 = vmul.f32 %v1361, %v656
    %v1380 = vadd.f32 %v1378, %v1379
    %1382 = vrot.lane.b32.xlu0 %v1380, 96
    %v1383 = vpop.permute.xlu0 %1382
    %v1384 = vsel %vm126, %v1383, 0
    %1386 = vmatprep.subr.mxu0 0.0
    %1387 = vmatpush1.msra.mxu0 %v49
    %1388 = vmatprep.subr.mxu0 0.0
    %1389 = vmatpush1.msra.mxu0 %v50
    %1390 = vmatprep.subr.mxu0 0.0
    %1391 = vmatpush1.msra.mxu0 %v51
    %1392 = vmatprep.subr.mxu0 0.0
    %1393 = vmatpush1.msra.mxu0 %v52
    %1394 = vmatprep.subr.mxu0 0.0
    %1395 = vmatpush1.msra.mxu0 0.0
    %1396 = vmatprep.subr.mxu0 0.0
    %1397 = vmatpush1.msra.mxu0 0.0
    %1398 = vmatprep.subr.mxu0 0.0
    %1399 = vmatpush1.msra.mxu0 0.0
    %1400 = vmatprep.subr.mxu0 0.0
    %1401 = vmatpush1.msra.mxu0 0.0
    %1402 = vmatprep.subr.mxu0 0.0
    %1403 = vmatpush1.msra.mxu0 0.0
    %1404 = vmatprep.subr.mxu0 0.0
    %1405 = vmatpush1.msra.mxu0 0.0
    %1406 = vmatprep.subr.mxu0 0.0
    %1407 = vmatpush1.msra.mxu0 0.0
    %1408 = vmatprep.subr.mxu0 0.0
    %1409 = vmatpush1.msra.mxu0 0.0
    %1410 = vmatprep.subr.mxu0 0.0
    %1411 = vmatpush1.msra.mxu0 0.0
    %1412 = vmatprep.subr.mxu0 0.0
    %1413 = vmatpush1.msra.mxu0 0.0
    %1414 = vmatprep.subr.mxu0 0.0
    %1415 = vmatpush1.msra.mxu0 0.0
    %1416 = vmatprep.subr.mxu0 0.0
    %1417 = vmatpush1.msra.mxu0 0.0
    %1418 = vmatprep.subr.mxu0 0.0
    %1419 = vmatpush1.msra.mxu0 0.0
    %1420 = vmatprep.subr.mxu0 0.0
    %1421 = vmatpush1.msra.mxu0 0.0
    %1422 = vmatprep.subr.mxu0 0.0
    %1423 = vmatpush1.msra.mxu0 0.0
    %1424 = vmatprep.subr.mxu0 0.0
    %1425 = vmatpush1.msra.mxu0 0.0
    %1426 = vmatprep.subr.mxu0 0.0
    %1427 = vmatpush1.msra.mxu0 0.0
    %1428 = vmatprep.subr.mxu0 0.0
    %1429 = vmatpush1.msra.mxu0 0.0
    %1430 = vmatprep.subr.mxu0 0.0
    %1431 = vmatpush1.msra.mxu0 0.0
    %1432 = vmatprep.subr.mxu0 0.0
    %1433 = vmatpush1.msra.mxu0 0.0
    %1434 = vmatprep.subr.mxu0 0.0
    %1435 = vmatpush1.msra.mxu0 0.0
    %1436 = vmatprep.subr.mxu0 0.0
    %1437 = vmatpush1.msra.mxu0 0.0
    %1438 = vmatprep.subr.mxu0 0.0
    %1439 = vmatpush1.msra.mxu0 0.0
    %1440 = vmatprep.subr.mxu0 0.0
    %1441 = vmatpush1.msra.mxu0 0.0
    %1442 = vmatprep.subr.mxu0 0.0
    %1443 = vmatpush1.msra.mxu0 0.0
    %1444 = vmatprep.subr.mxu0 0.0
    %1445 = vmatpush1.msra.mxu0 0.0
    %1446 = vmatprep.subr.mxu0 0.0
    %1447 = vmatpush1.msra.mxu0 0.0
    %1448 = vmatprep.subr.mxu0 0.0
    %1449 = vmatpush1.msra.mxu0 0.0
    %1450 = vmatprep.mubr.f32.mxu0 0.0
    %1451 = vmatmul.mubr.f32.gmra.mrb[0].mxu0 %v1384
    %v1452 = vpop.f32.mrb[0].mxu0
    %v1453 = vadd.f32 %v79, %v1452
    %v1454 = vpop.f32.mrb[0].mxu0
    %1455 = vdwg.mxu0
    %v1456 = vmax.f32 %v1453, 0.0
    %v1458 = vsel %vm126, %v1456, 0
    %1460 = vmatprep.subr.mxu0 0.0
    %1461 = vmatpush1.msra.mxu0 %v53
    %1462 = vmatprep.subr.mxu0 0.0
    %1463 = vmatpush1.msra.mxu0 %v54
    %1464 = vmatprep.subr.mxu0 0.0
    %1465 = vmatpush1.msra.mxu0 %v55
    %1466 = vmatprep.subr.mxu0 0.0
    %1467 = vmatpush1.msra.mxu0 %v56
    %1468 = vmatprep.subr.mxu0 0.0
    %1469 = vmatpush1.msra.mxu0 0.0
    %1470 = vmatprep.subr.mxu0 0.0
    %1471 = vmatpush1.msra.mxu0 0.0
    %1472 = vmatprep.subr.mxu0 0.0
    %1473 = vmatpush1.msra.mxu0 0.0
    %1474 = vmatprep.subr.mxu0 0.0
    %1475 = vmatpush1.msra.mxu0 0.0
    %1476 = vmatprep.subr.mxu0 0.0
    %1477 = vmatpush1.msra.mxu0 0.0
    %1478 = vmatprep.subr.mxu0 0.0
    %1479 = vmatpush1.msra.mxu0 0.0
    %1480 = vmatprep.subr.mxu0 0.0
    %1481 = vmatpush1.msra.mxu0 0.0
    %1482 = vmatprep.subr.mxu0 0.0
    %1483 = vmatpush1.msra.mxu0 0.0
    %1484 = vmatprep.subr.mxu0 0.0
    %1485 = vmatpush1.msra.mxu0 0.0
    %1486 = vmatprep.subr.mxu0 0.0
    %1487 = vmatpush1.msra.mxu0 0.0
    %1488 = vmatprep.subr.mxu0 0.0
    %1489 = vmatpush1.msra.mxu0 0.0
    %1490 = vmatprep.subr.mxu0 0.0
    %1491 = vmatpush1.msra.mxu0 0.0
    %1492 = vmatprep.subr.mxu0 0.0
    %1493 = vmatpush1.msra.mxu0 0.0
    %1494 = vmatprep.subr.mxu0 0.0
    %1495 = vmatpush1.msra.mxu0 0.0
    %1496 = vmatprep.subr.mxu0 0.0
    %1497 = vmatpush1.msra.mxu0 0.0
    %1498 = vmatprep.subr.mxu0 0.0
    %1499 = vmatpush1.msra.mxu0 0.0
    %1500 = vmatprep.subr.mxu0 0.0
    %1501 = vmatpush1.msra.mxu0 0.0
    %1502 = vmatprep.subr.mxu0 0.0
    %1503 = vmatpush1.msra.mxu0 0.0
    %1504 = vmatprep.subr.mxu0 0.0
    %1505 = vmatpush1.msra.mxu0 0.0
    %1506 = vmatprep.subr.mxu0 0.0
    %1507 = vmatpush1.msra.mxu0 0.0
    %1508 = vmatprep.subr.mxu0 0.0
    %1509 = vmatpush1.msra.mxu0 0.0
    %1510 = vmatprep.subr.mxu0 0.0
    %1511 = vmatpush1.msra.mxu0 0.0
    %1512 = vmatprep.subr.mxu0 0.0
    %1513 = vmatpush1.msra.mxu0 0.0
    %1514 = vmatprep.subr.mxu0 0.0
    %1515 = vmatpush1.msra.mxu0 0.0
    %1516 = vmatprep.subr.mxu0 0.0
    %1517 = vmatpush1.msra.mxu0 0.0
    %1518 = vmatprep.subr.mxu0 0.0
    %1519 = vmatpush1.msra.mxu0 0.0
    %1520 = vmatprep.subr.mxu0 0.0
    %1521 = vmatpush1.msra.mxu0 0.0
    %1522 = vmatprep.subr.mxu0 0.0
    %1523 = vmatpush1.msra.mxu0 0.0
    %1524 = vmatprep.mubr.f32.mxu0 0.0
    %1525 = vmatmul.mubr.f32.gmra.mrb[0].mxu0 %v1458
    %v1526 = vpop.f32.mrb[0].mxu0
    %v1527 = vadd.f32 %v84, %v1526
    %v1528 = vpop.f32.mrb[0].mxu0
    %1529 = vdwg.mxu0
    %v1530 = vmax.f32 %v1527, 0.0
    %v1532 = vsel %vm126, %v1530, 0
    %1534 = vmatprep.subr.mxu0 0.0
    %1535 = vmatpush1.msra.mxu0 %v57
    %1536 = vmatprep.subr.mxu0 0.0
    %1537 = vmatpush1.msra.mxu0 %v58
    %1538 = vmatprep.subr.mxu0 0.0
    %1539 = vmatpush1.msra.mxu0 %v59
    %1540 = vmatprep.subr.mxu0 0.0
    %1541 = vmatpush1.msra.mxu0 %v60
    %1542 = vmatprep.subr.mxu0 0.0
    %1543 = vmatpush1.msra.mxu0 0.0
    %1544 = vmatprep.subr.mxu0 0.0
    %1545 = vmatpush1.msra.mxu0 0.0
    %1546 = vmatprep.subr.mxu0 0.0
    %1547 = vmatpush1.msra.mxu0 0.0
    %1548 = vmatprep.subr.mxu0 0.0
    %1549 = vmatpush1.msra.mxu0 0.0
    %1550 = vmatprep.subr.mxu0 0.0
    %1551 = vmatpush1.msra.mxu0 0.0
    %1552 = vmatprep.subr.mxu0 0.0
    %1553 = vmatpush1.msra.mxu0 0.0
    %1554 = vmatprep.subr.mxu0 0.0
    %1555 = vmatpush1.msra.mxu0 0.0
    %1556 = vmatprep.subr.mxu0 0.0
    %1557 = vmatpush1.msra.mxu0 0.0
    %1558 = vmatprep.subr.mxu0 0.0
    %1559 = vmatpush1.msra.mxu0 0.0
    %1560 = vmatprep.subr.mxu0 0.0
    %1561 = vmatpush1.msra.mxu0 0.0
    %1562 = vmatprep.subr.mxu0 0.0
    %1563 = vmatpush1.msra.mxu0 0.0
    %1564 = vmatprep.subr.mxu0 0.0
    %1565 = vmatpush1.msra.mxu0 0.0
    %1566 = vmatprep.subr.mxu0 0.0
    %1567 = vmatpush1.msra.mxu0 0.0
    %1568 = vmatprep.subr.mxu0 0.0
    %1569 = vmatpush1.msra.mxu0 0.0
    %1570 = vmatprep.subr.mxu0 0.0
    %1571 = vmatpush1.msra.mxu0 0.0
    %1572 = vmatprep.subr.mxu0 0.0
    %1573 = vmatpush1.msra.mxu0 0.0
    %1574 = vmatprep.subr.mxu0 0.0
    %1575 = vmatpush1.msra.mxu0 0.0
    %1576 = vmatprep.subr.mxu0 0.0
    %1577 = vmatpush1.msra.mxu0 0.0
    %1578 = vmatprep.subr.mxu0 0.0
    %1579 = vmatpush1.msra.mxu0 0.0
    %1580 = vmatprep.subr.mxu0 0.0
    %1581 = vmatpush1.msra.mxu0 0.0
    %1582 = vmatprep.subr.mxu0 0.0
    %1583 = vmatpush1.msra.mxu0 0.0
    %1584 = vmatprep.subr.mxu0 0.0
    %1585 = vmatpush1.msra.mxu0 0.0
    %1586 = vmatprep.subr.mxu0 0.0
    %1587 = vmatpush1.msra.mxu0 0.0
    %1588 = vmatprep.subr.mxu0 0.0
    %1589 = vmatpush1.msra.mxu0 0.0
    %1590 = vmatprep.subr.mxu0 0.0
    %1591 = vmatpush1.msra.mxu0 0.0
    %1592 = vmatprep.subr.mxu0 0.0
    %1593 = vmatpush1.msra.mxu0 0.0
    %1594 = vmatprep.subr.mxu0 0.0
    %1595 = vmatpush1.msra.mxu0 0.0
    %1596 = vmatprep.subr.mxu0 0.0
    %1597 = vmatpush1.msra.mxu0 0.0
    %1598 = vmatprep.mubr.f32.mxu0 0.0
    %1599 = vmatmul.mubr.f32.gmra.mrb[0].mxu0 %v1532
    %v1600 = vpop.f32.mrb[0].mxu0
    %v1601 = vadd.f32 0.0, %v1600
    %v1602 = vpop.f32.mrb[0].mxu0
    %1603 = vdwg.mxu0
    %v1604 = vadd.f32 %v881, %v1601
    %v1605 = vadd.f32 %v1604, %v89
    %1607 = vrot.lane.b32.xlu0 %v1605, 4
    %v1608 = vpop.permute.xlu0 %1607
    %vm1610 = vcmask 64544
    %1611 = vst.msk [vmem:[%s3] sm:$0xff] %vm1610, %v1608
    %1612 = vmatprep.subr.mxu0 0.0
    %1613 = vmatpush1.msra.mxu0 %v61
    %1614 = vmatprep.subr.mxu0 0.0
    %1615 = vmatpush1.msra.mxu0 %v62
    %1616 = vmatprep.subr.mxu0 0.0
    %1617 = vmatpush1.msra.mxu0 %v63
    %1618 = vmatprep.subr.mxu0 0.0
    %1619 = vmatpush1.msra.mxu0 %v64
    %1620 = vmatprep.subr.mxu0 0.0
    %1621 = vmatpush1.msra.mxu0 0.0
    %1622 = vmatprep.subr.mxu0 0.0
    %1623 = vmatpush1.msra.mxu0 0.0
    %1624 = vmatprep.subr.mxu0 0.0
    %1625 = vmatpush1.msra.mxu0 0.0
    %1626 = vmatprep.subr.mxu0 0.0
    %1627 = vmatpush1.msra.mxu0 0.0
    %1628 = vmatprep.subr.mxu0 0.0
    %1629 = vmatpush1.msra.mxu0 0.0
    %1630 = vmatprep.subr.mxu0 0.0
    %1631 = vmatpush1.msra.mxu0 0.0
    %1632 = vmatprep.subr.mxu0 0.0
    %1633 = vmatpush1.msra.mxu0 0.0
    %1634 = vmatprep.subr.mxu0 0.0
    %1635 = vmatpush1.msra.mxu0 0.0
    %1636 = vmatprep.subr.mxu0 0.0
    %1637 = vmatpush1.msra.mxu0 0.0
    %1638 = vmatprep.subr.mxu0 0.0
    %1639 = vmatpush1.msra.mxu0 0.0
    %1640 = vmatprep.subr.mxu0 0.0
    %1641 = vmatpush1.msra.mxu0 0.0
    %1642 = vmatprep.subr.mxu0 0.0
    %1643 = vmatpush1.msra.mxu0 0.0
    %1644 = vmatprep.subr.mxu0 0.0
    %1645 = vmatpush1.msra.mxu0 0.0
    %1646 = vmatprep.subr.mxu0 0.0
    %1647 = vmatpush1.msra.mxu0 0.0
    %1648 = vmatprep.subr.mxu0 0.0
    %1649 = vmatpush1.msra.mxu0 0.0
    %1650 = vmatprep.subr.mxu0 0.0
    %1651 = vmatpush1.msra.mxu0 0.0
    %1652 = vmatprep.subr.mxu0 0.0
    %1653 = vmatpush1.msra.mxu0 0.0
    %1654 = vmatprep.subr.mxu0 0.0
    %1655 = vmatpush1.msra.mxu0 0.0
    %1656 = vmatprep.subr.mxu0 0.0
    %1657 = vmatpush1.msra.mxu0 0.0
    %1658 = vmatprep.subr.mxu0 0.0
    %1659 = vmatpush1.msra.mxu0 0.0
    %1660 = vmatprep.subr.mxu0 0.0
    %1661 = vmatpush1.msra.mxu0 0.0
    %1662 = vmatprep.subr.mxu0 0.0
    %1663 = vmatpush1.msra.mxu0 0.0
    %1664 = vmatprep.subr.mxu0 0.0
    %1665 = vmatpush1.msra.mxu0 0.0
    %1666 = vmatprep.subr.mxu0 0.0
    %1667 = vmatpush1.msra.mxu0 0.0
    %1668 = vmatprep.subr.mxu0 0.0
    %1669 = vmatpush1.msra.mxu0 0.0
    %1670 = vmatprep.subr.mxu0 0.0
    %1671 = vmatpush1.msra.mxu0 0.0
    %1672 = vmatprep.subr.mxu0 0.0
    %1673 = vmatpush1.msra.mxu0 0.0
    %1674 = vmatprep.subr.mxu0 0.0
    %1675 = vmatpush1.msra.mxu0 0.0
    %1676 = vmatprep.mubr.f32.mxu0 0.0
    %1677 = vmatmul.mubr.f32.gmra.mrb[0].mxu0 %v1532
    %v1678 = vpop.f32.mrb[0].mxu0
    %v1679 = vadd.f32 0.0, %v1678
    %v1680 = vpop.f32.mrb[0].mxu0
    %1681 = vdwg.mxu0
    %v1682 = vadd.f32 %v954, %v1679
    %v1683 = vadd.f32 %v1682, %v94
    %1684 = vmatprep.subr.mxu0 0.0
    %1685 = vmatpush1.msra.mxu0 %v28
    %1686 = vmatprep.subr.mxu0 0.0
    %1687 = vmatpush1.msra.mxu0 %v29
    %1688 = vmatprep.subr.mxu0 0.0
    %1689 = vmatpush1.msra.mxu0 %v30
    %1690 = vmatprep.subr.mxu0 0.0
    %1691 = vmatpush1.msra.mxu0 %v31
    %1692 = vmatprep.subr.mxu0 0.0
    %1693 = vmatpush1.msra.mxu0 0.0
    %1694 = vmatprep.subr.mxu0 0.0
    %1695 = vmatpush1.msra.mxu0 0.0
    %1696 = vmatprep.subr.mxu0 0.0
    %1697 = vmatpush1.msra.mxu0 0.0
    %1698 = vmatprep.subr.mxu0 0.0
    %1699 = vmatpush1.msra.mxu0 0.0
    %1700 = vmatprep.subr.mxu0 0.0
    %1701 = vmatpush1.msra.mxu0 0.0
    %1702 = vmatprep.subr.mxu0 0.0
    %1703 = vmatpush1.msra.mxu0 0.0
    %1704 = vmatprep.subr.mxu0 0.0
    %1705 = vmatpush1.msra.mxu0 0.0
    %1706 = vmatprep.subr.mxu0 0.0
    %1707 = vmatpush1.msra.mxu0 0.0
    %1708 = vmatprep.subr.mxu0 0.0
    %1709 = vmatpush1.msra.mxu0 0.0
    %1710 = vmatprep.subr.mxu0 0.0
    %1711 = vmatpush1.msra.mxu0 0.0
    %1712 = vmatprep.subr.mxu0 0.0
    %1713 = vmatpush1.msra.mxu0 0.0
    %1714 = vmatprep.subr.mxu0 0.0
    %1715 = vmatpush1.msra.mxu0 0.0
    %1716 = vmatprep.subr.mxu0 0.0
    %1717 = vmatpush1.msra.mxu0 0.0
    %1718 = vmatprep.subr.mxu0 0.0
    %1719 = vmatpush1.msra.mxu0 0.0
    %1720 = vmatprep.subr.mxu0 0.0
    %1721 = vmatpush1.msra.mxu0 0.0
    %1722 = vmatprep.subr.mxu0 0.0
    %1723 = vmatpush1.msra.mxu0 0.0
    %1724 = vmatprep.subr.mxu0 0.0
    %1725 = vmatpush1.msra.mxu0 0.0
    %1726 = vmatprep.subr.mxu0 0.0
    %1727 = vmatpush1.msra.mxu0 0.0
    %1728 = vmatprep.subr.mxu0 0.0
    %1729 = vmatpush1.msra.mxu0 0.0
    %1730 = vmatprep.subr.mxu0 0.0
    %1731 = vmatpush1.msra.mxu0 0.0
    %1732 = vmatprep.subr.mxu0 0.0
    %1733 = vmatpush1.msra.mxu0 0.0
    %1734 = vmatprep.subr.mxu0 0.0
    %1735 = vmatpush1.msra.mxu0 0.0
    %1736 = vmatprep.subr.mxu0 0.0
    %1737 = vmatpush1.msra.mxu0 0.0
    %1738 = vmatprep.subr.mxu0 0.0
    %1739 = vmatpush1.msra.mxu0 0.0
    %1740 = vmatprep.subr.mxu0 0.0
    %1741 = vmatpush1.msra.mxu0 0.0
    %1742 = vmatprep.subr.mxu0 0.0
    %1743 = vmatpush1.msra.mxu0 0.0
    %1744 = vmatprep.subr.mxu0 0.0
    %1745 = vmatpush1.msra.mxu0 0.0
    %1746 = vmatprep.subr.mxu0 0.0
    %1747 = vmatpush1.msra.mxu0 0.0
    %1748 = vmatprep.mubr.f32.mxu0 0.0
    %1749 = vmatmul.mubr.f32.gmra.mrb[0].mxu0 %v1384
    %v1750 = vpop.f32.mrb[0].mxu0
    %v1751 = vadd.f32 0.0, %v1750
    %v1752 = vpop.f32.mrb[0].mxu0
    %1753 = vdwg.mxu0
    %1755 = vrot.lane.b32.xlu0 %v1751, 64
    %v1756 = vpop.permute.xlu0 %1755
    %1758 = vmatprep.subr.mxu0 0.0
    %1759 = vmatpush1.msra.mxu0 %v1751
    %1760 = vmatprep.subr.mxu0 0.0
    %1761 = vmatpush1.msra.mxu0 %v1756
    %1762 = vmatprep.subr.mxu0 0.0
    %1763 = vmatpush1.msra.mxu0 0.0
    %1764 = vmatprep.subr.mxu0 0.0
    %1765 = vmatpush1.msra.mxu0 0.0
    %1766 = vmatprep.subr.mxu0 0.0
    %1767 = vmatpush1.msra.mxu0 0.0
    %1768 = vmatprep.subr.mxu0 0.0
    %1769 = vmatpush1.msra.mxu0 0.0
    %1770 = vmatprep.subr.mxu0 0.0
    %1771 = vmatpush1.msra.mxu0 0.0
    %1772 = vmatprep.subr.mxu0 0.0
    %1773 = vmatpush1.msra.mxu0 0.0
    %1774 = vmatprep.subr.mxu0 0.0
    %1775 = vmatpush1.msra.mxu0 0.0
    %1776 = vmatprep.subr.mxu0 0.0
    %1777 = vmatpush1.msra.mxu0 0.0
    %1778 = vmatprep.subr.mxu0 0.0
    %1779 = vmatpush1.msra.mxu0 0.0
    %1780 = vmatprep.subr.mxu0 0.0
    %1781 = vmatpush1.msra.mxu0 0.0
    %1782 = vmatprep.subr.mxu0 0.0
    %1783 = vmatpush1.msra.mxu0 0.0
    %1784 = vmatprep.subr.mxu0 0.0
    %1785 = vmatpush1.msra.mxu0 0.0
    %1786 = vmatprep.subr.mxu0 0.0
    %1787 = vmatpush1.msra.mxu0 0.0
    %1788 = vmatprep.subr.mxu0 0.0
    %1789 = vmatpush1.msra.mxu0 0.0
    %1790 = vmatprep.subr.mxu0 0.0
    %1791 = vmatpush1.msra.mxu0 0.0
    %1792 = vmatprep.subr.mxu0 0.0
    %1793 = vmatpush1.msra.mxu0 0.0
    %1794 = vmatprep.subr.mxu0 0.0
    %1795 = vmatpush1.msra.mxu0 0.0
    %1796 = vmatprep.subr.mxu0 0.0
    %1797 = vmatpush1.msra.mxu0 0.0
    %1798 = vmatprep.subr.mxu0 0.0
    %1799 = vmatpush1.msra.mxu0 0.0
    %1800 = vmatprep.subr.mxu0 0.0
    %1801 = vmatpush1.msra.mxu0 0.0
    %1802 = vmatprep.subr.mxu0 0.0
    %1803 = vmatpush1.msra.mxu0 0.0
    %1804 = vmatprep.subr.mxu0 0.0
    %1805 = vmatpush1.msra.mxu0 0.0
    %1806 = vmatprep.subr.mxu0 0.0
    %1807 = vmatpush1.msra.mxu0 0.0
    %1808 = vmatprep.subr.mxu0 0.0
    %1809 = vmatpush1.msra.mxu0 0.0
    %1810 = vmatprep.subr.mxu0 0.0
    %1811 = vmatpush1.msra.mxu0 0.0
    %1812 = vmatprep.subr.mxu0 0.0
    %1813 = vmatpush1.msra.mxu0 0.0
    %1814 = vmatprep.subr.mxu0 0.0
    %1815 = vmatpush1.msra.mxu0 0.0
    %1816 = vmatprep.subr.mxu0 0.0
    %1817 = vmatpush1.msra.mxu0 0.0
    %1818 = vmatprep.subr.mxu0 0.0
    %1819 = vmatpush1.msra.mxu0 0.0
    %1820 = vmatprep.subr.mxu0 0.0
    %1821 = vmatpush1.msra.mxu0 0.0
    %1822 = vmatprep.mubr.f32.mxu0 0.0
    %1823 = vmatmul.mubr.f32.gmra.mrb[0].mxu0 %v292
    %v1824 = vpop.f32.mrb[0].mxu0
    %v1825 = vadd.f32 %v69, %v1824
    %v1826 = vpop.f32.mrb[0].mxu0
    %1827 = vmatprep.mubr.f32.mxu0 0.0
    %1828 = vmatmul.mubr.f32.gmra.mrb[0].mxu0 %v295
    %v1829 = vpop.f32.mrb[0].mxu0
    %v1830 = vadd.f32 %v69, %v1829
    %v1831 = vpop.f32.mrb[0].mxu0
    %1832 = vmatprep.mubr.f32.mxu0 0.0
    %1833 = vmatmul.mubr.f32.gmra.mrb[0].mxu0 %v298
    %v1834 = vpop.f32.mrb[0].mxu0
    %v1835 = vadd.f32 %v69, %v1834
    %v1836 = vpop.f32.mrb[0].mxu0
    %1837 = vdwg.mxu0
    %v1838 = vtanh.pop %v1825
    %v1839 = vtanh.pop %v1830
    %v1840 = vtanh.pop %v1835
    %v1842 = vsel %vm383, %v1838, 0
    %v1845 = vsel %vm383, %v1839, 0
    %v1848 = vsel %vm383, %v1840, 0
    %1850 = vmatprep.subr.mxu0 0.0
    %1851 = vmatpush1.msra.mxu0 %v36
    %1852 = vmatprep.subr.mxu0 0.0
    %1853 = vmatpush1.msra.mxu0 %v37
    %1854 = vmatprep.subr.mxu0 0.0
    %1855 = vmatpush1.msra.mxu0 %v38
    %1856 = vmatprep.subr.mxu0 0.0
    %1857 = vmatpush1.msra.mxu0 %v39
    %1858 = vmatprep.subr.mxu0 0.0
    %1859 = vmatpush1.msra.mxu0 %v40
    %1860 = vmatprep.subr.mxu0 0.0
    %1861 = vmatpush1.msra.mxu0 %v41
    %1862 = vmatprep.subr.mxu0 0.0
    %1863 = vmatpush1.msra.mxu0 %v42
    %1864 = vmatprep.subr.mxu0 0.0
    %1865 = vmatpush1.msra.mxu0 %v43
    %1866 = vmatprep.subr.mxu0 0.0
    %1867 = vmatpush1.msra.mxu0 0.0
    %1868 = vmatprep.subr.mxu0 0.0
    %1869 = vmatpush1.msra.mxu0 0.0
    %1870 = vmatprep.subr.mxu0 0.0
    %1871 = vmatpush1.msra.mxu0 0.0
    %1872 = vmatprep.subr.mxu0 0.0
    %1873 = vmatpush1.msra.mxu0 0.0
    %1874 = vmatprep.subr.mxu0 0.0
    %1875 = vmatpush1.msra.mxu0 0.0
    %1876 = vmatprep.subr.mxu0 0.0
    %1877 = vmatpush1.msra.mxu0 0.0
    %1878 = vmatprep.subr.mxu0 0.0
    %1879 = vmatpush1.msra.mxu0 0.0
    %1880 = vmatprep.subr.mxu0 0.0
    %1881 = vmatpush1.msra.mxu0 0.0
    %1882 = vmatprep.subr.mxu0 0.0
    %1883 = vmatpush1.msra.mxu0 0.0
    %1884 = vmatprep.subr.mxu0 0.0
    %1885 = vmatpush1.msra.mxu0 0.0
    %1886 = vmatprep.subr.mxu0 0.0
    %1887 = vmatpush1.msra.mxu0 0.0
    %1888 = vmatprep.subr.mxu0 0.0
    %1889 = vmatpush1.msra.mxu0 0.0
    %1890 = vmatprep.subr.mxu0 0.0
    %1891 = vmatpush1.msra.mxu0 0.0
    %1892 = vmatprep.subr.mxu0 0.0
    %1893 = vmatpush1.msra.mxu0 0.0
    %1894 = vmatprep.subr.mxu0 0.0
    %1895 = vmatpush1.msra.mxu0 0.0
    %1896 = vmatprep.subr.mxu0 0.0
    %1897 = vmatpush1.msra.mxu0 0.0
    %1898 = vmatprep.subr.mxu0 0.0
    %1899 = vmatpush1.msra.mxu0 0.0
    %1900 = vmatprep.subr.mxu0 0.0
    %1901 = vmatpush1.msra.mxu0 0.0
    %1902 = vmatprep.subr.mxu0 0.0
    %1903 = vmatpush1.msra.mxu0 0.0
    %1904 = vmatprep.subr.mxu0 0.0
    %1905 = vmatpush1.msra.mxu0 0.0
    %1906 = vmatprep.subr.mxu0 0.0
    %1907 = vmatpush1.msra.mxu0 0.0
    %1908 = vmatprep.subr.mxu0 0.0
    %1909 = vmatpush1.msra.mxu0 0.0
    %1910 = vmatprep.subr.mxu0 0.0
    %1911 = vmatpush1.msra.mxu0 0.0
    %1912 = vmatprep.subr.mxu0 0.0
    %1913 = vmatpush1.msra.mxu0 0.0
    %1914 = vmatprep.mubr.f32.mxu0 0.0
    %1915 = vmatmul.mubr.f32.gmra.mrb[0].mxu0 %v1842
    %v1916 = vpop.f32.mrb[0].mxu0
    %v1917 = vadd.f32 %v74, %v1916
    %v1918 = vpop.f32.mrb[0].mxu0
    %1919 = vmatprep.mubr.f32.mxu0 0.0
    %1920 = vmatmul.mubr.f32.gmra.mrb[0].mxu0 %v1845
    %v1921 = vpop.f32.mrb[0].mxu0
    %v1922 = vadd.f32 %v74, %v1921
    %v1923 = vpop.f32.mrb[0].mxu0
    %1924 = vmatprep.mubr.f32.mxu0 0.0
    %1925 = vmatmul.mubr.f32.gmra.mrb[0].mxu0 %v1848
    %v1926 = vpop.f32.mrb[0].mxu0
    %v1927 = vadd.f32 %v74, %v1926
    %v1928 = vpop.f32.mrb[0].mxu0
    %1929 = vdwg.mxu0
    %v1930 = vtanh.pop %v1917
    %v1931 = vtanh.pop %v1922
    %v1932 = vtanh.pop %v1927
    %v1933 = vmul.f32 %v1930, %v127
    %v1934 = vmul.f32 %v1931, %v128
    %v1935 = vmul.f32 %v1932, %v129
    %1936 = vmatprep.subr.mxu0 0.0
    %1937 = vmatpush1.msra.mxu0 %v1933
    %1938 = vmatprep.subr.mxu0 0.0
    %1939 = vmatpush1.msra.mxu0 %v1934
    %1940 = vmatprep.subr.mxu0 0.0
    %1941 = vmatpush1.msra.mxu0 %v1935
    %1942 = vmatprep.subr.mxu0 0.0
    %1943 = vmatpush1.msra.mxu0 0.0
    %1944 = vmatprep.subr.mxu0 0.0
    %1945 = vmatpush1.msra.mxu0 0.0
    %1946 = vmatprep.subr.mxu0 0.0
    %1947 = vmatpush1.msra.mxu0 0.0
    %1948 = vmatprep.subr.mxu0 0.0
    %1949 = vmatpush1.msra.mxu0 0.0
    %1950 = vmatprep.subr.mxu0 0.0
    %1951 = vmatpush1.msra.mxu0 0.0
    %1952 = vmatprep.subr.mxu0 0.0
    %1953 = vmatpush1.msra.mxu0 0.0
    %1954 = vmatprep.subr.mxu0 0.0
    %1955 = vmatpush1.msra.mxu0 0.0
    %1956 = vmatprep.subr.mxu0 0.0
    %1957 = vmatpush1.msra.mxu0 0.0
    %1958 = vmatprep.subr.mxu0 0.0
    %1959 = vmatpush1.msra.mxu0 0.0
    %1960 = vmatprep.subr.mxu0 0.0
    %1961 = vmatpush1.msra.mxu0 0.0
    %1962 = vmatprep.subr.mxu0 0.0
    %1963 = vmatpush1.msra.mxu0 0.0
    %1964 = vmatprep.subr.mxu0 0.0
    %1965 = vmatpush1.msra.mxu0 0.0
    %1966 = vmatprep.subr.mxu0 0.0
    %1967 = vmatpush1.msra.mxu0 0.0
    %1968 = vmatprep.subr.mxu0 0.0
    %1969 = vmatpush1.msra.mxu0 0.0
    %1970 = vmatprep.subr.mxu0 0.0
    %1971 = vmatpush1.msra.mxu0 0.0
    %1972 = vmatprep.subr.mxu0 0.0
    %1973 = vmatpush1.msra.mxu0 0.0
    %1974 = vmatprep.subr.mxu0 0.0
    %1975 = vmatpush1.msra.mxu0 0.0
    %1976 = vmatprep.subr.mxu0 0.0
    %1977 = vmatpush1.msra.mxu0 0.0
    %1978 = vmatprep.subr.mxu0 0.0
    %1979 = vmatpush1.msra.mxu0 0.0
    %1980 = vmatprep.subr.mxu0 0.0
    %1981 = vmatpush1.msra.mxu0 0.0
    %1982 = vmatprep.subr.mxu0 0.0
    %1983 = vmatpush1.msra.mxu0 0.0
    %1984 = vmatprep.subr.mxu0 0.0
    %1985 = vmatpush1.msra.mxu0 0.0
    %1986 = vmatprep.subr.mxu0 0.0
    %1987 = vmatpush1.msra.mxu0 0.0
    %1988 = vmatprep.subr.mxu0 0.0
    %1989 = vmatpush1.msra.mxu0 0.0
    %1990 = vmatprep.subr.mxu0 0.0
    %1991 = vmatpush1.msra.mxu0 0.0
    %1992 = vmatprep.subr.mxu0 0.0
    %1993 = vmatpush1.msra.mxu0 0.0
    %1994 = vmatprep.subr.mxu0 0.0
    %1995 = vmatpush1.msra.mxu0 0.0
    %1996 = vmatprep.subr.mxu0 0.0
    %1997 = vmatpush1.msra.mxu0 0.0
    %1998 = vmatprep.subr.mxu0 0.0
    %1999 = vmatpush1.msra.mxu0 0.0
    %2000 = vmatprep.mubr.f32.mxu0 0.0
    %2001 = vmatmul.mubr.f32.gmra.mrb[0].mxu0 %v481
    %v2002 = vpop.f32.mrb[0].mxu0
    %v2003 = vadd.f32 0.0, %v2002
    %v2004 = vpop.f32.mrb[0].mxu0
    %2005 = vdwg.mxu0
    %2007 = vrot.lane.b32.xlu0 %v2003, 96
    %v2008 = vpop.permute.xlu0 %2007
    %v2010 = vadd.f32 %v2003, %v2008
    %v2012 = vsel %vm126, %v2010, 0
    %2014 = vmatprep.subr.mxu0 0.0
    %2015 = vmatpush1.msra.mxu0 %v44
    %2016 = vmatprep.subr.mxu0 0.0
    %2017 = vmatpush1.msra.mxu0 %v45
    %2018 = vmatprep.subr.mxu0 0.0
    %2019 = vmatpush1.msra.mxu0 %v46
    %2020 = vmatprep.subr.mxu0 0.0
    %2021 = vmatpush1.msra.mxu0 %v47
    %2022 = vmatprep.subr.mxu0 0.0
    %2023 = vmatpush1.msra.mxu0 0.0
    %2024 = vmatprep.subr.mxu0 0.0
    %2025 = vmatpush1.msra.mxu0 0.0
    %2026 = vmatprep.subr.mxu0 0.0
    %2027 = vmatpush1.msra.mxu0 0.0
    %2028 = vmatprep.subr.mxu0 0.0
    %2029 = vmatpush1.msra.mxu0 0.0
    %2030 = vmatprep.subr.mxu0 0.0
    %2031 = vmatpush1.msra.mxu0 0.0
    %2032 = vmatprep.subr.mxu0 0.0
    %2033 = vmatpush1.msra.mxu0 0.0
    %2034 = vmatprep.subr.mxu0 0.0
    %2035 = vmatpush1.msra.mxu0 0.0
    %2036 = vmatprep.subr.mxu0 0.0
    %2037 = vmatpush1.msra.mxu0 0.0
    %2038 = vmatprep.subr.mxu0 0.0
    %2039 = vmatpush1.msra.mxu0 0.0
    %2040 = vmatprep.subr.mxu0 0.0
    %2041 = vmatpush1.msra.mxu0 0.0
    %2042 = vmatprep.subr.mxu0 0.0
    %2043 = vmatpush1.msra.mxu0 0.0
    %2044 = vmatprep.subr.mxu0 0.0
    %2045 = vmatpush1.msra.mxu0 0.0
    %2046 = vmatprep.subr.mxu0 0.0
    %2047 = vmatpush1.msra.mxu0 0.0
    %2048 = vmatprep.subr.mxu0 0.0
    %2049 = vmatpush1.msra.mxu0 0.0
    %2050 = vmatprep.subr.mxu0 0.0
    %2051 = vmatpush1.msra.mxu0 0.0
    %2052 = vmatprep.subr.mxu0 0.0
    %2053 = vmatpush1.msra.mxu0 0.0
    %2054 = vmatprep.subr.mxu0 0.0
    %2055 = vmatpush1.msra.mxu0 0.0
    %2056 = vmatprep.subr.mxu0 0.0
    %2057 = vmatpush1.msra.mxu0 0.0
    %2058 = vmatprep.subr.mxu0 0.0
    %2059 = vmatpush1.msra.mxu0 0.0
    %2060 = vmatprep.subr.mxu0 0.0
    %2061 = vmatpush1.msra.mxu0 0.0
    %2062 = vmatprep.subr.mxu0 0.0
    %2063 = vmatpush1.msra.mxu0 0.0
    %2064 = vmatprep.subr.mxu0 0.0
    %2065 = vmatpush1.msra.mxu0 0.0
    %2066 = vmatprep.subr.mxu0 0.0
    %2067 = vmatpush1.msra.mxu0 0.0
    %2068 = vmatprep.subr.mxu0 0.0
    %2069 = vmatpush1.msra.mxu0 0.0
    %2070 = vmatprep.subr.mxu0 0.0
    %2071 = vmatpush1.msra.mxu0 0.0
    %2072 = vmatprep.subr.mxu0 0.0
    %2073 = vmatpush1.msra.mxu0 0.0
    %2074 = vmatprep.subr.mxu0 0.0
    %2075 = vmatpush1.msra.mxu0 0.0
    %2076 = vmatprep.subr.mxu0 0.0
    %2077 = vmatpush1.msra.mxu0 0.0
    %2078 = vmatprep.mubr.f32.mxu0 0.0
    %2079 = vmatmul.mubr.f32.gmra.mrb[0].mxu0 %v2012
    %v2080 = vpop.f32.mrb[0].mxu0
    %v2081 = vadd.f32 0.0, %v2080
    %v2082 = vpop.f32.mrb[0].mxu0
    %2083 = vdwg.mxu0
    %v2084 = vadd.f32 %v1683, %v2081
    %v2085 = vxor.u32 %v2084, 2147483648
    %v2086 = vmul.f32 %v2085, 1.442695
    %v2087 = vpow.pop %v2086
    %v2088 = vadd.f32 %v2087, 1.0
    %v2089 = vrcp.pop %v2088
    %v2090 = vmul.f32 1.0, %v2089
    %2092 = vrot.lane.b32.xlu0 %v2081, 64
    %v2093 = vpop.permute.xlu0 %2092
    %v2095 = vmul.f32 %v2090, %v2093
    %2097 = vrot.lane.b32.xlu0 %v2095, 64
    %v2098 = vpop.permute.xlu0 %2097
    %v2100 = vadd.f32 %v1683, %v2098
    %v2101 = vtanh.pop %v2100
    %v2102 = vsub.f32 1.0, %v2090
    %2104 = vrot.lane.b32.xlu0 %v2101, 96
    %v2105 = vpop.permute.xlu0 %2104
    %v2107 = vmul.f32 %v2102, %v2105
    %v2108 = vmul.f32 %v2090, %v1380
    %v2109 = vadd.f32 %v2107, %v2108
    %2111 = vrot.lane.b32.xlu0 %v2109, 96
    %v2112 = vpop.permute.xlu0 %2111
    %v2113 = vsel %vm126, %v2112, 0
    %2115 = vmatprep.subr.mxu0 0.0
    %2116 = vmatpush1.msra.mxu0 %v49
    %2117 = vmatprep.subr.mxu0 0.0
    %2118 = vmatpush1.msra.mxu0 %v50
    %2119 = vmatprep.subr.mxu0 0.0
    %2120 = vmatpush1.msra.mxu0 %v51
    %2121 = vmatprep.subr.mxu0 0.0
    %2122 = vmatpush1.msra.mxu0 %v52
    %2123 = vmatprep.subr.mxu0 0.0
    %2124 = vmatpush1.msra.mxu0 0.0
    %2125 = vmatprep.subr.mxu0 0.0
    %2126 = vmatpush1.msra.mxu0 0.0
    %2127 = vmatprep.subr.mxu0 0.0
    %2128 = vmatpush1.msra.mxu0 0.0
    %2129 = vmatprep.subr.mxu0 0.0
    %2130 = vmatpush1.msra.mxu0 0.0
    %2131 = vmatprep.subr.mxu0 0.0
    %2132 = vmatpush1.msra.mxu0 0.0
    %2133 = vmatprep.subr.mxu0 0.0
    %2134 = vmatpush1.msra.mxu0 0.0
    %2135 = vmatprep.subr.mxu0 0.0
    %2136 = vmatpush1.msra.mxu0 0.0
    %2137 = vmatprep.subr.mxu0 0.0
    %2138 = vmatpush1.msra.mxu0 0.0
    %2139 = vmatprep.subr.mxu0 0.0
    %2140 = vmatpush1.msra.mxu0 0.0
    %2141 = vmatprep.subr.mxu0 0.0
    %2142 = vmatpush1.msra.mxu0 0.0
    %2143 = vmatprep.subr.mxu0 0.0
    %2144 = vmatpush1.msra.mxu0 0.0
    %2145 = vmatprep.subr.mxu0 0.0
    %2146 = vmatpush1.msra.mxu0 0.0
    %2147 = vmatprep.subr.mxu0 0.0
    %2148 = vmatpush1.msra.mxu0 0.0
    %2149 = vmatprep.subr.mxu0 0.0
    %2150 = vmatpush1.msra.mxu0 0.0
    %2151 = vmatprep.subr.mxu0 0.0
    %2152 = vmatpush1.msra.mxu0 0.0
    %2153 = vmatprep.subr.mxu0 0.0
    %2154 = vmatpush1.msra.mxu0 0.0
    %2155 = vmatprep.subr.mxu0 0.0
    %2156 = vmatpush1.msra.mxu0 0.0
    %2157 = vmatprep.subr.mxu0 0.0
    %2158 = vmatpush1.msra.mxu0 0.0
    %2159 = vmatprep.subr.mxu0 0.0
    %2160 = vmatpush1.msra.mxu0 0.0
    %2161 = vmatprep.subr.mxu0 0.0
    %2162 = vmatpush1.msra.mxu0 0.0
    %2163 = vmatprep.subr.mxu0 0.0
    %2164 = vmatpush1.msra.mxu0 0.0
    %2165 = vmatprep.subr.mxu0 0.0
    %2166 = vmatpush1.msra.mxu0 0.0
    %2167 = vmatprep.subr.mxu0 0.0
    %2168 = vmatpush1.msra.mxu0 0.0
    %2169 = vmatprep.subr.mxu0 0.0
    %2170 = vmatpush1.msra.mxu0 0.0
    %2171 = vmatprep.subr.mxu0 0.0
    %2172 = vmatpush1.msra.mxu0 0.0
    %2173 = vmatprep.subr.mxu0 0.0
    %2174 = vmatpush1.msra.mxu0 0.0
    %2175 = vmatprep.subr.mxu0 0.0
    %2176 = vmatpush1.msra.mxu0 0.0
    %2177 = vmatprep.subr.mxu0 0.0
    %2178 = vmatpush1.msra.mxu0 0.0
    %2179 = vmatprep.mubr.f32.mxu0 0.0
    %2180 = vmatmul.mubr.f32.gmra.mrb[0].mxu0 %v2113
    %v2181 = vpop.f32.mrb[0].mxu0
    %v2182 = vadd.f32 %v79, %v2181
    %v2183 = vpop.f32.mrb[0].mxu0
    %2184 = vdwg.mxu0
    %v2185 = vmax.f32 %v2182, 0.0
    %v2187 = vsel %vm126, %v2185, 0
    %2189 = vmatprep.subr.mxu0 0.0
    %2190 = vmatpush1.msra.mxu0 %v53
    %2191 = vmatprep.subr.mxu0 0.0
    %2192 = vmatpush1.msra.mxu0 %v54
    %2193 = vmatprep.subr.mxu0 0.0
    %2194 = vmatpush1.msra.mxu0 %v55
    %2195 = vmatprep.subr.mxu0 0.0
    %2196 = vmatpush1.msra.mxu0 %v56
    %2197 = vmatprep.subr.mxu0 0.0
    %2198 = vmatpush1.msra.mxu0 0.0
    %2199 = vmatprep.subr.mxu0 0.0
    %2200 = vmatpush1.msra.mxu0 0.0
    %2201 = vmatprep.subr.mxu0 0.0
    %2202 = vmatpush1.msra.mxu0 0.0
    %2203 = vmatprep.subr.mxu0 0.0
    %2204 = vmatpush1.msra.mxu0 0.0
    %2205 = vmatprep.subr.mxu0 0.0
    %2206 = vmatpush1.msra.mxu0 0.0
    %2207 = vmatprep.subr.mxu0 0.0
    %2208 = vmatpush1.msra.mxu0 0.0
    %2209 = vmatprep.subr.mxu0 0.0
    %2210 = vmatpush1.msra.mxu0 0.0
    %2211 = vmatprep.subr.mxu0 0.0
    %2212 = vmatpush1.msra.mxu0 0.0
    %2213 = vmatprep.subr.mxu0 0.0
    %2214 = vmatpush1.msra.mxu0 0.0
    %2215 = vmatprep.subr.mxu0 0.0
    %2216 = vmatpush1.msra.mxu0 0.0
    %2217 = vmatprep.subr.mxu0 0.0
    %2218 = vmatpush1.msra.mxu0 0.0
    %2219 = vmatprep.subr.mxu0 0.0
    %2220 = vmatpush1.msra.mxu0 0.0
    %2221 = vmatprep.subr.mxu0 0.0
    %2222 = vmatpush1.msra.mxu0 0.0
    %2223 = vmatprep.subr.mxu0 0.0
    %2224 = vmatpush1.msra.mxu0 0.0
    %2225 = vmatprep.subr.mxu0 0.0
    %2226 = vmatpush1.msra.mxu0 0.0
    %2227 = vmatprep.subr.mxu0 0.0
    %2228 = vmatpush1.msra.mxu0 0.0
    %2229 = vmatprep.subr.mxu0 0.0
    %2230 = vmatpush1.msra.mxu0 0.0
    %2231 = vmatprep.subr.mxu0 0.0
    %2232 = vmatpush1.msra.mxu0 0.0
    %2233 = vmatprep.subr.mxu0 0.0
    %2234 = vmatpush1.msra.mxu0 0.0
    %2235 = vmatprep.subr.mxu0 0.0
    %2236 = vmatpush1.msra.mxu0 0.0
    %2237 = vmatprep.subr.mxu0 0.0
    %2238 = vmatpush1.msra.mxu0 0.0
    %2239 = vmatprep.subr.mxu0 0.0
    %2240 = vmatpush1.msra.mxu0 0.0
    %2241 = vmatprep.subr.mxu0 0.0
    %2242 = vmatpush1.msra.mxu0 0.0
    %2243 = vmatprep.subr.mxu0 0.0
    %2244 = vmatpush1.msra.mxu0 0.0
    %2245 = vmatprep.subr.mxu0 0.0
    %2246 = vmatpush1.msra.mxu0 0.0
    %2247 = vmatprep.subr.mxu0 0.0
    %2248 = vmatpush1.msra.mxu0 0.0
    %2249 = vmatprep.subr.mxu0 0.0
    %2250 = vmatpush1.msra.mxu0 0.0
    %2251 = vmatprep.subr.mxu0 0.0
    %2252 = vmatpush1.msra.mxu0 0.0
    %2253 = vmatprep.mubr.f32.mxu0 0.0
    %2254 = vmatmul.mubr.f32.gmra.mrb[0].mxu0 %v2187
    %v2255 = vpop.f32.mrb[0].mxu0
    %v2256 = vadd.f32 %v84, %v2255
    %v2257 = vpop.f32.mrb[0].mxu0
    %2258 = vdwg.mxu0
    %v2259 = vmax.f32 %v2256, 0.0
    %v2261 = vsel %vm126, %v2259, 0
    %2263 = vmatprep.subr.mxu0 0.0
    %2264 = vmatpush1.msra.mxu0 %v57
    %2265 = vmatprep.subr.mxu0 0.0
    %2266 = vmatpush1.msra.mxu0 %v58
    %2267 = vmatprep.subr.mxu0 0.0
    %2268 = vmatpush1.msra.mxu0 %v59
    %2269 = vmatprep.subr.mxu0 0.0
    %2270 = vmatpush1.msra.mxu0 %v60
    %2271 = vmatprep.subr.mxu0 0.0
    %2272 = vmatpush1.msra.mxu0 0.0
    %2273 = vmatprep.subr.mxu0 0.0
    %2274 = vmatpush1.msra.mxu0 0.0
    %2275 = vmatprep.subr.mxu0 0.0
    %2276 = vmatpush1.msra.mxu0 0.0
    %2277 = vmatprep.subr.mxu0 0.0
    %2278 = vmatpush1.msra.mxu0 0.0
    %2279 = vmatprep.subr.mxu0 0.0
    %2280 = vmatpush1.msra.mxu0 0.0
    %2281 = vmatprep.subr.mxu0 0.0
    %2282 = vmatpush1.msra.mxu0 0.0
    %2283 = vmatprep.subr.mxu0 0.0
    %2284 = vmatpush1.msra.mxu0 0.0
    %2285 = vmatprep.subr.mxu0 0.0
    %2286 = vmatpush1.msra.mxu0 0.0
    %2287 = vmatprep.subr.mxu0 0.0
    %2288 = vmatpush1.msra.mxu0 0.0
    %2289 = vmatprep.subr.mxu0 0.0
    %2290 = vmatpush1.msra.mxu0 0.0
    %2291 = vmatprep.subr.mxu0 0.0
    %2292 = vmatpush1.msra.mxu0 0.0
    %2293 = vmatprep.subr.mxu0 0.0
    %2294 = vmatpush1.msra.mxu0 0.0
    %2295 = vmatprep.subr.mxu0 0.0
    %2296 = vmatpush1.msra.mxu0 0.0
    %2297 = vmatprep.subr.mxu0 0.0
    %2298 = vmatpush1.msra.mxu0 0.0
    %2299 = vmatprep.subr.mxu0 0.0
    %2300 = vmatpush1.msra.mxu0 0.0
    %2301 = vmatprep.subr.mxu0 0.0
    %2302 = vmatpush1.msra.mxu0 0.0
    %2303 = vmatprep.subr.mxu0 0.0
    %2304 = vmatpush1.msra.mxu0 0.0
    %2305 = vmatprep.subr.mxu0 0.0
    %2306 = vmatpush1.msra.mxu0 0.0
    %2307 = vmatprep.subr.mxu0 0.0
    %2308 = vmatpush1.msra.mxu0 0.0
    %2309 = vmatprep.subr.mxu0 0.0
    %2310 = vmatpush1.msra.mxu0 0.0
    %2311 = vmatprep.subr.mxu0 0.0
    %2312 = vmatpush1.msra.mxu0 0.0
    %2313 = vmatprep.subr.mxu0 0.0
    %2314 = vmatpush1.msra.mxu0 0.0
    %2315 = vmatprep.subr.mxu0 0.0
    %2316 = vmatpush1.msra.mxu0 0.0
    %2317 = vmatprep.subr.mxu0 0.0
    %2318 = vmatpush1.msra.mxu0 0.0
    %2319 = vmatprep.subr.mxu0 0.0
    %2320 = vmatpush1.msra.mxu0 0.0
    %2321 = vmatprep.subr.mxu0 0.0
    %2322 = vmatpush1.msra.mxu0 0.0
    %2323 = vmatprep.subr.mxu0 0.0
    %2324 = vmatpush1.msra.mxu0 0.0
    %2325 = vmatprep.subr.mxu0 0.0
    %2326 = vmatpush1.msra.mxu0 0.0
    %2327 = vmatprep.mubr.f32.mxu0 0.0
    %2328 = vmatmul.mubr.f32.gmra.mrb[0].mxu0 %v2261
    %v2329 = vpop.f32.mrb[0].mxu0
    %v2330 = vadd.f32 0.0, %v2329
    %v2331 = vpop.f32.mrb[0].mxu0
    %2332 = vdwg.mxu0
    %v2333 = vadd.f32 %v1605, %v2330
    %v2334 = vadd.f32 %v2333, %v89
    %2336 = vrot.lane.b32.xlu0 %v2334, 8
    %v2337 = vpop.permute.xlu0 %2336
    %vm2339 = vcmask 97344
    %2340 = vst.msk [vmem:[%s3] sm:$0xff] %vm2339, %v2337
    %2341 = vmatprep.subr.mxu0 0.0
    %2342 = vmatpush1.msra.mxu0 %v61
    %2343 = vmatprep.subr.mxu0 0.0
    %2344 = vmatpush1.msra.mxu0 %v62
    %2345 = vmatprep.subr.mxu0 0.0
    %2346 = vmatpush1.msra.mxu0 %v63
    %2347 = vmatprep.subr.mxu0 0.0
    %2348 = vmatpush1.msra.mxu0 %v64
    %2349 = vmatprep.subr.mxu0 0.0
    %2350 = vmatpush1.msra.mxu0 0.0
    %2351 = vmatprep.subr.mxu0 0.0
    %2352 = vmatpush1.msra.mxu0 0.0
    %2353 = vmatprep.subr.mxu0 0.0
    %2354 = vmatpush1.msra.mxu0 0.0
    %2355 = vmatprep.subr.mxu0 0.0
    %2356 = vmatpush1.msra.mxu0 0.0
    %2357 = vmatprep.subr.mxu0 0.0
    %2358 = vmatpush1.msra.mxu0 0.0
    %2359 = vmatprep.subr.mxu0 0.0
    %2360 = vmatpush1.msra.mxu0 0.0
    %2361 = vmatprep.subr.mxu0 0.0
    %2362 = vmatpush1.msra.mxu0 0.0
    %2363 = vmatprep.subr.mxu0 0.0
    %2364 = vmatpush1.msra.mxu0 0.0
    %2365 = vmatprep.subr.mxu0 0.0
    %2366 = vmatpush1.msra.mxu0 0.0
    %2367 = vmatprep.subr.mxu0 0.0
    %2368 = vmatpush1.msra.mxu0 0.0
    %2369 = vmatprep.subr.mxu0 0.0
    %2370 = vmatpush1.msra.mxu0 0.0
    %2371 = vmatprep.subr.mxu0 0.0
    %2372 = vmatpush1.msra.mxu0 0.0
    %2373 = vmatprep.subr.mxu0 0.0
    %2374 = vmatpush1.msra.mxu0 0.0
    %2375 = vmatprep.subr.mxu0 0.0
    %2376 = vmatpush1.msra.mxu0 0.0
    %2377 = vmatprep.subr.mxu0 0.0
    %2378 = vmatpush1.msra.mxu0 0.0
    %2379 = vmatprep.subr.mxu0 0.0
    %2380 = vmatpush1.msra.mxu0 0.0
    %2381 = vmatprep.subr.mxu0 0.0
    %2382 = vmatpush1.msra.mxu0 0.0
    %2383 = vmatprep.subr.mxu0 0.0
    %2384 = vmatpush1.msra.mxu0 0.0
    %2385 = vmatprep.subr.mxu0 0.0
    %2386 = vmatpush1.msra.mxu0 0.0
    %2387 = vmatprep.subr.mxu0 0.0
    %2388 = vmatpush1.msra.mxu0 0.0
    %2389 = vmatprep.subr.mxu0 0.0
    %2390 = vmatpush1.msra.mxu0 0.0
    %2391 = vmatprep.subr.mxu0 0.0
    %2392 = vmatpush1.msra.mxu0 0.0
    %2393 = vmatprep.subr.mxu0 0.0
    %2394 = vmatpush1.msra.mxu0 0.0
    %2395 = vmatprep.subr.mxu0 0.0
    %2396 = vmatpush1.msra.mxu0 0.0
    %2397 = vmatprep.subr.mxu0 0.0
    %2398 = vmatpush1.msra.mxu0 0.0
    %2399 = vmatprep.subr.mxu0 0.0
    %2400 = vmatpush1.msra.mxu0 0.0
    %2401 = vmatprep.subr.mxu0 0.0
    %2402 = vmatpush1.msra.mxu0 0.0
    %2403 = vmatprep.subr.mxu0 0.0
    %2404 = vmatpush1.msra.mxu0 0.0
    %2405 = vmatprep.mubr.f32.mxu0 0.0
    %2406 = vmatmul.mubr.f32.gmra.mrb[0].mxu0 %v2261
    %v2407 = vpop.f32.mrb[0].mxu0
    %v2408 = vadd.f32 0.0, %v2407
    %v2409 = vpop.f32.mrb[0].mxu0
    %2410 = vdwg.mxu0
    %v2411 = vadd.f32 %v1683, %v2408
    %v2412 = vadd.f32 %v2411, %v94
    %2413 = vmatprep.subr.mxu0 0.0
    %2414 = vmatpush1.msra.mxu0 %v28
    %2415 = vmatprep.subr.mxu0 0.0
    %2416 = vmatpush1.msra.mxu0 %v29
    %2417 = vmatprep.subr.mxu0 0.0
    %2418 = vmatpush1.msra.mxu0 %v30
    %2419 = vmatprep.subr.mxu0 0.0
    %2420 = vmatpush1.msra.mxu0 %v31
    %2421 = vmatprep.subr.mxu0 0.0
    %2422 = vmatpush1.msra.mxu0 0.0
    %2423 = vmatprep.subr.mxu0 0.0
    %2424 = vmatpush1.msra.mxu0 0.0
    %2425 = vmatprep.subr.mxu0 0.0
    %2426 = vmatpush1.msra.mxu0 0.0
    %2427 = vmatprep.subr.mxu0 0.0
    %2428 = vmatpush1.msra.mxu0 0.0
    %2429 = vmatprep.subr.mxu0 0.0
    %2430 = vmatpush1.msra.mxu0 0.0
    %2431 = vmatprep.subr.mxu0 0.0
    %2432 = vmatpush1.msra.mxu0 0.0
    %2433 = vmatprep.subr.mxu0 0.0
    %2434 = vmatpush1.msra.mxu0 0.0
    %2435 = vmatprep.subr.mxu0 0.0
    %2436 = vmatpush1.msra.mxu0 0.0
    %2437 = vmatprep.subr.mxu0 0.0
    %2438 = vmatpush1.msra.mxu0 0.0
    %2439 = vmatprep.subr.mxu0 0.0
    %2440 = vmatpush1.msra.mxu0 0.0
    %2441 = vmatprep.subr.mxu0 0.0
    %2442 = vmatpush1.msra.mxu0 0.0
    %2443 = vmatprep.subr.mxu0 0.0
    %2444 = vmatpush1.msra.mxu0 0.0
    %2445 = vmatprep.subr.mxu0 0.0
    %2446 = vmatpush1.msra.mxu0 0.0
    %2447 = vmatprep.subr.mxu0 0.0
    %2448 = vmatpush1.msra.mxu0 0.0
    %2449 = vmatprep.subr.mxu0 0.0
    %2450 = vmatpush1.msra.mxu0 0.0
    %2451 = vmatprep.subr.mxu0 0.0
    %2452 = vmatpush1.msra.mxu0 0.0
    %2453 = vmatprep.subr.mxu0 0.0
    %2454 = vmatpush1.msra.mxu0 0.0
    %2455 = vmatprep.subr.mxu0 0.0
    %2456 = vmatpush1.msra.mxu0 0.0
    %2457 = vmatprep.subr.mxu0 0.0
    %2458 = vmatpush1.msra.mxu0 0.0
    %2459 = vmatprep.subr.mxu0 0.0
    %2460 = vmatpush1.msra.mxu0 0.0
    %2461 = vmatprep.subr.mxu0 0.0
    %2462 = vmatpush1.msra.mxu0 0.0
    %2463 = vmatprep.subr.mxu0 0.0
    %2464 = vmatpush1.msra.mxu0 0.0
    %2465 = vmatprep.subr.mxu0 0.0
    %2466 = vmatpush1.msra.mxu0 0.0
    %2467 = vmatprep.subr.mxu0 0.0
    %2468 = vmatpush1.msra.mxu0 0.0
    %2469 = vmatprep.subr.mxu0 0.0
    %2470 = vmatpush1.msra.mxu0 0.0
    %2471 = vmatprep.subr.mxu0 0.0
    %2472 = vmatpush1.msra.mxu0 0.0
    %2473 = vmatprep.subr.mxu0 0.0
    %2474 = vmatpush1.msra.mxu0 0.0
    %2475 = vmatprep.subr.mxu0 0.0
    %2476 = vmatpush1.msra.mxu0 0.0
    %2477 = vmatprep.mubr.f32.mxu0 0.0
    %2478 = vmatmul.mubr.f32.gmra.mrb[0].mxu0 %v2113
    %v2479 = vpop.f32.mrb[0].mxu0
    %v2480 = vadd.f32 0.0, %v2479
    %v2481 = vpop.f32.mrb[0].mxu0
    %2482 = vdwg.mxu0
    %2484 = vrot.lane.b32.xlu0 %v2480, 64
    %v2485 = vpop.permute.xlu0 %2484
    %2487 = vmatprep.subr.mxu0 0.0
    %2488 = vmatpush1.msra.mxu0 %v2480
    %2489 = vmatprep.subr.mxu0 0.0
    %2490 = vmatpush1.msra.mxu0 %v2485
    %2491 = vmatprep.subr.mxu0 0.0
    %2492 = vmatpush1.msra.mxu0 0.0
    %2493 = vmatprep.subr.mxu0 0.0
    %2494 = vmatpush1.msra.mxu0 0.0
    %2495 = vmatprep.subr.mxu0 0.0
    %2496 = vmatpush1.msra.mxu0 0.0
    %2497 = vmatprep.subr.mxu0 0.0
    %2498 = vmatpush1.msra.mxu0 0.0
    %2499 = vmatprep.subr.mxu0 0.0
    %2500 = vmatpush1.msra.mxu0 0.0
    %2501 = vmatprep.subr.mxu0 0.0
    %2502 = vmatpush1.msra.mxu0 0.0
    %2503 = vmatprep.subr.mxu0 0.0
    %2504 = vmatpush1.msra.mxu0 0.0
    %2505 = vmatprep.subr.mxu0 0.0
    %2506 = vmatpush1.msra.mxu0 0.0
    %2507 = vmatprep.subr.mxu0 0.0
    %2508 = vmatpush1.msra.mxu0 0.0
    %2509 = vmatprep.subr.mxu0 0.0
    %2510 = vmatpush1.msra.mxu0 0.0
    %2511 = vmatprep.subr.mxu0 0.0
    %2512 = vmatpush1.msra.mxu0 0.0
    %2513 = vmatprep.subr.mxu0 0.0
    %2514 = vmatpush1.msra.mxu0 0.0
    %2515 = vmatprep.subr.mxu0 0.0
    %2516 = vmatpush1.msra.mxu0 0.0
    %2517 = vmatprep.subr.mxu0 0.0
    %2518 = vmatpush1.msra.mxu0 0.0
    %2519 = vmatprep.subr.mxu0 0.0
    %2520 = vmatpush1.msra.mxu0 0.0
    %2521 = vmatprep.subr.mxu0 0.0
    %2522 = vmatpush1.msra.mxu0 0.0
    %2523 = vmatprep.subr.mxu0 0.0
    %2524 = vmatpush1.msra.mxu0 0.0
    %2525 = vmatprep.subr.mxu0 0.0
    %2526 = vmatpush1.msra.mxu0 0.0
    %2527 = vmatprep.subr.mxu0 0.0
    %2528 = vmatpush1.msra.mxu0 0.0
    %2529 = vmatprep.subr.mxu0 0.0
    %2530 = vmatpush1.msra.mxu0 0.0
    %2531 = vmatprep.subr.mxu0 0.0
    %2532 = vmatpush1.msra.mxu0 0.0
    %2533 = vmatprep.subr.mxu0 0.0
    %2534 = vmatpush1.msra.mxu0 0.0
    %2535 = vmatprep.subr.mxu0 0.0
    %2536 = vmatpush1.msra.mxu0 0.0
    %2537 = vmatprep.subr.mxu0 0.0
    %2538 = vmatpush1.msra.mxu0 0.0
    %2539 = vmatprep.subr.mxu0 0.0
    %2540 = vmatpush1.msra.mxu0 0.0
    %2541 = vmatprep.subr.mxu0 0.0
    %2542 = vmatpush1.msra.mxu0 0.0
    %2543 = vmatprep.subr.mxu0 0.0
    %2544 = vmatpush1.msra.mxu0 0.0
    %2545 = vmatprep.subr.mxu0 0.0
    %2546 = vmatpush1.msra.mxu0 0.0
    %2547 = vmatprep.subr.mxu0 0.0
    %2548 = vmatpush1.msra.mxu0 0.0
    %2549 = vmatprep.subr.mxu0 0.0
    %2550 = vmatpush1.msra.mxu0 0.0
    %2551 = vmatprep.mubr.f32.mxu0 0.0
    %2552 = vmatmul.mubr.f32.gmra.mrb[0].mxu0 %v292
    %v2553 = vpop.f32.mrb[0].mxu0
    %v2554 = vadd.f32 %v69, %v2553
    %v2555 = vpop.f32.mrb[0].mxu0
    %2556 = vmatprep.mubr.f32.mxu0 0.0
    %2557 = vmatmul.mubr.f32.gmra.mrb[0].mxu0 %v295
    %v2558 = vpop.f32.mrb[0].mxu0
    %v2559 = vadd.f32 %v69, %v2558
    %v2560 = vpop.f32.mrb[0].mxu0
    %2561 = vmatprep.mubr.f32.mxu0 0.0
    %2562 = vmatmul.mubr.f32.gmra.mrb[0].mxu0 %v298
    %v2563 = vpop.f32.mrb[0].mxu0
    %v2564 = vadd.f32 %v69, %v2563
    %v2565 = vpop.f32.mrb[0].mxu0
    %2566 = vdwg.mxu0
    %v2567 = vtanh.pop %v2554
    %v2568 = vtanh.pop %v2559
    %v2569 = vtanh.pop %v2564
    %v2571 = vsel %vm383, %v2567, 0
    %v2574 = vsel %vm383, %v2568, 0
    %v2577 = vsel %vm383, %v2569, 0
    %2579 = vmatprep.subr.mxu0 0.0
    %2580 = vmatpush1.msra.mxu0 %v36
    %2581 = vmatprep.subr.mxu0 0.0
    %2582 = vmatpush1.msra.mxu0 %v37
    %2583 = vmatprep.subr.mxu0 0.0
    %2584 = vmatpush1.msra.mxu0 %v38
    %2585 = vmatprep.subr.mxu0 0.0
    %2586 = vmatpush1.msra.mxu0 %v39
    %2587 = vmatprep.subr.mxu0 0.0
    %2588 = vmatpush1.msra.mxu0 %v40
    %2589 = vmatprep.subr.mxu0 0.0
    %2590 = vmatpush1.msra.mxu0 %v41
    %2591 = vmatprep.subr.mxu0 0.0
    %2592 = vmatpush1.msra.mxu0 %v42
    %2593 = vmatprep.subr.mxu0 0.0
    %2594 = vmatpush1.msra.mxu0 %v43
    %2595 = vmatprep.subr.mxu0 0.0
    %2596 = vmatpush1.msra.mxu0 0.0
    %2597 = vmatprep.subr.mxu0 0.0
    %2598 = vmatpush1.msra.mxu0 0.0
    %2599 = vmatprep.subr.mxu0 0.0
    %2600 = vmatpush1.msra.mxu0 0.0
    %2601 = vmatprep.subr.mxu0 0.0
    %2602 = vmatpush1.msra.mxu0 0.0
    %2603 = vmatprep.subr.mxu0 0.0
    %2604 = vmatpush1.msra.mxu0 0.0
    %2605 = vmatprep.subr.mxu0 0.0
    %2606 = vmatpush1.msra.mxu0 0.0
    %2607 = vmatprep.subr.mxu0 0.0
    %2608 = vmatpush1.msra.mxu0 0.0
    %2609 = vmatprep.subr.mxu0 0.0
    %2610 = vmatpush1.msra.mxu0 0.0
    %2611 = vmatprep.subr.mxu0 0.0
    %2612 = vmatpush1.msra.mxu0 0.0
    %2613 = vmatprep.subr.mxu0 0.0
    %2614 = vmatpush1.msra.mxu0 0.0
    %2615 = vmatprep.subr.mxu0 0.0
    %2616 = vmatpush1.msra.mxu0 0.0
    %2617 = vmatprep.subr.mxu0 0.0
    %2618 = vmatpush1.msra.mxu0 0.0
    %2619 = vmatprep.subr.mxu0 0.0
    %2620 = vmatpush1.msra.mxu0 0.0
    %2621 = vmatprep.subr.mxu0 0.0
    %2622 = vmatpush1.msra.mxu0 0.0
    %2623 = vmatprep.subr.mxu0 0.0
    %2624 = vmatpush1.msra.mxu0 0.0
    %2625 = vmatprep.subr.mxu0 0.0
    %2626 = vmatpush1.msra.mxu0 0.0
    %2627 = vmatprep.subr.mxu0 0.0
    %2628 = vmatpush1.msra.mxu0 0.0
    %2629 = vmatprep.subr.mxu0 0.0
    %2630 = vmatpush1.msra.mxu0 0.0
    %2631 = vmatprep.subr.mxu0 0.0
    %2632 = vmatpush1.msra.mxu0 0.0
    %2633 = vmatprep.subr.mxu0 0.0
    %2634 = vmatpush1.msra.mxu0 0.0
    %2635 = vmatprep.subr.mxu0 0.0
    %2636 = vmatpush1.msra.mxu0 0.0
    %2637 = vmatprep.subr.mxu0 0.0
    %2638 = vmatpush1.msra.mxu0 0.0
    %2639 = vmatprep.subr.mxu0 0.0
    %2640 = vmatpush1.msra.mxu0 0.0
    %2641 = vmatprep.subr.mxu0 0.0
    %2642 = vmatpush1.msra.mxu0 0.0
    %2643 = vmatprep.mubr.f32.mxu0 0.0
    %2644 = vmatmul.mubr.f32.gmra.mrb[0].mxu0 %v2571
    %v2645 = vpop.f32.mrb[0].mxu0
    %v2646 = vadd.f32 %v74, %v2645
    %v2647 = vpop.f32.mrb[0].mxu0
    %2648 = vmatprep.mubr.f32.mxu0 0.0
    %2649 = vmatmul.mubr.f32.gmra.mrb[0].mxu0 %v2574
    %v2650 = vpop.f32.mrb[0].mxu0
    %v2651 = vadd.f32 %v74, %v2650
    %v2652 = vpop.f32.mrb[0].mxu0
    %2653 = vmatprep.mubr.f32.mxu0 0.0
    %2654 = vmatmul.mubr.f32.gmra.mrb[0].mxu0 %v2577
    %v2655 = vpop.f32.mrb[0].mxu0
    %v2656 = vadd.f32 %v74, %v2655
    %v2657 = vpop.f32.mrb[0].mxu0
    %2658 = vdwg.mxu0
    %v2659 = vtanh.pop %v2646
    %v2660 = vtanh.pop %v2651
    %v2661 = vtanh.pop %v2656
    %v2662 = vmul.f32 %v2659, %v127
    %v2663 = vmul.f32 %v2660, %v128
    %v2664 = vmul.f32 %v2661, %v129
    %2665 = vmatprep.subr.mxu0 0.0
    %2666 = vmatpush1.msra.mxu0 %v2662
    %2667 = vmatprep.subr.mxu0 0.0
    %2668 = vmatpush1.msra.mxu0 %v2663
    %2669 = vmatprep.subr.mxu0 0.0
    %2670 = vmatpush1.msra.mxu0 %v2664
    %2671 = vmatprep.subr.mxu0 0.0
    %2672 = vmatpush1.msra.mxu0 0.0
    %2673 = vmatprep.subr.mxu0 0.0
    %2674 = vmatpush1.msra.mxu0 0.0
    %2675 = vmatprep.subr.mxu0 0.0
    %2676 = vmatpush1.msra.mxu0 0.0
    %2677 = vmatprep.subr.mxu0 0.0
    %2678 = vmatpush1.msra.mxu0 0.0
    %2679 = vmatprep.subr.mxu0 0.0
    %2680 = vmatpush1.msra.mxu0 0.0
    %2681 = vmatprep.subr.mxu0 0.0
    %2682 = vmatpush1.msra.mxu0 0.0
    %2683 = vmatprep.subr.mxu0 0.0
    %2684 = vmatpush1.msra.mxu0 0.0
    %2685 = vmatprep.subr.mxu0 0.0
    %2686 = vmatpush1.msra.mxu0 0.0
    %2687 = vmatprep.subr.mxu0 0.0
    %2688 = vmatpush1.msra.mxu0 0.0
    %2689 = vmatprep.subr.mxu0 0.0
    %2690 = vmatpush1.msra.mxu0 0.0
    %2691 = vmatprep.subr.mxu0 0.0
    %2692 = vmatpush1.msra.mxu0 0.0
    %2693 = vmatprep.subr.mxu0 0.0
    %2694 = vmatpush1.msra.mxu0 0.0
    %2695 = vmatprep.subr.mxu0 0.0
    %2696 = vmatpush1.msra.mxu0 0.0
    %2697 = vmatprep.subr.mxu0 0.0
    %2698 = vmatpush1.msra.mxu0 0.0
    %2699 = vmatprep.subr.mxu0 0.0
    %2700 = vmatpush1.msra.mxu0 0.0
    %2701 = vmatprep.subr.mxu0 0.0
    %2702 = vmatpush1.msra.mxu0 0.0
    %2703 = vmatprep.subr.mxu0 0.0
    %2704 = vmatpush1.msra.mxu0 0.0
    %2705 = vmatprep.subr.mxu0 0.0
    %2706 = vmatpush1.msra.mxu0 0.0
    %2707 = vmatprep.subr.mxu0 0.0
    %2708 = vmatpush1.msra.mxu0 0.0
    %2709 = vmatprep.subr.mxu0 0.0
    %2710 = vmatpush1.msra.mxu0 0.0
    %2711 = vmatprep.subr.mxu0 0.0
    %2712 = vmatpush1.msra.mxu0 0.0
    %2713 = vmatprep.subr.mxu0 0.0
    %2714 = vmatpush1.msra.mxu0 0.0
    %2715 = vmatprep.subr.mxu0 0.0
    %2716 = vmatpush1.msra.mxu0 0.0
    %2717 = vmatprep.subr.mxu0 0.0
    %2718 = vmatpush1.msra.mxu0 0.0
    %2719 = vmatprep.subr.mxu0 0.0
    %2720 = vmatpush1.msra.mxu0 0.0
    %2721 = vmatprep.subr.mxu0 0.0
    %2722 = vmatpush1.msra.mxu0 0.0
    %2723 = vmatprep.subr.mxu0 0.0
    %2724 = vmatpush1.msra.mxu0 0.0
    %2725 = vmatprep.subr.mxu0 0.0
    %2726 = vmatpush1.msra.mxu0 0.0
    %2727 = vmatprep.subr.mxu0 0.0
    %2728 = vmatpush1.msra.mxu0 0.0
    %2729 = vmatprep.mubr.f32.mxu0 0.0
    %2730 = vmatmul.mubr.f32.gmra.mrb[0].mxu0 %v481
    %v2731 = vpop.f32.mrb[0].mxu0
    %v2732 = vadd.f32 0.0, %v2731
    %v2733 = vpop.f32.mrb[0].mxu0
    %2734 = vdwg.mxu0
    %2736 = vrot.lane.b32.xlu0 %v2732, 96
    %v2737 = vpop.permute.xlu0 %2736
    %v2739 = vadd.f32 %v2732, %v2737
    %v2741 = vsel %vm126, %v2739, 0
    %2743 = vmatprep.subr.mxu0 0.0
    %2744 = vmatpush1.msra.mxu0 %v44
    %2745 = vmatprep.subr.mxu0 0.0
    %2746 = vmatpush1.msra.mxu0 %v45
    %2747 = vmatprep.subr.mxu0 0.0
    %2748 = vmatpush1.msra.mxu0 %v46
    %2749 = vmatprep.subr.mxu0 0.0
    %2750 = vmatpush1.msra.mxu0 %v47
    %2751 = vmatprep.subr.mxu0 0.0
    %2752 = vmatpush1.msra.mxu0 0.0
    %2753 = vmatprep.subr.mxu0 0.0
    %2754 = vmatpush1.msra.mxu0 0.0
    %2755 = vmatprep.subr.mxu0 0.0
    %2756 = vmatpush1.msra.mxu0 0.0
    %2757 = vmatprep.subr.mxu0 0.0
    %2758 = vmatpush1.msra.mxu0 0.0
    %2759 = vmatprep.subr.mxu0 0.0
    %2760 = vmatpush1.msra.mxu0 0.0
    %2761 = vmatprep.subr.mxu0 0.0
    %2762 = vmatpush1.msra.mxu0 0.0
    %2763 = vmatprep.subr.mxu0 0.0
    %2764 = vmatpush1.msra.mxu0 0.0
    %2765 = vmatprep.subr.mxu0 0.0
    %2766 = vmatpush1.msra.mxu0 0.0
    %2767 = vmatprep.subr.mxu0 0.0
    %2768 = vmatpush1.msra.mxu0 0.0
    %2769 = vmatprep.subr.mxu0 0.0
    %2770 = vmatpush1.msra.mxu0 0.0
    %2771 = vmatprep.subr.mxu0 0.0
    %2772 = vmatpush1.msra.mxu0 0.0
    %2773 = vmatprep.subr.mxu0 0.0
    %2774 = vmatpush1.msra.mxu0 0.0
    %2775 = vmatprep.subr.mxu0 0.0
    %2776 = vmatpush1.msra.mxu0 0.0
    %2777 = vmatprep.subr.mxu0 0.0
    %2778 = vmatpush1.msra.mxu0 0.0
    %2779 = vmatprep.subr.mxu0 0.0
    %2780 = vmatpush1.msra.mxu0 0.0
    %2781 = vmatprep.subr.mxu0 0.0
    %2782 = vmatpush1.msra.mxu0 0.0
    %2783 = vmatprep.subr.mxu0 0.0
    %2784 = vmatpush1.msra.mxu0 0.0
    %2785 = vmatprep.subr.mxu0 0.0
    %2786 = vmatpush1.msra.mxu0 0.0
    %2787 = vmatprep.subr.mxu0 0.0
    %2788 = vmatpush1.msra.mxu0 0.0
    %2789 = vmatprep.subr.mxu0 0.0
    %2790 = vmatpush1.msra.mxu0 0.0
    %2791 = vmatprep.subr.mxu0 0.0
    %2792 = vmatpush1.msra.mxu0 0.0
    %2793 = vmatprep.subr.mxu0 0.0
    %2794 = vmatpush1.msra.mxu0 0.0
    %2795 = vmatprep.subr.mxu0 0.0
    %2796 = vmatpush1.msra.mxu0 0.0
    %2797 = vmatprep.subr.mxu0 0.0
    %2798 = vmatpush1.msra.mxu0 0.0
    %2799 = vmatprep.subr.mxu0 0.0
    %2800 = vmatpush1.msra.mxu0 0.0
    %2801 = vmatprep.subr.mxu0 0.0
    %2802 = vmatpush1.msra.mxu0 0.0
    %2803 = vmatprep.subr.mxu0 0.0
    %2804 = vmatpush1.msra.mxu0 0.0
    %2805 = vmatprep.subr.mxu0 0.0
    %2806 = vmatpush1.msra.mxu0 0.0
    %2807 = vmatprep.mubr.f32.mxu0 0.0
    %2808 = vmatmul.mubr.f32.gmra.mrb[0].mxu0 %v2741
    %v2809 = vpop.f32.mrb[0].mxu0
    %v2810 = vadd.f32 0.0, %v2809
    %v2811 = vpop.f32.mrb[0].mxu0
    %2812 = vdwg.mxu0
    %v2813 = vadd.f32 %v2412, %v2810
    %v2814 = vxor.u32 %v2813, 2147483648
    %v2815 = vmul.f32 %v2814, 1.442695
    %v2816 = vpow.pop %v2815
    %v2817 = vadd.f32 %v2816, 1.0
    %v2818 = vrcp.pop %v2817
    %v2819 = vmul.f32 1.0, %v2818
    %2821 = vrot.lane.b32.xlu0 %v2810, 64
    %v2822 = vpop.permute.xlu0 %2821
    %v2824 = vmul.f32 %v2819, %v2822
    %2826 = vrot.lane.b32.xlu0 %v2824, 64
    %v2827 = vpop.permute.xlu0 %2826
    %v2829 = vadd.f32 %v2412, %v2827
    %v2830 = vtanh.pop %v2829
    %v2831 = vsub.f32 1.0, %v2819
    %2833 = vrot.lane.b32.xlu0 %v2830, 96
    %v2834 = vpop.permute.xlu0 %2833
    %v2836 = vmul.f32 %v2831, %v2834
    %v2837 = vmul.f32 %v2819, %v2109
    %v2838 = vadd.f32 %v2836, %v2837
    %2840 = vrot.lane.b32.xlu0 %v2838, 96
    %v2841 = vpop.permute.xlu0 %2840
    %v2842 = vsel %vm126, %v2841, 0
    %2844 = vmatprep.subr.mxu0 0.0
    %2845 = vmatpush1.msra.mxu0 %v49
    %2846 = vmatprep.subr.mxu0 0.0
    %2847 = vmatpush1.msra.mxu0 %v50
    %2848 = vmatprep.subr.mxu0 0.0
    %2849 = vmatpush1.msra.mxu0 %v51
    %2850 = vmatprep.subr.mxu0 0.0
    %2851 = vmatpush1.msra.mxu0 %v52
    %2852 = vmatprep.subr.mxu0 0.0
    %2853 = vmatpush1.msra.mxu0 0.0
    %2854 = vmatprep.subr.mxu0 0.0
    %2855 = vmatpush1.msra.mxu0 0.0
    %2856 = vmatprep.subr.mxu0 0.0
    %2857 = vmatpush1.msra.mxu0 0.0
    %2858 = vmatprep.subr.mxu0 0.0
    %2859 = vmatpush1.msra.mxu0 0.0
    %2860 = vmatprep.subr.mxu0 0.0
    %2861 = vmatpush1.msra.mxu0 0.0
    %2862 = vmatprep.subr.mxu0 0.0
    %2863 = vmatpush1.msra.mxu0 0.0
    %2864 = vmatprep.subr.mxu0 0.0
    %2865 = vmatpush1.msra.mxu0 0.0
    %2866 = vmatprep.subr.mxu0 0.0
    %2867 = vmatpush1.msra.mxu0 0.0
    %2868 = vmatprep.subr.mxu0 0.0
    %2869 = vmatpush1.msra.mxu0 0.0
    %2870 = vmatprep.subr.mxu0 0.0
    %2871 = vmatpush1.msra.mxu0 0.0
    %2872 = vmatprep.subr.mxu0 0.0
    %2873 = vmatpush1.msra.mxu0 0.0
    %2874 = vmatprep.subr.mxu0 0.0
    %2875 = vmatpush1.msra.mxu0 0.0
    %2876 = vmatprep.subr.mxu0 0.0
    %2877 = vmatpush1.msra.mxu0 0.0
    %2878 = vmatprep.subr.mxu0 0.0
    %2879 = vmatpush1.msra.mxu0 0.0
    %2880 = vmatprep.subr.mxu0 0.0
    %2881 = vmatpush1.msra.mxu0 0.0
    %2882 = vmatprep.subr.mxu0 0.0
    %2883 = vmatpush1.msra.mxu0 0.0
    %2884 = vmatprep.subr.mxu0 0.0
    %2885 = vmatpush1.msra.mxu0 0.0
    %2886 = vmatprep.subr.mxu0 0.0
    %2887 = vmatpush1.msra.mxu0 0.0
    %2888 = vmatprep.subr.mxu0 0.0
    %2889 = vmatpush1.msra.mxu0 0.0
    %2890 = vmatprep.subr.mxu0 0.0
    %2891 = vmatpush1.msra.mxu0 0.0
    %2892 = vmatprep.subr.mxu0 0.0
    %2893 = vmatpush1.msra.mxu0 0.0
    %2894 = vmatprep.subr.mxu0 0.0
    %2895 = vmatpush1.msra.mxu0 0.0
    %2896 = vmatprep.subr.mxu0 0.0
    %2897 = vmatpush1.msra.mxu0 0.0
    %2898 = vmatprep.subr.mxu0 0.0
    %2899 = vmatpush1.msra.mxu0 0.0
    %2900 = vmatprep.subr.mxu0 0.0
    %2901 = vmatpush1.msra.mxu0 0.0
    %2902 = vmatprep.subr.mxu0 0.0
    %2903 = vmatpush1.msra.mxu0 0.0
    %2904 = vmatprep.subr.mxu0 0.0
    %2905 = vmatpush1.msra.mxu0 0.0
    %2906 = vmatprep.subr.mxu0 0.0
    %2907 = vmatpush1.msra.mxu0 0.0
    %2908 = vmatprep.mubr.f32.mxu0 0.0
    %2909 = vmatmul.mubr.f32.gmra.mrb[0].mxu0 %v2842
    %v2910 = vpop.f32.mrb[0].mxu0
    %v2911 = vadd.f32 %v79, %v2910
    %v2912 = vpop.f32.mrb[0].mxu0
    %2913 = vdwg.mxu0
    %v2914 = vmax.f32 %v2911, 0.0
    %v2916 = vsel %vm126, %v2914, 0
    %2918 = vmatprep.subr.mxu0 0.0
    %2919 = vmatpush1.msra.mxu0 %v53
    %2920 = vmatprep.subr.mxu0 0.0
    %2921 = vmatpush1.msra.mxu0 %v54
    %2922 = vmatprep.subr.mxu0 0.0
    %2923 = vmatpush1.msra.mxu0 %v55
    %2924 = vmatprep.subr.mxu0 0.0
    %2925 = vmatpush1.msra.mxu0 %v56
    %2926 = vmatprep.subr.mxu0 0.0
    %2927 = vmatpush1.msra.mxu0 0.0
    %2928 = vmatprep.subr.mxu0 0.0
    %2929 = vmatpush1.msra.mxu0 0.0
    %2930 = vmatprep.subr.mxu0 0.0
    %2931 = vmatpush1.msra.mxu0 0.0
    %2932 = vmatprep.subr.mxu0 0.0
    %2933 = vmatpush1.msra.mxu0 0.0
    %2934 = vmatprep.subr.mxu0 0.0
    %2935 = vmatpush1.msra.mxu0 0.0
    %2936 = vmatprep.subr.mxu0 0.0
    %2937 = vmatpush1.msra.mxu0 0.0
    %2938 = vmatprep.subr.mxu0 0.0
    %2939 = vmatpush1.msra.mxu0 0.0
    %2940 = vmatprep.subr.mxu0 0.0
    %2941 = vmatpush1.msra.mxu0 0.0
    %2942 = vmatprep.subr.mxu0 0.0
    %2943 = vmatpush1.msra.mxu0 0.0
    %2944 = vmatprep.subr.mxu0 0.0
    %2945 = vmatpush1.msra.mxu0 0.0
    %2946 = vmatprep.subr.mxu0 0.0
    %2947 = vmatpush1.msra.mxu0 0.0
    %2948 = vmatprep.subr.mxu0 0.0
    %2949 = vmatpush1.msra.mxu0 0.0
    %2950 = vmatprep.subr.mxu0 0.0
    %2951 = vmatpush1.msra.mxu0 0.0
    %2952 = vmatprep.subr.mxu0 0.0
    %2953 = vmatpush1.msra.mxu0 0.0
    %2954 = vmatprep.subr.mxu0 0.0
    %2955 = vmatpush1.msra.mxu0 0.0
    %2956 = vmatprep.subr.mxu0 0.0
    %2957 = vmatpush1.msra.mxu0 0.0
    %2958 = vmatprep.subr.mxu0 0.0
    %2959 = vmatpush1.msra.mxu0 0.0
    %2960 = vmatprep.subr.mxu0 0.0
    %2961 = vmatpush1.msra.mxu0 0.0
    %2962 = vmatprep.subr.mxu0 0.0
    %2963 = vmatpush1.msra.mxu0 0.0
    %2964 = vmatprep.subr.mxu0 0.0
    %2965 = vmatpush1.msra.mxu0 0.0
    %2966 = vmatprep.subr.mxu0 0.0
    %2967 = vmatpush1.msra.mxu0 0.0
    %2968 = vmatprep.subr.mxu0 0.0
    %2969 = vmatpush1.msra.mxu0 0.0
    %2970 = vmatprep.subr.mxu0 0.0
    %2971 = vmatpush1.msra.mxu0 0.0
    %2972 = vmatprep.subr.mxu0 0.0
    %2973 = vmatpush1.msra.mxu0 0.0
    %2974 = vmatprep.subr.mxu0 0.0
    %2975 = vmatpush1.msra.mxu0 0.0
    %2976 = vmatprep.subr.mxu0 0.0
    %2977 = vmatpush1.msra.mxu0 0.0
    %2978 = vmatprep.subr.mxu0 0.0
    %2979 = vmatpush1.msra.mxu0 0.0
    %2980 = vmatprep.subr.mxu0 0.0
    %2981 = vmatpush1.msra.mxu0 0.0
    %2982 = vmatprep.mubr.f32.mxu0 0.0
    %2983 = vmatmul.mubr.f32.gmra.mrb[0].mxu0 %v2916
    %v2984 = vpop.f32.mrb[0].mxu0
    %v2985 = vadd.f32 %v84, %v2984
    %v2986 = vpop.f32.mrb[0].mxu0
    %2987 = vdwg.mxu0
    %v2988 = vmax.f32 %v2985, 0.0
    %v2990 = vsel %vm126, %v2988, 0
    %2992 = vmatprep.subr.mxu0 0.0
    %2993 = vmatpush1.msra.mxu0 %v57
    %2994 = vmatprep.subr.mxu0 0.0
    %2995 = vmatpush1.msra.mxu0 %v58
    %2996 = vmatprep.subr.mxu0 0.0
    %2997 = vmatpush1.msra.mxu0 %v59
    %2998 = vmatprep.subr.mxu0 0.0
    %2999 = vmatpush1.msra.mxu0 %v60
    %3000 = vmatprep.subr.mxu0 0.0
    %3001 = vmatpush1.msra.mxu0 0.0
    %3002 = vmatprep.subr.mxu0 0.0
    %3003 = vmatpush1.msra.mxu0 0.0
    %3004 = vmatprep.subr.mxu0 0.0
    %3005 = vmatpush1.msra.mxu0 0.0
    %3006 = vmatprep.subr.mxu0 0.0
    %3007 = vmatpush1.msra.mxu0 0.0
    %3008 = vmatprep.subr.mxu0 0.0
    %3009 = vmatpush1.msra.mxu0 0.0
    %3010 = vmatprep.subr.mxu0 0.0
    %3011 = vmatpush1.msra.mxu0 0.0
    %3012 = vmatprep.subr.mxu0 0.0
    %3013 = vmatpush1.msra.mxu0 0.0
    %3014 = vmatprep.subr.mxu0 0.0
    %3015 = vmatpush1.msra.mxu0 0.0
    %3016 = vmatprep.subr.mxu0 0.0
    %3017 = vmatpush1.msra.mxu0 0.0
    %3018 = vmatprep.subr.mxu0 0.0
    %3019 = vmatpush1.msra.mxu0 0.0
    %3020 = vmatprep.subr.mxu0 0.0
    %3021 = vmatpush1.msra.mxu0 0.0
    %3022 = vmatprep.subr.mxu0 0.0
    %3023 = vmatpush1.msra.mxu0 0.0
    %3024 = vmatprep.subr.mxu0 0.0
    %3025 = vmatpush1.msra.mxu0 0.0
    %3026 = vmatprep.subr.mxu0 0.0
    %3027 = vmatpush1.msra.mxu0 0.0
    %3028 = vmatprep.subr.mxu0 0.0
    %3029 = vmatpush1.msra.mxu0 0.0
    %3030 = vmatprep.subr.mxu0 0.0
    %3031 = vmatpush1.msra.mxu0 0.0
    %3032 = vmatprep.subr.mxu0 0.0
    %3033 = vmatpush1.msra.mxu0 0.0
    %3034 = vmatprep.subr.mxu0 0.0
    %3035 = vmatpush1.msra.mxu0 0.0
    %3036 = vmatprep.subr.mxu0 0.0
    %3037 = vmatpush1.msra.mxu0 0.0
    %3038 = vmatprep.subr.mxu0 0.0
    %3039 = vmatpush1.msra.mxu0 0.0
    %3040 = vmatprep.subr.mxu0 0.0
    %3041 = vmatpush1.msra.mxu0 0.0
    %3042 = vmatprep.subr.mxu0 0.0
    %3043 = vmatpush1.msra.mxu0 0.0
    %3044 = vmatprep.subr.mxu0 0.0
    %3045 = vmatpush1.msra.mxu0 0.0
    %3046 = vmatprep.subr.mxu0 0.0
    %3047 = vmatpush1.msra.mxu0 0.0
    %3048 = vmatprep.subr.mxu0 0.0
    %3049 = vmatpush1.msra.mxu0 0.0
    %3050 = vmatprep.subr.mxu0 0.0
    %3051 = vmatpush1.msra.mxu0 0.0
    %3052 = vmatprep.subr.mxu0 0.0
    %3053 = vmatpush1.msra.mxu0 0.0
    %3054 = vmatprep.subr.mxu0 0.0
    %3055 = vmatpush1.msra.mxu0 0.0
    %3056 = vmatprep.mubr.f32.mxu0 0.0
    %3057 = vmatmul.mubr.f32.gmra.mrb[0].mxu0 %v2990
    %v3058 = vpop.f32.mrb[0].mxu0
    %v3059 = vadd.f32 0.0, %v3058
    %v3060 = vpop.f32.mrb[0].mxu0
    %3061 = vdwg.mxu0
    %v3062 = vadd.f32 %v2334, %v3059
    %v3063 = vadd.f32 %v3062, %v89
    %3065 = vrot.lane.b32.xlu0 %v3063, 12
    %v3066 = vpop.permute.xlu0 %3065
    %vm3068 = vcmask 130144
    %3069 = vst.msk [vmem:[%s3] sm:$0xff] %vm3068, %v3066
    %3070 = vmatprep.subr.mxu0 0.0
    %3071 = vmatpush1.msra.mxu0 %v61
    %3072 = vmatprep.subr.mxu0 0.0
    %3073 = vmatpush1.msra.mxu0 %v62
    %3074 = vmatprep.subr.mxu0 0.0
    %3075 = vmatpush1.msra.mxu0 %v63
    %3076 = vmatprep.subr.mxu0 0.0
    %3077 = vmatpush1.msra.mxu0 %v64
    %3078 = vmatprep.subr.mxu0 0.0
    %3079 = vmatpush1.msra.mxu0 0.0
    %3080 = vmatprep.subr.mxu0 0.0
    %3081 = vmatpush1.msra.mxu0 0.0
    %3082 = vmatprep.subr.mxu0 0.0
    %3083 = vmatpush1.msra.mxu0 0.0
    %3084 = vmatprep.subr.mxu0 0.0
    %3085 = vmatpush1.msra.mxu0 0.0
    %3086 = vmatprep.subr.mxu0 0.0
    %3087 = vmatpush1.msra.mxu0 0.0
    %3088 = vmatprep.subr.mxu0 0.0
    %3089 = vmatpush1.msra.mxu0 0.0
    %3090 = vmatprep.subr.mxu0 0.0
    %3091 = vmatpush1.msra.mxu0 0.0
    %3092 = vmatprep.subr.mxu0 0.0
    %3093 = vmatpush1.msra.mxu0 0.0
    %3094 = vmatprep.subr.mxu0 0.0
    %3095 = vmatpush1.msra.mxu0 0.0
    %3096 = vmatprep.subr.mxu0 0.0
    %3097 = vmatpush1.msra.mxu0 0.0
    %3098 = vmatprep.subr.mxu0 0.0
    %3099 = vmatpush1.msra.mxu0 0.0
    %3100 = vmatprep.subr.mxu0 0.0
    %3101 = vmatpush1.msra.mxu0 0.0
    %3102 = vmatprep.subr.mxu0 0.0
    %3103 = vmatpush1.msra.mxu0 0.0
    %3104 = vmatprep.subr.mxu0 0.0
    %3105 = vmatpush1.msra.mxu0 0.0
    %3106 = vmatprep.subr.mxu0 0.0
    %3107 = vmatpush1.msra.mxu0 0.0
    %3108 = vmatprep.subr.mxu0 0.0
    %3109 = vmatpush1.msra.mxu0 0.0
    %3110 = vmatprep.subr.mxu0 0.0
    %3111 = vmatpush1.msra.mxu0 0.0
    %3112 = vmatprep.subr.mxu0 0.0
    %3113 = vmatpush1.msra.mxu0 0.0
    %3114 = vmatprep.subr.mxu0 0.0
    %3115 = vmatpush1.msra.mxu0 0.0
    %3116 = vmatprep.subr.mxu0 0.0
    %3117 = vmatpush1.msra.mxu0 0.0
    %3118 = vmatprep.subr.mxu0 0.0
    %3119 = vmatpush1.msra.mxu0 0.0
    %3120 = vmatprep.subr.mxu0 0.0
    %3121 = vmatpush1.msra.mxu0 0.0
    %3122 = vmatprep.subr.mxu0 0.0
    %3123 = vmatpush1.msra.mxu0 0.0
    %3124 = vmatprep.subr.mxu0 0.0
    %3125 = vmatpush1.msra.mxu0 0.0
    %3126 = vmatprep.subr.mxu0 0.0
    %3127 = vmatpush1.msra.mxu0 0.0
    %3128 = vmatprep.subr.mxu0 0.0
    %3129 = vmatpush1.msra.mxu0 0.0
    %3130 = vmatprep.subr.mxu0 0.0
    %3131 = vmatpush1.msra.mxu0 0.0
    %3132 = vmatprep.subr.mxu0 0.0
    %3133 = vmatpush1.msra.mxu0 0.0
    %3134 = vmatprep.mubr.f32.mxu0 0.0
    %3135 = vmatmul.mubr.f32.gmra.mrb[0].mxu0 %v2990
    %v3136 = vpop.f32.mrb[0].mxu0
    %v3137 = vadd.f32 0.0, %v3136
    %v3138 = vpop.f32.mrb[0].mxu0
    %3139 = vdwg.mxu0
    %v3140 = vadd.f32 %v2412, %v3137
    %v3141 = vadd.f32 %v3140, %v94
    %3142 = vmatprep.subr.mxu0 0.0
    %3143 = vmatpush1.msra.mxu0 %v28
    %3144 = vmatprep.subr.mxu0 0.0
    %3145 = vmatpush1.msra.mxu0 %v29
    %3146 = vmatprep.subr.mxu0 0.0
    %3147 = vmatpush1.msra.mxu0 %v30
    %3148 = vmatprep.subr.mxu0 0.0
    %3149 = vmatpush1.msra.mxu0 %v31
    %3150 = vmatprep.subr.mxu0 0.0
    %3151 = vmatpush1.msra.mxu0 0.0
    %3152 = vmatprep.subr.mxu0 0.0
    %3153 = vmatpush1.msra.mxu0 0.0
    %3154 = vmatprep.subr.mxu0 0.0
    %3155 = vmatpush1.msra.mxu0 0.0
    %3156 = vmatprep.subr.mxu0 0.0
    %3157 = vmatpush1.msra.mxu0 0.0
    %3158 = vmatprep.subr.mxu0 0.0
    %3159 = vmatpush1.msra.mxu0 0.0
    %3160 = vmatprep.subr.mxu0 0.0
    %3161 = vmatpush1.msra.mxu0 0.0
    %3162 = vmatprep.subr.mxu0 0.0
    %3163 = vmatpush1.msra.mxu0 0.0
    %3164 = vmatprep.subr.mxu0 0.0
    %3165 = vmatpush1.msra.mxu0 0.0
    %3166 = vmatprep.subr.mxu0 0.0
    %3167 = vmatpush1.msra.mxu0 0.0
    %3168 = vmatprep.subr.mxu0 0.0
    %3169 = vmatpush1.msra.mxu0 0.0
    %3170 = vmatprep.subr.mxu0 0.0
    %3171 = vmatpush1.msra.mxu0 0.0
    %3172 = vmatprep.subr.mxu0 0.0
    %3173 = vmatpush1.msra.mxu0 0.0
    %3174 = vmatprep.subr.mxu0 0.0
    %3175 = vmatpush1.msra.mxu0 0.0
    %3176 = vmatprep.subr.mxu0 0.0
    %3177 = vmatpush1.msra.mxu0 0.0
    %3178 = vmatprep.subr.mxu0 0.0
    %3179 = vmatpush1.msra.mxu0 0.0
    %3180 = vmatprep.subr.mxu0 0.0
    %3181 = vmatpush1.msra.mxu0 0.0
    %3182 = vmatprep.subr.mxu0 0.0
    %3183 = vmatpush1.msra.mxu0 0.0
    %3184 = vmatprep.subr.mxu0 0.0
    %3185 = vmatpush1.msra.mxu0 0.0
    %3186 = vmatprep.subr.mxu0 0.0
    %3187 = vmatpush1.msra.mxu0 0.0
    %3188 = vmatprep.subr.mxu0 0.0
    %3189 = vmatpush1.msra.mxu0 0.0
    %3190 = vmatprep.subr.mxu0 0.0
    %3191 = vmatpush1.msra.mxu0 0.0
    %3192 = vmatprep.subr.mxu0 0.0
    %3193 = vmatpush1.msra.mxu0 0.0
    %3194 = vmatprep.subr.mxu0 0.0
    %3195 = vmatpush1.msra.mxu0 0.0
    %3196 = vmatprep.subr.mxu0 0.0
    %3197 = vmatpush1.msra.mxu0 0.0
    %3198 = vmatprep.subr.mxu0 0.0
    %3199 = vmatpush1.msra.mxu0 0.0
    %3200 = vmatprep.subr.mxu0 0.0
    %3201 = vmatpush1.msra.mxu0 0.0
    %3202 = vmatprep.subr.mxu0 0.0
    %3203 = vmatpush1.msra.mxu0 0.0
    %3204 = vmatprep.subr.mxu0 0.0
    %3205 = vmatpush1.msra.mxu0 0.0
    %3206 = vmatprep.mubr.f32.mxu0 0.0
    %3207 = vmatmul.mubr.f32.gmra.mrb[0].mxu0 %v2842
    %v3208 = vpop.f32.mrb[0].mxu0
    %v3209 = vadd.f32 0.0, %v3208
    %v3210 = vpop.f32.mrb[0].mxu0
    %3211 = vdwg.mxu0
    %3213 = vrot.lane.b32.xlu0 %v3209, 64
    %v3214 = vpop.permute.xlu0 %3213
    %3216 = vmatprep.subr.mxu0 0.0
    %3217 = vmatpush1.msra.mxu0 %v3209
    %3218 = vmatprep.subr.mxu0 0.0
    %3219 = vmatpush1.msra.mxu0 %v3214
    %3220 = vmatprep.subr.mxu0 0.0
    %3221 = vmatpush1.msra.mxu0 0.0
    %3222 = vmatprep.subr.mxu0 0.0
    %3223 = vmatpush1.msra.mxu0 0.0
    %3224 = vmatprep.subr.mxu0 0.0
    %3225 = vmatpush1.msra.mxu0 0.0
    %3226 = vmatprep.subr.mxu0 0.0
    %3227 = vmatpush1.msra.mxu0 0.0
    %3228 = vmatprep.subr.mxu0 0.0
    %3229 = vmatpush1.msra.mxu0 0.0
    %3230 = vmatprep.subr.mxu0 0.0
    %3231 = vmatpush1.msra.mxu0 0.0
    %3232 = vmatprep.subr.mxu0 0.0
    %3233 = vmatpush1.msra.mxu0 0.0
    %3234 = vmatprep.subr.mxu0 0.0
    %3235 = vmatpush1.msra.mxu0 0.0
    %3236 = vmatprep.subr.mxu0 0.0
    %3237 = vmatpush1.msra.mxu0 0.0
    %3238 = vmatprep.subr.mxu0 0.0
    %3239 = vmatpush1.msra.mxu0 0.0
    %3240 = vmatprep.subr.mxu0 0.0
    %3241 = vmatpush1.msra.mxu0 0.0
    %3242 = vmatprep.subr.mxu0 0.0
    %3243 = vmatpush1.msra.mxu0 0.0
    %3244 = vmatprep.subr.mxu0 0.0
    %3245 = vmatpush1.msra.mxu0 0.0
    %3246 = vmatprep.subr.mxu0 0.0
    %3247 = vmatpush1.msra.mxu0 0.0
    %3248 = vmatprep.subr.mxu0 0.0
    %3249 = vmatpush1.msra.mxu0 0.0
    %3250 = vmatprep.subr.mxu0 0.0
    %3251 = vmatpush1.msra.mxu0 0.0
    %3252 = vmatprep.subr.mxu0 0.0
    %3253 = vmatpush1.msra.mxu0 0.0
    %3254 = vmatprep.subr.mxu0 0.0
    %3255 = vmatpush1.msra.mxu0 0.0
    %3256 = vmatprep.subr.mxu0 0.0
    %3257 = vmatpush1.msra.mxu0 0.0
    %3258 = vmatprep.subr.mxu0 0.0
    %3259 = vmatpush1.msra.mxu0 0.0
    %3260 = vmatprep.subr.mxu0 0.0
    %3261 = vmatpush1.msra.mxu0 0.0
    %3262 = vmatprep.subr.mxu0 0.0
    %3263 = vmatpush1.msra.mxu0 0.0
    %3264 = vmatprep.subr.mxu0 0.0
    %3265 = vmatpush1.msra.mxu0 0.0
    %3266 = vmatprep.subr.mxu0 0.0
    %3267 = vmatpush1.msra.mxu0 0.0
    %3268 = vmatprep.subr.mxu0 0.0
    %3269 = vmatpush1.msra.mxu0 0.0
    %3270 = vmatprep.subr.mxu0 0.0
    %3271 = vmatpush1.msra.mxu0 0.0
    %3272 = vmatprep.subr.mxu0 0.0
    %3273 = vmatpush1.msra.mxu0 0.0
    %3274 = vmatprep.subr.mxu0 0.0
    %3275 = vmatpush1.msra.mxu0 0.0
    %3276 = vmatprep.subr.mxu0 0.0
    %3277 = vmatpush1.msra.mxu0 0.0
    %3278 = vmatprep.subr.mxu0 0.0
    %3279 = vmatpush1.msra.mxu0 0.0
    %3280 = vmatprep.mubr.f32.mxu0 0.0
    %3281 = vmatmul.mubr.f32.gmra.mrb[0].mxu0 %v292
    %v3282 = vpop.f32.mrb[0].mxu0
    %v3283 = vadd.f32 %v69, %v3282
    %v3284 = vpop.f32.mrb[0].mxu0
    %3285 = vmatprep.mubr.f32.mxu0 0.0
    %3286 = vmatmul.mubr.f32.gmra.mrb[0].mxu0 %v295
    %v3287 = vpop.f32.mrb[0].mxu0
    %v3288 = vadd.f32 %v69, %v3287
    %v3289 = vpop.f32.mrb[0].mxu0
    %3290 = vmatprep.mubr.f32.mxu0 0.0
    %3291 = vmatmul.mubr.f32.gmra.mrb[0].mxu0 %v298
    %v3292 = vpop.f32.mrb[0].mxu0
    %v3293 = vadd.f32 %v69, %v3292
    %v3294 = vpop.f32.mrb[0].mxu0
    %3295 = vdwg.mxu0
    %v3296 = vtanh.pop %v3283
    %v3297 = vtanh.pop %v3288
    %v3298 = vtanh.pop %v3293
    %v3300 = vsel %vm383, %v3296, 0
    %v3303 = vsel %vm383, %v3297, 0
    %v3306 = vsel %vm383, %v3298, 0
    %3308 = vmatprep.subr.mxu0 0.0
    %3309 = vmatpush1.msra.mxu0 %v36
    %3310 = vmatprep.subr.mxu0 0.0
    %3311 = vmatpush1.msra.mxu0 %v37
    %3312 = vmatprep.subr.mxu0 0.0
    %3313 = vmatpush1.msra.mxu0 %v38
    %3314 = vmatprep.subr.mxu0 0.0
    %3315 = vmatpush1.msra.mxu0 %v39
    %3316 = vmatprep.subr.mxu0 0.0
    %3317 = vmatpush1.msra.mxu0 %v40
    %3318 = vmatprep.subr.mxu0 0.0
    %3319 = vmatpush1.msra.mxu0 %v41
    %3320 = vmatprep.subr.mxu0 0.0
    %3321 = vmatpush1.msra.mxu0 %v42
    %3322 = vmatprep.subr.mxu0 0.0
    %3323 = vmatpush1.msra.mxu0 %v43
    %3324 = vmatprep.subr.mxu0 0.0
    %3325 = vmatpush1.msra.mxu0 0.0
    %3326 = vmatprep.subr.mxu0 0.0
    %3327 = vmatpush1.msra.mxu0 0.0
    %3328 = vmatprep.subr.mxu0 0.0
    %3329 = vmatpush1.msra.mxu0 0.0
    %3330 = vmatprep.subr.mxu0 0.0
    %3331 = vmatpush1.msra.mxu0 0.0
    %3332 = vmatprep.subr.mxu0 0.0
    %3333 = vmatpush1.msra.mxu0 0.0
    %3334 = vmatprep.subr.mxu0 0.0
    %3335 = vmatpush1.msra.mxu0 0.0
    %3336 = vmatprep.subr.mxu0 0.0
    %3337 = vmatpush1.msra.mxu0 0.0
    %3338 = vmatprep.subr.mxu0 0.0
    %3339 = vmatpush1.msra.mxu0 0.0
    %3340 = vmatprep.subr.mxu0 0.0
    %3341 = vmatpush1.msra.mxu0 0.0
    %3342 = vmatprep.subr.mxu0 0.0
    %3343 = vmatpush1.msra.mxu0 0.0
    %3344 = vmatprep.subr.mxu0 0.0
    %3345 = vmatpush1.msra.mxu0 0.0
    %3346 = vmatprep.subr.mxu0 0.0
    %3347 = vmatpush1.msra.mxu0 0.0
    %3348 = vmatprep.subr.mxu0 0.0
    %3349 = vmatpush1.msra.mxu0 0.0
    %3350 = vmatprep.subr.mxu0 0.0
    %3351 = vmatpush1.msra.mxu0 0.0
    %3352 = vmatprep.subr.mxu0 0.0
    %3353 = vmatpush1.msra.mxu0 0.0
    %3354 = vmatprep.subr.mxu0 0.0
    %3355 = vmatpush1.msra.mxu0 0.0
    %3356 = vmatprep.subr.mxu0 0.0
    %3357 = vmatpush1.msra.mxu0 0.0
    %3358 = vmatprep.subr.mxu0 0.0
    %3359 = vmatpush1.msra.mxu0 0.0
    %3360 = vmatprep.subr.mxu0 0.0
    %3361 = vmatpush1.msra.mxu0 0.0
    %3362 = vmatprep.subr.mxu0 0.0
    %3363 = vmatpush1.msra.mxu0 0.0
    %3364 = vmatprep.subr.mxu0 0.0
    %3365 = vmatpush1.msra.mxu0 0.0
    %3366 = vmatprep.subr.mxu0 0.0
    %3367 = vmatpush1.msra.mxu0 0.0
    %3368 = vmatprep.subr.mxu0 0.0
    %3369 = vmatpush1.msra.mxu0 0.0
    %3370 = vmatprep.subr.mxu0 0.0
    %3371 = vmatpush1.msra.mxu0 0.0
    %3372 = vmatprep.mubr.f32.mxu0 0.0
    %3373 = vmatmul.mubr.f32.gmra.mrb[0].mxu0 %v3300
    %v3374 = vpop.f32.mrb[0].mxu0
    %v3375 = vadd.f32 %v74, %v3374
    %v3376 = vpop.f32.mrb[0].mxu0
    %3377 = vmatprep.mubr.f32.mxu0 0.0
    %3378 = vmatmul.mubr.f32.gmra.mrb[0].mxu0 %v3303
    %v3379 = vpop.f32.mrb[0].mxu0
    %v3380 = vadd.f32 %v74, %v3379
    %v3381 = vpop.f32.mrb[0].mxu0
    %3382 = vmatprep.mubr.f32.mxu0 0.0
    %3383 = vmatmul.mubr.f32.gmra.mrb[0].mxu0 %v3306
    %v3384 = vpop.f32.mrb[0].mxu0
    %v3385 = vadd.f32 %v74, %v3384
    %v3386 = vpop.f32.mrb[0].mxu0
    %3387 = vdwg.mxu0
    %v3388 = vtanh.pop %v3375
    %v3389 = vtanh.pop %v3380
    %v3390 = vtanh.pop %v3385
    %v3391 = vmul.f32 %v3388, %v127
    %v3392 = vmul.f32 %v3389, %v128
    %v3393 = vmul.f32 %v3390, %v129
    %3394 = vmatprep.subr.mxu0 0.0
    %3395 = vmatpush1.msra.mxu0 %v3391
    %3396 = vmatprep.subr.mxu0 0.0
    %3397 = vmatpush1.msra.mxu0 %v3392
    %3398 = vmatprep.subr.mxu0 0.0
    %3399 = vmatpush1.msra.mxu0 %v3393
    %3400 = vmatprep.subr.mxu0 0.0
    %3401 = vmatpush1.msra.mxu0 0.0
    %3402 = vmatprep.subr.mxu0 0.0
    %3403 = vmatpush1.msra.mxu0 0.0
    %3404 = vmatprep.subr.mxu0 0.0
    %3405 = vmatpush1.msra.mxu0 0.0
    %3406 = vmatprep.subr.mxu0 0.0
    %3407 = vmatpush1.msra.mxu0 0.0
    %3408 = vmatprep.subr.mxu0 0.0
    %3409 = vmatpush1.msra.mxu0 0.0
    %3410 = vmatprep.subr.mxu0 0.0
    %3411 = vmatpush1.msra.mxu0 0.0
    %3412 = vmatprep.subr.mxu0 0.0
    %3413 = vmatpush1.msra.mxu0 0.0
    %3414 = vmatprep.subr.mxu0 0.0
    %3415 = vmatpush1.msra.mxu0 0.0
    %3416 = vmatprep.subr.mxu0 0.0
    %3417 = vmatpush1.msra.mxu0 0.0
    %3418 = vmatprep.subr.mxu0 0.0
    %3419 = vmatpush1.msra.mxu0 0.0
    %3420 = vmatprep.subr.mxu0 0.0
    %3421 = vmatpush1.msra.mxu0 0.0
    %3422 = vmatprep.subr.mxu0 0.0
    %3423 = vmatpush1.msra.mxu0 0.0
    %3424 = vmatprep.subr.mxu0 0.0
    %3425 = vmatpush1.msra.mxu0 0.0
    %3426 = vmatprep.subr.mxu0 0.0
    %3427 = vmatpush1.msra.mxu0 0.0
    %3428 = vmatprep.subr.mxu0 0.0
    %3429 = vmatpush1.msra.mxu0 0.0
    %3430 = vmatprep.subr.mxu0 0.0
    %3431 = vmatpush1.msra.mxu0 0.0
    %3432 = vmatprep.subr.mxu0 0.0
    %3433 = vmatpush1.msra.mxu0 0.0
    %3434 = vmatprep.subr.mxu0 0.0
    %3435 = vmatpush1.msra.mxu0 0.0
    %3436 = vmatprep.subr.mxu0 0.0
    %3437 = vmatpush1.msra.mxu0 0.0
    %3438 = vmatprep.subr.mxu0 0.0
    %3439 = vmatpush1.msra.mxu0 0.0
    %3440 = vmatprep.subr.mxu0 0.0
    %3441 = vmatpush1.msra.mxu0 0.0
    %3442 = vmatprep.subr.mxu0 0.0
    %3443 = vmatpush1.msra.mxu0 0.0
    %3444 = vmatprep.subr.mxu0 0.0
    %3445 = vmatpush1.msra.mxu0 0.0
    %3446 = vmatprep.subr.mxu0 0.0
    %3447 = vmatpush1.msra.mxu0 0.0
    %3448 = vmatprep.subr.mxu0 0.0
    %3449 = vmatpush1.msra.mxu0 0.0
    %3450 = vmatprep.subr.mxu0 0.0
    %3451 = vmatpush1.msra.mxu0 0.0
    %3452 = vmatprep.subr.mxu0 0.0
    %3453 = vmatpush1.msra.mxu0 0.0
    %3454 = vmatprep.subr.mxu0 0.0
    %3455 = vmatpush1.msra.mxu0 0.0
    %3456 = vmatprep.subr.mxu0 0.0
    %3457 = vmatpush1.msra.mxu0 0.0
    %3458 = vmatprep.mubr.f32.mxu0 0.0
    %3459 = vmatmul.mubr.f32.gmra.mrb[0].mxu0 %v481
    %v3460 = vpop.f32.mrb[0].mxu0
    %v3461 = vadd.f32 0.0, %v3460
    %v3462 = vpop.f32.mrb[0].mxu0
    %3463 = vdwg.mxu0
    %3465 = vrot.lane.b32.xlu0 %v3461, 96
    %v3466 = vpop.permute.xlu0 %3465
    %v3468 = vadd.f32 %v3461, %v3466
    %v3470 = vsel %vm126, %v3468, 0
    %3472 = vmatprep.subr.mxu0 0.0
    %3473 = vmatpush1.msra.mxu0 %v44
    %3474 = vmatprep.subr.mxu0 0.0
    %3475 = vmatpush1.msra.mxu0 %v45
    %3476 = vmatprep.subr.mxu0 0.0
    %3477 = vmatpush1.msra.mxu0 %v46
    %3478 = vmatprep.subr.mxu0 0.0
    %3479 = vmatpush1.msra.mxu0 %v47
    %3480 = vmatprep.subr.mxu0 0.0
    %3481 = vmatpush1.msra.mxu0 0.0
    %3482 = vmatprep.subr.mxu0 0.0
    %3483 = vmatpush1.msra.mxu0 0.0
    %3484 = vmatprep.subr.mxu0 0.0
    %3485 = vmatpush1.msra.mxu0 0.0
    %3486 = vmatprep.subr.mxu0 0.0
    %3487 = vmatpush1.msra.mxu0 0.0
    %3488 = vmatprep.subr.mxu0 0.0
    %3489 = vmatpush1.msra.mxu0 0.0
    %3490 = vmatprep.subr.mxu0 0.0
    %3491 = vmatpush1.msra.mxu0 0.0
    %3492 = vmatprep.subr.mxu0 0.0
    %3493 = vmatpush1.msra.mxu0 0.0
    %3494 = vmatprep.subr.mxu0 0.0
    %3495 = vmatpush1.msra.mxu0 0.0
    %3496 = vmatprep.subr.mxu0 0.0
    %3497 = vmatpush1.msra.mxu0 0.0
    %3498 = vmatprep.subr.mxu0 0.0
    %3499 = vmatpush1.msra.mxu0 0.0
    %3500 = vmatprep.subr.mxu0 0.0
    %3501 = vmatpush1.msra.mxu0 0.0
    %3502 = vmatprep.subr.mxu0 0.0
    %3503 = vmatpush1.msra.mxu0 0.0
    %3504 = vmatprep.subr.mxu0 0.0
    %3505 = vmatpush1.msra.mxu0 0.0
    %3506 = vmatprep.subr.mxu0 0.0
    %3507 = vmatpush1.msra.mxu0 0.0
    %3508 = vmatprep.subr.mxu0 0.0
    %3509 = vmatpush1.msra.mxu0 0.0
    %3510 = vmatprep.subr.mxu0 0.0
    %3511 = vmatpush1.msra.mxu0 0.0
    %3512 = vmatprep.subr.mxu0 0.0
    %3513 = vmatpush1.msra.mxu0 0.0
    %3514 = vmatprep.subr.mxu0 0.0
    %3515 = vmatpush1.msra.mxu0 0.0
    %3516 = vmatprep.subr.mxu0 0.0
    %3517 = vmatpush1.msra.mxu0 0.0
    %3518 = vmatprep.subr.mxu0 0.0
    %3519 = vmatpush1.msra.mxu0 0.0
    %3520 = vmatprep.subr.mxu0 0.0
    %3521 = vmatpush1.msra.mxu0 0.0
    %3522 = vmatprep.subr.mxu0 0.0
    %3523 = vmatpush1.msra.mxu0 0.0
    %3524 = vmatprep.subr.mxu0 0.0
    %3525 = vmatpush1.msra.mxu0 0.0
    %3526 = vmatprep.subr.mxu0 0.0
    %3527 = vmatpush1.msra.mxu0 0.0
    %3528 = vmatprep.subr.mxu0 0.0
    %3529 = vmatpush1.msra.mxu0 0.0
    %3530 = vmatprep.subr.mxu0 0.0
    %3531 = vmatpush1.msra.mxu0 0.0
    %3532 = vmatprep.subr.mxu0 0.0
    %3533 = vmatpush1.msra.mxu0 0.0
    %3534 = vmatprep.subr.mxu0 0.0
    %3535 = vmatpush1.msra.mxu0 0.0
    %3536 = vmatprep.mubr.f32.mxu0 0.0
    %3537 = vmatmul.mubr.f32.gmra.mrb[0].mxu0 %v3470
    %v3538 = vpop.f32.mrb[0].mxu0
    %v3539 = vadd.f32 0.0, %v3538
    %v3540 = vpop.f32.mrb[0].mxu0
    %3541 = vdwg.mxu0
    %v3542 = vadd.f32 %v3141, %v3539
    %v3543 = vxor.u32 %v3542, 2147483648
    %v3544 = vmul.f32 %v3543, 1.442695
    %v3545 = vpow.pop %v3544
    %v3546 = vadd.f32 %v3545, 1.0
    %v3547 = vrcp.pop %v3546
    %v3548 = vmul.f32 1.0, %v3547
    %3550 = vrot.lane.b32.xlu0 %v3539, 64
    %v3551 = vpop.permute.xlu0 %3550
    %v3553 = vmul.f32 %v3548, %v3551
    %3555 = vrot.lane.b32.xlu0 %v3553, 64
    %v3556 = vpop.permute.xlu0 %3555
    %v3558 = vadd.f32 %v3141, %v3556
    %v3559 = vtanh.pop %v3558
    %v3560 = vsub.f32 1.0, %v3548
    %3562 = vrot.lane.b32.xlu0 %v3559, 96
    %v3563 = vpop.permute.xlu0 %3562
    %v3565 = vmul.f32 %v3560, %v3563
    %v3566 = vmul.f32 %v3548, %v2838
    %v3567 = vadd.f32 %v3565, %v3566
    %3569 = vrot.lane.b32.xlu0 %v3567, 96
    %v3570 = vpop.permute.xlu0 %3569
    %v3571 = vsel %vm126, %v3570, 0
    %3573 = vmatprep.subr.mxu0 0.0
    %3574 = vmatpush1.msra.mxu0 %v49
    %3575 = vmatprep.subr.mxu0 0.0
    %3576 = vmatpush1.msra.mxu0 %v50
    %3577 = vmatprep.subr.mxu0 0.0
    %3578 = vmatpush1.msra.mxu0 %v51
    %3579 = vmatprep.subr.mxu0 0.0
    %3580 = vmatpush1.msra.mxu0 %v52
    %3581 = vmatprep.subr.mxu0 0.0
    %3582 = vmatpush1.msra.mxu0 0.0
    %3583 = vmatprep.subr.mxu0 0.0
    %3584 = vmatpush1.msra.mxu0 0.0
    %3585 = vmatprep.subr.mxu0 0.0
    %3586 = vmatpush1.msra.mxu0 0.0
    %3587 = vmatprep.subr.mxu0 0.0
    %3588 = vmatpush1.msra.mxu0 0.0
    %3589 = vmatprep.subr.mxu0 0.0
    %3590 = vmatpush1.msra.mxu0 0.0
    %3591 = vmatprep.subr.mxu0 0.0
    %3592 = vmatpush1.msra.mxu0 0.0
    %3593 = vmatprep.subr.mxu0 0.0
    %3594 = vmatpush1.msra.mxu0 0.0
    %3595 = vmatprep.subr.mxu0 0.0
    %3596 = vmatpush1.msra.mxu0 0.0
    %3597 = vmatprep.subr.mxu0 0.0
    %3598 = vmatpush1.msra.mxu0 0.0
    %3599 = vmatprep.subr.mxu0 0.0
    %3600 = vmatpush1.msra.mxu0 0.0
    %3601 = vmatprep.subr.mxu0 0.0
    %3602 = vmatpush1.msra.mxu0 0.0
    %3603 = vmatprep.subr.mxu0 0.0
    %3604 = vmatpush1.msra.mxu0 0.0
    %3605 = vmatprep.subr.mxu0 0.0
    %3606 = vmatpush1.msra.mxu0 0.0
    %3607 = vmatprep.subr.mxu0 0.0
    %3608 = vmatpush1.msra.mxu0 0.0
    %3609 = vmatprep.subr.mxu0 0.0
    %3610 = vmatpush1.msra.mxu0 0.0
    %3611 = vmatprep.subr.mxu0 0.0
    %3612 = vmatpush1.msra.mxu0 0.0
    %3613 = vmatprep.subr.mxu0 0.0
    %3614 = vmatpush1.msra.mxu0 0.0
    %3615 = vmatprep.subr.mxu0 0.0
    %3616 = vmatpush1.msra.mxu0 0.0
    %3617 = vmatprep.subr.mxu0 0.0
    %3618 = vmatpush1.msra.mxu0 0.0
    %3619 = vmatprep.subr.mxu0 0.0
    %3620 = vmatpush1.msra.mxu0 0.0
    %3621 = vmatprep.subr.mxu0 0.0
    %3622 = vmatpush1.msra.mxu0 0.0
    %3623 = vmatprep.subr.mxu0 0.0
    %3624 = vmatpush1.msra.mxu0 0.0
    %3625 = vmatprep.subr.mxu0 0.0
    %3626 = vmatpush1.msra.mxu0 0.0
    %3627 = vmatprep.subr.mxu0 0.0
    %3628 = vmatpush1.msra.mxu0 0.0
    %3629 = vmatprep.subr.mxu0 0.0
    %3630 = vmatpush1.msra.mxu0 0.0
    %3631 = vmatprep.subr.mxu0 0.0
    %3632 = vmatpush1.msra.mxu0 0.0
    %3633 = vmatprep.subr.mxu0 0.0
    %3634 = vmatpush1.msra.mxu0 0.0
    %3635 = vmatprep.subr.mxu0 0.0
    %3636 = vmatpush1.msra.mxu0 0.0
    %3637 = vmatprep.mubr.f32.mxu0 0.0
    %3638 = vmatmul.mubr.f32.gmra.mrb[0].mxu0 %v3571
    %v3639 = vpop.f32.mrb[0].mxu0
    %v3640 = vadd.f32 %v79, %v3639
    %v3641 = vpop.f32.mrb[0].mxu0
    %3642 = vdwg.mxu0
    %v3643 = vmax.f32 %v3640, 0.0
    %v3645 = vsel %vm126, %v3643, 0
    %3647 = vmatprep.subr.mxu0 0.0
    %3648 = vmatpush1.msra.mxu0 %v53
    %3649 = vmatprep.subr.mxu0 0.0
    %3650 = vmatpush1.msra.mxu0 %v54
    %3651 = vmatprep.subr.mxu0 0.0
    %3652 = vmatpush1.msra.mxu0 %v55
    %3653 = vmatprep.subr.mxu0 0.0
    %3654 = vmatpush1.msra.mxu0 %v56
    %3655 = vmatprep.subr.mxu0 0.0
    %3656 = vmatpush1.msra.mxu0 0.0
    %3657 = vmatprep.subr.mxu0 0.0
    %3658 = vmatpush1.msra.mxu0 0.0
    %3659 = vmatprep.subr.mxu0 0.0
    %3660 = vmatpush1.msra.mxu0 0.0
    %3661 = vmatprep.subr.mxu0 0.0
    %3662 = vmatpush1.msra.mxu0 0.0
    %3663 = vmatprep.subr.mxu0 0.0
    %3664 = vmatpush1.msra.mxu0 0.0
    %3665 = vmatprep.subr.mxu0 0.0
    %3666 = vmatpush1.msra.mxu0 0.0
    %3667 = vmatprep.subr.mxu0 0.0
    %3668 = vmatpush1.msra.mxu0 0.0
    %3669 = vmatprep.subr.mxu0 0.0
    %3670 = vmatpush1.msra.mxu0 0.0
    %3671 = vmatprep.subr.mxu0 0.0
    %3672 = vmatpush1.msra.mxu0 0.0
    %3673 = vmatprep.subr.mxu0 0.0
    %3674 = vmatpush1.msra.mxu0 0.0
    %3675 = vmatprep.subr.mxu0 0.0
    %3676 = vmatpush1.msra.mxu0 0.0
    %3677 = vmatprep.subr.mxu0 0.0
    %3678 = vmatpush1.msra.mxu0 0.0
    %3679 = vmatprep.subr.mxu0 0.0
    %3680 = vmatpush1.msra.mxu0 0.0
    %3681 = vmatprep.subr.mxu0 0.0
    %3682 = vmatpush1.msra.mxu0 0.0
    %3683 = vmatprep.subr.mxu0 0.0
    %3684 = vmatpush1.msra.mxu0 0.0
    %3685 = vmatprep.subr.mxu0 0.0
    %3686 = vmatpush1.msra.mxu0 0.0
    %3687 = vmatprep.subr.mxu0 0.0
    %3688 = vmatpush1.msra.mxu0 0.0
    %3689 = vmatprep.subr.mxu0 0.0
    %3690 = vmatpush1.msra.mxu0 0.0
    %3691 = vmatprep.subr.mxu0 0.0
    %3692 = vmatpush1.msra.mxu0 0.0
    %3693 = vmatprep.subr.mxu0 0.0
    %3694 = vmatpush1.msra.mxu0 0.0
    %3695 = vmatprep.subr.mxu0 0.0
    %3696 = vmatpush1.msra.mxu0 0.0
    %3697 = vmatprep.subr.mxu0 0.0
    %3698 = vmatpush1.msra.mxu0 0.0
    %3699 = vmatprep.subr.mxu0 0.0
    %3700 = vmatpush1.msra.mxu0 0.0
    %3701 = vmatprep.subr.mxu0 0.0
    %3702 = vmatpush1.msra.mxu0 0.0
    %3703 = vmatprep.subr.mxu0 0.0
    %3704 = vmatpush1.msra.mxu0 0.0
    %3705 = vmatprep.subr.mxu0 0.0
    %3706 = vmatpush1.msra.mxu0 0.0
    %3707 = vmatprep.subr.mxu0 0.0
    %3708 = vmatpush1.msra.mxu0 0.0
    %3709 = vmatprep.subr.mxu0 0.0
    %3710 = vmatpush1.msra.mxu0 0.0
    %3711 = vmatprep.mubr.f32.mxu0 0.0
    %3712 = vmatmul.mubr.f32.gmra.mrb[0].mxu0 %v3645
    %v3713 = vpop.f32.mrb[0].mxu0
    %v3714 = vadd.f32 %v84, %v3713
    %v3715 = vpop.f32.mrb[0].mxu0
    %3716 = vdwg.mxu0
    %v3717 = vmax.f32 %v3714, 0.0
    %v3719 = vsel %vm126, %v3717, 0
    %3721 = vmatprep.subr.mxu0 0.0
    %3722 = vmatpush1.msra.mxu0 %v57
    %3723 = vmatprep.subr.mxu0 0.0
    %3724 = vmatpush1.msra.mxu0 %v58
    %3725 = vmatprep.subr.mxu0 0.0
    %3726 = vmatpush1.msra.mxu0 %v59
    %3727 = vmatprep.subr.mxu0 0.0
    %3728 = vmatpush1.msra.mxu0 %v60
    %3729 = vmatprep.subr.mxu0 0.0
    %3730 = vmatpush1.msra.mxu0 0.0
    %3731 = vmatprep.subr.mxu0 0.0
    %3732 = vmatpush1.msra.mxu0 0.0
    %3733 = vmatprep.subr.mxu0 0.0
    %3734 = vmatpush1.msra.mxu0 0.0
    %3735 = vmatprep.subr.mxu0 0.0
    %3736 = vmatpush1.msra.mxu0 0.0
    %3737 = vmatprep.subr.mxu0 0.0
    %3738 = vmatpush1.msra.mxu0 0.0
    %3739 = vmatprep.subr.mxu0 0.0
    %3740 = vmatpush1.msra.mxu0 0.0
    %3741 = vmatprep.subr.mxu0 0.0
    %3742 = vmatpush1.msra.mxu0 0.0
    %3743 = vmatprep.subr.mxu0 0.0
    %3744 = vmatpush1.msra.mxu0 0.0
    %3745 = vmatprep.subr.mxu0 0.0
    %3746 = vmatpush1.msra.mxu0 0.0
    %3747 = vmatprep.subr.mxu0 0.0
    %3748 = vmatpush1.msra.mxu0 0.0
    %3749 = vmatprep.subr.mxu0 0.0
    %3750 = vmatpush1.msra.mxu0 0.0
    %3751 = vmatprep.subr.mxu0 0.0
    %3752 = vmatpush1.msra.mxu0 0.0
    %3753 = vmatprep.subr.mxu0 0.0
    %3754 = vmatpush1.msra.mxu0 0.0
    %3755 = vmatprep.subr.mxu0 0.0
    %3756 = vmatpush1.msra.mxu0 0.0
    %3757 = vmatprep.subr.mxu0 0.0
    %3758 = vmatpush1.msra.mxu0 0.0
    %3759 = vmatprep.subr.mxu0 0.0
    %3760 = vmatpush1.msra.mxu0 0.0
    %3761 = vmatprep.subr.mxu0 0.0
    %3762 = vmatpush1.msra.mxu0 0.0
    %3763 = vmatprep.subr.mxu0 0.0
    %3764 = vmatpush1.msra.mxu0 0.0
    %3765 = vmatprep.subr.mxu0 0.0
    %3766 = vmatpush1.msra.mxu0 0.0
    %3767 = vmatprep.subr.mxu0 0.0
    %3768 = vmatpush1.msra.mxu0 0.0
    %3769 = vmatprep.subr.mxu0 0.0
    %3770 = vmatpush1.msra.mxu0 0.0
    %3771 = vmatprep.subr.mxu0 0.0
    %3772 = vmatpush1.msra.mxu0 0.0
    %3773 = vmatprep.subr.mxu0 0.0
    %3774 = vmatpush1.msra.mxu0 0.0
    %3775 = vmatprep.subr.mxu0 0.0
    %3776 = vmatpush1.msra.mxu0 0.0
    %3777 = vmatprep.subr.mxu0 0.0
    %3778 = vmatpush1.msra.mxu0 0.0
    %3779 = vmatprep.subr.mxu0 0.0
    %3780 = vmatpush1.msra.mxu0 0.0
    %3781 = vmatprep.subr.mxu0 0.0
    %3782 = vmatpush1.msra.mxu0 0.0
    %3783 = vmatprep.subr.mxu0 0.0
    %3784 = vmatpush1.msra.mxu0 0.0
    %3785 = vmatprep.mubr.f32.mxu0 0.0
    %3786 = vmatmul.mubr.f32.gmra.mrb[0].mxu0 %v3719
    %v3787 = vpop.f32.mrb[0].mxu0
    %v3788 = vadd.f32 0.0, %v3787
    %v3789 = vpop.f32.mrb[0].mxu0
    %3790 = vdwg.mxu0
    %v3791 = vadd.f32 %v3063, %v3788
    %v3792 = vadd.f32 %v3791, %v89
    %3794 = vrot.lane.b32.xlu0 %v3792, 16
    %v3795 = vpop.permute.xlu0 %3794
    %vm3797 = vcmask 162944
    %3798 = vst.msk [vmem:[%s3] sm:$0xff] %vm3797, %v3795
    %3799 = vmatprep.subr.mxu0 0.0
    %3800 = vmatpush1.msra.mxu0 %v61
    %3801 = vmatprep.subr.mxu0 0.0
    %3802 = vmatpush1.msra.mxu0 %v62
    %3803 = vmatprep.subr.mxu0 0.0
    %3804 = vmatpush1.msra.mxu0 %v63
    %3805 = vmatprep.subr.mxu0 0.0
    %3806 = vmatpush1.msra.mxu0 %v64
    %3807 = vmatprep.subr.mxu0 0.0
    %3808 = vmatpush1.msra.mxu0 0.0
    %3809 = vmatprep.subr.mxu0 0.0
    %3810 = vmatpush1.msra.mxu0 0.0
    %3811 = vmatprep.subr.mxu0 0.0
    %3812 = vmatpush1.msra.mxu0 0.0
    %3813 = vmatprep.subr.mxu0 0.0
    %3814 = vmatpush1.msra.mxu0 0.0
    %3815 = vmatprep.subr.mxu0 0.0
    %3816 = vmatpush1.msra.mxu0 0.0
    %3817 = vmatprep.subr.mxu0 0.0
    %3818 = vmatpush1.msra.mxu0 0.0
    %3819 = vmatprep.subr.mxu0 0.0
    %3820 = vmatpush1.msra.mxu0 0.0
    %3821 = vmatprep.subr.mxu0 0.0
    %3822 = vmatpush1.msra.mxu0 0.0
    %3823 = vmatprep.subr.mxu0 0.0
    %3824 = vmatpush1.msra.mxu0 0.0
    %3825 = vmatprep.subr.mxu0 0.0
    %3826 = vmatpush1.msra.mxu0 0.0
    %3827 = vmatprep.subr.mxu0 0.0
    %3828 = vmatpush1.msra.mxu0 0.0
    %3829 = vmatprep.subr.mxu0 0.0
    %3830 = vmatpush1.msra.mxu0 0.0
    %3831 = vmatprep.subr.mxu0 0.0
    %3832 = vmatpush1.msra.mxu0 0.0
    %3833 = vmatprep.subr.mxu0 0.0
    %3834 = vmatpush1.msra.mxu0 0.0
    %3835 = vmatprep.subr.mxu0 0.0
    %3836 = vmatpush1.msra.mxu0 0.0
    %3837 = vmatprep.subr.mxu0 0.0
    %3838 = vmatpush1.msra.mxu0 0.0
    %3839 = vmatprep.subr.mxu0 0.0
    %3840 = vmatpush1.msra.mxu0 0.0
    %3841 = vmatprep.subr.mxu0 0.0
    %3842 = vmatpush1.msra.mxu0 0.0
    %3843 = vmatprep.subr.mxu0 0.0
    %3844 = vmatpush1.msra.mxu0 0.0
    %3845 = vmatprep.subr.mxu0 0.0
    %3846 = vmatpush1.msra.mxu0 0.0
    %3847 = vmatprep.subr.mxu0 0.0
    %3848 = vmatpush1.msra.mxu0 0.0
    %3849 = vmatprep.subr.mxu0 0.0
    %3850 = vmatpush1.msra.mxu0 0.0
    %3851 = vmatprep.subr.mxu0 0.0
    %3852 = vmatpush1.msra.mxu0 0.0
    %3853 = vmatprep.subr.mxu0 0.0
    %3854 = vmatpush1.msra.mxu0 0.0
    %3855 = vmatprep.subr.mxu0 0.0
    %3856 = vmatpush1.msra.mxu0 0.0
    %3857 = vmatprep.subr.mxu0 0.0
    %3858 = vmatpush1.msra.mxu0 0.0
    %3859 = vmatprep.subr.mxu0 0.0
    %3860 = vmatpush1.msra.mxu0 0.0
    %3861 = vmatprep.subr.mxu0 0.0
    %3862 = vmatpush1.msra.mxu0 0.0
    %3863 = vmatprep.mubr.f32.mxu0 0.0
    %3864 = vmatmul.mubr.f32.gmra.mrb[0].mxu0 %v3719
    %v3865 = vpop.f32.mrb[0].mxu0
    %v3866 = vadd.f32 0.0, %v3865
    %v3867 = vpop.f32.mrb[0].mxu0
    %3868 = vdwg.mxu0
    %v3869 = vadd.f32 %v3141, %v3866
    %v3870 = vadd.f32 %v3869, %v94
    %3871 = vmatprep.subr.mxu0 0.0
    %3872 = vmatpush1.msra.mxu0 %v28
    %3873 = vmatprep.subr.mxu0 0.0
    %3874 = vmatpush1.msra.mxu0 %v29
    %3875 = vmatprep.subr.mxu0 0.0
    %3876 = vmatpush1.msra.mxu0 %v30
    %3877 = vmatprep.subr.mxu0 0.0
    %3878 = vmatpush1.msra.mxu0 %v31
    %3879 = vmatprep.subr.mxu0 0.0
    %3880 = vmatpush1.msra.mxu0 0.0
    %3881 = vmatprep.subr.mxu0 0.0
    %3882 = vmatpush1.msra.mxu0 0.0
    %3883 = vmatprep.subr.mxu0 0.0
    %3884 = vmatpush1.msra.mxu0 0.0
    %3885 = vmatprep.subr.mxu0 0.0
    %3886 = vmatpush1.msra.mxu0 0.0
    %3887 = vmatprep.subr.mxu0 0.0
    %3888 = vmatpush1.msra.mxu0 0.0
    %3889 = vmatprep.subr.mxu0 0.0
    %3890 = vmatpush1.msra.mxu0 0.0
    %3891 = vmatprep.subr.mxu0 0.0
    %3892 = vmatpush1.msra.mxu0 0.0
    %3893 = vmatprep.subr.mxu0 0.0
    %3894 = vmatpush1.msra.mxu0 0.0
    %3895 = vmatprep.subr.mxu0 0.0
    %3896 = vmatpush1.msra.mxu0 0.0
    %3897 = vmatprep.subr.mxu0 0.0
    %3898 = vmatpush1.msra.mxu0 0.0
    %3899 = vmatprep.subr.mxu0 0.0
    %3900 = vmatpush1.msra.mxu0 0.0
    %3901 = vmatprep.subr.mxu0 0.0
    %3902 = vmatpush1.msra.mxu0 0.0
    %3903 = vmatprep.subr.mxu0 0.0
    %3904 = vmatpush1.msra.mxu0 0.0
    %3905 = vmatprep.subr.mxu0 0.0
    %3906 = vmatpush1.msra.mxu0 0.0
    %3907 = vmatprep.subr.mxu0 0.0
    %3908 = vmatpush1.msra.mxu0 0.0
    %3909 = vmatprep.subr.mxu0 0.0
    %3910 = vmatpush1.msra.mxu0 0.0
    %3911 = vmatprep.subr.mxu0 0.0
    %3912 = vmatpush1.msra.mxu0 0.0
    %3913 = vmatprep.subr.mxu0 0.0
    %3914 = vmatpush1.msra.mxu0 0.0
    %3915 = vmatprep.subr.mxu0 0.0
    %3916 = vmatpush1.msra.mxu0 0.0
    %3917 = vmatprep.subr.mxu0 0.0
    %3918 = vmatpush1.msra.mxu0 0.0
    %3919 = vmatprep.subr.mxu0 0.0
    %3920 = vmatpush1.msra.mxu0 0.0
    %3921 = vmatprep.subr.mxu0 0.0
    %3922 = vmatpush1.msra.mxu0 0.0
    %3923 = vmatprep.subr.mxu0 0.0
    %3924 = vmatpush1.msra.mxu0 0.0
    %3925 = vmatprep.subr.mxu0 0.0
    %3926 = vmatpush1.msra.mxu0 0.0
    %3927 = vmatprep.subr.mxu0 0.0
    %3928 = vmatpush1.msra.mxu0 0.0
    %3929 = vmatprep.subr.mxu0 0.0
    %3930 = vmatpush1.msra.mxu0 0.0
    %3931 = vmatprep.subr.mxu0 0.0
    %3932 = vmatpush1.msra.mxu0 0.0
    %3933 = vmatprep.subr.mxu0 0.0
    %3934 = vmatpush1.msra.mxu0 0.0
    %3935 = vmatprep.mubr.f32.mxu0 0.0
    %3936 = vmatmul.mubr.f32.gmra.mrb[0].mxu0 %v3571
    %v3937 = vpop.f32.mrb[0].mxu0
    %v3938 = vadd.f32 0.0, %v3937
    %v3939 = vpop.f32.mrb[0].mxu0
    %3940 = vdwg.mxu0
    %3942 = vrot.lane.b32.xlu0 %v3938, 64
    %v3943 = vpop.permute.xlu0 %3942
    %3945 = vmatprep.subr.mxu0 0.0
    %3946 = vmatpush1.msra.mxu0 %v3938
    %3947 = vmatprep.subr.mxu0 0.0
    %3948 = vmatpush1.msra.mxu0 %v3943
    %3949 = vmatprep.subr.mxu0 0.0
    %3950 = vmatpush1.msra.mxu0 0.0
    %3951 = vmatprep.subr.mxu0 0.0
    %3952 = vmatpush1.msra.mxu0 0.0
    %3953 = vmatprep.subr.mxu0 0.0
    %3954 = vmatpush1.msra.mxu0 0.0
    %3955 = vmatprep.subr.mxu0 0.0
    %3956 = vmatpush1.msra.mxu0 0.0
    %3957 = vmatprep.subr.mxu0 0.0
    %3958 = vmatpush1.msra.mxu0 0.0
    %3959 = vmatprep.subr.mxu0 0.0
    %3960 = vmatpush1.msra.mxu0 0.0
    %3961 = vmatprep.subr.mxu0 0.0
    %3962 = vmatpush1.msra.mxu0 0.0
    %3963 = vmatprep.subr.mxu0 0.0
    %3964 = vmatpush1.msra.mxu0 0.0
    %3965 = vmatprep.subr.mxu0 0.0
    %3966 = vmatpush1.msra.mxu0 0.0
    %3967 = vmatprep.subr.mxu0 0.0
    %3968 = vmatpush1.msra.mxu0 0.0
    %3969 = vmatprep.subr.mxu0 0.0
    %3970 = vmatpush1.msra.mxu0 0.0
    %3971 = vmatprep.subr.mxu0 0.0
    %3972 = vmatpush1.msra.mxu0 0.0
    %3973 = vmatprep.subr.mxu0 0.0
    %3974 = vmatpush1.msra.mxu0 0.0
    %3975 = vmatprep.subr.mxu0 0.0
    %3976 = vmatpush1.msra.mxu0 0.0
    %3977 = vmatprep.subr.mxu0 0.0
    %3978 = vmatpush1.msra.mxu0 0.0
    %3979 = vmatprep.subr.mxu0 0.0
    %3980 = vmatpush1.msra.mxu0 0.0
    %3981 = vmatprep.subr.mxu0 0.0
    %3982 = vmatpush1.msra.mxu0 0.0
    %3983 = vmatprep.subr.mxu0 0.0
    %3984 = vmatpush1.msra.mxu0 0.0
    %3985 = vmatprep.subr.mxu0 0.0
    %3986 = vmatpush1.msra.mxu0 0.0
    %3987 = vmatprep.subr.mxu0 0.0
    %3988 = vmatpush1.msra.mxu0 0.0
    %3989 = vmatprep.subr.mxu0 0.0
    %3990 = vmatpush1.msra.mxu0 0.0
    %3991 = vmatprep.subr.mxu0 0.0
    %3992 = vmatpush1.msra.mxu0 0.0
    %3993 = vmatprep.subr.mxu0 0.0
    %3994 = vmatpush1.msra.mxu0 0.0
    %3995 = vmatprep.subr.mxu0 0.0
    %3996 = vmatpush1.msra.mxu0 0.0
    %3997 = vmatprep.subr.mxu0 0.0
    %3998 = vmatpush1.msra.mxu0 0.0
    %3999 = vmatprep.subr.mxu0 0.0
    %4000 = vmatpush1.msra.mxu0 0.0
    %4001 = vmatprep.subr.mxu0 0.0
    %4002 = vmatpush1.msra.mxu0 0.0
    %4003 = vmatprep.subr.mxu0 0.0
    %4004 = vmatpush1.msra.mxu0 0.0
    %4005 = vmatprep.subr.mxu0 0.0
    %4006 = vmatpush1.msra.mxu0 0.0
    %4007 = vmatprep.subr.mxu0 0.0
    %4008 = vmatpush1.msra.mxu0 0.0
    %4009 = vmatprep.mubr.f32.mxu0 0.0
    %4010 = vmatmul.mubr.f32.gmra.mrb[0].mxu0 %v292
    %v4011 = vpop.f32.mrb[0].mxu0
    %v4012 = vadd.f32 %v69, %v4011
    %v4013 = vpop.f32.mrb[0].mxu0
    %4014 = vmatprep.mubr.f32.mxu0 0.0
    %4015 = vmatmul.mubr.f32.gmra.mrb[0].mxu0 %v295
    %v4016 = vpop.f32.mrb[0].mxu0
    %v4017 = vadd.f32 %v69, %v4016
    %v4018 = vpop.f32.mrb[0].mxu0
    %4019 = vmatprep.mubr.f32.mxu0 0.0
    %4020 = vmatmul.mubr.f32.gmra.mrb[0].mxu0 %v298
    %v4021 = vpop.f32.mrb[0].mxu0
    %v4022 = vadd.f32 %v69, %v4021
    %v4023 = vpop.f32.mrb[0].mxu0
    %4024 = vdwg.mxu0
    %v4025 = vtanh.pop %v4012
    %v4026 = vtanh.pop %v4017
    %v4027 = vtanh.pop %v4022
    %v4029 = vsel %vm383, %v4025, 0
    %v4032 = vsel %vm383, %v4026, 0
    %v4035 = vsel %vm383, %v4027, 0
    %4037 = vmatprep.subr.mxu0 0.0
    %4038 = vmatpush1.msra.mxu0 %v36
    %4039 = vmatprep.subr.mxu0 0.0
    %4040 = vmatpush1.msra.mxu0 %v37
    %4041 = vmatprep.subr.mxu0 0.0
    %4042 = vmatpush1.msra.mxu0 %v38
    %4043 = vmatprep.subr.mxu0 0.0
    %4044 = vmatpush1.msra.mxu0 %v39
    %4045 = vmatprep.subr.mxu0 0.0
    %4046 = vmatpush1.msra.mxu0 %v40
    %4047 = vmatprep.subr.mxu0 0.0
    %4048 = vmatpush1.msra.mxu0 %v41
    %4049 = vmatprep.subr.mxu0 0.0
    %4050 = vmatpush1.msra.mxu0 %v42
    %4051 = vmatprep.subr.mxu0 0.0
    %4052 = vmatpush1.msra.mxu0 %v43
    %4053 = vmatprep.subr.mxu0 0.0
    %4054 = vmatpush1.msra.mxu0 0.0
    %4055 = vmatprep.subr.mxu0 0.0
    %4056 = vmatpush1.msra.mxu0 0.0
    %4057 = vmatprep.subr.mxu0 0.0
    %4058 = vmatpush1.msra.mxu0 0.0
    %4059 = vmatprep.subr.mxu0 0.0
    %4060 = vmatpush1.msra.mxu0 0.0
    %4061 = vmatprep.subr.mxu0 0.0
    %4062 = vmatpush1.msra.mxu0 0.0
    %4063 = vmatprep.subr.mxu0 0.0
    %4064 = vmatpush1.msra.mxu0 0.0
    %4065 = vmatprep.subr.mxu0 0.0
    %4066 = vmatpush1.msra.mxu0 0.0
    %4067 = vmatprep.subr.mxu0 0.0
    %4068 = vmatpush1.msra.mxu0 0.0
    %4069 = vmatprep.subr.mxu0 0.0
    %4070 = vmatpush1.msra.mxu0 0.0
    %4071 = vmatprep.subr.mxu0 0.0
    %4072 = vmatpush1.msra.mxu0 0.0
    %4073 = vmatprep.subr.mxu0 0.0
    %4074 = vmatpush1.msra.mxu0 0.0
    %4075 = vmatprep.subr.mxu0 0.0
    %4076 = vmatpush1.msra.mxu0 0.0
    %4077 = vmatprep.subr.mxu0 0.0
    %4078 = vmatpush1.msra.mxu0 0.0
    %4079 = vmatprep.subr.mxu0 0.0
    %4080 = vmatpush1.msra.mxu0 0.0
    %4081 = vmatprep.subr.mxu0 0.0
    %4082 = vmatpush1.msra.mxu0 0.0
    %4083 = vmatprep.subr.mxu0 0.0
    %4084 = vmatpush1.msra.mxu0 0.0
    %4085 = vmatprep.subr.mxu0 0.0
    %4086 = vmatpush1.msra.mxu0 0.0
    %4087 = vmatprep.subr.mxu0 0.0
    %4088 = vmatpush1.msra.mxu0 0.0
    %4089 = vmatprep.subr.mxu0 0.0
    %4090 = vmatpush1.msra.mxu0 0.0
    %4091 = vmatprep.subr.mxu0 0.0
    %4092 = vmatpush1.msra.mxu0 0.0
    %4093 = vmatprep.subr.mxu0 0.0
    %4094 = vmatpush1.msra.mxu0 0.0
    %4095 = vmatprep.subr.mxu0 0.0
    %4096 = vmatpush1.msra.mxu0 0.0
    %4097 = vmatprep.subr.mxu0 0.0
    %4098 = vmatpush1.msra.mxu0 0.0
    %4099 = vmatprep.subr.mxu0 0.0
    %4100 = vmatpush1.msra.mxu0 0.0
    %4101 = vmatprep.mubr.f32.mxu0 0.0
    %4102 = vmatmul.mubr.f32.gmra.mrb[0].mxu0 %v4029
    %v4103 = vpop.f32.mrb[0].mxu0
    %v4104 = vadd.f32 %v74, %v4103
    %v4105 = vpop.f32.mrb[0].mxu0
    %4106 = vmatprep.mubr.f32.mxu0 0.0
    %4107 = vmatmul.mubr.f32.gmra.mrb[0].mxu0 %v4032
    %v4108 = vpop.f32.mrb[0].mxu0
    %v4109 = vadd.f32 %v74, %v4108
    %v4110 = vpop.f32.mrb[0].mxu0
    %4111 = vmatprep.mubr.f32.mxu0 0.0
    %4112 = vmatmul.mubr.f32.gmra.mrb[0].mxu0 %v4035
    %v4113 = vpop.f32.mrb[0].mxu0
    %v4114 = vadd.f32 %v74, %v4113
    %v4115 = vpop.f32.mrb[0].mxu0
    %4116 = vdwg.mxu0
    %v4117 = vtanh.pop %v4104
    %v4118 = vtanh.pop %v4109
    %v4119 = vtanh.pop %v4114
    %v4120 = vmul.f32 %v4117, %v127
    %v4121 = vmul.f32 %v4118, %v128
    %v4122 = vmul.f32 %v4119, %v129
    %4123 = vmatprep.subr.mxu0 0.0
    %4124 = vmatpush1.msra.mxu0 %v4120
    %4125 = vmatprep.subr.mxu0 0.0
    %4126 = vmatpush1.msra.mxu0 %v4121
    %4127 = vmatprep.subr.mxu0 0.0
    %4128 = vmatpush1.msra.mxu0 %v4122
    %4129 = vmatprep.subr.mxu0 0.0
    %4130 = vmatpush1.msra.mxu0 0.0
    %4131 = vmatprep.subr.mxu0 0.0
    %4132 = vmatpush1.msra.mxu0 0.0
    %4133 = vmatprep.subr.mxu0 0.0
    %4134 = vmatpush1.msra.mxu0 0.0
    %4135 = vmatprep.subr.mxu0 0.0
    %4136 = vmatpush1.msra.mxu0 0.0
    %4137 = vmatprep.subr.mxu0 0.0
    %4138 = vmatpush1.msra.mxu0 0.0
    %4139 = vmatprep.subr.mxu0 0.0
    %4140 = vmatpush1.msra.mxu0 0.0
    %4141 = vmatprep.subr.mxu0 0.0
    %4142 = vmatpush1.msra.mxu0 0.0
    %4143 = vmatprep.subr.mxu0 0.0
    %4144 = vmatpush1.msra.mxu0 0.0
    %4145 = vmatprep.subr.mxu0 0.0
    %4146 = vmatpush1.msra.mxu0 0.0
    %4147 = vmatprep.subr.mxu0 0.0
    %4148 = vmatpush1.msra.mxu0 0.0
    %4149 = vmatprep.subr.mxu0 0.0
    %4150 = vmatpush1.msra.mxu0 0.0
    %4151 = vmatprep.subr.mxu0 0.0
    %4152 = vmatpush1.msra.mxu0 0.0
    %4153 = vmatprep.subr.mxu0 0.0
    %4154 = vmatpush1.msra.mxu0 0.0
    %4155 = vmatprep.subr.mxu0 0.0
    %4156 = vmatpush1.msra.mxu0 0.0
    %4157 = vmatprep.subr.mxu0 0.0
    %4158 = vmatpush1.msra.mxu0 0.0
    %4159 = vmatprep.subr.mxu0 0.0
    %4160 = vmatpush1.msra.mxu0 0.0
    %4161 = vmatprep.subr.mxu0 0.0
    %4162 = vmatpush1.msra.mxu0 0.0
    %4163 = vmatprep.subr.mxu0 0.0
    %4164 = vmatpush1.msra.mxu0 0.0
    %4165 = vmatprep.subr.mxu0 0.0
    %4166 = vmatpush1.msra.mxu0 0.0
    %4167 = vmatprep.subr.mxu0 0.0
    %4168 = vmatpush1.msra.mxu0 0.0
    %4169 = vmatprep.subr.mxu0 0.0
    %4170 = vmatpush1.msra.mxu0 0.0
    %4171 = vmatprep.subr.mxu0 0.0
    %4172 = vmatpush1.msra.mxu0 0.0
    %4173 = vmatprep.subr.mxu0 0.0
    %4174 = vmatpush1.msra.mxu0 0.0
    %4175 = vmatprep.subr.mxu0 0.0
    %4176 = vmatpush1.msra.mxu0 0.0
    %4177 = vmatprep.subr.mxu0 0.0
    %4178 = vmatpush1.msra.mxu0 0.0
    %4179 = vmatprep.subr.mxu0 0.0
    %4180 = vmatpush1.msra.mxu0 0.0
    %4181 = vmatprep.subr.mxu0 0.0
    %4182 = vmatpush1.msra.mxu0 0.0
    %4183 = vmatprep.subr.mxu0 0.0
    %4184 = vmatpush1.msra.mxu0 0.0
    %4185 = vmatprep.subr.mxu0 0.0
    %4186 = vmatpush1.msra.mxu0 0.0
    %4187 = vmatprep.mubr.f32.mxu0 0.0
    %4188 = vmatmul.mubr.f32.gmra.mrb[0].mxu0 %v481
    %v4189 = vpop.f32.mrb[0].mxu0
    %v4190 = vadd.f32 0.0, %v4189
    %v4191 = vpop.f32.mrb[0].mxu0
    %4192 = vdwg.mxu0
    %4194 = vrot.lane.b32.xlu0 %v4190, 96
    %v4195 = vpop.permute.xlu0 %4194
    %v4197 = vadd.f32 %v4190, %v4195
    %v4199 = vsel %vm126, %v4197, 0
    %4201 = vmatprep.subr.mxu0 0.0
    %4202 = vmatpush1.msra.mxu0 %v44
    %4203 = vmatprep.subr.mxu0 0.0
    %4204 = vmatpush1.msra.mxu0 %v45
    %4205 = vmatprep.subr.mxu0 0.0
    %4206 = vmatpush1.msra.mxu0 %v46
    %4207 = vmatprep.subr.mxu0 0.0
    %4208 = vmatpush1.msra.mxu0 %v47
    %4209 = vmatprep.subr.mxu0 0.0
    %4210 = vmatpush1.msra.mxu0 0.0
    %4211 = vmatprep.subr.mxu0 0.0
    %4212 = vmatpush1.msra.mxu0 0.0
    %4213 = vmatprep.subr.mxu0 0.0
    %4214 = vmatpush1.msra.mxu0 0.0
    %4215 = vmatprep.subr.mxu0 0.0
    %4216 = vmatpush1.msra.mxu0 0.0
    %4217 = vmatprep.subr.mxu0 0.0
    %4218 = vmatpush1.msra.mxu0 0.0
    %4219 = vmatprep.subr.mxu0 0.0
    %4220 = vmatpush1.msra.mxu0 0.0
    %4221 = vmatprep.subr.mxu0 0.0
    %4222 = vmatpush1.msra.mxu0 0.0
    %4223 = vmatprep.subr.mxu0 0.0
    %4224 = vmatpush1.msra.mxu0 0.0
    %4225 = vmatprep.subr.mxu0 0.0
    %4226 = vmatpush1.msra.mxu0 0.0
    %4227 = vmatprep.subr.mxu0 0.0
    %4228 = vmatpush1.msra.mxu0 0.0
    %4229 = vmatprep.subr.mxu0 0.0
    %4230 = vmatpush1.msra.mxu0 0.0
    %4231 = vmatprep.subr.mxu0 0.0
    %4232 = vmatpush1.msra.mxu0 0.0
    %4233 = vmatprep.subr.mxu0 0.0
    %4234 = vmatpush1.msra.mxu0 0.0
    %4235 = vmatprep.subr.mxu0 0.0
    %4236 = vmatpush1.msra.mxu0 0.0
    %4237 = vmatprep.subr.mxu0 0.0
    %4238 = vmatpush1.msra.mxu0 0.0
    %4239 = vmatprep.subr.mxu0 0.0
    %4240 = vmatpush1.msra.mxu0 0.0
    %4241 = vmatprep.subr.mxu0 0.0
    %4242 = vmatpush1.msra.mxu0 0.0
    %4243 = vmatprep.subr.mxu0 0.0
    %4244 = vmatpush1.msra.mxu0 0.0
    %4245 = vmatprep.subr.mxu0 0.0
    %4246 = vmatpush1.msra.mxu0 0.0
    %4247 = vmatprep.subr.mxu0 0.0
    %4248 = vmatpush1.msra.mxu0 0.0
    %4249 = vmatprep.subr.mxu0 0.0
    %4250 = vmatpush1.msra.mxu0 0.0
    %4251 = vmatprep.subr.mxu0 0.0
    %4252 = vmatpush1.msra.mxu0 0.0
    %4253 = vmatprep.subr.mxu0 0.0
    %4254 = vmatpush1.msra.mxu0 0.0
    %4255 = vmatprep.subr.mxu0 0.0
    %4256 = vmatpush1.msra.mxu0 0.0
    %4257 = vmatprep.subr.mxu0 0.0
    %4258 = vmatpush1.msra.mxu0 0.0
    %4259 = vmatprep.subr.mxu0 0.0
    %4260 = vmatpush1.msra.mxu0 0.0
    %4261 = vmatprep.subr.mxu0 0.0
    %4262 = vmatpush1.msra.mxu0 0.0
    %4263 = vmatprep.subr.mxu0 0.0
    %4264 = vmatpush1.msra.mxu0 0.0
    %4265 = vmatprep.mubr.f32.mxu0 0.0
    %4266 = vmatmul.mubr.f32.gmra.mrb[0].mxu0 %v4199
    %v4267 = vpop.f32.mrb[0].mxu0
    %v4268 = vadd.f32 0.0, %v4267
    %v4269 = vpop.f32.mrb[0].mxu0
    %4270 = vdwg.mxu0
    %v4271 = vadd.f32 %v3870, %v4268
    %v4272 = vxor.u32 %v4271, 2147483648
    %v4273 = vmul.f32 %v4272, 1.442695
    %v4274 = vpow.pop %v4273
    %v4275 = vadd.f32 %v4274, 1.0
    %v4276 = vrcp.pop %v4275
    %v4277 = vmul.f32 1.0, %v4276
    %4279 = vrot.lane.b32.xlu0 %v4268, 64
    %v4280 = vpop.permute.xlu0 %4279
    %v4282 = vmul.f32 %v4277, %v4280
    %4284 = vrot.lane.b32.xlu0 %v4282, 64
    %v4285 = vpop.permute.xlu0 %4284
    %v4287 = vadd.f32 %v3870, %v4285
    %v4288 = vtanh.pop %v4287
    %v4289 = vsub.f32 1.0, %v4277
    %4291 = vrot.lane.b32.xlu0 %v4288, 96
    %v4292 = vpop.permute.xlu0 %4291
    %v4294 = vmul.f32 %v4289, %v4292
    %v4295 = vmul.f32 %v4277, %v3567
    %v4296 = vadd.f32 %v4294, %v4295
    %4298 = vrot.lane.b32.xlu0 %v4296, 96
    %v4299 = vpop.permute.xlu0 %4298
    %v4300 = vsel %vm126, %v4299, 0
    %4302 = vmatprep.subr.mxu0 0.0
    %4303 = vmatpush1.msra.mxu0 %v49
    %4304 = vmatprep.subr.mxu0 0.0
    %4305 = vmatpush1.msra.mxu0 %v50
    %4306 = vmatprep.subr.mxu0 0.0
    %4307 = vmatpush1.msra.mxu0 %v51
    %4308 = vmatprep.subr.mxu0 0.0
    %4309 = vmatpush1.msra.mxu0 %v52
    %4310 = vmatprep.subr.mxu0 0.0
    %4311 = vmatpush1.msra.mxu0 0.0
    %4312 = vmatprep.subr.mxu0 0.0
    %4313 = vmatpush1.msra.mxu0 0.0
    %4314 = vmatprep.subr.mxu0 0.0
    %4315 = vmatpush1.msra.mxu0 0.0
    %4316 = vmatprep.subr.mxu0 0.0
    %4317 = vmatpush1.msra.mxu0 0.0
    %4318 = vmatprep.subr.mxu0 0.0
    %4319 = vmatpush1.msra.mxu0 0.0
    %4320 = vmatprep.subr.mxu0 0.0
    %4321 = vmatpush1.msra.mxu0 0.0
    %4322 = vmatprep.subr.mxu0 0.0
    %4323 = vmatpush1.msra.mxu0 0.0
    %4324 = vmatprep.subr.mxu0 0.0
    %4325 = vmatpush1.msra.mxu0 0.0
    %4326 = vmatprep.subr.mxu0 0.0
    %4327 = vmatpush1.msra.mxu0 0.0
    %4328 = vmatprep.subr.mxu0 0.0
    %4329 = vmatpush1.msra.mxu0 0.0
    %4330 = vmatprep.subr.mxu0 0.0
    %4331 = vmatpush1.msra.mxu0 0.0
    %4332 = vmatprep.subr.mxu0 0.0
    %4333 = vmatpush1.msra.mxu0 0.0
    %4334 = vmatprep.subr.mxu0 0.0
    %4335 = vmatpush1.msra.mxu0 0.0
    %4336 = vmatprep.subr.mxu0 0.0
    %4337 = vmatpush1.msra.mxu0 0.0
    %4338 = vmatprep.subr.mxu0 0.0
    %4339 = vmatpush1.msra.mxu0 0.0
    %4340 = vmatprep.subr.mxu0 0.0
    %4341 = vmatpush1.msra.mxu0 0.0
    %4342 = vmatprep.subr.mxu0 0.0
    %4343 = vmatpush1.msra.mxu0 0.0
    %4344 = vmatprep.subr.mxu0 0.0
    %4345 = vmatpush1.msra.mxu0 0.0
    %4346 = vmatprep.subr.mxu0 0.0
    %4347 = vmatpush1.msra.mxu0 0.0
    %4348 = vmatprep.subr.mxu0 0.0
    %4349 = vmatpush1.msra.mxu0 0.0
    %4350 = vmatprep.subr.mxu0 0.0
    %4351 = vmatpush1.msra.mxu0 0.0
    %4352 = vmatprep.subr.mxu0 0.0
    %4353 = vmatpush1.msra.mxu0 0.0
    %4354 = vmatprep.subr.mxu0 0.0
    %4355 = vmatpush1.msra.mxu0 0.0
    %4356 = vmatprep.subr.mxu0 0.0
    %4357 = vmatpush1.msra.mxu0 0.0
    %4358 = vmatprep.subr.mxu0 0.0
    %4359 = vmatpush1.msra.mxu0 0.0
    %4360 = vmatprep.subr.mxu0 0.0
    %4361 = vmatpush1.msra.mxu0 0.0
    %4362 = vmatprep.subr.mxu0 0.0
    %4363 = vmatpush1.msra.mxu0 0.0
    %4364 = vmatprep.subr.mxu0 0.0
    %4365 = vmatpush1.msra.mxu0 0.0
    %4366 = vmatprep.mubr.f32.mxu0 0.0
    %4367 = vmatmul.mubr.f32.gmra.mrb[0].mxu0 %v4300
    %v4368 = vpop.f32.mrb[0].mxu0
    %v4369 = vadd.f32 %v79, %v4368
    %v4370 = vpop.f32.mrb[0].mxu0
    %4371 = vdwg.mxu0
    %v4372 = vmax.f32 %v4369, 0.0
    %v4374 = vsel %vm126, %v4372, 0
    %4376 = vmatprep.subr.mxu0 0.0
    %4377 = vmatpush1.msra.mxu0 %v53
    %4378 = vmatprep.subr.mxu0 0.0
    %4379 = vmatpush1.msra.mxu0 %v54
    %4380 = vmatprep.subr.mxu0 0.0
    %4381 = vmatpush1.msra.mxu0 %v55
    %4382 = vmatprep.subr.mxu0 0.0
    %4383 = vmatpush1.msra.mxu0 %v56
    %4384 = vmatprep.subr.mxu0 0.0
    %4385 = vmatpush1.msra.mxu0 0.0
    %4386 = vmatprep.subr.mxu0 0.0
    %4387 = vmatpush1.msra.mxu0 0.0
    %4388 = vmatprep.subr.mxu0 0.0
    %4389 = vmatpush1.msra.mxu0 0.0
    %4390 = vmatprep.subr.mxu0 0.0
    %4391 = vmatpush1.msra.mxu0 0.0
    %4392 = vmatprep.subr.mxu0 0.0
    %4393 = vmatpush1.msra.mxu0 0.0
    %4394 = vmatprep.subr.mxu0 0.0
    %4395 = vmatpush1.msra.mxu0 0.0
    %4396 = vmatprep.subr.mxu0 0.0
    %4397 = vmatpush1.msra.mxu0 0.0
    %4398 = vmatprep.subr.mxu0 0.0
    %4399 = vmatpush1.msra.mxu0 0.0
    %4400 = vmatprep.subr.mxu0 0.0
    %4401 = vmatpush1.msra.mxu0 0.0
    %4402 = vmatprep.subr.mxu0 0.0
    %4403 = vmatpush1.msra.mxu0 0.0
    %4404 = vmatprep.subr.mxu0 0.0
    %4405 = vmatpush1.msra.mxu0 0.0
    %4406 = vmatprep.subr.mxu0 0.0
    %4407 = vmatpush1.msra.mxu0 0.0
    %4408 = vmatprep.subr.mxu0 0.0
    %4409 = vmatpush1.msra.mxu0 0.0
    %4410 = vmatprep.subr.mxu0 0.0
    %4411 = vmatpush1.msra.mxu0 0.0
    %4412 = vmatprep.subr.mxu0 0.0
    %4413 = vmatpush1.msra.mxu0 0.0
    %4414 = vmatprep.subr.mxu0 0.0
    %4415 = vmatpush1.msra.mxu0 0.0
    %4416 = vmatprep.subr.mxu0 0.0
    %4417 = vmatpush1.msra.mxu0 0.0
    %4418 = vmatprep.subr.mxu0 0.0
    %4419 = vmatpush1.msra.mxu0 0.0
    %4420 = vmatprep.subr.mxu0 0.0
    %4421 = vmatpush1.msra.mxu0 0.0
    %4422 = vmatprep.subr.mxu0 0.0
    %4423 = vmatpush1.msra.mxu0 0.0
    %4424 = vmatprep.subr.mxu0 0.0
    %4425 = vmatpush1.msra.mxu0 0.0
    %4426 = vmatprep.subr.mxu0 0.0
    %4427 = vmatpush1.msra.mxu0 0.0
    %4428 = vmatprep.subr.mxu0 0.0
    %4429 = vmatpush1.msra.mxu0 0.0
    %4430 = vmatprep.subr.mxu0 0.0
    %4431 = vmatpush1.msra.mxu0 0.0
    %4432 = vmatprep.subr.mxu0 0.0
    %4433 = vmatpush1.msra.mxu0 0.0
    %4434 = vmatprep.subr.mxu0 0.0
    %4435 = vmatpush1.msra.mxu0 0.0
    %4436 = vmatprep.subr.mxu0 0.0
    %4437 = vmatpush1.msra.mxu0 0.0
    %4438 = vmatprep.subr.mxu0 0.0
    %4439 = vmatpush1.msra.mxu0 0.0
    %4440 = vmatprep.mubr.f32.mxu0 0.0
    %4441 = vmatmul.mubr.f32.gmra.mrb[0].mxu0 %v4374
    %v4442 = vpop.f32.mrb[0].mxu0
    %v4443 = vadd.f32 %v84, %v4442
    %v4444 = vpop.f32.mrb[0].mxu0
    %4445 = vdwg.mxu0
    %v4446 = vmax.f32 %v4443, 0.0
    %v4448 = vsel %vm126, %v4446, 0
    %4450 = vmatprep.subr.mxu0 0.0
    %4451 = vmatpush1.msra.mxu0 %v57
    %4452 = vmatprep.subr.mxu0 0.0
    %4453 = vmatpush1.msra.mxu0 %v58
    %4454 = vmatprep.subr.mxu0 0.0
    %4455 = vmatpush1.msra.mxu0 %v59
    %4456 = vmatprep.subr.mxu0 0.0
    %4457 = vmatpush1.msra.mxu0 %v60
    %4458 = vmatprep.subr.mxu0 0.0
    %4459 = vmatpush1.msra.mxu0 0.0
    %4460 = vmatprep.subr.mxu0 0.0
    %4461 = vmatpush1.msra.mxu0 0.0
    %4462 = vmatprep.subr.mxu0 0.0
    %4463 = vmatpush1.msra.mxu0 0.0
    %4464 = vmatprep.subr.mxu0 0.0
    %4465 = vmatpush1.msra.mxu0 0.0
    %4466 = vmatprep.subr.mxu0 0.0
    %4467 = vmatpush1.msra.mxu0 0.0
    %4468 = vmatprep.subr.mxu0 0.0
    %4469 = vmatpush1.msra.mxu0 0.0
    %4470 = vmatprep.subr.mxu0 0.0
    %4471 = vmatpush1.msra.mxu0 0.0
    %4472 = vmatprep.subr.mxu0 0.0
    %4473 = vmatpush1.msra.mxu0 0.0
    %4474 = vmatprep.subr.mxu0 0.0
    %4475 = vmatpush1.msra.mxu0 0.0
    %4476 = vmatprep.subr.mxu0 0.0
    %4477 = vmatpush1.msra.mxu0 0.0
    %4478 = vmatprep.subr.mxu0 0.0
    %4479 = vmatpush1.msra.mxu0 0.0
    %4480 = vmatprep.subr.mxu0 0.0
    %4481 = vmatpush1.msra.mxu0 0.0
    %4482 = vmatprep.subr.mxu0 0.0
    %4483 = vmatpush1.msra.mxu0 0.0
    %4484 = vmatprep.subr.mxu0 0.0
    %4485 = vmatpush1.msra.mxu0 0.0
    %4486 = vmatprep.subr.mxu0 0.0
    %4487 = vmatpush1.msra.mxu0 0.0
    %4488 = vmatprep.subr.mxu0 0.0
    %4489 = vmatpush1.msra.mxu0 0.0
    %4490 = vmatprep.subr.mxu0 0.0
    %4491 = vmatpush1.msra.mxu0 0.0
    %4492 = vmatprep.subr.mxu0 0.0
    %4493 = vmatpush1.msra.mxu0 0.0
    %4494 = vmatprep.subr.mxu0 0.0
    %4495 = vmatpush1.msra.mxu0 0.0
    %4496 = vmatprep.subr.mxu0 0.0
    %4497 = vmatpush1.msra.mxu0 0.0
    %4498 = vmatprep.subr.mxu0 0.0
    %4499 = vmatpush1.msra.mxu0 0.0
    %4500 = vmatprep.subr.mxu0 0.0
    %4501 = vmatpush1.msra.mxu0 0.0
    %4502 = vmatprep.subr.mxu0 0.0
    %4503 = vmatpush1.msra.mxu0 0.0
    %4504 = vmatprep.subr.mxu0 0.0
    %4505 = vmatpush1.msra.mxu0 0.0
    %4506 = vmatprep.subr.mxu0 0.0
    %4507 = vmatpush1.msra.mxu0 0.0
    %4508 = vmatprep.subr.mxu0 0.0
    %4509 = vmatpush1.msra.mxu0 0.0
    %4510 = vmatprep.subr.mxu0 0.0
    %4511 = vmatpush1.msra.mxu0 0.0
    %4512 = vmatprep.subr.mxu0 0.0
    %4513 = vmatpush1.msra.mxu0 0.0
    %4514 = vmatprep.mubr.f32.mxu0 0.0
    %4515 = vmatmul.mubr.f32.gmra.mrb[0].mxu0 %v4448
    %v4516 = vpop.f32.mrb[0].mxu0
    %v4517 = vadd.f32 0.0, %v4516
    %v4518 = vpop.f32.mrb[0].mxu0
    %4519 = vdwg.mxu0
    %v4520 = vadd.f32 %v3792, %v4517
    %v4521 = vadd.f32 %v4520, %v89
    %4523 = vrot.lane.b32.xlu0 %v4521, 20
    %v4524 = vpop.permute.xlu0 %4523
    %vm4526 = vcmask 195744
    %4527 = vst.msk [vmem:[%s3] sm:$0xff] %vm4526, %v4524
    %4528 = vmatprep.subr.mxu0 0.0
    %4529 = vmatpush1.msra.mxu0 %v61
    %4530 = vmatprep.subr.mxu0 0.0
    %4531 = vmatpush1.msra.mxu0 %v62
    %4532 = vmatprep.subr.mxu0 0.0
    %4533 = vmatpush1.msra.mxu0 %v63
    %4534 = vmatprep.subr.mxu0 0.0
    %4535 = vmatpush1.msra.mxu0 %v64
    %4536 = vmatprep.subr.mxu0 0.0
    %4537 = vmatpush1.msra.mxu0 0.0
    %4538 = vmatprep.subr.mxu0 0.0
    %4539 = vmatpush1.msra.mxu0 0.0
    %4540 = vmatprep.subr.mxu0 0.0
    %4541 = vmatpush1.msra.mxu0 0.0
    %4542 = vmatprep.subr.mxu0 0.0
    %4543 = vmatpush1.msra.mxu0 0.0
    %4544 = vmatprep.subr.mxu0 0.0
    %4545 = vmatpush1.msra.mxu0 0.0
    %4546 = vmatprep.subr.mxu0 0.0
    %4547 = vmatpush1.msra.mxu0 0.0
    %4548 = vmatprep.subr.mxu0 0.0
    %4549 = vmatpush1.msra.mxu0 0.0
    %4550 = vmatprep.subr.mxu0 0.0
    %4551 = vmatpush1.msra.mxu0 0.0
    %4552 = vmatprep.subr.mxu0 0.0
    %4553 = vmatpush1.msra.mxu0 0.0
    %4554 = vmatprep.subr.mxu0 0.0
    %4555 = vmatpush1.msra.mxu0 0.0
    %4556 = vmatprep.subr.mxu0 0.0
    %4557 = vmatpush1.msra.mxu0 0.0
    %4558 = vmatprep.subr.mxu0 0.0
    %4559 = vmatpush1.msra.mxu0 0.0
    %4560 = vmatprep.subr.mxu0 0.0
    %4561 = vmatpush1.msra.mxu0 0.0
    %4562 = vmatprep.subr.mxu0 0.0
    %4563 = vmatpush1.msra.mxu0 0.0
    %4564 = vmatprep.subr.mxu0 0.0
    %4565 = vmatpush1.msra.mxu0 0.0
    %4566 = vmatprep.subr.mxu0 0.0
    %4567 = vmatpush1.msra.mxu0 0.0
    %4568 = vmatprep.subr.mxu0 0.0
    %4569 = vmatpush1.msra.mxu0 0.0
    %4570 = vmatprep.subr.mxu0 0.0
    %4571 = vmatpush1.msra.mxu0 0.0
    %4572 = vmatprep.subr.mxu0 0.0
    %4573 = vmatpush1.msra.mxu0 0.0
    %4574 = vmatprep.subr.mxu0 0.0
    %4575 = vmatpush1.msra.mxu0 0.0
    %4576 = vmatprep.subr.mxu0 0.0
    %4577 = vmatpush1.msra.mxu0 0.0
    %4578 = vmatprep.subr.mxu0 0.0
    %4579 = vmatpush1.msra.mxu0 0.0
    %4580 = vmatprep.subr.mxu0 0.0
    %4581 = vmatpush1.msra.mxu0 0.0
    %4582 = vmatprep.subr.mxu0 0.0
    %4583 = vmatpush1.msra.mxu0 0.0
    %4584 = vmatprep.subr.mxu0 0.0
    %4585 = vmatpush1.msra.mxu0 0.0
    %4586 = vmatprep.subr.mxu0 0.0
    %4587 = vmatpush1.msra.mxu0 0.0
    %4588 = vmatprep.subr.mxu0 0.0
    %4589 = vmatpush1.msra.mxu0 0.0
    %4590 = vmatprep.subr.mxu0 0.0
    %4591 = vmatpush1.msra.mxu0 0.0
    %4592 = vmatprep.mubr.f32.mxu0 0.0
    %4593 = vmatmul.mubr.f32.gmra.mrb[0].mxu0 %v4448
    %v4594 = vpop.f32.mrb[0].mxu0
    %v4595 = vadd.f32 0.0, %v4594
    %v4596 = vpop.f32.mrb[0].mxu0
    %4597 = vdwg.mxu0
    %v4598 = vadd.f32 %v3870, %v4595
    %v4599 = vadd.f32 %v4598, %v94
    %4600 = vmatprep.subr.mxu0 0.0
    %4601 = vmatpush1.msra.mxu0 %v28
    %4602 = vmatprep.subr.mxu0 0.0
    %4603 = vmatpush1.msra.mxu0 %v29
    %4604 = vmatprep.subr.mxu0 0.0
    %4605 = vmatpush1.msra.mxu0 %v30
    %4606 = vmatprep.subr.mxu0 0.0
    %4607 = vmatpush1.msra.mxu0 %v31
    %4608 = vmatprep.subr.mxu0 0.0
    %4609 = vmatpush1.msra.mxu0 0.0
    %4610 = vmatprep.subr.mxu0 0.0
    %4611 = vmatpush1.msra.mxu0 0.0
    %4612 = vmatprep.subr.mxu0 0.0
    %4613 = vmatpush1.msra.mxu0 0.0
    %4614 = vmatprep.subr.mxu0 0.0
    %4615 = vmatpush1.msra.mxu0 0.0
    %4616 = vmatprep.subr.mxu0 0.0
    %4617 = vmatpush1.msra.mxu0 0.0
    %4618 = vmatprep.subr.mxu0 0.0
    %4619 = vmatpush1.msra.mxu0 0.0
    %4620 = vmatprep.subr.mxu0 0.0
    %4621 = vmatpush1.msra.mxu0 0.0
    %4622 = vmatprep.subr.mxu0 0.0
    %4623 = vmatpush1.msra.mxu0 0.0
    %4624 = vmatprep.subr.mxu0 0.0
    %4625 = vmatpush1.msra.mxu0 0.0
    %4626 = vmatprep.subr.mxu0 0.0
    %4627 = vmatpush1.msra.mxu0 0.0
    %4628 = vmatprep.subr.mxu0 0.0
    %4629 = vmatpush1.msra.mxu0 0.0
    %4630 = vmatprep.subr.mxu0 0.0
    %4631 = vmatpush1.msra.mxu0 0.0
    %4632 = vmatprep.subr.mxu0 0.0
    %4633 = vmatpush1.msra.mxu0 0.0
    %4634 = vmatprep.subr.mxu0 0.0
    %4635 = vmatpush1.msra.mxu0 0.0
    %4636 = vmatprep.subr.mxu0 0.0
    %4637 = vmatpush1.msra.mxu0 0.0
    %4638 = vmatprep.subr.mxu0 0.0
    %4639 = vmatpush1.msra.mxu0 0.0
    %4640 = vmatprep.subr.mxu0 0.0
    %4641 = vmatpush1.msra.mxu0 0.0
    %4642 = vmatprep.subr.mxu0 0.0
    %4643 = vmatpush1.msra.mxu0 0.0
    %4644 = vmatprep.subr.mxu0 0.0
    %4645 = vmatpush1.msra.mxu0 0.0
    %4646 = vmatprep.subr.mxu0 0.0
    %4647 = vmatpush1.msra.mxu0 0.0
    %4648 = vmatprep.subr.mxu0 0.0
    %4649 = vmatpush1.msra.mxu0 0.0
    %4650 = vmatprep.subr.mxu0 0.0
    %4651 = vmatpush1.msra.mxu0 0.0
    %4652 = vmatprep.subr.mxu0 0.0
    %4653 = vmatpush1.msra.mxu0 0.0
    %4654 = vmatprep.subr.mxu0 0.0
    %4655 = vmatpush1.msra.mxu0 0.0
    %4656 = vmatprep.subr.mxu0 0.0
    %4657 = vmatpush1.msra.mxu0 0.0
    %4658 = vmatprep.subr.mxu0 0.0
    %4659 = vmatpush1.msra.mxu0 0.0
    %4660 = vmatprep.subr.mxu0 0.0
    %4661 = vmatpush1.msra.mxu0 0.0
    %4662 = vmatprep.subr.mxu0 0.0
    %4663 = vmatpush1.msra.mxu0 0.0
    %4664 = vmatprep.mubr.f32.mxu0 0.0
    %4665 = vmatmul.mubr.f32.gmra.mrb[0].mxu0 %v4300
    %v4666 = vpop.f32.mrb[0].mxu0
    %v4667 = vadd.f32 0.0, %v4666
    %v4668 = vpop.f32.mrb[0].mxu0
    %4669 = vdwg.mxu0
    %4671 = vrot.lane.b32.xlu0 %v4667, 64
    %v4672 = vpop.permute.xlu0 %4671
    %4674 = vmatprep.subr.mxu0 0.0
    %4675 = vmatpush1.msra.mxu0 %v4667
    %4676 = vmatprep.subr.mxu0 0.0
    %4677 = vmatpush1.msra.mxu0 %v4672
    %4678 = vmatprep.subr.mxu0 0.0
    %4679 = vmatpush1.msra.mxu0 0.0
    %4680 = vmatprep.subr.mxu0 0.0
    %4681 = vmatpush1.msra.mxu0 0.0
    %4682 = vmatprep.subr.mxu0 0.0
    %4683 = vmatpush1.msra.mxu0 0.0
    %4684 = vmatprep.subr.mxu0 0.0
    %4685 = vmatpush1.msra.mxu0 0.0
    %4686 = vmatprep.subr.mxu0 0.0
    %4687 = vmatpush1.msra.mxu0 0.0
    %4688 = vmatprep.subr.mxu0 0.0
    %4689 = vmatpush1.msra.mxu0 0.0
    %4690 = vmatprep.subr.mxu0 0.0
    %4691 = vmatpush1.msra.mxu0 0.0
    %4692 = vmatprep.subr.mxu0 0.0
    %4693 = vmatpush1.msra.mxu0 0.0
    %4694 = vmatprep.subr.mxu0 0.0
    %4695 = vmatpush1.msra.mxu0 0.0
    %4696 = vmatprep.subr.mxu0 0.0
    %4697 = vmatpush1.msra.mxu0 0.0
    %4698 = vmatprep.subr.mxu0 0.0
    %4699 = vmatpush1.msra.mxu0 0.0
    %4700 = vmatprep.subr.mxu0 0.0
    %4701 = vmatpush1.msra.mxu0 0.0
    %4702 = vmatprep.subr.mxu0 0.0
    %4703 = vmatpush1.msra.mxu0 0.0
    %4704 = vmatprep.subr.mxu0 0.0
    %4705 = vmatpush1.msra.mxu0 0.0
    %4706 = vmatprep.subr.mxu0 0.0
    %4707 = vmatpush1.msra.mxu0 0.0
    %4708 = vmatprep.subr.mxu0 0.0
    %4709 = vmatpush1.msra.mxu0 0.0
    %4710 = vmatprep.subr.mxu0 0.0
    %4711 = vmatpush1.msra.mxu0 0.0
    %4712 = vmatprep.subr.mxu0 0.0
    %4713 = vmatpush1.msra.mxu0 0.0
    %4714 = vmatprep.subr.mxu0 0.0
    %4715 = vmatpush1.msra.mxu0 0.0
    %4716 = vmatprep.subr.mxu0 0.0
    %4717 = vmatpush1.msra.mxu0 0.0
    %4718 = vmatprep.subr.mxu0 0.0
    %4719 = vmatpush1.msra.mxu0 0.0
    %4720 = vmatprep.subr.mxu0 0.0
    %4721 = vmatpush1.msra.mxu0 0.0
    %4722 = vmatprep.subr.mxu0 0.0
    %4723 = vmatpush1.msra.mxu0 0.0
    %4724 = vmatprep.subr.mxu0 0.0
    %4725 = vmatpush1.msra.mxu0 0.0
    %4726 = vmatprep.subr.mxu0 0.0
    %4727 = vmatpush1.msra.mxu0 0.0
    %4728 = vmatprep.subr.mxu0 0.0
    %4729 = vmatpush1.msra.mxu0 0.0
    %4730 = vmatprep.subr.mxu0 0.0
    %4731 = vmatpush1.msra.mxu0 0.0
    %4732 = vmatprep.subr.mxu0 0.0
    %4733 = vmatpush1.msra.mxu0 0.0
    %4734 = vmatprep.subr.mxu0 0.0
    %4735 = vmatpush1.msra.mxu0 0.0
    %4736 = vmatprep.subr.mxu0 0.0
    %4737 = vmatpush1.msra.mxu0 0.0
    %4738 = vmatprep.mubr.f32.mxu0 0.0
    %4739 = vmatmul.mubr.f32.gmra.mrb[0].mxu0 %v292
    %v4740 = vpop.f32.mrb[0].mxu0
    %v4741 = vadd.f32 %v69, %v4740
    %v4742 = vpop.f32.mrb[0].mxu0
    %4743 = vmatprep.mubr.f32.mxu0 0.0
    %4744 = vmatmul.mubr.f32.gmra.mrb[0].mxu0 %v295
    %v4745 = vpop.f32.mrb[0].mxu0
    %v4746 = vadd.f32 %v69, %v4745
    %v4747 = vpop.f32.mrb[0].mxu0
    %4748 = vmatprep.mubr.f32.mxu0 0.0
    %4749 = vmatmul.mubr.f32.gmra.mrb[0].mxu0 %v298
    %v4750 = vpop.f32.mrb[0].mxu0
    %v4751 = vadd.f32 %v69, %v4750
    %v4752 = vpop.f32.mrb[0].mxu0
    %4753 = vdwg.mxu0
    %v4754 = vtanh.pop %v4741
    %v4755 = vtanh.pop %v4746
    %v4756 = vtanh.pop %v4751
    %v4758 = vsel %vm383, %v4754, 0
    %v4761 = vsel %vm383, %v4755, 0
    %v4764 = vsel %vm383, %v4756, 0
    %4766 = vmatprep.subr.mxu0 0.0
    %4767 = vmatpush1.msra.mxu0 %v36
    %4768 = vmatprep.subr.mxu0 0.0
    %4769 = vmatpush1.msra.mxu0 %v37
    %4770 = vmatprep.subr.mxu0 0.0
    %4771 = vmatpush1.msra.mxu0 %v38
    %4772 = vmatprep.subr.mxu0 0.0
    %4773 = vmatpush1.msra.mxu0 %v39
    %4774 = vmatprep.subr.mxu0 0.0
    %4775 = vmatpush1.msra.mxu0 %v40
    %4776 = vmatprep.subr.mxu0 0.0
    %4777 = vmatpush1.msra.mxu0 %v41
    %4778 = vmatprep.subr.mxu0 0.0
    %4779 = vmatpush1.msra.mxu0 %v42
    %4780 = vmatprep.subr.mxu0 0.0
    %4781 = vmatpush1.msra.mxu0 %v43
    %4782 = vmatprep.subr.mxu0 0.0
    %4783 = vmatpush1.msra.mxu0 0.0
    %4784 = vmatprep.subr.mxu0 0.0
    %4785 = vmatpush1.msra.mxu0 0.0
    %4786 = vmatprep.subr.mxu0 0.0
    %4787 = vmatpush1.msra.mxu0 0.0
    %4788 = vmatprep.subr.mxu0 0.0
    %4789 = vmatpush1.msra.mxu0 0.0
    %4790 = vmatprep.subr.mxu0 0.0
    %4791 = vmatpush1.msra.mxu0 0.0
    %4792 = vmatprep.subr.mxu0 0.0
    %4793 = vmatpush1.msra.mxu0 0.0
    %4794 = vmatprep.subr.mxu0 0.0
    %4795 = vmatpush1.msra.mxu0 0.0
    %4796 = vmatprep.subr.mxu0 0.0
    %4797 = vmatpush1.msra.mxu0 0.0
    %4798 = vmatprep.subr.mxu0 0.0
    %4799 = vmatpush1.msra.mxu0 0.0
    %4800 = vmatprep.subr.mxu0 0.0
    %4801 = vmatpush1.msra.mxu0 0.0
    %4802 = vmatprep.subr.mxu0 0.0
    %4803 = vmatpush1.msra.mxu0 0.0
    %4804 = vmatprep.subr.mxu0 0.0
    %4805 = vmatpush1.msra.mxu0 0.0
    %4806 = vmatprep.subr.mxu0 0.0
    %4807 = vmatpush1.msra.mxu0 0.0
    %4808 = vmatprep.subr.mxu0 0.0
    %4809 = vmatpush1.msra.mxu0 0.0
    %4810 = vmatprep.subr.mxu0 0.0
    %4811 = vmatpush1.msra.mxu0 0.0
    %4812 = vmatprep.subr.mxu0 0.0
    %4813 = vmatpush1.msra.mxu0 0.0
    %4814 = vmatprep.subr.mxu0 0.0
    %4815 = vmatpush1.msra.mxu0 0.0
    %4816 = vmatprep.subr.mxu0 0.0
    %4817 = vmatpush1.msra.mxu0 0.0
    %4818 = vmatprep.subr.mxu0 0.0
    %4819 = vmatpush1.msra.mxu0 0.0
    %4820 = vmatprep.subr.mxu0 0.0
    %4821 = vmatpush1.msra.mxu0 0.0
    %4822 = vmatprep.subr.mxu0 0.0
    %4823 = vmatpush1.msra.mxu0 0.0
    %4824 = vmatprep.subr.mxu0 0.0
    %4825 = vmatpush1.msra.mxu0 0.0
    %4826 = vmatprep.subr.mxu0 0.0
    %4827 = vmatpush1.msra.mxu0 0.0
    %4828 = vmatprep.subr.mxu0 0.0
    %4829 = vmatpush1.msra.mxu0 0.0
    %4830 = vmatprep.mubr.f32.mxu0 0.0
    %4831 = vmatmul.mubr.f32.gmra.mrb[0].mxu0 %v4758
    %v4832 = vpop.f32.mrb[0].mxu0
    %v4833 = vadd.f32 %v74, %v4832
    %v4834 = vpop.f32.mrb[0].mxu0
    %4835 = vmatprep.mubr.f32.mxu0 0.0
    %4836 = vmatmul.mubr.f32.gmra.mrb[0].mxu0 %v4761
    %v4837 = vpop.f32.mrb[0].mxu0
    %v4838 = vadd.f32 %v74, %v4837
    %v4839 = vpop.f32.mrb[0].mxu0
    %4840 = vmatprep.mubr.f32.mxu0 0.0
    %4841 = vmatmul.mubr.f32.gmra.mrb[0].mxu0 %v4764
    %v4842 = vpop.f32.mrb[0].mxu0
    %v4843 = vadd.f32 %v74, %v4842
    %v4844 = vpop.f32.mrb[0].mxu0
    %4845 = vdwg.mxu0
    %v4846 = vtanh.pop %v4833
    %v4847 = vtanh.pop %v4838
    %v4848 = vtanh.pop %v4843
    %v4849 = vmul.f32 %v4846, %v127
    %v4850 = vmul.f32 %v4847, %v128
    %v4851 = vmul.f32 %v4848, %v129
    %4852 = vmatprep.subr.mxu0 0.0
    %4853 = vmatpush1.msra.mxu0 %v4849
    %4854 = vmatprep.subr.mxu0 0.0
    %4855 = vmatpush1.msra.mxu0 %v4850
    %4856 = vmatprep.subr.mxu0 0.0
    %4857 = vmatpush1.msra.mxu0 %v4851
    %4858 = vmatprep.subr.mxu0 0.0
    %4859 = vmatpush1.msra.mxu0 0.0
    %4860 = vmatprep.subr.mxu0 0.0
    %4861 = vmatpush1.msra.mxu0 0.0
    %4862 = vmatprep.subr.mxu0 0.0
    %4863 = vmatpush1.msra.mxu0 0.0
    %4864 = vmatprep.subr.mxu0 0.0
    %4865 = vmatpush1.msra.mxu0 0.0
    %4866 = vmatprep.subr.mxu0 0.0
    %4867 = vmatpush1.msra.mxu0 0.0
    %4868 = vmatprep.subr.mxu0 0.0
    %4869 = vmatpush1.msra.mxu0 0.0
    %4870 = vmatprep.subr.mxu0 0.0
    %4871 = vmatpush1.msra.mxu0 0.0
    %4872 = vmatprep.subr.mxu0 0.0
    %4873 = vmatpush1.msra.mxu0 0.0
    %4874 = vmatprep.subr.mxu0 0.0
    %4875 = vmatpush1.msra.mxu0 0.0
    %4876 = vmatprep.subr.mxu0 0.0
    %4877 = vmatpush1.msra.mxu0 0.0
    %4878 = vmatprep.subr.mxu0 0.0
    %4879 = vmatpush1.msra.mxu0 0.0
    %4880 = vmatprep.subr.mxu0 0.0
    %4881 = vmatpush1.msra.mxu0 0.0
    %4882 = vmatprep.subr.mxu0 0.0
    %4883 = vmatpush1.msra.mxu0 0.0
    %4884 = vmatprep.subr.mxu0 0.0
    %4885 = vmatpush1.msra.mxu0 0.0
    %4886 = vmatprep.subr.mxu0 0.0
    %4887 = vmatpush1.msra.mxu0 0.0
    %4888 = vmatprep.subr.mxu0 0.0
    %4889 = vmatpush1.msra.mxu0 0.0
    %4890 = vmatprep.subr.mxu0 0.0
    %4891 = vmatpush1.msra.mxu0 0.0
    %4892 = vmatprep.subr.mxu0 0.0
    %4893 = vmatpush1.msra.mxu0 0.0
    %4894 = vmatprep.subr.mxu0 0.0
    %4895 = vmatpush1.msra.mxu0 0.0
    %4896 = vmatprep.subr.mxu0 0.0
    %4897 = vmatpush1.msra.mxu0 0.0
    %4898 = vmatprep.subr.mxu0 0.0
    %4899 = vmatpush1.msra.mxu0 0.0
    %4900 = vmatprep.subr.mxu0 0.0
    %4901 = vmatpush1.msra.mxu0 0.0
    %4902 = vmatprep.subr.mxu0 0.0
    %4903 = vmatpush1.msra.mxu0 0.0
    %4904 = vmatprep.subr.mxu0 0.0
    %4905 = vmatpush1.msra.mxu0 0.0
    %4906 = vmatprep.subr.mxu0 0.0
    %4907 = vmatpush1.msra.mxu0 0.0
    %4908 = vmatprep.subr.mxu0 0.0
    %4909 = vmatpush1.msra.mxu0 0.0
    %4910 = vmatprep.subr.mxu0 0.0
    %4911 = vmatpush1.msra.mxu0 0.0
    %4912 = vmatprep.subr.mxu0 0.0
    %4913 = vmatpush1.msra.mxu0 0.0
    %4914 = vmatprep.subr.mxu0 0.0
    %4915 = vmatpush1.msra.mxu0 0.0
    %4916 = vmatprep.mubr.f32.mxu0 0.0
    %4917 = vmatmul.mubr.f32.gmra.mrb[0].mxu0 %v481
    %v4918 = vpop.f32.mrb[0].mxu0
    %v4919 = vadd.f32 0.0, %v4918
    %v4920 = vpop.f32.mrb[0].mxu0
    %4921 = vdwg.mxu0
    %4923 = vrot.lane.b32.xlu0 %v4919, 96
    %v4924 = vpop.permute.xlu0 %4923
    %v4926 = vadd.f32 %v4919, %v4924
    %v4928 = vsel %vm126, %v4926, 0
    %4930 = vmatprep.subr.mxu0 0.0
    %4931 = vmatpush1.msra.mxu0 %v44
    %4932 = vmatprep.subr.mxu0 0.0
    %4933 = vmatpush1.msra.mxu0 %v45
    %4934 = vmatprep.subr.mxu0 0.0
    %4935 = vmatpush1.msra.mxu0 %v46
    %4936 = vmatprep.subr.mxu0 0.0
    %4937 = vmatpush1.msra.mxu0 %v47
    %4938 = vmatprep.subr.mxu0 0.0
    %4939 = vmatpush1.msra.mxu0 0.0
    %4940 = vmatprep.subr.mxu0 0.0
    %4941 = vmatpush1.msra.mxu0 0.0
    %4942 = vmatprep.subr.mxu0 0.0
    %4943 = vmatpush1.msra.mxu0 0.0
    %4944 = vmatprep.subr.mxu0 0.0
    %4945 = vmatpush1.msra.mxu0 0.0
    %4946 = vmatprep.subr.mxu0 0.0
    %4947 = vmatpush1.msra.mxu0 0.0
    %4948 = vmatprep.subr.mxu0 0.0
    %4949 = vmatpush1.msra.mxu0 0.0
    %4950 = vmatprep.subr.mxu0 0.0
    %4951 = vmatpush1.msra.mxu0 0.0
    %4952 = vmatprep.subr.mxu0 0.0
    %4953 = vmatpush1.msra.mxu0 0.0
    %4954 = vmatprep.subr.mxu0 0.0
    %4955 = vmatpush1.msra.mxu0 0.0
    %4956 = vmatprep.subr.mxu0 0.0
    %4957 = vmatpush1.msra.mxu0 0.0
    %4958 = vmatprep.subr.mxu0 0.0
    %4959 = vmatpush1.msra.mxu0 0.0
    %4960 = vmatprep.subr.mxu0 0.0
    %4961 = vmatpush1.msra.mxu0 0.0
    %4962 = vmatprep.subr.mxu0 0.0
    %4963 = vmatpush1.msra.mxu0 0.0
    %4964 = vmatprep.subr.mxu0 0.0
    %4965 = vmatpush1.msra.mxu0 0.0
    %4966 = vmatprep.subr.mxu0 0.0
    %4967 = vmatpush1.msra.mxu0 0.0
    %4968 = vmatprep.subr.mxu0 0.0
    %4969 = vmatpush1.msra.mxu0 0.0
    %4970 = vmatprep.subr.mxu0 0.0
    %4971 = vmatpush1.msra.mxu0 0.0
    %4972 = vmatprep.subr.mxu0 0.0
    %4973 = vmatpush1.msra.mxu0 0.0
    %4974 = vmatprep.subr.mxu0 0.0
    %4975 = vmatpush1.msra.mxu0 0.0
    %4976 = vmatprep.subr.mxu0 0.0
    %4977 = vmatpush1.msra.mxu0 0.0
    %4978 = vmatprep.subr.mxu0 0.0
    %4979 = vmatpush1.msra.mxu0 0.0
    %4980 = vmatprep.subr.mxu0 0.0
    %4981 = vmatpush1.msra.mxu0 0.0
    %4982 = vmatprep.subr.mxu0 0.0
    %4983 = vmatpush1.msra.mxu0 0.0
    %4984 = vmatprep.subr.mxu0 0.0
    %4985 = vmatpush1.msra.mxu0 0.0
    %4986 = vmatprep.subr.mxu0 0.0
    %4987 = vmatpush1.msra.mxu0 0.0
    %4988 = vmatprep.subr.mxu0 0.0
    %4989 = vmatpush1.msra.mxu0 0.0
    %4990 = vmatprep.subr.mxu0 0.0
    %4991 = vmatpush1.msra.mxu0 0.0
    %4992 = vmatprep.subr.mxu0 0.0
    %4993 = vmatpush1.msra.mxu0 0.0
    %4994 = vmatprep.mubr.f32.mxu0 0.0
    %4995 = vmatmul.mubr.f32.gmra.mrb[0].mxu0 %v4928
    %v4996 = vpop.f32.mrb[0].mxu0
    %v4997 = vadd.f32 0.0, %v4996
    %v4998 = vpop.f32.mrb[0].mxu0
    %4999 = vdwg.mxu0
    %v5000 = vadd.f32 %v4599, %v4997
    %v5001 = vxor.u32 %v5000, 2147483648
    %v5002 = vmul.f32 %v5001, 1.442695
    %v5003 = vpow.pop %v5002
    %v5004 = vadd.f32 %v5003, 1.0
    %v5005 = vrcp.pop %v5004
    %v5006 = vmul.f32 1.0, %v5005
    %5008 = vrot.lane.b32.xlu0 %v4997, 64
    %v5009 = vpop.permute.xlu0 %5008
    %v5011 = vmul.f32 %v5006, %v5009
    %5013 = vrot.lane.b32.xlu0 %v5011, 64
    %v5014 = vpop.permute.xlu0 %5013
    %v5016 = vadd.f32 %v4599, %v5014
    %v5017 = vtanh.pop %v5016
    %v5018 = vsub.f32 1.0, %v5006
    %5020 = vrot.lane.b32.xlu0 %v5017, 96
    %v5021 = vpop.permute.xlu0 %5020
    %v5023 = vmul.f32 %v5018, %v5021
    %v5024 = vmul.f32 %v5006, %v4296
    %v5025 = vadd.f32 %v5023, %v5024
    %5027 = vrot.lane.b32.xlu0 %v5025, 96
    %v5028 = vpop.permute.xlu0 %5027
    %v5029 = vsel %vm126, %v5028, 0
    %5031 = vmatprep.subr.mxu0 0.0
    %5032 = vmatpush1.msra.mxu0 %v49
    %5033 = vmatprep.subr.mxu0 0.0
    %5034 = vmatpush1.msra.mxu0 %v50
    %5035 = vmatprep.subr.mxu0 0.0
    %5036 = vmatpush1.msra.mxu0 %v51
    %5037 = vmatprep.subr.mxu0 0.0
    %5038 = vmatpush1.msra.mxu0 %v52
    %5039 = vmatprep.subr.mxu0 0.0
    %5040 = vmatpush1.msra.mxu0 0.0
    %5041 = vmatprep.subr.mxu0 0.0
    %5042 = vmatpush1.msra.mxu0 0.0
    %5043 = vmatprep.subr.mxu0 0.0
    %5044 = vmatpush1.msra.mxu0 0.0
    %5045 = vmatprep.subr.mxu0 0.0
    %5046 = vmatpush1.msra.mxu0 0.0
    %5047 = vmatprep.subr.mxu0 0.0
    %5048 = vmatpush1.msra.mxu0 0.0
    %5049 = vmatprep.subr.mxu0 0.0
    %5050 = vmatpush1.msra.mxu0 0.0
    %5051 = vmatprep.subr.mxu0 0.0
    %5052 = vmatpush1.msra.mxu0 0.0
    %5053 = vmatprep.subr.mxu0 0.0
    %5054 = vmatpush1.msra.mxu0 0.0
    %5055 = vmatprep.subr.mxu0 0.0
    %5056 = vmatpush1.msra.mxu0 0.0
    %5057 = vmatprep.subr.mxu0 0.0
    %5058 = vmatpush1.msra.mxu0 0.0
    %5059 = vmatprep.subr.mxu0 0.0
    %5060 = vmatpush1.msra.mxu0 0.0
    %5061 = vmatprep.subr.mxu0 0.0
    %5062 = vmatpush1.msra.mxu0 0.0
    %5063 = vmatprep.subr.mxu0 0.0
    %5064 = vmatpush1.msra.mxu0 0.0
    %5065 = vmatprep.subr.mxu0 0.0
    %5066 = vmatpush1.msra.mxu0 0.0
    %5067 = vmatprep.subr.mxu0 0.0
    %5068 = vmatpush1.msra.mxu0 0.0
    %5069 = vmatprep.subr.mxu0 0.0
    %5070 = vmatpush1.msra.mxu0 0.0
    %5071 = vmatprep.subr.mxu0 0.0
    %5072 = vmatpush1.msra.mxu0 0.0
    %5073 = vmatprep.subr.mxu0 0.0
    %5074 = vmatpush1.msra.mxu0 0.0
    %5075 = vmatprep.subr.mxu0 0.0
    %5076 = vmatpush1.msra.mxu0 0.0
    %5077 = vmatprep.subr.mxu0 0.0
    %5078 = vmatpush1.msra.mxu0 0.0
    %5079 = vmatprep.subr.mxu0 0.0
    %5080 = vmatpush1.msra.mxu0 0.0
    %5081 = vmatprep.subr.mxu0 0.0
    %5082 = vmatpush1.msra.mxu0 0.0
    %5083 = vmatprep.subr.mxu0 0.0
    %5084 = vmatpush1.msra.mxu0 0.0
    %5085 = vmatprep.subr.mxu0 0.0
    %5086 = vmatpush1.msra.mxu0 0.0
    %5087 = vmatprep.subr.mxu0 0.0
    %5088 = vmatpush1.msra.mxu0 0.0
    %5089 = vmatprep.subr.mxu0 0.0
    %5090 = vmatpush1.msra.mxu0 0.0
    %5091 = vmatprep.subr.mxu0 0.0
    %5092 = vmatpush1.msra.mxu0 0.0
    %5093 = vmatprep.subr.mxu0 0.0
    %5094 = vmatpush1.msra.mxu0 0.0
    %5095 = vmatprep.mubr.f32.mxu0 0.0
    %5096 = vmatmul.mubr.f32.gmra.mrb[0].mxu0 %v5029
    %v5097 = vpop.f32.mrb[0].mxu0
    %v5098 = vadd.f32 %v79, %v5097
    %v5099 = vpop.f32.mrb[0].mxu0
    %5100 = vdwg.mxu0
    %v5101 = vmax.f32 %v5098, 0.0
    %v5103 = vsel %vm126, %v5101, 0
    %5105 = vmatprep.subr.mxu0 0.0
    %5106 = vmatpush1.msra.mxu0 %v53
    %5107 = vmatprep.subr.mxu0 0.0
    %5108 = vmatpush1.msra.mxu0 %v54
    %5109 = vmatprep.subr.mxu0 0.0
    %5110 = vmatpush1.msra.mxu0 %v55
    %5111 = vmatprep.subr.mxu0 0.0
    %5112 = vmatpush1.msra.mxu0 %v56
    %5113 = vmatprep.subr.mxu0 0.0
    %5114 = vmatpush1.msra.mxu0 0.0
    %5115 = vmatprep.subr.mxu0 0.0
    %5116 = vmatpush1.msra.mxu0 0.0
    %5117 = vmatprep.subr.mxu0 0.0
    %5118 = vmatpush1.msra.mxu0 0.0
    %5119 = vmatprep.subr.mxu0 0.0
    %5120 = vmatpush1.msra.mxu0 0.0
    %5121 = vmatprep.subr.mxu0 0.0
    %5122 = vmatpush1.msra.mxu0 0.0
    %5123 = vmatprep.subr.mxu0 0.0
    %5124 = vmatpush1.msra.mxu0 0.0
    %5125 = vmatprep.subr.mxu0 0.0
    %5126 = vmatpush1.msra.mxu0 0.0
    %5127 = vmatprep.subr.mxu0 0.0
    %5128 = vmatpush1.msra.mxu0 0.0
    %5129 = vmatprep.subr.mxu0 0.0
    %5130 = vmatpush1.msra.mxu0 0.0
    %5131 = vmatprep.subr.mxu0 0.0
    %5132 = vmatpush1.msra.mxu0 0.0
    %5133 = vmatprep.subr.mxu0 0.0
    %5134 = vmatpush1.msra.mxu0 0.0
    %5135 = vmatprep.subr.mxu0 0.0
    %5136 = vmatpush1.msra.mxu0 0.0
    %5137 = vmatprep.subr.mxu0 0.0
    %5138 = vmatpush1.msra.mxu0 0.0
    %5139 = vmatprep.subr.mxu0 0.0
    %5140 = vmatpush1.msra.mxu0 0.0
    %5141 = vmatprep.subr.mxu0 0.0
    %5142 = vmatpush1.msra.mxu0 0.0
    %5143 = vmatprep.subr.mxu0 0.0
    %5144 = vmatpush1.msra.mxu0 0.0
    %5145 = vmatprep.subr.mxu0 0.0
    %5146 = vmatpush1.msra.mxu0 0.0
    %5147 = vmatprep.subr.mxu0 0.0
    %5148 = vmatpush1.msra.mxu0 0.0
    %5149 = vmatprep.subr.mxu0 0.0
    %5150 = vmatpush1.msra.mxu0 0.0
    %5151 = vmatprep.subr.mxu0 0.0
    %5152 = vmatpush1.msra.mxu0 0.0
    %5153 = vmatprep.subr.mxu0 0.0
    %5154 = vmatpush1.msra.mxu0 0.0
    %5155 = vmatprep.subr.mxu0 0.0
    %5156 = vmatpush1.msra.mxu0 0.0
    %5157 = vmatprep.subr.mxu0 0.0
    %5158 = vmatpush1.msra.mxu0 0.0
    %5159 = vmatprep.subr.mxu0 0.0
    %5160 = vmatpush1.msra.mxu0 0.0
    %5161 = vmatprep.subr.mxu0 0.0
    %5162 = vmatpush1.msra.mxu0 0.0
    %5163 = vmatprep.subr.mxu0 0.0
    %5164 = vmatpush1.msra.mxu0 0.0
    %5165 = vmatprep.subr.mxu0 0.0
    %5166 = vmatpush1.msra.mxu0 0.0
    %5167 = vmatprep.subr.mxu0 0.0
    %5168 = vmatpush1.msra.mxu0 0.0
    %5169 = vmatprep.mubr.f32.mxu0 0.0
    %5170 = vmatmul.mubr.f32.gmra.mrb[0].mxu0 %v5103
    %v5171 = vpop.f32.mrb[0].mxu0
    %v5172 = vadd.f32 %v84, %v5171
    %v5173 = vpop.f32.mrb[0].mxu0
    %5174 = vdwg.mxu0
    %v5175 = vmax.f32 %v5172, 0.0
    %v5177 = vsel %vm126, %v5175, 0
    %5179 = vmatprep.subr.mxu0 0.0
    %5180 = vmatpush1.msra.mxu0 %v57
    %5181 = vmatprep.subr.mxu0 0.0
    %5182 = vmatpush1.msra.mxu0 %v58
    %5183 = vmatprep.subr.mxu0 0.0
    %5184 = vmatpush1.msra.mxu0 %v59
    %5185 = vmatprep.subr.mxu0 0.0
    %5186 = vmatpush1.msra.mxu0 %v60
    %5187 = vmatprep.subr.mxu0 0.0
    %5188 = vmatpush1.msra.mxu0 0.0
    %5189 = vmatprep.subr.mxu0 0.0
    %5190 = vmatpush1.msra.mxu0 0.0
    %5191 = vmatprep.subr.mxu0 0.0
    %5192 = vmatpush1.msra.mxu0 0.0
    %5193 = vmatprep.subr.mxu0 0.0
    %5194 = vmatpush1.msra.mxu0 0.0
    %5195 = vmatprep.subr.mxu0 0.0
    %5196 = vmatpush1.msra.mxu0 0.0
    %5197 = vmatprep.subr.mxu0 0.0
    %5198 = vmatpush1.msra.mxu0 0.0
    %5199 = vmatprep.subr.mxu0 0.0
    %5200 = vmatpush1.msra.mxu0 0.0
    %5201 = vmatprep.subr.mxu0 0.0
    %5202 = vmatpush1.msra.mxu0 0.0
    %5203 = vmatprep.subr.mxu0 0.0
    %5204 = vmatpush1.msra.mxu0 0.0
    %5205 = vmatprep.subr.mxu0 0.0
    %5206 = vmatpush1.msra.mxu0 0.0
    %5207 = vmatprep.subr.mxu0 0.0
    %5208 = vmatpush1.msra.mxu0 0.0
    %5209 = vmatprep.subr.mxu0 0.0
    %5210 = vmatpush1.msra.mxu0 0.0
    %5211 = vmatprep.subr.mxu0 0.0
    %5212 = vmatpush1.msra.mxu0 0.0
    %5213 = vmatprep.subr.mxu0 0.0
    %5214 = vmatpush1.msra.mxu0 0.0
    %5215 = vmatprep.subr.mxu0 0.0
    %5216 = vmatpush1.msra.mxu0 0.0
    %5217 = vmatprep.subr.mxu0 0.0
    %5218 = vmatpush1.msra.mxu0 0.0
    %5219 = vmatprep.subr.mxu0 0.0
    %5220 = vmatpush1.msra.mxu0 0.0
    %5221 = vmatprep.subr.mxu0 0.0
    %5222 = vmatpush1.msra.mxu0 0.0
    %5223 = vmatprep.subr.mxu0 0.0
    %5224 = vmatpush1.msra.mxu0 0.0
    %5225 = vmatprep.subr.mxu0 0.0
    %5226 = vmatpush1.msra.mxu0 0.0
    %5227 = vmatprep.subr.mxu0 0.0
    %5228 = vmatpush1.msra.mxu0 0.0
    %5229 = vmatprep.subr.mxu0 0.0
    %5230 = vmatpush1.msra.mxu0 0.0
    %5231 = vmatprep.subr.mxu0 0.0
    %5232 = vmatpush1.msra.mxu0 0.0
    %5233 = vmatprep.subr.mxu0 0.0
    %5234 = vmatpush1.msra.mxu0 0.0
    %5235 = vmatprep.subr.mxu0 0.0
    %5236 = vmatpush1.msra.mxu0 0.0
    %5237 = vmatprep.subr.mxu0 0.0
    %5238 = vmatpush1.msra.mxu0 0.0
    %5239 = vmatprep.subr.mxu0 0.0
    %5240 = vmatpush1.msra.mxu0 0.0
    %5241 = vmatprep.subr.mxu0 0.0
    %5242 = vmatpush1.msra.mxu0 0.0
    %5243 = vmatprep.mubr.f32.mxu0 0.0
    %5244 = vmatmul.mubr.f32.gmra.mrb[0].mxu0 %v5177
    %v5245 = vpop.f32.mrb[0].mxu0
    %v5246 = vadd.f32 0.0, %v5245
    %v5247 = vpop.f32.mrb[0].mxu0
    %5248 = vdwg.mxu0
    %v5249 = vadd.f32 %v4521, %v5246
    %v5250 = vadd.f32 %v5249, %v89
    %5252 = vrot.lane.b32.xlu0 %v5250, 24
    %v5253 = vpop.permute.xlu0 %5252
    %vm5255 = vcmask 228544
    %5256 = vst.msk [vmem:[%s3] sm:$0xff] %vm5255, %v5253
    %5257 = vmatprep.subr.mxu0 0.0
    %5258 = vmatpush1.msra.mxu0 %v61
    %5259 = vmatprep.subr.mxu0 0.0
    %5260 = vmatpush1.msra.mxu0 %v62
    %5261 = vmatprep.subr.mxu0 0.0
    %5262 = vmatpush1.msra.mxu0 %v63
    %5263 = vmatprep.subr.mxu0 0.0
    %5264 = vmatpush1.msra.mxu0 %v64
    %5265 = vmatprep.subr.mxu0 0.0
    %5266 = vmatpush1.msra.mxu0 0.0
    %5267 = vmatprep.subr.mxu0 0.0
    %5268 = vmatpush1.msra.mxu0 0.0
    %5269 = vmatprep.subr.mxu0 0.0
    %5270 = vmatpush1.msra.mxu0 0.0
    %5271 = vmatprep.subr.mxu0 0.0
    %5272 = vmatpush1.msra.mxu0 0.0
    %5273 = vmatprep.subr.mxu0 0.0
    %5274 = vmatpush1.msra.mxu0 0.0
    %5275 = vmatprep.subr.mxu0 0.0
    %5276 = vmatpush1.msra.mxu0 0.0
    %5277 = vmatprep.subr.mxu0 0.0
    %5278 = vmatpush1.msra.mxu0 0.0
    %5279 = vmatprep.subr.mxu0 0.0
    %5280 = vmatpush1.msra.mxu0 0.0
    %5281 = vmatprep.subr.mxu0 0.0
    %5282 = vmatpush1.msra.mxu0 0.0
    %5283 = vmatprep.subr.mxu0 0.0
    %5284 = vmatpush1.msra.mxu0 0.0
    %5285 = vmatprep.subr.mxu0 0.0
    %5286 = vmatpush1.msra.mxu0 0.0
    %5287 = vmatprep.subr.mxu0 0.0
    %5288 = vmatpush1.msra.mxu0 0.0
    %5289 = vmatprep.subr.mxu0 0.0
    %5290 = vmatpush1.msra.mxu0 0.0
    %5291 = vmatprep.subr.mxu0 0.0
    %5292 = vmatpush1.msra.mxu0 0.0
    %5293 = vmatprep.subr.mxu0 0.0
    %5294 = vmatpush1.msra.mxu0 0.0
    %5295 = vmatprep.subr.mxu0 0.0
    %5296 = vmatpush1.msra.mxu0 0.0
    %5297 = vmatprep.subr.mxu0 0.0
    %5298 = vmatpush1.msra.mxu0 0.0
    %5299 = vmatprep.subr.mxu0 0.0
    %5300 = vmatpush1.msra.mxu0 0.0
    %5301 = vmatprep.subr.mxu0 0.0
    %5302 = vmatpush1.msra.mxu0 0.0
    %5303 = vmatprep.subr.mxu0 0.0
    %5304 = vmatpush1.msra.mxu0 0.0
    %5305 = vmatprep.subr.mxu0 0.0
    %5306 = vmatpush1.msra.mxu0 0.0
    %5307 = vmatprep.subr.mxu0 0.0
    %5308 = vmatpush1.msra.mxu0 0.0
    %5309 = vmatprep.subr.mxu0 0.0
    %5310 = vmatpush1.msra.mxu0 0.0
    %5311 = vmatprep.subr.mxu0 0.0
    %5312 = vmatpush1.msra.mxu0 0.0
    %5313 = vmatprep.subr.mxu0 0.0
    %5314 = vmatpush1.msra.mxu0 0.0
    %5315 = vmatprep.subr.mxu0 0.0
    %5316 = vmatpush1.msra.mxu0 0.0
    %5317 = vmatprep.subr.mxu0 0.0
    %5318 = vmatpush1.msra.mxu0 0.0
    %5319 = vmatprep.subr.mxu0 0.0
    %5320 = vmatpush1.msra.mxu0 0.0
    %5321 = vmatprep.mubr.f32.mxu0 0.0
    %5322 = vmatmul.mubr.f32.gmra.mrb[0].mxu0 %v5177
    %v5323 = vpop.f32.mrb[0].mxu0
    %v5324 = vadd.f32 0.0, %v5323
    %v5325 = vpop.f32.mrb[0].mxu0
    %5326 = vdwg.mxu0
    %v5327 = vadd.f32 %v4599, %v5324
    %v5328 = vadd.f32 %v5327, %v94
    %5329 = vmatprep.subr.mxu0 0.0
    %5330 = vmatpush1.msra.mxu0 %v28
    %5331 = vmatprep.subr.mxu0 0.0
    %5332 = vmatpush1.msra.mxu0 %v29
    %5333 = vmatprep.subr.mxu0 0.0
    %5334 = vmatpush1.msra.mxu0 %v30
    %5335 = vmatprep.subr.mxu0 0.0
    %5336 = vmatpush1.msra.mxu0 %v31
    %5337 = vmatprep.subr.mxu0 0.0
    %5338 = vmatpush1.msra.mxu0 0.0
    %5339 = vmatprep.subr.mxu0 0.0
    %5340 = vmatpush1.msra.mxu0 0.0
    %5341 = vmatprep.subr.mxu0 0.0
    %5342 = vmatpush1.msra.mxu0 0.0
    %5343 = vmatprep.subr.mxu0 0.0
    %5344 = vmatpush1.msra.mxu0 0.0
    %5345 = vmatprep.subr.mxu0 0.0
    %5346 = vmatpush1.msra.mxu0 0.0
    %5347 = vmatprep.subr.mxu0 0.0
    %5348 = vmatpush1.msra.mxu0 0.0
    %5349 = vmatprep.subr.mxu0 0.0
    %5350 = vmatpush1.msra.mxu0 0.0
    %5351 = vmatprep.subr.mxu0 0.0
    %5352 = vmatpush1.msra.mxu0 0.0
    %5353 = vmatprep.subr.mxu0 0.0
    %5354 = vmatpush1.msra.mxu0 0.0
    %5355 = vmatprep.subr.mxu0 0.0
    %5356 = vmatpush1.msra.mxu0 0.0
    %5357 = vmatprep.subr.mxu0 0.0
    %5358 = vmatpush1.msra.mxu0 0.0
    %5359 = vmatprep.subr.mxu0 0.0
    %5360 = vmatpush1.msra.mxu0 0.0
    %5361 = vmatprep.subr.mxu0 0.0
    %5362 = vmatpush1.msra.mxu0 0.0
    %5363 = vmatprep.subr.mxu0 0.0
    %5364 = vmatpush1.msra.mxu0 0.0
    %5365 = vmatprep.subr.mxu0 0.0
    %5366 = vmatpush1.msra.mxu0 0.0
    %5367 = vmatprep.subr.mxu0 0.0
    %5368 = vmatpush1.msra.mxu0 0.0
    %5369 = vmatprep.subr.mxu0 0.0
    %5370 = vmatpush1.msra.mxu0 0.0
    %5371 = vmatprep.subr.mxu0 0.0
    %5372 = vmatpush1.msra.mxu0 0.0
    %5373 = vmatprep.subr.mxu0 0.0
    %5374 = vmatpush1.msra.mxu0 0.0
    %5375 = vmatprep.subr.mxu0 0.0
    %5376 = vmatpush1.msra.mxu0 0.0
    %5377 = vmatprep.subr.mxu0 0.0
    %5378 = vmatpush1.msra.mxu0 0.0
    %5379 = vmatprep.subr.mxu0 0.0
    %5380 = vmatpush1.msra.mxu0 0.0
    %5381 = vmatprep.subr.mxu0 0.0
    %5382 = vmatpush1.msra.mxu0 0.0
    %5383 = vmatprep.subr.mxu0 0.0
    %5384 = vmatpush1.msra.mxu0 0.0
    %5385 = vmatprep.subr.mxu0 0.0
    %5386 = vmatpush1.msra.mxu0 0.0
    %5387 = vmatprep.subr.mxu0 0.0
    %5388 = vmatpush1.msra.mxu0 0.0
    %5389 = vmatprep.subr.mxu0 0.0
    %5390 = vmatpush1.msra.mxu0 0.0
    %5391 = vmatprep.subr.mxu0 0.0
    %5392 = vmatpush1.msra.mxu0 0.0
    %5393 = vmatprep.mubr.f32.mxu0 0.0
    %5394 = vmatmul.mubr.f32.gmra.mrb[0].mxu0 %v5029
    %v5395 = vpop.f32.mrb[0].mxu0
    %v5396 = vadd.f32 0.0, %v5395
    %v5397 = vpop.f32.mrb[0].mxu0
    %5398 = vdwg.mxu0
    %5400 = vrot.lane.b32.xlu0 %v5396, 64
    %v5401 = vpop.permute.xlu0 %5400
    %5403 = vmatprep.subr.mxu0 0.0
    %5404 = vmatpush1.msra.mxu0 %v5396
    %5405 = vmatprep.subr.mxu0 0.0
    %5406 = vmatpush1.msra.mxu0 %v5401
    %5407 = vmatprep.subr.mxu0 0.0
    %5408 = vmatpush1.msra.mxu0 0.0
    %5409 = vmatprep.subr.mxu0 0.0
    %5410 = vmatpush1.msra.mxu0 0.0
    %5411 = vmatprep.subr.mxu0 0.0
    %5412 = vmatpush1.msra.mxu0 0.0
    %5413 = vmatprep.subr.mxu0 0.0
    %5414 = vmatpush1.msra.mxu0 0.0
    %5415 = vmatprep.subr.mxu0 0.0
    %5416 = vmatpush1.msra.mxu0 0.0
    %5417 = vmatprep.subr.mxu0 0.0
    %5418 = vmatpush1.msra.mxu0 0.0
    %5419 = vmatprep.subr.mxu0 0.0
    %5420 = vmatpush1.msra.mxu0 0.0
    %5421 = vmatprep.subr.mxu0 0.0
    %5422 = vmatpush1.msra.mxu0 0.0
    %5423 = vmatprep.subr.mxu0 0.0
    %5424 = vmatpush1.msra.mxu0 0.0
    %5425 = vmatprep.subr.mxu0 0.0
    %5426 = vmatpush1.msra.mxu0 0.0
    %5427 = vmatprep.subr.mxu0 0.0
    %5428 = vmatpush1.msra.mxu0 0.0
    %5429 = vmatprep.subr.mxu0 0.0
    %5430 = vmatpush1.msra.mxu0 0.0
    %5431 = vmatprep.subr.mxu0 0.0
    %5432 = vmatpush1.msra.mxu0 0.0
    %5433 = vmatprep.subr.mxu0 0.0
    %5434 = vmatpush1.msra.mxu0 0.0
    %5435 = vmatprep.subr.mxu0 0.0
    %5436 = vmatpush1.msra.mxu0 0.0
    %5437 = vmatprep.subr.mxu0 0.0
    %5438 = vmatpush1.msra.mxu0 0.0
    %5439 = vmatprep.subr.mxu0 0.0
    %5440 = vmatpush1.msra.mxu0 0.0
    %5441 = vmatprep.subr.mxu0 0.0
    %5442 = vmatpush1.msra.mxu0 0.0
    %5443 = vmatprep.subr.mxu0 0.0
    %5444 = vmatpush1.msra.mxu0 0.0
    %5445 = vmatprep.subr.mxu0 0.0
    %5446 = vmatpush1.msra.mxu0 0.0
    %5447 = vmatprep.subr.mxu0 0.0
    %5448 = vmatpush1.msra.mxu0 0.0
    %5449 = vmatprep.subr.mxu0 0.0
    %5450 = vmatpush1.msra.mxu0 0.0
    %5451 = vmatprep.subr.mxu0 0.0
    %5452 = vmatpush1.msra.mxu0 0.0
    %5453 = vmatprep.subr.mxu0 0.0
    %5454 = vmatpush1.msra.mxu0 0.0
    %5455 = vmatprep.subr.mxu0 0.0
    %5456 = vmatpush1.msra.mxu0 0.0
    %5457 = vmatprep.subr.mxu0 0.0
    %5458 = vmatpush1.msra.mxu0 0.0
    %5459 = vmatprep.subr.mxu0 0.0
    %5460 = vmatpush1.msra.mxu0 0.0
    %5461 = vmatprep.subr.mxu0 0.0
    %5462 = vmatpush1.msra.mxu0 0.0
    %5463 = vmatprep.subr.mxu0 0.0
    %5464 = vmatpush1.msra.mxu0 0.0
    %5465 = vmatprep.subr.mxu0 0.0
    %5466 = vmatpush1.msra.mxu0 0.0
    %5467 = vmatprep.mubr.f32.mxu0 0.0
    %5468 = vmatmul.mubr.f32.gmra.mrb[0].mxu0 %v292
    %v5469 = vpop.f32.mrb[0].mxu0
    %v5470 = vadd.f32 %v69, %v5469
    %v5471 = vpop.f32.mrb[0].mxu0
    %5472 = vmatprep.mubr.f32.mxu0 0.0
    %5473 = vmatmul.mubr.f32.gmra.mrb[0].mxu0 %v295
    %v5474 = vpop.f32.mrb[0].mxu0
    %v5475 = vadd.f32 %v69, %v5474
    %v5476 = vpop.f32.mrb[0].mxu0
    %5477 = vmatprep.mubr.f32.mxu0 0.0
    %5478 = vmatmul.mubr.f32.gmra.mrb[0].mxu0 %v298
    %v5479 = vpop.f32.mrb[0].mxu0
    %v5480 = vadd.f32 %v69, %v5479
    %v5481 = vpop.f32.mrb[0].mxu0
    %5482 = vdwg.mxu0
    %v5483 = vtanh.pop %v5470
    %v5484 = vtanh.pop %v5475
    %v5485 = vtanh.pop %v5480
    %v5487 = vsel %vm383, %v5483, 0
    %v5490 = vsel %vm383, %v5484, 0
    %v5493 = vsel %vm383, %v5485, 0
    %5495 = vmatprep.subr.mxu0 0.0
    %5496 = vmatpush1.msra.mxu0 %v36
    %5497 = vmatprep.subr.mxu0 0.0
    %5498 = vmatpush1.msra.mxu0 %v37
    %5499 = vmatprep.subr.mxu0 0.0
    %5500 = vmatpush1.msra.mxu0 %v38
    %5501 = vmatprep.subr.mxu0 0.0
    %5502 = vmatpush1.msra.mxu0 %v39
    %5503 = vmatprep.subr.mxu0 0.0
    %5504 = vmatpush1.msra.mxu0 %v40
    %5505 = vmatprep.subr.mxu0 0.0
    %5506 = vmatpush1.msra.mxu0 %v41
    %5507 = vmatprep.subr.mxu0 0.0
    %5508 = vmatpush1.msra.mxu0 %v42
    %5509 = vmatprep.subr.mxu0 0.0
    %5510 = vmatpush1.msra.mxu0 %v43
    %5511 = vmatprep.subr.mxu0 0.0
    %5512 = vmatpush1.msra.mxu0 0.0
    %5513 = vmatprep.subr.mxu0 0.0
    %5514 = vmatpush1.msra.mxu0 0.0
    %5515 = vmatprep.subr.mxu0 0.0
    %5516 = vmatpush1.msra.mxu0 0.0
    %5517 = vmatprep.subr.mxu0 0.0
    %5518 = vmatpush1.msra.mxu0 0.0
    %5519 = vmatprep.subr.mxu0 0.0
    %5520 = vmatpush1.msra.mxu0 0.0
    %5521 = vmatprep.subr.mxu0 0.0
    %5522 = vmatpush1.msra.mxu0 0.0
    %5523 = vmatprep.subr.mxu0 0.0
    %5524 = vmatpush1.msra.mxu0 0.0
    %5525 = vmatprep.subr.mxu0 0.0
    %5526 = vmatpush1.msra.mxu0 0.0
    %5527 = vmatprep.subr.mxu0 0.0
    %5528 = vmatpush1.msra.mxu0 0.0
    %5529 = vmatprep.subr.mxu0 0.0
    %5530 = vmatpush1.msra.mxu0 0.0
    %5531 = vmatprep.subr.mxu0 0.0
    %5532 = vmatpush1.msra.mxu0 0.0
    %5533 = vmatprep.subr.mxu0 0.0
    %5534 = vmatpush1.msra.mxu0 0.0
    %5535 = vmatprep.subr.mxu0 0.0
    %5536 = vmatpush1.msra.mxu0 0.0
    %5537 = vmatprep.subr.mxu0 0.0
    %5538 = vmatpush1.msra.mxu0 0.0
    %5539 = vmatprep.subr.mxu0 0.0
    %5540 = vmatpush1.msra.mxu0 0.0
    %5541 = vmatprep.subr.mxu0 0.0
    %5542 = vmatpush1.msra.mxu0 0.0
    %5543 = vmatprep.subr.mxu0 0.0
    %5544 = vmatpush1.msra.mxu0 0.0
    %5545 = vmatprep.subr.mxu0 0.0
    %5546 = vmatpush1.msra.mxu0 0.0
    %5547 = vmatprep.subr.mxu0 0.0
    %5548 = vmatpush1.msra.mxu0 0.0
    %5549 = vmatprep.subr.mxu0 0.0
    %5550 = vmatpush1.msra.mxu0 0.0
    %5551 = vmatprep.subr.mxu0 0.0
    %5552 = vmatpush1.msra.mxu0 0.0
    %5553 = vmatprep.subr.mxu0 0.0
    %5554 = vmatpush1.msra.mxu0 0.0
    %5555 = vmatprep.subr.mxu0 0.0
    %5556 = vmatpush1.msra.mxu0 0.0
    %5557 = vmatprep.subr.mxu0 0.0
    %5558 = vmatpush1.msra.mxu0 0.0
    %5559 = vmatprep.mubr.f32.mxu0 0.0
    %5560 = vmatmul.mubr.f32.gmra.mrb[0].mxu0 %v5487
    %v5561 = vpop.f32.mrb[0].mxu0
    %v5562 = vadd.f32 %v74, %v5561
    %v5563 = vpop.f32.mrb[0].mxu0
    %5564 = vmatprep.mubr.f32.mxu0 0.0
    %5565 = vmatmul.mubr.f32.gmra.mrb[0].mxu0 %v5490
    %v5566 = vpop.f32.mrb[0].mxu0
    %v5567 = vadd.f32 %v74, %v5566
    %v5568 = vpop.f32.mrb[0].mxu0
    %5569 = vmatprep.mubr.f32.mxu0 0.0
    %5570 = vmatmul.mubr.f32.gmra.mrb[0].mxu0 %v5493
    %v5571 = vpop.f32.mrb[0].mxu0
    %v5572 = vadd.f32 %v74, %v5571
    %v5573 = vpop.f32.mrb[0].mxu0
    %5574 = vdwg.mxu0
    %v5575 = vtanh.pop %v5562
    %v5576 = vtanh.pop %v5567
    %v5577 = vtanh.pop %v5572
    %v5578 = vmul.f32 %v5575, %v127
    %v5579 = vmul.f32 %v5576, %v128
    %v5580 = vmul.f32 %v5577, %v129
    %5581 = vmatprep.subr.mxu0 0.0
    %5582 = vmatpush1.msra.mxu0 %v5578
    %5583 = vmatprep.subr.mxu0 0.0
    %5584 = vmatpush1.msra.mxu0 %v5579
    %5585 = vmatprep.subr.mxu0 0.0
    %5586 = vmatpush1.msra.mxu0 %v5580
    %5587 = vmatprep.subr.mxu0 0.0
    %5588 = vmatpush1.msra.mxu0 0.0
    %5589 = vmatprep.subr.mxu0 0.0
    %5590 = vmatpush1.msra.mxu0 0.0
    %5591 = vmatprep.subr.mxu0 0.0
    %5592 = vmatpush1.msra.mxu0 0.0
    %5593 = vmatprep.subr.mxu0 0.0
    %5594 = vmatpush1.msra.mxu0 0.0
    %5595 = vmatprep.subr.mxu0 0.0
    %5596 = vmatpush1.msra.mxu0 0.0
    %5597 = vmatprep.subr.mxu0 0.0
    %5598 = vmatpush1.msra.mxu0 0.0
    %5599 = vmatprep.subr.mxu0 0.0
    %5600 = vmatpush1.msra.mxu0 0.0
    %5601 = vmatprep.subr.mxu0 0.0
    %5602 = vmatpush1.msra.mxu0 0.0
    %5603 = vmatprep.subr.mxu0 0.0
    %5604 = vmatpush1.msra.mxu0 0.0
    %5605 = vmatprep.subr.mxu0 0.0
    %5606 = vmatpush1.msra.mxu0 0.0
    %5607 = vmatprep.subr.mxu0 0.0
    %5608 = vmatpush1.msra.mxu0 0.0
    %5609 = vmatprep.subr.mxu0 0.0
    %5610 = vmatpush1.msra.mxu0 0.0
    %5611 = vmatprep.subr.mxu0 0.0
    %5612 = vmatpush1.msra.mxu0 0.0
    %5613 = vmatprep.subr.mxu0 0.0
    %5614 = vmatpush1.msra.mxu0 0.0
    %5615 = vmatprep.subr.mxu0 0.0
    %5616 = vmatpush1.msra.mxu0 0.0
    %5617 = vmatprep.subr.mxu0 0.0
    %5618 = vmatpush1.msra.mxu0 0.0
    %5619 = vmatprep.subr.mxu0 0.0
    %5620 = vmatpush1.msra.mxu0 0.0
    %5621 = vmatprep.subr.mxu0 0.0
    %5622 = vmatpush1.msra.mxu0 0.0
    %5623 = vmatprep.subr.mxu0 0.0
    %5624 = vmatpush1.msra.mxu0 0.0
    %5625 = vmatprep.subr.mxu0 0.0
    %5626 = vmatpush1.msra.mxu0 0.0
    %5627 = vmatprep.subr.mxu0 0.0
    %5628 = vmatpush1.msra.mxu0 0.0
    %5629 = vmatprep.subr.mxu0 0.0
    %5630 = vmatpush1.msra.mxu0 0.0
    %5631 = vmatprep.subr.mxu0 0.0
    %5632 = vmatpush1.msra.mxu0 0.0
    %5633 = vmatprep.subr.mxu0 0.0
    %5634 = vmatpush1.msra.mxu0 0.0
    %5635 = vmatprep.subr.mxu0 0.0
    %5636 = vmatpush1.msra.mxu0 0.0
    %5637 = vmatprep.subr.mxu0 0.0
    %5638 = vmatpush1.msra.mxu0 0.0
    %5639 = vmatprep.subr.mxu0 0.0
    %5640 = vmatpush1.msra.mxu0 0.0
    %5641 = vmatprep.subr.mxu0 0.0
    %5642 = vmatpush1.msra.mxu0 0.0
    %5643 = vmatprep.subr.mxu0 0.0
    %5644 = vmatpush1.msra.mxu0 0.0
    %5645 = vmatprep.mubr.f32.mxu0 0.0
    %5646 = vmatmul.mubr.f32.gmra.mrb[0].mxu0 %v481
    %v5647 = vpop.f32.mrb[0].mxu0
    %v5648 = vadd.f32 0.0, %v5647
    %v5649 = vpop.f32.mrb[0].mxu0
    %5650 = vdwg.mxu0
    %5652 = vrot.lane.b32.xlu0 %v5648, 96
    %v5653 = vpop.permute.xlu0 %5652
    %v5655 = vadd.f32 %v5648, %v5653
    %v5657 = vsel %vm126, %v5655, 0
    %5659 = vmatprep.subr.mxu0 0.0
    %5660 = vmatpush1.msra.mxu0 %v44
    %5661 = vmatprep.subr.mxu0 0.0
    %5662 = vmatpush1.msra.mxu0 %v45
    %5663 = vmatprep.subr.mxu0 0.0
    %5664 = vmatpush1.msra.mxu0 %v46
    %5665 = vmatprep.subr.mxu0 0.0
    %5666 = vmatpush1.msra.mxu0 %v47
    %5667 = vmatprep.subr.mxu0 0.0
    %5668 = vmatpush1.msra.mxu0 0.0
    %5669 = vmatprep.subr.mxu0 0.0
    %5670 = vmatpush1.msra.mxu0 0.0
    %5671 = vmatprep.subr.mxu0 0.0
    %5672 = vmatpush1.msra.mxu0 0.0
    %5673 = vmatprep.subr.mxu0 0.0
    %5674 = vmatpush1.msra.mxu0 0.0
    %5675 = vmatprep.subr.mxu0 0.0
    %5676 = vmatpush1.msra.mxu0 0.0
    %5677 = vmatprep.subr.mxu0 0.0
    %5678 = vmatpush1.msra.mxu0 0.0
    %5679 = vmatprep.subr.mxu0 0.0
    %5680 = vmatpush1.msra.mxu0 0.0
    %5681 = vmatprep.subr.mxu0 0.0
    %5682 = vmatpush1.msra.mxu0 0.0
    %5683 = vmatprep.subr.mxu0 0.0
    %5684 = vmatpush1.msra.mxu0 0.0
    %5685 = vmatprep.subr.mxu0 0.0
    %5686 = vmatpush1.msra.mxu0 0.0
    %5687 = vmatprep.subr.mxu0 0.0
    %5688 = vmatpush1.msra.mxu0 0.0
    %5689 = vmatprep.subr.mxu0 0.0
    %5690 = vmatpush1.msra.mxu0 0.0
    %5691 = vmatprep.subr.mxu0 0.0
    %5692 = vmatpush1.msra.mxu0 0.0
    %5693 = vmatprep.subr.mxu0 0.0
    %5694 = vmatpush1.msra.mxu0 0.0
    %5695 = vmatprep.subr.mxu0 0.0
    %5696 = vmatpush1.msra.mxu0 0.0
    %5697 = vmatprep.subr.mxu0 0.0
    %5698 = vmatpush1.msra.mxu0 0.0
    %5699 = vmatprep.subr.mxu0 0.0
    %5700 = vmatpush1.msra.mxu0 0.0
    %5701 = vmatprep.subr.mxu0 0.0
    %5702 = vmatpush1.msra.mxu0 0.0
    %5703 = vmatprep.subr.mxu0 0.0
    %5704 = vmatpush1.msra.mxu0 0.0
    %5705 = vmatprep.subr.mxu0 0.0
    %5706 = vmatpush1.msra.mxu0 0.0
    %5707 = vmatprep.subr.mxu0 0.0
    %5708 = vmatpush1.msra.mxu0 0.0
    %5709 = vmatprep.subr.mxu0 0.0
    %5710 = vmatpush1.msra.mxu0 0.0
    %5711 = vmatprep.subr.mxu0 0.0
    %5712 = vmatpush1.msra.mxu0 0.0
    %5713 = vmatprep.subr.mxu0 0.0
    %5714 = vmatpush1.msra.mxu0 0.0
    %5715 = vmatprep.subr.mxu0 0.0
    %5716 = vmatpush1.msra.mxu0 0.0
    %5717 = vmatprep.subr.mxu0 0.0
    %5718 = vmatpush1.msra.mxu0 0.0
    %5719 = vmatprep.subr.mxu0 0.0
    %5720 = vmatpush1.msra.mxu0 0.0
    %5721 = vmatprep.subr.mxu0 0.0
    %5722 = vmatpush1.msra.mxu0 0.0
    %5723 = vmatprep.mubr.f32.mxu0 0.0
    %5724 = vmatmul.mubr.f32.gmra.mrb[0].mxu0 %v5657
    %v5725 = vpop.f32.mrb[0].mxu0
    %v5726 = vadd.f32 0.0, %v5725
    %v5727 = vpop.f32.mrb[0].mxu0
    %5728 = vdwg.mxu0
    %v5729 = vadd.f32 %v5328, %v5726
    %v5730 = vxor.u32 %v5729, 2147483648
    %v5731 = vmul.f32 %v5730, 1.442695
    %v5732 = vpow.pop %v5731
    %v5733 = vadd.f32 %v5732, 1.0
    %v5734 = vrcp.pop %v5733
    %v5735 = vmul.f32 1.0, %v5734
    %5737 = vrot.lane.b32.xlu0 %v5726, 64
    %v5738 = vpop.permute.xlu0 %5737
    %v5740 = vmul.f32 %v5735, %v5738
    %5742 = vrot.lane.b32.xlu0 %v5740, 64
    %v5743 = vpop.permute.xlu0 %5742
    %v5745 = vadd.f32 %v5328, %v5743
    %v5746 = vtanh.pop %v5745
    %v5747 = vsub.f32 1.0, %v5735
    %5749 = vrot.lane.b32.xlu0 %v5746, 96
    %v5750 = vpop.permute.xlu0 %5749
    %v5752 = vmul.f32 %v5747, %v5750
    %v5753 = vmul.f32 %v5735, %v5025
    %v5754 = vadd.f32 %v5752, %v5753
    %5756 = vrot.lane.b32.xlu0 %v5754, 96
    %v5757 = vpop.permute.xlu0 %5756
    %v5758 = vsel %vm126, %v5757, 0
    %5760 = vmatprep.subr.mxu0 0.0
    %5761 = vmatpush1.msra.mxu0 %v49
    %5762 = vmatprep.subr.mxu0 0.0
    %5763 = vmatpush1.msra.mxu0 %v50
    %5764 = vmatprep.subr.mxu0 0.0
    %5765 = vmatpush1.msra.mxu0 %v51
    %5766 = vmatprep.subr.mxu0 0.0
    %5767 = vmatpush1.msra.mxu0 %v52
    %5768 = vmatprep.subr.mxu0 0.0
    %5769 = vmatpush1.msra.mxu0 0.0
    %5770 = vmatprep.subr.mxu0 0.0
    %5771 = vmatpush1.msra.mxu0 0.0
    %5772 = vmatprep.subr.mxu0 0.0
    %5773 = vmatpush1.msra.mxu0 0.0
    %5774 = vmatprep.subr.mxu0 0.0
    %5775 = vmatpush1.msra.mxu0 0.0
    %5776 = vmatprep.subr.mxu0 0.0
    %5777 = vmatpush1.msra.mxu0 0.0
    %5778 = vmatprep.subr.mxu0 0.0
    %5779 = vmatpush1.msra.mxu0 0.0
    %5780 = vmatprep.subr.mxu0 0.0
    %5781 = vmatpush1.msra.mxu0 0.0
    %5782 = vmatprep.subr.mxu0 0.0
    %5783 = vmatpush1.msra.mxu0 0.0
    %5784 = vmatprep.subr.mxu0 0.0
    %5785 = vmatpush1.msra.mxu0 0.0
    %5786 = vmatprep.subr.mxu0 0.0
    %5787 = vmatpush1.msra.mxu0 0.0
    %5788 = vmatprep.subr.mxu0 0.0
    %5789 = vmatpush1.msra.mxu0 0.0
    %5790 = vmatprep.subr.mxu0 0.0
    %5791 = vmatpush1.msra.mxu0 0.0
    %5792 = vmatprep.subr.mxu0 0.0
    %5793 = vmatpush1.msra.mxu0 0.0
    %5794 = vmatprep.subr.mxu0 0.0
    %5795 = vmatpush1.msra.mxu0 0.0
    %5796 = vmatprep.subr.mxu0 0.0
    %5797 = vmatpush1.msra.mxu0 0.0
    %5798 = vmatprep.subr.mxu0 0.0
    %5799 = vmatpush1.msra.mxu0 0.0
    %5800 = vmatprep.subr.mxu0 0.0
    %5801 = vmatpush1.msra.mxu0 0.0
    %5802 = vmatprep.subr.mxu0 0.0
    %5803 = vmatpush1.msra.mxu0 0.0
    %5804 = vmatprep.subr.mxu0 0.0
    %5805 = vmatpush1.msra.mxu0 0.0
    %5806 = vmatprep.subr.mxu0 0.0
    %5807 = vmatpush1.msra.mxu0 0.0
    %5808 = vmatprep.subr.mxu0 0.0
    %5809 = vmatpush1.msra.mxu0 0.0
    %5810 = vmatprep.subr.mxu0 0.0
    %5811 = vmatpush1.msra.mxu0 0.0
    %5812 = vmatprep.subr.mxu0 0.0
    %5813 = vmatpush1.msra.mxu0 0.0
    %5814 = vmatprep.subr.mxu0 0.0
    %5815 = vmatpush1.msra.mxu0 0.0
    %5816 = vmatprep.subr.mxu0 0.0
    %5817 = vmatpush1.msra.mxu0 0.0
    %5818 = vmatprep.subr.mxu0 0.0
    %5819 = vmatpush1.msra.mxu0 0.0
    %5820 = vmatprep.subr.mxu0 0.0
    %5821 = vmatpush1.msra.mxu0 0.0
    %5822 = vmatprep.subr.mxu0 0.0
    %5823 = vmatpush1.msra.mxu0 0.0
    %5824 = vmatprep.mubr.f32.mxu0 0.0
    %5825 = vmatmul.mubr.f32.gmra.mrb[0].mxu0 %v5758
    %v5826 = vpop.f32.mrb[0].mxu0
    %v5827 = vadd.f32 %v79, %v5826
    %v5828 = vpop.f32.mrb[0].mxu0
    %5829 = vdwg.mxu0
    %v5830 = vmax.f32 %v5827, 0.0
    %v5832 = vsel %vm126, %v5830, 0
    %5834 = vmatprep.subr.mxu0 0.0
    %5835 = vmatpush1.msra.mxu0 %v53
    %5836 = vmatprep.subr.mxu0 0.0
    %5837 = vmatpush1.msra.mxu0 %v54
    %5838 = vmatprep.subr.mxu0 0.0
    %5839 = vmatpush1.msra.mxu0 %v55
    %5840 = vmatprep.subr.mxu0 0.0
    %5841 = vmatpush1.msra.mxu0 %v56
    %5842 = vmatprep.subr.mxu0 0.0
    %5843 = vmatpush1.msra.mxu0 0.0
    %5844 = vmatprep.subr.mxu0 0.0
    %5845 = vmatpush1.msra.mxu0 0.0
    %5846 = vmatprep.subr.mxu0 0.0
    %5847 = vmatpush1.msra.mxu0 0.0
    %5848 = vmatprep.subr.mxu0 0.0
    %5849 = vmatpush1.msra.mxu0 0.0
    %5850 = vmatprep.subr.mxu0 0.0
    %5851 = vmatpush1.msra.mxu0 0.0
    %5852 = vmatprep.subr.mxu0 0.0
    %5853 = vmatpush1.msra.mxu0 0.0
    %5854 = vmatprep.subr.mxu0 0.0
    %5855 = vmatpush1.msra.mxu0 0.0
    %5856 = vmatprep.subr.mxu0 0.0
    %5857 = vmatpush1.msra.mxu0 0.0
    %5858 = vmatprep.subr.mxu0 0.0
    %5859 = vmatpush1.msra.mxu0 0.0
    %5860 = vmatprep.subr.mxu0 0.0
    %5861 = vmatpush1.msra.mxu0 0.0
    %5862 = vmatprep.subr.mxu0 0.0
    %5863 = vmatpush1.msra.mxu0 0.0
    %5864 = vmatprep.subr.mxu0 0.0
    %5865 = vmatpush1.msra.mxu0 0.0
    %5866 = vmatprep.subr.mxu0 0.0
    %5867 = vmatpush1.msra.mxu0 0.0
    %5868 = vmatprep.subr.mxu0 0.0
    %5869 = vmatpush1.msra.mxu0 0.0
    %5870 = vmatprep.subr.mxu0 0.0
    %5871 = vmatpush1.msra.mxu0 0.0
    %5872 = vmatprep.subr.mxu0 0.0
    %5873 = vmatpush1.msra.mxu0 0.0
    %5874 = vmatprep.subr.mxu0 0.0
    %5875 = vmatpush1.msra.mxu0 0.0
    %5876 = vmatprep.subr.mxu0 0.0
    %5877 = vmatpush1.msra.mxu0 0.0
    %5878 = vmatprep.subr.mxu0 0.0
    %5879 = vmatpush1.msra.mxu0 0.0
    %5880 = vmatprep.subr.mxu0 0.0
    %5881 = vmatpush1.msra.mxu0 0.0
    %5882 = vmatprep.subr.mxu0 0.0
    %5883 = vmatpush1.msra.mxu0 0.0
    %5884 = vmatprep.subr.mxu0 0.0
    %5885 = vmatpush1.msra.mxu0 0.0
    %5886 = vmatprep.subr.mxu0 0.0
    %5887 = vmatpush1.msra.mxu0 0.0
    %5888 = vmatprep.subr.mxu0 0.0
    %5889 = vmatpush1.msra.mxu0 0.0
    %5890 = vmatprep.subr.mxu0 0.0
    %5891 = vmatpush1.msra.mxu0 0.0
    %5892 = vmatprep.subr.mxu0 0.0
    %5893 = vmatpush1.msra.mxu0 0.0
    %5894 = vmatprep.subr.mxu0 0.0
    %5895 = vmatpush1.msra.mxu0 0.0
    %5896 = vmatprep.subr.mxu0 0.0
    %5897 = vmatpush1.msra.mxu0 0.0
    %5898 = vmatprep.mubr.f32.mxu0 0.0
    %5899 = vmatmul.mubr.f32.gmra.mrb[0].mxu0 %v5832
    %v5900 = vpop.f32.mrb[0].mxu0
    %v5901 = vadd.f32 %v84, %v5900
    %v5902 = vpop.f32.mrb[0].mxu0
    %5903 = vdwg.mxu0
    %v5904 = vmax.f32 %v5901, 0.0
    %v5906 = vsel %vm126, %v5904, 0
    %5908 = vmatprep.subr.mxu0 0.0
    %5909 = vmatpush1.msra.mxu0 %v57
    %5910 = vmatprep.subr.mxu0 0.0
    %5911 = vmatpush1.msra.mxu0 %v58
    %5912 = vmatprep.subr.mxu0 0.0
    %5913 = vmatpush1.msra.mxu0 %v59
    %5914 = vmatprep.subr.mxu0 0.0
    %5915 = vmatpush1.msra.mxu0 %v60
    %5916 = vmatprep.subr.mxu0 0.0
    %5917 = vmatpush1.msra.mxu0 0.0
    %5918 = vmatprep.subr.mxu0 0.0
    %5919 = vmatpush1.msra.mxu0 0.0
    %5920 = vmatprep.subr.mxu0 0.0
    %5921 = vmatpush1.msra.mxu0 0.0
    %5922 = vmatprep.subr.mxu0 0.0
    %5923 = vmatpush1.msra.mxu0 0.0
    %5924 = vmatprep.subr.mxu0 0.0
    %5925 = vmatpush1.msra.mxu0 0.0
    %5926 = vmatprep.subr.mxu0 0.0
    %5927 = vmatpush1.msra.mxu0 0.0
    %5928 = vmatprep.subr.mxu0 0.0
    %5929 = vmatpush1.msra.mxu0 0.0
    %5930 = vmatprep.subr.mxu0 0.0
    %5931 = vmatpush1.msra.mxu0 0.0
    %5932 = vmatprep.subr.mxu0 0.0
    %5933 = vmatpush1.msra.mxu0 0.0
    %5934 = vmatprep.subr.mxu0 0.0
    %5935 = vmatpush1.msra.mxu0 0.0
    %5936 = vmatprep.subr.mxu0 0.0
    %5937 = vmatpush1.msra.mxu0 0.0
    %5938 = vmatprep.subr.mxu0 0.0
    %5939 = vmatpush1.msra.mxu0 0.0
    %5940 = vmatprep.subr.mxu0 0.0
    %5941 = vmatpush1.msra.mxu0 0.0
    %5942 = vmatprep.subr.mxu0 0.0
    %5943 = vmatpush1.msra.mxu0 0.0
    %5944 = vmatprep.subr.mxu0 0.0
    %5945 = vmatpush1.msra.mxu0 0.0
    %5946 = vmatprep.subr.mxu0 0.0
    %5947 = vmatpush1.msra.mxu0 0.0
    %5948 = vmatprep.subr.mxu0 0.0
    %5949 = vmatpush1.msra.mxu0 0.0
    %5950 = vmatprep.subr.mxu0 0.0
    %5951 = vmatpush1.msra.mxu0 0.0
    %5952 = vmatprep.subr.mxu0 0.0
    %5953 = vmatpush1.msra.mxu0 0.0
    %5954 = vmatprep.subr.mxu0 0.0
    %5955 = vmatpush1.msra.mxu0 0.0
    %5956 = vmatprep.subr.mxu0 0.0
    %5957 = vmatpush1.msra.mxu0 0.0
    %5958 = vmatprep.subr.mxu0 0.0
    %5959 = vmatpush1.msra.mxu0 0.0
    %5960 = vmatprep.subr.mxu0 0.0
    %5961 = vmatpush1.msra.mxu0 0.0
    %5962 = vmatprep.subr.mxu0 0.0
    %5963 = vmatpush1.msra.mxu0 0.0
    %5964 = vmatprep.subr.mxu0 0.0
    %5965 = vmatpush1.msra.mxu0 0.0
    %5966 = vmatprep.subr.mxu0 0.0
    %5967 = vmatpush1.msra.mxu0 0.0
    %5968 = vmatprep.subr.mxu0 0.0
    %5969 = vmatpush1.msra.mxu0 0.0
    %5970 = vmatprep.subr.mxu0 0.0
    %5971 = vmatpush1.msra.mxu0 0.0
    %5972 = vmatprep.mubr.f32.mxu0 0.0
    %5973 = vmatmul.mubr.f32.gmra.mrb[0].mxu0 %v5906
    %v5974 = vpop.f32.mrb[0].mxu0
    %v5975 = vadd.f32 0.0, %v5974
    %v5976 = vpop.f32.mrb[0].mxu0
    %5977 = vdwg.mxu0
    %v5978 = vadd.f32 %v5250, %v5975
    %v5979 = vadd.f32 %v5978, %v89
    %5981 = vrot.lane.b32.xlu0 %v5979, 28
    %v5982 = vpop.permute.xlu0 %5981
    %vm5984 = vcmask 261344
    %5985 = vst.msk [vmem:[%s3] sm:$0xff] %vm5984, %v5982
    // Predicated region
    $region18: #{graph_rnn_decoder_forward.1} parent=1 // pred_check
      _
    $region19: #{graph_rnn_decoder_forward.1} parent=1 // pred_check_branch
      %5987 = sbr.rel (0) target = $region21
    $region20: #{graph_rnn_decoder_forward.1} parent=1 // pred_region
      _
    $region21: #{graph_rnn_decoder_forward.1} parent=1 // pred_fallthru
      _
    // Predicated region
    $region22: #{graph_rnn_decoder_forward.1} parent=1 // pred_check
      _
    $region23: #{graph_rnn_decoder_forward.1} parent=1 // pred_check_branch
      %5989 = sbr.rel (0) target = $region25
    $region24: #{graph_rnn_decoder_forward.1} parent=1 // pred_region
      _
    $region25: #{graph_rnn_decoder_forward.1} parent=1 // pred_fallthru
      _
    %5990 = vsyncpa [#allocation3], 1

</llo_original>
